<compile_context>
chip_gen: v7x
topology: tpu7x:2x2x1
jax: 0.10.0
libtpu: 0.0.40
codegen_flags: <defaults>
</compile_context>

<pallas_src>
import functools
import math

import jax
import jax.numpy as jnp
import numpy as np
from jax import lax
from jax.experimental import pallas as pl
from jax.experimental.pallas import tpu as pltpu

_GN_GROUPS = 32
_GN_EPS = 1e-6
_LN_EPS = 1e-5
_LANE = 128


def _round_up(v, m):
  return -(-v // m) * m


# --------------------------------------------------------------------------
# Kernel
# --------------------------------------------------------------------------
def _attn_block_kernel(
    # inputs ----------------------------------------------------------------
    x_ref, ctx_ref, gns_ref, gnb_ref, xmask_ref,
    w_ci, b_ci,
    ln1_g, ln1_b, wq1, wk1, wv1, wo1, bo1,
    ln2_g, ln2_b, wq2, wk2, wv2, wo2, bo2,
    ln3_g, ln3_b, ba, bg, bff2,
    w_co, b_co,
    wa_hbm, wg_hbm, w2_hbm,
    # outputs ---------------------------------------------------------------
    o_ref,
    # scratch ---------------------------------------------------------------
    acc_ref, wa_buf, wg_buf, w2_buf, ff_sem,
    *, n_head, n_real_c, n_ff_chunks, use_ctx_mask):
  f32, bf16 = jnp.float32, jnp.bfloat16

  x = x_ref[0]                      # (S, Cp) f32  -- outer residual
  ctx = ctx_ref[0].astype(bf16)     # (Lcp, Dcp) bf16
  _, Cp = x.shape
  pad_c = Cp - n_real_c
  inv_c = 1.0 / n_real_c

  def dotf(a, b):                   # bf16 operands, f32 MXU accumulation
    return jnp.dot(a, b, preferred_element_type=f32)

  # --- GEGLU weight streaming: issue the first chunk's DMA now so it is
  # hidden behind both attention stages ---
  def ff_fetch(j, slot):
    pltpu.make_async_copy(wa_hbm.at[j], wa_buf.at[slot], ff_sem.at[0, slot]).start()
    pltpu.make_async_copy(wg_hbm.at[j], wg_buf.at[slot], ff_sem.at[1, slot]).start()
    pltpu.make_async_copy(w2_hbm.at[j], w2_buf.at[slot], ff_sem.at[2, slot]).start()

  ff_fetch(0, 0)

  def layernorm(t, g_ref, b_ref):
    # Channels are zero padded to Cp; stats use the real channel count with an
    # exact correction for the (Cp - C) zero entries.  Padded gamma/beta are 0
    # so padded output channels stay exactly 0.
    mu = jnp.sum(t, axis=-1, keepdims=True) * inv_c
    d = t - mu
    var = (jnp.sum(d * d, axis=-1, keepdims=True) - pad_c * (mu * mu)) * inv_c
    scale = lax.rsqrt(var + _LN_EPS) * g_ref[...]
    return (d * scale + b_ref[...]).astype(bf16)

  def attention(xq, xkv, wq, wk, wv, wo, bias):
    # 1/sqrt(dh) is folded into wq (wrapper); softmax normalisation deferred
    # to the (S, dh_pad) head output; K contracted on its last dim (no .T).
    acc_ref[...] = jnp.zeros_like(acc_ref)

    def head_body(hd, carry):
      qh = dotf(xq, wq[hd]).astype(bf16)             # (S,  dh_pad)
      kh = dotf(xkv, wk[hd]).astype(bf16)            # (Sk, dh_pad)
      vh = dotf(xkv, wv[hd]).astype(bf16)            # (Sk, dh_pad)
      s = lax.dot_general(qh, kh, (((1,), (1,)), ((), ())),
                          preferred_element_type=f32)  # (S, Sk)
      if bias is not None:
        s = s + bias
      m = jnp.max(s, axis=-1, keepdims=True)
      e = jnp.exp(s - m)
      l = jnp.sum(e, axis=-1, keepdims=True)
      oh = dotf(e.astype(bf16), vh)                  # (S, dh_pad) unnormalised
      oh = (oh * pl.reciprocal(l, approx=True)).astype(bf16)
      acc_ref[...] += dotf(oh, wo[hd])               # per-head out-projection
      return carry

    lax.fori_loop(0, n_head, head_body, 0)
    return acc_ref[...]

  # ---- GroupNorm(32, eps=1e-6): stats hoisted to the wrapper and folded
  # with gamma/beta into per-batch per-channel scale/shift ----
  h = x * gns_ref[0] + gnb_ref[0]

  # ---- conv_input (1x1 conv == per-token channel matmul) ----
  h = dotf(h.astype(bf16), w_ci[...]) + b_ci[...]

  # ---- self-attention (no in_proj bias, out_proj has bias) ----
  h1 = layernorm(h, ln1_g, ln1_b)
  h = h + attention(h1, h1, wq1, wk1, wv1, wo1, None) + bo1[...]

  # ---- cross-attention over the (padded, masked) context ----
  h2 = layernorm(h, ln2_g, ln2_b)
  ctx_bias = xmask_ref[...] if use_ctx_mask else None
  h = h + attention(h2, ctx, wq2, wk2, wv2, wo2, ctx_bias) + bo2[...]

  # ---- GEGLU feed-forward: weights streamed from HBM, double-buffered ----
  h3 = layernorm(h, ln3_g, ln3_b)
  acc_ref[...] = jnp.zeros_like(acc_ref)

  def ff_body(j, carry):
    slot = lax.rem(j, 2)
    pltpu.make_async_copy(wa_hbm.at[0], wa_buf.at[slot], ff_sem.at[0, slot]).wait()
    pltpu.make_async_copy(wg_hbm.at[0], wg_buf.at[slot], ff_sem.at[1, slot]).wait()
    pltpu.make_async_copy(w2_hbm.at[0], w2_buf.at[slot], ff_sem.at[2, slot]).wait()

    @pl.when(j + 1 < n_ff_chunks)
    def _():
      ff_fetch(j + 1, 1 - slot)

    a_j = dotf(h3, wa_buf[slot]) + ba[j]
    g_j = dotf(h3, wg_buf[slot]) + bg[j]
    gelu_g = 0.5 * g_j * (1.0 + lax.erf(g_j * (1.0 / math.sqrt(2.0))))  # exact GELU
    acc_ref[...] += dotf((a_j * gelu_g).astype(bf16), w2_buf[slot])
    return carry

  lax.fori_loop(0, n_ff_chunks, ff_body, 0)
  h = h + acc_ref[...] + bff2[...]

  # ---- conv_output (1x1) + outer residual (original input tokens) ----
  o_ref[0] = x + dotf(h.astype(bf16), w_co[...]) + b_co[...]


# --------------------------------------------------------------------------
# Wrapper-side layout helpers
# --------------------------------------------------------------------------
def _pad_axis(a, axis, new_size):
  pad = new_size - a.shape[axis]
  if pad <= 0:
    return a
  widths = [(0, 0)] * a.ndim
  widths[axis] = (0, pad)
  return jnp.pad(a, widths)


def _head_proj(w, n_head, dh, dh_pad, in_pad):
  """(in_dim, n_head*dh) -> (n_head, in_pad, dh_pad), zero padded."""
  ind = w.shape[0]
  w = w.reshape(ind, n_head, dh)
  w = _pad_axis(_pad_axis(w, 0, in_pad), 2, dh_pad)
  return jnp.transpose(w, (1, 0, 2))


def _head_out(w, n_head, dh, dh_pad, out_pad):
  """(n_head*dh, out_dim) -> (n_head, dh_pad, out_pad), zero padded."""
  outd = w.shape[1]
  w = w.reshape(n_head, dh, outd)
  return _pad_axis(_pad_axis(w, 1, dh_pad), 2, out_pad)


def _vmem_limit_bytes():
  phys = 64 * 1024 * 1024
  try:
    phys = int(getattr(pltpu.get_tpu_info(), "vmem_capacity_bytes", phys))
  except Exception:
    pass
  # ~96 MiB on v5e/v6e (128 MiB physical), ~48 MiB on v7x (64 MiB physical).
  return max(32 * 1024 * 1024, min(phys * 3 // 4, 100 * 1024 * 1024))


# --------------------------------------------------------------------------
# Wrapper
# --------------------------------------------------------------------------
def unet_attention_block(image, context, params, *, n_head):
  """image: (N, C, H, W) f32 (NCHW, as in PyTorch); context: (N, Lc, d_context) f32."""
  N, C, H, W = image.shape
  S = H * W
  Lc, Dc = context.shape[1], context.shape[2]
  bf16 = jnp.bfloat16
  p = params

  dh = C // n_head
  dh_pad = _round_up(dh, _LANE)
  C_pad = _round_up(C, _LANE)
  Dc_pad = _round_up(Dc, _LANE)
  Lc_pad = _round_up(Lc, _LANE)
  FH = 4 * C
  if FH % _LANE == 0:
    ff_chunk = 256 if FH % 256 == 0 else _LANE
  else:
    ff_chunk = FH  # TODO(synk): pad the GEGLU hidden dim for unusual C
  n_ff_chunks = FH // ff_chunk
  inv_sqrt_dh = 1.0 / math.sqrt(dh)

  # Token layout (N, S, C) — what the PyTorch module switches to internally.
  x_tok = jnp.transpose(image, (0, 2, 3, 1)).reshape(N, S, C)

  # GroupNorm stats hoisted (two-pass f32, numerically robust), gamma/beta folded in.
  G, Cg = _GN_GROUPS, C // _GN_GROUPS
  xg = x_tok.reshape(N, S, G, Cg)
  mu = jnp.mean(xg, axis=(1, 3), keepdims=True)
  var = jnp.mean((xg - mu) ** 2, axis=(1, 3), keepdims=True)
  rstd = lax.rsqrt(var + _GN_EPS)
  gam = p["gn_g"].reshape(1, 1, G, Cg)
  bet = p["gn_b"].reshape(1, 1, G, Cg)
  gn_scale = jnp.broadcast_to(rstd * gam, (N, 1, G, Cg)).reshape(N, 1, C)
  gn_shift = jnp.broadcast_to(bet - mu * rstd * gam, (N, 1, G, Cg)).reshape(N, 1, C)

  # Lane-dense zero padding; padded channels stay exactly 0 through every stage.
  x_pad = _pad_axis(x_tok, 2, C_pad)
  gn_scale = _pad_axis(gn_scale, 2, C_pad)
  gn_shift = _pad_axis(gn_shift, 2, C_pad)
  ctx_pad = _pad_axis(_pad_axis(context, 1, Lc_pad), 2, Dc_pad)

  # Additive mask for padded context keys (keeps softmax exact).
  use_ctx_mask = Lc_pad != Lc
  xmask = jnp.where(jnp.arange(Lc_pad) < Lc, 0.0, -1e30)
  xmask = xmask.astype(jnp.float32).reshape(1, Lc_pad)

  def pad_c(v):      # (1, C) -> (1, C_pad)
    return _pad_axis(v, 1, C_pad)

  def pad_cc(w):     # (C, C) -> (C_pad, C_pad)
    return _pad_axis(_pad_axis(w, 0, C_pad), 1, C_pad)

  # Attention projections: per-head leading-dim layout, each head zero padded
  # to a 128-lane block; 1/sqrt(dh) folded into the query weights.
  wq1 = _head_proj(p["w_in1"][:, :C] * inv_sqrt_dh, n_head, dh, dh_pad, C_pad).astype(bf16)
  wk1 = _head_proj(p["w_in1"][:, C:2 * C], n_head, dh, dh_pad, C_pad).astype(bf16)
  wv1 = _head_proj(p["w_in1"][:, 2 * C:], n_head, dh, dh_pad, C_pad).astype(bf16)
  wo1 = _head_out(p["w_out1"], n_head, dh, dh_pad, C_pad).astype(bf16)
  wq2 = _head_proj(p["w_q2"] * inv_sqrt_dh, n_head, dh, dh_pad, C_pad).astype(bf16)
  wk2 = _head_proj(p["w_k2"], n_head, dh, dh_pad, Dc_pad).astype(bf16)
  wv2 = _head_proj(p["w_v2"], n_head, dh, dh_pad, Dc_pad).astype(bf16)
  wo2 = _head_out(p["w_out2"], n_head, dh, dh_pad, C_pad).astype(bf16)

  # GEGLU weights pre-chunked along the hidden dim so the kernel streams
  # chunk-sized slabs from HBM with leading-index DMAs (not VMEM resident).
  wa = _pad_axis(p["w_gg1"][:, :FH], 0, C_pad)
  wg = _pad_axis(p["w_gg1"][:, FH:], 0, C_pad)
  wa = jnp.transpose(wa.reshape(C_pad, n_ff_chunks, ff_chunk), (1, 0, 2)).astype(bf16)
  wg = jnp.transpose(wg.reshape(C_pad, n_ff_chunks, ff_chunk), (1, 0, 2)).astype(bf16)
  w2 = _pad_axis(p["w_gg2"], 1, C_pad).reshape(n_ff_chunks, ff_chunk, C_pad).astype(bf16)
  ba = p["b_gg1"][:, :FH].reshape(n_ff_chunks, 1, ff_chunk)
  bg = p["b_gg1"][:, FH:].reshape(n_ff_chunks, 1, ff_chunk)

  resident = [
      pad_cc(p["w_ci"]).astype(bf16), pad_c(p["b_ci"]),
      pad_c(p["ln1_g"]), pad_c(p["ln1_b"]),
      wq1, wk1, wv1, wo1, pad_c(p["b_out1"]),
      pad_c(p["ln2_g"]), pad_c(p["ln2_b"]),
      wq2, wk2, wv2, wo2, pad_c(p["b_out2"]),
      pad_c(p["ln3_g"]), pad_c(p["ln3_b"]),
      ba, bg, pad_c(p["b_gg2"]),
      pad_cc(p["w_co"]).astype(bf16), pad_c(p["b_co"]),
  ]
  streamed = [wa, wg, w2]

  def const_map(ndim):
    return lambda b, _nd=ndim: (0,) * _nd

  in_specs = ([pl.BlockSpec((1, S, C_pad), lambda b: (b, 0, 0)),
               pl.BlockSpec((1, Lc_pad, Dc_pad), lambda b: (b, 0, 0)),
               pl.BlockSpec((1, 1, C_pad), lambda b: (b, 0, 0)),
               pl.BlockSpec((1, 1, C_pad), lambda b: (b, 0, 0)),
               pl.BlockSpec((1, Lc_pad), lambda b: (0, 0))]
              + [pl.BlockSpec(w.shape, const_map(w.ndim)) for w in resident]
              + [pl.BlockSpec(memory_space=pl.ANY)] * len(streamed))

  kernel = functools.partial(
      _attn_block_kernel, n_head=n_head, n_real_c=C,
      n_ff_chunks=n_ff_chunks, use_ctx_mask=use_ctx_mask)

  out_tok = pl.pallas_call(
      kernel,
      out_shape=jax.ShapeDtypeStruct((N, S, C_pad), jnp.float32),
      grid_spec=pltpu.PrefetchScalarGridSpec(
          num_scalar_prefetch=0,
          grid=(N,),
          in_specs=in_specs,
          out_specs=pl.BlockSpec((1, S, C_pad), lambda b: (b, 0, 0)),
          scratch_shapes=[
              pltpu.VMEM((S, C_pad), jnp.float32),       # attn / FF accumulator
              pltpu.VMEM((2, C_pad, ff_chunk), bf16),    # streamed GEGLU "a" weights
              pltpu.VMEM((2, C_pad, ff_chunk), bf16),    # streamed GEGLU gate weights
              pltpu.VMEM((2, ff_chunk, C_pad), bf16),    # streamed GEGLU proj weights
              pltpu.SemaphoreType.DMA((3, 2)),
          ]),
      compiler_params=pltpu.CompilerParams(
          dimension_semantics=("parallel",),
          vmem_limit_bytes=_vmem_limit_bytes()),
  )(x_pad, ctx_pad, gn_scale, gn_shift, xmask, *resident, *streamed)

  out = out_tok[:, :, :C]
  return jnp.transpose(out.reshape(N, H, W, C), (0, 3, 1, 2))


# ------------------------ pure-JAX reference (for checking) ------------------------
def ref_forward(image, context, p, n_head):
  N, C, H, W = image.shape
  S = H * W
  x = jnp.transpose(image, (0, 2, 3, 1)).reshape(N, S, C)
  G, Cg = _GN_GROUPS, C // _GN_GROUPS
  xg = x.reshape(N, S, G, Cg)
  mu = jnp.mean(xg, axis=(1, 3), keepdims=True)
  var = jnp.mean((xg - mu) ** 2, axis=(1, 3), keepdims=True)
  h = ((xg - mu) / jnp.sqrt(var + _GN_EPS)).reshape(N, S, C) * p["gn_g"] + p["gn_b"]
  h = h @ p["w_ci"] + p["b_ci"]

  def ln(t, g, b):
    m = jnp.mean(t, -1, keepdims=True)
    v = jnp.mean((t - m) ** 2, -1, keepdims=True)
    return (t - m) / jnp.sqrt(v + _LN_EPS) * g + b

  def mha(q, k, v):
    dh = q.shape[-1] // n_head
    qh = q.reshape(N, -1, n_head, dh).transpose(0, 2, 1, 3)
    kh = k.reshape(N, -1, n_head, dh).transpose(0, 2, 1, 3)
    vh = v.reshape(N, -1, n_head, dh).transpose(0, 2, 1, 3)
    s = jnp.einsum("nhqd,nhkd->nhqk", qh, kh) / math.sqrt(dh)
    a = jax.nn.softmax(s, axis=-1)
    o = jnp.einsum("nhqk,nhkd->nhqd", a, vh)
    return o.transpose(0, 2, 1, 3).reshape(N, -1, q.shape[-1])

  h1 = ln(h, p["ln1_g"], p["ln1_b"])
  q, k, v = jnp.split(h1 @ p["w_in1"], 3, axis=-1)
  h = h + mha(q, k, v) @ p["w_out1"] + p["b_out1"]

  h2 = ln(h, p["ln2_g"], p["ln2_b"])
  h = h + mha(h2 @ p["w_q2"], context @ p["w_k2"], context @ p["w_v2"]) @ p["w_out2"] + p["b_out2"]

  h3 = ln(h, p["ln3_g"], p["ln3_b"])
  a, gate = jnp.split(h3 @ p["w_gg1"] + p["b_gg1"], 2, axis=-1)
  h = h + (a * jax.nn.gelu(gate, approximate=False)) @ p["w_gg2"] + p["b_gg2"]

  out = x + h @ p["w_co"] + p["b_co"]
  return jnp.transpose(out.reshape(N, H, W, C), (0, 3, 1, 2))


def make_params(key, n_head, n_embed, d_context):
  C = n_head * n_embed
  keys = iter(jax.random.split(key, 32))

  def w(shape, scale=0.05):
    return scale * jax.random.normal(next(keys), shape, dtype=jnp.float32)

  return {
      "gn_g": 1.0 + w((1, C), 0.1), "gn_b": w((1, C)),
      "w_ci": w((C, C)), "b_ci": w((1, C)),
      "ln1_g": 1.0 + w((1, C), 0.1), "ln1_b": w((1, C)),
      "w_in1": w((C, 3 * C)), "w_out1": w((C, C)), "b_out1": w((1, C)),
      "ln2_g": 1.0 + w((1, C), 0.1), "ln2_b": w((1, C)),
      "w_q2": w((C, C)), "w_k2": w((d_context, C)), "w_v2": w((d_context, C)),
      "w_out2": w((C, C)), "b_out2": w((1, C)),
      "ln3_g": 1.0 + w((1, C), 0.1), "ln3_b": w((1, C)),
      "w_gg1": w((C, 8 * C)), "b_gg1": w((1, 8 * C)),
      "w_gg2": w((4 * C, C)), "b_gg2": w((1, C)),
      "w_co": w((C, C)), "b_co": w((1, C)),
  }


if __name__ == "__main__":
  n_head, n_embed, d_context = 4, 8, 64
  C = n_head * n_embed                 # 32 (divisible by 32 for GroupNorm)
  N, H, W, Lc = 2, 16, 16, 8

  key = jax.random.PRNGKey(0)
  k_img, k_ctx, k_par = jax.random.split(key, 3)
  image = jax.random.normal(k_img, (N, C, H, W), dtype=jnp.float32)
  context = jax.random.normal(k_ctx, (N, Lc, d_context), dtype=jnp.float32)
  params = make_params(k_par, n_head, n_embed, d_context)

  fwd = jax.jit(functools.partial(unet_attention_block, n_head=n_head))
  out = jax.block_until_ready(fwd(image, context, params))

  ref = ref_forward(image, context, params, n_head)
  assert out.shape == image.shape
  np.testing.assert_allclose(np.asarray(out), np.asarray(ref), atol=2e-2, rtol=2e-2)
  print("KERNEL_OK")
</pallas_src>

<mosaic_0001>
module attributes {stable_mosaic.version = 11 : i64} {
  func.func @_attn_block_kernel(%arg0: i32, %arg1: memref<1x256x128xf32, #tpu.memory_space<vmem>>, %arg2: memref<1x128x128xf32, #tpu.memory_space<vmem>>, %arg3: memref<1x1x128xf32, #tpu.memory_space<vmem>>, %arg4: memref<1x1x128xf32, #tpu.memory_space<vmem>>, %arg5: memref<1x128xf32, #tpu.memory_space<vmem>>, %arg6: memref<128x128xbf16, #tpu.memory_space<vmem>>, %arg7: memref<1x128xf32, #tpu.memory_space<vmem>>, %arg8: memref<1x128xf32, #tpu.memory_space<vmem>>, %arg9: memref<1x128xf32, #tpu.memory_space<vmem>>, %arg10: memref<4x128x128xbf16, #tpu.memory_space<vmem>>, %arg11: memref<4x128x128xbf16, #tpu.memory_space<vmem>>, %arg12: memref<4x128x128xbf16, #tpu.memory_space<vmem>>, %arg13: memref<4x128x128xbf16, #tpu.memory_space<vmem>>, %arg14: memref<1x128xf32, #tpu.memory_space<vmem>>, %arg15: memref<1x128xf32, #tpu.memory_space<vmem>>, %arg16: memref<1x128xf32, #tpu.memory_space<vmem>>, %arg17: memref<4x128x128xbf16, #tpu.memory_space<vmem>>, %arg18: memref<4x128x128xbf16, #tpu.memory_space<vmem>>, %arg19: memref<4x128x128xbf16, #tpu.memory_space<vmem>>, %arg20: memref<4x128x128xbf16, #tpu.memory_space<vmem>>, %arg21: memref<1x128xf32, #tpu.memory_space<vmem>>, %arg22: memref<1x128xf32, #tpu.memory_space<vmem>>, %arg23: memref<1x128xf32, #tpu.memory_space<vmem>>, %arg24: memref<1x1x128xf32, #tpu.memory_space<vmem>>, %arg25: memref<1x1x128xf32, #tpu.memory_space<vmem>>, %arg26: memref<1x128xf32, #tpu.memory_space<vmem>>, %arg27: memref<128x128xbf16, #tpu.memory_space<vmem>>, %arg28: memref<1x128xf32, #tpu.memory_space<vmem>>, %arg29: memref<1x128x128xbf16, #tpu.memory_space<any>>, %arg30: memref<1x128x128xbf16, #tpu.memory_space<any>>, %arg31: memref<1x128x128xbf16, #tpu.memory_space<any>>, %arg32: memref<1x256x128xf32, #tpu.memory_space<vmem>>, %arg33: memref<256x128xf32, #tpu.memory_space<vmem>>, %arg34: memref<2x128x128xbf16, #tpu.memory_space<vmem>>, %arg35: memref<2x128x128xbf16, #tpu.memory_space<vmem>>, %arg36: memref<2x128x128xbf16, #tpu.memory_space<vmem>>, %arg37: memref<3x2x!tpu.dma_semaphore, #tpu.memory_space<semaphore_mem>>) attributes {dimension_semantics = [#tpu.dimension_semantics<parallel>], iteration_bounds = array<i64: 2>, scalar_prefetch = 0 : i64, scratch_operands = 5 : i64, tpu.core_type = #tpu.core_type<tc>, window_params = [{transform_indices = @transform_0, window_bounds = array<i64: 1, 256, 128>}, {transform_indices = @transform_1, window_bounds = array<i64: 1, 128, 128>}, {transform_indices = @transform_2, window_bounds = array<i64: 1, 1, 128>}, {transform_indices = @transform_3, window_bounds = array<i64: 1, 1, 128>}, {pipeline_mode = #tpu.pipeline_mode<synchronous>, transform_indices = @transform_4, window_bounds = array<i64: 1, 128>}, {pipeline_mode = #tpu.pipeline_mode<synchronous>, transform_indices = @transform_5, window_bounds = array<i64: 128, 128>}, {pipeline_mode = #tpu.pipeline_mode<synchronous>, transform_indices = @transform_6, window_bounds = array<i64: 1, 128>}, {pipeline_mode = #tpu.pipeline_mode<synchronous>, transform_indices = @transform_7, window_bounds = array<i64: 1, 128>}, {pipeline_mode = #tpu.pipeline_mode<synchronous>, transform_indices = @transform_8, window_bounds = array<i64: 1, 128>}, {pipeline_mode = #tpu.pipeline_mode<synchronous>, transform_indices = @transform_9, window_bounds = array<i64: 4, 128, 128>}, {pipeline_mode = #tpu.pipeline_mode<synchronous>, transform_indices = @transform_10, window_bounds = array<i64: 4, 128, 128>}, {pipeline_mode = #tpu.pipeline_mode<synchronous>, transform_indices = @transform_11, window_bounds = array<i64: 4, 128, 128>}, {pipeline_mode = #tpu.pipeline_mode<synchronous>, transform_indices = @transform_12, window_bounds = array<i64: 4, 128, 128>}, {pipeline_mode = #tpu.pipeline_mode<synchronous>, transform_indices = @transform_13, window_bounds = array<i64: 1, 128>}, {pipeline_mode = #tpu.pipeline_mode<synchronous>, transform_indices = @transform_14, window_bounds = array<i64: 1, 128>}, {pipeline_mode = #tpu.pipeline_mode<synchronous>, transform_indices = @transform_15, window_bounds = array<i64: 1, 128>}, {pipeline_mode = #tpu.pipeline_mode<synchronous>, transform_indices = @transform_16, window_bounds = array<i64: 4, 128, 128>}, {pipeline_mode = #tpu.pipeline_mode<synchronous>, transform_indices = @transform_17, window_bounds = array<i64: 4, 128, 128>}, {pipeline_mode = #tpu.pipeline_mode<synchronous>, transform_indices = @transform_18, window_bounds = array<i64: 4, 128, 128>}, {pipeline_mode = #tpu.pipeline_mode<synchronous>, transform_indices = @transform_19, window_bounds = array<i64: 4, 128, 128>}, {pipeline_mode = #tpu.pipeline_mode<synchronous>, transform_indices = @transform_20, window_bounds = array<i64: 1, 128>}, {pipeline_mode = #tpu.pipeline_mode<synchronous>, transform_indices = @transform_21, window_bounds = array<i64: 1, 128>}, {pipeline_mode = #tpu.pipeline_mode<synchronous>, transform_indices = @transform_22, window_bounds = array<i64: 1, 128>}, {pipeline_mode = #tpu.pipeline_mode<synchronous>, transform_indices = @transform_23, window_bounds = array<i64: 1, 1, 128>}, {pipeline_mode = #tpu.pipeline_mode<synchronous>, transform_indices = @transform_24, window_bounds = array<i64: 1, 1, 128>}, {pipeline_mode = #tpu.pipeline_mode<synchronous>, transform_indices = @transform_25, window_bounds = array<i64: 1, 128>}, {pipeline_mode = #tpu.pipeline_mode<synchronous>, transform_indices = @transform_26, window_bounds = array<i64: 128, 128>}, {pipeline_mode = #tpu.pipeline_mode<synchronous>, transform_indices = @transform_27, window_bounds = array<i64: 1, 128>}, {}, {}, {}, {transform_indices = @transform_31, window_bounds = array<i64: 1, 256, 128>}]} {
    %c0 = arith.constant 0 : index
    %c0_0 = arith.constant 0 : index
    %c0_1 = arith.constant 0 : index
    %0 = vector.load %arg1[%c0, %c0_0, %c0_1] : memref<1x256x128xf32, #tpu.memory_space<vmem>>, vector<1x256x128xf32>
    %1 = vector.shape_cast %0 : vector<1x256x128xf32> to vector<256x128xf32>
    %c0_2 = arith.constant 0 : index
    %c0_3 = arith.constant 0 : index
    %c0_4 = arith.constant 0 : index
    %2 = vector.load %arg2[%c0_2, %c0_3, %c0_4] : memref<1x128x128xf32, #tpu.memory_space<vmem>>, vector<1x128x128xf32>
    %3 = vector.shape_cast %2 : vector<1x128x128xf32> to vector<128x128xf32>
    %4 = arith.truncf %3 : vector<128x128xf32> to vector<128x128xbf16>
    %c0_i32 = arith.constant 0 : i32
    %c0_i32_5 = arith.constant 0 : i32
    %c0_i32_6 = arith.constant 0 : i32
    %c0_i32_7 = arith.constant 0 : i32
    %c0_i32_8 = arith.constant 0 : i32
    %c0_i32_9 = arith.constant 0 : i32
    %5 = tpu.memref_slice %arg29[%c0_i32, %c0_i32_8, %c0_i32_9] : memref<1x128x128xbf16, #tpu.memory_space<any>> -> memref<1x128x128xbf16, #tpu.memory_space<any>>
    %6 = tpu.memref_squeeze %5 : memref<1x128x128xbf16, #tpu.memory_space<any>> -> memref<128x128xbf16, #tpu.memory_space<any>>
    %c0_i32_10 = arith.constant 0 : i32
    %c0_i32_11 = arith.constant 0 : i32
    %7 = tpu.memref_slice %arg34[%c0_i32_5, %c0_i32_10, %c0_i32_11] : memref<2x128x128xbf16, #tpu.memory_space<vmem>> -> memref<1x128x128xbf16, #tpu.memory_space<vmem>>
    %8 = tpu.memref_squeeze %7 : memref<1x128x128xbf16, #tpu.memory_space<vmem>> -> memref<128x128xbf16, #tpu.memory_space<vmem>>
    %9 = tpu.memref_slice %arg37[%c0_i32_6, %c0_i32_7] : memref<3x2x!tpu.dma_semaphore, #tpu.memory_space<semaphore_mem>> -> memref<1x1x!tpu.dma_semaphore, #tpu.memory_space<semaphore_mem>>
    %10 = tpu.memref_squeeze %9 : memref<1x1x!tpu.dma_semaphore, #tpu.memory_space<semaphore_mem>> -> memref<!tpu.dma_semaphore, #tpu.memory_space<semaphore_mem>>
    tpu.enqueue_dma source(%6 : memref<128x128xbf16, #tpu.memory_space<any>>) target(%8 : memref<128x128xbf16, #tpu.memory_space<vmem>>) target_semaphore(%10 : memref<!tpu.dma_semaphore, #tpu.memory_space<semaphore_mem>>)
    %c0_i32_12 = arith.constant 0 : i32
    %c0_i32_13 = arith.constant 0 : i32
    %c1_i32 = arith.constant 1 : i32
    %c0_i32_14 = arith.constant 0 : i32
    %c0_i32_15 = arith.constant 0 : i32
    %c0_i32_16 = arith.constant 0 : i32
    %11 = tpu.memref_slice %arg30[%c0_i32_12, %c0_i32_15, %c0_i32_16] : memref<1x128x128xbf16, #tpu.memory_space<any>> -> memref<1x128x128xbf16, #tpu.memory_space<any>>
    %12 = tpu.memref_squeeze %11 : memref<1x128x128xbf16, #tpu.memory_space<any>> -> memref<128x128xbf16, #tpu.memory_space<any>>
    %c0_i32_17 = arith.constant 0 : i32
    %c0_i32_18 = arith.constant 0 : i32
    %13 = tpu.memref_slice %arg35[%c0_i32_13, %c0_i32_17, %c0_i32_18] : memref<2x128x128xbf16, #tpu.memory_space<vmem>> -> memref<1x128x128xbf16, #tpu.memory_space<vmem>>
    %14 = tpu.memref_squeeze %13 : memref<1x128x128xbf16, #tpu.memory_space<vmem>> -> memref<128x128xbf16, #tpu.memory_space<vmem>>
    %15 = tpu.memref_slice %arg37[%c1_i32, %c0_i32_14] : memref<3x2x!tpu.dma_semaphore, #tpu.memory_space<semaphore_mem>> -> memref<1x1x!tpu.dma_semaphore, #tpu.memory_space<semaphore_mem>>
    %16 = tpu.memref_squeeze %15 : memref<1x1x!tpu.dma_semaphore, #tpu.memory_space<semaphore_mem>> -> memref<!tpu.dma_semaphore, #tpu.memory_space<semaphore_mem>>
    tpu.enqueue_dma source(%12 : memref<128x128xbf16, #tpu.memory_space<any>>) target(%14 : memref<128x128xbf16, #tpu.memory_space<vmem>>) target_semaphore(%16 : memref<!tpu.dma_semaphore, #tpu.memory_space<semaphore_mem>>)
    %c0_i32_19 = arith.constant 0 : i32
    %c0_i32_20 = arith.constant 0 : i32
    %c2_i32 = arith.constant 2 : i32
    %c0_i32_21 = arith.constant 0 : i32
    %c0_i32_22 = arith.constant 0 : i32
    %c0_i32_23 = arith.constant 0 : i32
    %17 = tpu.memref_slice %arg31[%c0_i32_19, %c0_i32_22, %c0_i32_23] : memref<1x128x128xbf16, #tpu.memory_space<any>> -> memref<1x128x128xbf16, #tpu.memory_space<any>>
    %18 = tpu.memref_squeeze %17 : memref<1x128x128xbf16, #tpu.memory_space<any>> -> memref<128x128xbf16, #tpu.memory_space<any>>
    %c0_i32_24 = arith.constant 0 : i32
    %c0_i32_25 = arith.constant 0 : i32
    %19 = tpu.memref_slice %arg36[%c0_i32_20, %c0_i32_24, %c0_i32_25] : memref<2x128x128xbf16, #tpu.memory_space<vmem>> -> memref<1x128x128xbf16, #tpu.memory_space<vmem>>
    %20 = tpu.memref_squeeze %19 : memref<1x128x128xbf16, #tpu.memory_space<vmem>> -> memref<128x128xbf16, #tpu.memory_space<vmem>>
    %21 = tpu.memref_slice %arg37[%c2_i32, %c0_i32_21] : memref<3x2x!tpu.dma_semaphore, #tpu.memory_space<semaphore_mem>> -> memref<1x1x!tpu.dma_semaphore, #tpu.memory_space<semaphore_mem>>
    %22 = tpu.memref_squeeze %21 : memref<1x1x!tpu.dma_semaphore, #tpu.memory_space<semaphore_mem>> -> memref<!tpu.dma_semaphore, #tpu.memory_space<semaphore_mem>>
    tpu.enqueue_dma source(%18 : memref<128x128xbf16, #tpu.memory_space<any>>) target(%20 : memref<128x128xbf16, #tpu.memory_space<vmem>>) target_semaphore(%22 : memref<!tpu.dma_semaphore, #tpu.memory_space<semaphore_mem>>)
    %c0_26 = arith.constant 0 : index
    %c0_27 = arith.constant 0 : index
    %c0_28 = arith.constant 0 : index
    %23 = vector.load %arg3[%c0_26, %c0_27, %c0_28] : memref<1x1x128xf32, #tpu.memory_space<vmem>>, vector<1x1x128xf32>
    %24 = vector.shape_cast %23 : vector<1x1x128xf32> to vector<1x128xf32>
    %25 = vector.broadcast %24 : vector<1x128xf32> to vector<256x128xf32>
    %26 = arith.mulf %1, %25 : vector<256x128xf32>
    %c0_29 = arith.constant 0 : index
    %c0_30 = arith.constant 0 : index
    %c0_31 = arith.constant 0 : index
    %27 = vector.load %arg4[%c0_29, %c0_30, %c0_31] : memref<1x1x128xf32, #tpu.memory_space<vmem>>, vector<1x1x128xf32>
    %28 = vector.shape_cast %27 : vector<1x1x128xf32> to vector<1x128xf32>
    %29 = vector.broadcast %28 : vector<1x128xf32> to vector<256x128xf32>
    %30 = arith.addf %26, %29 : vector<256x128xf32>
    %31 = arith.truncf %30 : vector<256x128xf32> to vector<256x128xbf16>
    %c0_32 = arith.constant 0 : index
    %c0_33 = arith.constant 0 : index
    %32 = vector.load %arg6[%c0_32, %c0_33] : memref<128x128xbf16, #tpu.memory_space<vmem>>, vector<128x128xbf16>
    %cst = arith.constant dense<0.000000e+00> : vector<256x128xf32>
    %33 = tpu.matmul %31, %32, %cst {dimension_numbers = #tpu.dot_dimension_numbers<[1], [0], [0], [1], [0, 0, 1, 1], [], []>} : vector<256x128xbf16>, vector<128x128xbf16>, vector<256x128xf32> -> vector<256x128xf32>
    %c0_34 = arith.constant 0 : index
    %c0_35 = arith.constant 0 : index
    %34 = vector.load %arg7[%c0_34, %c0_35] : memref<1x128xf32, #tpu.memory_space<vmem>>, vector<1x128xf32>
    %35 = vector.broadcast %34 : vector<1x128xf32> to vector<256x128xf32>
    %36 = arith.addf %33, %35 : vector<256x128xf32>
    %cst_36 = arith.constant dense<0.000000e+00> : vector<256xf32>
    %37 = vector.multi_reduction <add>, %36, %cst_36 [1] : vector<256x128xf32> to vector<256xf32>
    %38 = vector.shape_cast %37 : vector<256xf32> to vector<256x1xf32>
    %cst_37 = arith.constant 3.125000e-02 : f32
    %39 = vector.broadcast %cst_37 : f32 to vector<256x1xf32>
    %40 = arith.mulf %38, %39 : vector<256x1xf32>
    %41 = vector.broadcast %40 : vector<256x1xf32> to vector<256x128xf32>
    %42 = arith.subf %36, %41 : vector<256x128xf32>
    %43 = arith.mulf %42, %42 : vector<256x128xf32>
    %cst_38 = arith.constant dense<0.000000e+00> : vector<256xf32>
    %44 = vector.multi_reduction <add>, %43, %cst_38 [1] : vector<256x128xf32> to vector<256xf32>
    %45 = vector.shape_cast %44 : vector<256xf32> to vector<256x1xf32>
    %46 = arith.mulf %40, %40 : vector<256x1xf32>
    %cst_39 = arith.constant 9.600000e+01 : f32
    %47 = vector.broadcast %cst_39 : f32 to vector<256x1xf32>
    %48 = arith.mulf %47, %46 : vector<256x1xf32>
    %49 = arith.subf %45, %48 : vector<256x1xf32>
    %cst_40 = arith.constant 3.125000e-02 : f32
    %50 = vector.broadcast %cst_40 : f32 to vector<256x1xf32>
    %51 = arith.mulf %49, %50 : vector<256x1xf32>
    %cst_41 = arith.constant 9.99999974E-6 : f32
    %52 = vector.broadcast %cst_41 : f32 to vector<256x1xf32>
    %53 = arith.addf %51, %52 : vector<256x1xf32>
    %54 = math.rsqrt %53 : vector<256x1xf32>
    %c0_42 = arith.constant 0 : index
    %c0_43 = arith.constant 0 : index
    %55 = vector.load %arg8[%c0_42, %c0_43] : memref<1x128xf32, #tpu.memory_space<vmem>>, vector<1x128xf32>
    %56 = vector.broadcast %54 : vector<256x1xf32> to vector<256x128xf32>
    %57 = vector.broadcast %55 : vector<1x128xf32> to vector<256x128xf32>
    %58 = arith.mulf %56, %57 : vector<256x128xf32>
    %59 = arith.mulf %42, %58 : vector<256x128xf32>
    %c0_44 = arith.constant 0 : index
    %c0_45 = arith.constant 0 : index
    %60 = vector.load %arg9[%c0_44, %c0_45] : memref<1x128xf32, #tpu.memory_space<vmem>>, vector<1x128xf32>
    %61 = vector.broadcast %60 : vector<1x128xf32> to vector<256x128xf32>
    %62 = arith.addf %59, %61 : vector<256x128xf32>
    %63 = arith.truncf %62 : vector<256x128xf32> to vector<256x128xbf16>
    %cst_46 = arith.constant 0.000000e+00 : f32
    %64 = vector.broadcast %cst_46 : f32 to vector<256x128xf32>
    %c0_47 = arith.constant 0 : index
    %c0_48 = arith.constant 0 : index
    %65 = vector.load %arg33[%c0_47, %c0_48] : memref<256x128xf32, #tpu.memory_space<vmem>>, vector<256x128xf32>
    tpu.vector_store %arg33[%c0_47, %c0_48], %64 {strides = array<i32>} : memref<256x128xf32, #tpu.memory_space<vmem>>, vector<256x128xf32>,
    %c0_i32_49 = arith.constant 0 : i32
    %c4_i32 = arith.constant 4 : i32
    %66 = arith.addi %c0_i32_49, %c4_i32 : i32
    %c1_i32_50 = arith.constant 1 : i32
    scf.for %arg38 = %c0_i32_49 to %66 step %c1_i32_50  : i32 {
      %210 = arith.index_cast %arg38 : i32 to index
      %c0_148 = arith.constant 0 : index
      %c0_149 = arith.constant 0 : index
      %211 = vector.load %arg10[%210, %c0_148, %c0_149] : memref<4x128x128xbf16, #tpu.memory_space<vmem>>, vector<1x128x128xbf16>
      %212 = vector.shape_cast %211 : vector<1x128x128xbf16> to vector<128x128xbf16>
      %cst_150 = arith.constant dense<0.000000e+00> : vector<256x128xf32>
      %213 = tpu.matmul %63, %212, %cst_150 {dimension_numbers = #tpu.dot_dimension_numbers<[1], [0], [0], [1], [0, 0, 1, 1], [], []>} : vector<256x128xbf16>, vector<128x128xbf16>, vector<256x128xf32> -> vector<256x128xf32>
      %214 = arith.truncf %213 : vector<256x128xf32> to vector<256x128xbf16>
      %215 = arith.index_cast %arg38 : i32 to index
      %c0_151 = arith.constant 0 : index
      %c0_152 = arith.constant 0 : index
      %216 = vector.load %arg11[%215, %c0_151, %c0_152] : memref<4x128x128xbf16, #tpu.memory_space<vmem>>, vector<1x128x128xbf16>
      %217 = vector.shape_cast %216 : vector<1x128x128xbf16> to vector<128x128xbf16>
      %cst_153 = arith.constant dense<0.000000e+00> : vector<256x128xf32>
      %218 = tpu.matmul %63, %217, %cst_153 {dimension_numbers = #tpu.dot_dimension_numbers<[1], [0], [0], [1], [0, 0, 1, 1], [], []>} : vector<256x128xbf16>, vector<128x128xbf16>, vector<256x128xf32> -> vector<256x128xf32>
      %219 = arith.truncf %218 : vector<256x128xf32> to vector<256x128xbf16>
      %220 = arith.index_cast %arg38 : i32 to index
      %c0_154 = arith.constant 0 : index
      %c0_155 = arith.constant 0 : index
      %221 = vector.load %arg12[%220, %c0_154, %c0_155] : memref<4x128x128xbf16, #tpu.memory_space<vmem>>, vector<1x128x128xbf16>
      %222 = vector.shape_cast %221 : vector<1x128x128xbf16> to vector<128x128xbf16>
      %cst_156 = arith.constant dense<0.000000e+00> : vector<256x128xf32>
      %223 = tpu.matmul %63, %222, %cst_156 {dimension_numbers = #tpu.dot_dimension_numbers<[1], [0], [0], [1], [0, 0, 1, 1], [], []>} : vector<256x128xbf16>, vector<128x128xbf16>, vector<256x128xf32> -> vector<256x128xf32>
      %224 = arith.truncf %223 : vector<256x128xf32> to vector<256x128xbf16>
      %cst_157 = arith.constant dense<0.000000e+00> : vector<256x256xf32>
      %225 = tpu.matmul %214, %219, %cst_157 {dimension_numbers = #tpu.dot_dimension_numbers<[1], [1], [0], [0], [0, 0, 1, 0], [], []>} : vector<256x128xbf16>, vector<256x128xbf16>, vector<256x256xf32> -> vector<256x256xf32>
      %cst_158 = arith.constant dense<0xFF800000> : vector<256xf32>
      %226 = vector.multi_reduction <maximumf>, %225, %cst_158 [1] : vector<256x256xf32> to vector<256xf32>
      %227 = vector.shape_cast %226 : vector<256xf32> to vector<256x1xf32>
      %228 = vector.broadcast %227 : vector<256x1xf32> to vector<256x256xf32>
      %229 = arith.subf %225, %228 : vector<256x256xf32>
      %230 = math.exp %229 : vector<256x256xf32>
      %cst_159 = arith.constant dense<0.000000e+00> : vector<256xf32>
      %231 = vector.multi_reduction <add>, %230, %cst_159 [1] : vector<256x256xf32> to vector<256xf32>
      %232 = vector.shape_cast %231 : vector<256xf32> to vector<256x1xf32>
      %233 = arith.truncf %230 : vector<256x256xf32> to vector<256x256xbf16>
      %cst_160 = arith.constant dense<0.000000e+00> : vector<256x128xf32>
      %234 = tpu.matmul %233, %224, %cst_160 {dimension_numbers = #tpu.dot_dimension_numbers<[1], [0], [0], [1], [0, 0, 1, 1], [], []>} : vector<256x256xbf16>, vector<256x128xbf16>, vector<256x128xf32> -> vector<256x128xf32>
      %235 = tpu.reciprocal %232 {approx = true} : vector<256x1xf32> -> vector<256x1xf32>
      %236 = vector.broadcast %235 : vector<256x1xf32> to vector<256x128xf32>
      %237 = arith.mulf %234, %236 : vector<256x128xf32>
      %238 = arith.truncf %237 : vector<256x128xf32> to vector<256x128xbf16>
      %c0_161 = arith.constant 0 : index
      %c0_162 = arith.constant 0 : index
      %239 = vector.load %arg33[%c0_161, %c0_162] : memref<256x128xf32, #tpu.memory_space<vmem>>, vector<256x128xf32>
      %240 = arith.index_cast %arg38 : i32 to index
      %c0_163 = arith.constant 0 : index
      %c0_164 = arith.constant 0 : index
      %241 = vector.load %arg13[%240, %c0_163, %c0_164] : memref<4x128x128xbf16, #tpu.memory_space<vmem>>, vector<1x128x128xbf16>
      %242 = vector.shape_cast %241 : vector<1x128x128xbf16> to vector<128x128xbf16>
      %cst_165 = arith.constant dense<0.000000e+00> : vector<256x128xf32>
      %243 = tpu.matmul %238, %242, %cst_165 {dimension_numbers = #tpu.dot_dimension_numbers<[1], [0], [0], [1], [0, 0, 1, 1], [], []>} : vector<256x128xbf16>, vector<128x128xbf16>, vector<256x128xf32> -> vector<256x128xf32>
      %244 = arith.addf %239, %243 : vector<256x128xf32>
      %c0_166 = arith.constant 0 : index
      %c0_167 = arith.constant 0 : index
      %245 = vector.load %arg33[%c0_166, %c0_167] : memref<256x128xf32, #tpu.memory_space<vmem>>, vector<256x128xf32>
      tpu.vector_store %arg33[%c0_166, %c0_167], %244 {strides = array<i32>} : memref<256x128xf32, #tpu.memory_space<vmem>>, vector<256x128xf32>,
    }
    %c4_i32_51 = arith.constant 4 : i32
    %c0_52 = arith.constant 0 : index
    %c0_53 = arith.constant 0 : index
    %67 = vector.load %arg33[%c0_52, %c0_53] : memref<256x128xf32, #tpu.memory_space<vmem>>, vector<256x128xf32>
    %68 = arith.addf %36, %67 : vector<256x128xf32>
    %c0_54 = arith.constant 0 : index
    %c0_55 = arith.constant 0 : index
    %69 = vector.load %arg14[%c0_54, %c0_55] : memref<1x128xf32, #tpu.memory_space<vmem>>, vector<1x128xf32>
    %70 = vector.broadcast %69 : vector<1x128xf32> to vector<256x128xf32>
    %71 = arith.addf %68, %70 : vector<256x128xf32>
    %cst_56 = arith.constant dense<0.000000e+00> : vector<256xf32>
    %72 = vector.multi_reduction <add>, %71, %cst_56 [1] : vector<256x128xf32> to vector<256xf32>
    %73 = vector.shape_cast %72 : vector<256xf32> to vector<256x1xf32>
    %cst_57 = arith.constant 3.125000e-02 : f32
    %74 = vector.broadcast %cst_57 : f32 to vector<256x1xf32>
    %75 = arith.mulf %73, %74 : vector<256x1xf32>
    %76 = vector.broadcast %75 : vector<256x1xf32> to vector<256x128xf32>
    %77 = arith.subf %71, %76 : vector<256x128xf32>
    %78 = arith.mulf %77, %77 : vector<256x128xf32>
    %cst_58 = arith.constant dense<0.000000e+00> : vector<256xf32>
    %79 = vector.multi_reduction <add>, %78, %cst_58 [1] : vector<256x128xf32> to vector<256xf32>
    %80 = vector.shape_cast %79 : vector<256xf32> to vector<256x1xf32>
    %81 = arith.mulf %75, %75 : vector<256x1xf32>
    %cst_59 = arith.constant 9.600000e+01 : f32
    %82 = vector.broadcast %cst_59 : f32 to vector<256x1xf32>
    %83 = arith.mulf %82, %81 : vector<256x1xf32>
    %84 = arith.subf %80, %83 : vector<256x1xf32>
    %cst_60 = arith.constant 3.125000e-02 : f32
    %85 = vector.broadcast %cst_60 : f32 to vector<256x1xf32>
    %86 = arith.mulf %84, %85 : vector<256x1xf32>
    %cst_61 = arith.constant 9.99999974E-6 : f32
    %87 = vector.broadcast %cst_61 : f32 to vector<256x1xf32>
    %88 = arith.addf %86, %87 : vector<256x1xf32>
    %89 = math.rsqrt %88 : vector<256x1xf32>
    %c0_62 = arith.constant 0 : index
    %c0_63 = arith.constant 0 : index
    %90 = vector.load %arg15[%c0_62, %c0_63] : memref<1x128xf32, #tpu.memory_space<vmem>>, vector<1x128xf32>
    %91 = vector.broadcast %89 : vector<256x1xf32> to vector<256x128xf32>
    %92 = vector.broadcast %90 : vector<1x128xf32> to vector<256x128xf32>
    %93 = arith.mulf %91, %92 : vector<256x128xf32>
    %94 = arith.mulf %77, %93 : vector<256x128xf32>
    %c0_64 = arith.constant 0 : index
    %c0_65 = arith.constant 0 : index
    %95 = vector.load %arg16[%c0_64, %c0_65] : memref<1x128xf32, #tpu.memory_space<vmem>>, vector<1x128xf32>
    %96 = vector.broadcast %95 : vector<1x128xf32> to vector<256x128xf32>
    %97 = arith.addf %94, %96 : vector<256x128xf32>
    %98 = arith.truncf %97 : vector<256x128xf32> to vector<256x128xbf16>
    %c0_66 = arith.constant 0 : index
    %c0_67 = arith.constant 0 : index
    %99 = vector.load %arg5[%c0_66, %c0_67] : memref<1x128xf32, #tpu.memory_space<vmem>>, vector<1x128xf32>
    %cst_68 = arith.constant 0.000000e+00 : f32
    %100 = vector.broadcast %cst_68 : f32 to vector<256x128xf32>
    %c0_69 = arith.constant 0 : index
    %c0_70 = arith.constant 0 : index
    %101 = vector.load %arg33[%c0_69, %c0_70] : memref<256x128xf32, #tpu.memory_space<vmem>>, vector<256x128xf32>
    tpu.vector_store %arg33[%c0_69, %c0_70], %100 {strides = array<i32>} : memref<256x128xf32, #tpu.memory_space<vmem>>, vector<256x128xf32>,
    %c0_i32_71 = arith.constant 0 : i32
    %c4_i32_72 = arith.constant 4 : i32
    %102 = arith.addi %c0_i32_71, %c4_i32_72 : i32
    %c1_i32_73 = arith.constant 1 : i32
    scf.for %arg38 = %c0_i32_71 to %102 step %c1_i32_73  : i32 {
      %210 = arith.index_cast %arg38 : i32 to index
      %c0_148 = arith.constant 0 : index
      %c0_149 = arith.constant 0 : index
      %211 = vector.load %arg17[%210, %c0_148, %c0_149] : memref<4x128x128xbf16, #tpu.memory_space<vmem>>, vector<1x128x128xbf16>
      %212 = vector.shape_cast %211 : vector<1x128x128xbf16> to vector<128x128xbf16>
      %cst_150 = arith.constant dense<0.000000e+00> : vector<256x128xf32>
      %213 = tpu.matmul %98, %212, %cst_150 {dimension_numbers = #tpu.dot_dimension_numbers<[1], [0], [0], [1], [0, 0, 1, 1], [], []>} : vector<256x128xbf16>, vector<128x128xbf16>, vector<256x128xf32> -> vector<256x128xf32>
      %214 = arith.truncf %213 : vector<256x128xf32> to vector<256x128xbf16>
      %215 = arith.index_cast %arg38 : i32 to index
      %c0_151 = arith.constant 0 : index
      %c0_152 = arith.constant 0 : index
      %216 = vector.load %arg18[%215, %c0_151, %c0_152] : memref<4x128x128xbf16, #tpu.memory_space<vmem>>, vector<1x128x128xbf16>
      %217 = vector.shape_cast %216 : vector<1x128x128xbf16> to vector<128x128xbf16>
      %cst_153 = arith.constant dense<0.000000e+00> : vector<128x128xf32>
      %218 = tpu.matmul %4, %217, %cst_153 {dimension_numbers = #tpu.dot_dimension_numbers<[1], [0], [0], [1], [0, 0, 1, 1], [], []>} : vector<128x128xbf16>, vector<128x128xbf16>, vector<128x128xf32> -> vector<128x128xf32>
      %219 = arith.truncf %218 : vector<128x128xf32> to vector<128x128xbf16>
      %220 = arith.index_cast %arg38 : i32 to index
      %c0_154 = arith.constant 0 : index
      %c0_155 = arith.constant 0 : index
      %221 = vector.load %arg19[%220, %c0_154, %c0_155] : memref<4x128x128xbf16, #tpu.memory_space<vmem>>, vector<1x128x128xbf16>
      %222 = vector.shape_cast %221 : vector<1x128x128xbf16> to vector<128x128xbf16>
      %cst_156 = arith.constant dense<0.000000e+00> : vector<128x128xf32>
      %223 = tpu.matmul %4, %222, %cst_156 {dimension_numbers = #tpu.dot_dimension_numbers<[1], [0], [0], [1], [0, 0, 1, 1], [], []>} : vector<128x128xbf16>, vector<128x128xbf16>, vector<128x128xf32> -> vector<128x128xf32>
      %224 = arith.truncf %223 : vector<128x128xf32> to vector<128x128xbf16>
      %cst_157 = arith.constant dense<0.000000e+00> : vector<256x128xf32>
      %225 = tpu.matmul %214, %219, %cst_157 {dimension_numbers = #tpu.dot_dimension_numbers<[1], [1], [0], [0], [0, 0, 1, 0], [], []>} : vector<256x128xbf16>, vector<128x128xbf16>, vector<256x128xf32> -> vector<256x128xf32>
      %226 = vector.broadcast %99 : vector<1x128xf32> to vector<256x128xf32>
      %227 = arith.addf %225, %226 : vector<256x128xf32>
      %cst_158 = arith.constant dense<0xFF800000> : vector<256xf32>
      %228 = vector.multi_reduction <maximumf>, %227, %cst_158 [1] : vector<256x128xf32> to vector<256xf32>
      %229 = vector.shape_cast %228 : vector<256xf32> to vector<256x1xf32>
      %230 = vector.broadcast %229 : vector<256x1xf32> to vector<256x128xf32>
      %231 = arith.subf %227, %230 : vector<256x128xf32>
      %232 = math.exp %231 : vector<256x128xf32>
      %cst_159 = arith.constant dense<0.000000e+00> : vector<256xf32>
      %233 = vector.multi_reduction <add>, %232, %cst_159 [1] : vector<256x128xf32> to vector<256xf32>
      %234 = vector.shape_cast %233 : vector<256xf32> to vector<256x1xf32>
      %235 = arith.truncf %232 : vector<256x128xf32> to vector<256x128xbf16>
      %cst_160 = arith.constant dense<0.000000e+00> : vector<256x128xf32>
      %236 = tpu.matmul %235, %224, %cst_160 {dimension_numbers = #tpu.dot_dimension_numbers<[1], [0], [0], [1], [0, 0, 1, 1], [], []>} : vector<256x128xbf16>, vector<128x128xbf16>, vector<256x128xf32> -> vector<256x128xf32>
      %237 = tpu.reciprocal %234 {approx = true} : vector<256x1xf32> -> vector<256x1xf32>
      %238 = vector.broadcast %237 : vector<256x1xf32> to vector<256x128xf32>
      %239 = arith.mulf %236, %238 : vector<256x128xf32>
      %240 = arith.truncf %239 : vector<256x128xf32> to vector<256x128xbf16>
      %c0_161 = arith.constant 0 : index
      %c0_162 = arith.constant 0 : index
      %241 = vector.load %arg33[%c0_161, %c0_162] : memref<256x128xf32, #tpu.memory_space<vmem>>, vector<256x128xf32>
      %242 = arith.index_cast %arg38 : i32 to index
      %c0_163 = arith.constant 0 : index
      %c0_164 = arith.constant 0 : index
      %243 = vector.load %arg20[%242, %c0_163, %c0_164] : memref<4x128x128xbf16, #tpu.memory_space<vmem>>, vector<1x128x128xbf16>
      %244 = vector.shape_cast %243 : vector<1x128x128xbf16> to vector<128x128xbf16>
      %cst_165 = arith.constant dense<0.000000e+00> : vector<256x128xf32>
      %245 = tpu.matmul %240, %244, %cst_165 {dimension_numbers = #tpu.dot_dimension_numbers<[1], [0], [0], [1], [0, 0, 1, 1], [], []>} : vector<256x128xbf16>, vector<128x128xbf16>, vector<256x128xf32> -> vector<256x128xf32>
      %246 = arith.addf %241, %245 : vector<256x128xf32>
      %c0_166 = arith.constant 0 : index
      %c0_167 = arith.constant 0 : index
      %247 = vector.load %arg33[%c0_166, %c0_167] : memref<256x128xf32, #tpu.memory_space<vmem>>, vector<256x128xf32>
      tpu.vector_store %arg33[%c0_166, %c0_167], %246 {strides = array<i32>} : memref<256x128xf32, #tpu.memory_space<vmem>>, vector<256x128xf32>,
    }
    %c4_i32_74 = arith.constant 4 : i32
    %c0_75 = arith.constant 0 : index
    %c0_76 = arith.constant 0 : index
    %103 = vector.load %arg33[%c0_75, %c0_76] : memref<256x128xf32, #tpu.memory_space<vmem>>, vector<256x128xf32>
    %104 = arith.addf %71, %103 : vector<256x128xf32>
    %c0_77 = arith.constant 0 : index
    %c0_78 = arith.constant 0 : index
    %105 = vector.load %arg21[%c0_77, %c0_78] : memref<1x128xf32, #tpu.memory_space<vmem>>, vector<1x128xf32>
    %106 = vector.broadcast %105 : vector<1x128xf32> to vector<256x128xf32>
    %107 = arith.addf %104, %106 : vector<256x128xf32>
    %cst_79 = arith.constant dense<0.000000e+00> : vector<256xf32>
    %108 = vector.multi_reduction <add>, %107, %cst_79 [1] : vector<256x128xf32> to vector<256xf32>
    %109 = vector.shape_cast %108 : vector<256xf32> to vector<256x1xf32>
    %cst_80 = arith.constant 3.125000e-02 : f32
    %110 = vector.broadcast %cst_80 : f32 to vector<256x1xf32>
    %111 = arith.mulf %109, %110 : vector<256x1xf32>
    %112 = vector.broadcast %111 : vector<256x1xf32> to vector<256x128xf32>
    %113 = arith.subf %107, %112 : vector<256x128xf32>
    %114 = arith.mulf %113, %113 : vector<256x128xf32>
    %cst_81 = arith.constant dense<0.000000e+00> : vector<256xf32>
    %115 = vector.multi_reduction <add>, %114, %cst_81 [1] : vector<256x128xf32> to vector<256xf32>
    %116 = vector.shape_cast %115 : vector<256xf32> to vector<256x1xf32>
    %117 = arith.mulf %111, %111 : vector<256x1xf32>
    %cst_82 = arith.constant 9.600000e+01 : f32
    %118 = vector.broadcast %cst_82 : f32 to vector<256x1xf32>
    %119 = arith.mulf %118, %117 : vector<256x1xf32>
    %120 = arith.subf %116, %119 : vector<256x1xf32>
    %cst_83 = arith.constant 3.125000e-02 : f32
    %121 = vector.broadcast %cst_83 : f32 to vector<256x1xf32>
    %122 = arith.mulf %120, %121 : vector<256x1xf32>
    %cst_84 = arith.constant 9.99999974E-6 : f32
    %123 = vector.broadcast %cst_84 : f32 to vector<256x1xf32>
    %124 = arith.addf %122, %123 : vector<256x1xf32>
    %125 = math.rsqrt %124 : vector<256x1xf32>
    %c0_85 = arith.constant 0 : index
    %c0_86 = arith.constant 0 : index
    %126 = vector.load %arg22[%c0_85, %c0_86] : memref<1x128xf32, #tpu.memory_space<vmem>>, vector<1x128xf32>
    %127 = vector.broadcast %125 : vector<256x1xf32> to vector<256x128xf32>
    %128 = vector.broadcast %126 : vector<1x128xf32> to vector<256x128xf32>
    %129 = arith.mulf %127, %128 : vector<256x128xf32>
    %130 = arith.mulf %113, %129 : vector<256x128xf32>
    %c0_87 = arith.constant 0 : index
    %c0_88 = arith.constant 0 : index
    %131 = vector.load %arg23[%c0_87, %c0_88] : memref<1x128xf32, #tpu.memory_space<vmem>>, vector<1x128xf32>
    %132 = vector.broadcast %131 : vector<1x128xf32> to vector<256x128xf32>
    %133 = arith.addf %130, %132 : vector<256x128xf32>
    %134 = arith.truncf %133 : vector<256x128xf32> to vector<256x128xbf16>
    %cst_89 = arith.constant 0.000000e+00 : f32
    %135 = vector.broadcast %cst_89 : f32 to vector<256x128xf32>
    %c0_90 = arith.constant 0 : index
    %c0_91 = arith.constant 0 : index
    %136 = vector.load %arg33[%c0_90, %c0_91] : memref<256x128xf32, #tpu.memory_space<vmem>>, vector<256x128xf32>
    tpu.vector_store %arg33[%c0_90, %c0_91], %135 {strides = array<i32>} : memref<256x128xf32, #tpu.memory_space<vmem>>, vector<256x128xf32>,
    %c0_i32_92 = arith.constant 0 : i32
    %c2_i32_93 = arith.constant 2 : i32
    %137 = arith.remsi %c0_i32_92, %c2_i32_93 : i32
    %c0_i32_94 = arith.constant 0 : i32
    %c0_i32_95 = arith.constant 0 : i32
    %c0_i32_96 = arith.constant 0 : i32
    %c0_i32_97 = arith.constant 0 : i32
    %138 = tpu.memref_slice %arg29[%c0_i32_94, %c0_i32_96, %c0_i32_97] : memref<1x128x128xbf16, #tpu.memory_space<any>> -> memref<1x128x128xbf16, #tpu.memory_space<any>>
    %139 = tpu.memref_squeeze %138 : memref<1x128x128xbf16, #tpu.memory_space<any>> -> memref<128x128xbf16, #tpu.memory_space<any>>
    %c0_i32_98 = arith.constant 0 : i32
    %c0_i32_99 = arith.constant 0 : i32
    %140 = tpu.memref_slice %arg34[%137, %c0_i32_98, %c0_i32_99] : memref<2x128x128xbf16, #tpu.memory_space<vmem>> -> memref<1x128x128xbf16, #tpu.memory_space<vmem>>
    %141 = tpu.memref_squeeze %140 : memref<1x128x128xbf16, #tpu.memory_space<vmem>> -> memref<128x128xbf16, #tpu.memory_space<vmem>>
    %142 = tpu.memref_slice %arg37[%c0_i32_95, %137] : memref<3x2x!tpu.dma_semaphore, #tpu.memory_space<semaphore_mem>> -> memref<1x1x!tpu.dma_semaphore, #tpu.memory_space<semaphore_mem>>
    %143 = tpu.memref_squeeze %142 : memref<1x1x!tpu.dma_semaphore, #tpu.memory_space<semaphore_mem>> -> memref<!tpu.dma_semaphore, #tpu.memory_space<semaphore_mem>>
    tpu.wait_dma2 semaphore(%143 : memref<!tpu.dma_semaphore, #tpu.memory_space<semaphore_mem>>) src(%139 : memref<128x128xbf16, #tpu.memory_space<any>>) dst(%141 : memref<128x128xbf16, #tpu.memory_space<vmem>>)
    %c0_i32_100 = arith.constant 0 : i32
    %c1_i32_101 = arith.constant 1 : i32
    %c0_i32_102 = arith.constant 0 : i32
    %c0_i32_103 = arith.constant 0 : i32
    %144 = tpu.memref_slice %arg30[%c0_i32_100, %c0_i32_102, %c0_i32_103] : memref<1x128x128xbf16, #tpu.memory_space<any>> -> memref<1x128x128xbf16, #tpu.memory_space<any>>
    %145 = tpu.memref_squeeze %144 : memref<1x128x128xbf16, #tpu.memory_space<any>> -> memref<128x128xbf16, #tpu.memory_space<any>>
    %c0_i32_104 = arith.constant 0 : i32
    %c0_i32_105 = arith.constant 0 : i32
    %146 = tpu.memref_slice %arg35[%137, %c0_i32_104, %c0_i32_105] : memref<2x128x128xbf16, #tpu.memory_space<vmem>> -> memref<1x128x128xbf16, #tpu.memory_space<vmem>>
    %147 = tpu.memref_squeeze %146 : memref<1x128x128xbf16, #tpu.memory_space<vmem>> -> memref<128x128xbf16, #tpu.memory_space<vmem>>
    %148 = tpu.memref_slice %arg37[%c1_i32_101, %137] : memref<3x2x!tpu.dma_semaphore, #tpu.memory_space<semaphore_mem>> -> memref<1x1x!tpu.dma_semaphore, #tpu.memory_space<semaphore_mem>>
    %149 = tpu.memref_squeeze %148 : memref<1x1x!tpu.dma_semaphore, #tpu.memory_space<semaphore_mem>> -> memref<!tpu.dma_semaphore, #tpu.memory_space<semaphore_mem>>
    tpu.wait_dma2 semaphore(%149 : memref<!tpu.dma_semaphore, #tpu.memory_space<semaphore_mem>>) src(%145 : memref<128x128xbf16, #tpu.memory_space<any>>) dst(%147 : memref<128x128xbf16, #tpu.memory_space<vmem>>)
    %c0_i32_106 = arith.constant 0 : i32
    %c2_i32_107 = arith.constant 2 : i32
    %c0_i32_108 = arith.constant 0 : i32
    %c0_i32_109 = arith.constant 0 : i32
    %150 = tpu.memref_slice %arg31[%c0_i32_106, %c0_i32_108, %c0_i32_109] : memref<1x128x128xbf16, #tpu.memory_space<any>> -> memref<1x128x128xbf16, #tpu.memory_space<any>>
    %151 = tpu.memref_squeeze %150 : memref<1x128x128xbf16, #tpu.memory_space<any>> -> memref<128x128xbf16, #tpu.memory_space<any>>
    %c0_i32_110 = arith.constant 0 : i32
    %c0_i32_111 = arith.constant 0 : i32
    %152 = tpu.memref_slice %arg36[%137, %c0_i32_110, %c0_i32_111] : memref<2x128x128xbf16, #tpu.memory_space<vmem>> -> memref<1x128x128xbf16, #tpu.memory_space<vmem>>
    %153 = tpu.memref_squeeze %152 : memref<1x128x128xbf16, #tpu.memory_space<vmem>> -> memref<128x128xbf16, #tpu.memory_space<vmem>>
    %154 = tpu.memref_slice %arg37[%c2_i32_107, %137] : memref<3x2x!tpu.dma_semaphore, #tpu.memory_space<semaphore_mem>> -> memref<1x1x!tpu.dma_semaphore, #tpu.memory_space<semaphore_mem>>
    %155 = tpu.memref_squeeze %154 : memref<1x1x!tpu.dma_semaphore, #tpu.memory_space<semaphore_mem>> -> memref<!tpu.dma_semaphore, #tpu.memory_space<semaphore_mem>>
    tpu.wait_dma2 semaphore(%155 : memref<!tpu.dma_semaphore, #tpu.memory_space<semaphore_mem>>) src(%151 : memref<128x128xbf16, #tpu.memory_space<any>>) dst(%153 : memref<128x128xbf16, #tpu.memory_space<vmem>>)
    %c1_i32_112 = arith.constant 1 : i32
    %156 = arith.addi %c0_i32_92, %c1_i32_112 : i32
    %c1_i32_113 = arith.constant 1 : i32
    %157 = arith.cmpi slt, %156, %c1_i32_113 : i32
    %158 = arith.extui %157 : i1 to i32
    %c0_i32_114 = arith.constant 0 : i32
    %159 = arith.cmpi ne, %158, %c0_i32_114 : i32
    scf.if %159 {
      %c1_i32_148 = arith.constant 1 : i32
      %210 = arith.addi %c0_i32_92, %c1_i32_148 : i32
      %c1_i32_149 = arith.constant 1 : i32
      %211 = arith.subi %c1_i32_149, %137 : i32
      %c0_i32_150 = arith.constant 0 : i32
      %c0_i32_151 = arith.constant 0 : i32
      %c0_i32_152 = arith.constant 0 : i32
      %212 = tpu.memref_slice %arg29[%210, %c0_i32_151, %c0_i32_152] : memref<1x128x128xbf16, #tpu.memory_space<any>> -> memref<1x128x128xbf16, #tpu.memory_space<any>>
      %213 = tpu.memref_squeeze %212 : memref<1x128x128xbf16, #tpu.memory_space<any>> -> memref<128x128xbf16, #tpu.memory_space<any>>
      %c0_i32_153 = arith.constant 0 : i32
      %c0_i32_154 = arith.constant 0 : i32
      %214 = tpu.memref_slice %arg34[%211, %c0_i32_153, %c0_i32_154] : memref<2x128x128xbf16, #tpu.memory_space<vmem>> -> memref<1x128x128xbf16, #tpu.memory_space<vmem>>
      %215 = tpu.memref_squeeze %214 : memref<1x128x128xbf16, #tpu.memory_space<vmem>> -> memref<128x128xbf16, #tpu.memory_space<vmem>>
      %216 = tpu.memref_slice %arg37[%c0_i32_150, %211] : memref<3x2x!tpu.dma_semaphore, #tpu.memory_space<semaphore_mem>> -> memref<1x1x!tpu.dma_semaphore, #tpu.memory_space<semaphore_mem>>
      %217 = tpu.memref_squeeze %216 : memref<1x1x!tpu.dma_semaphore, #tpu.memory_space<semaphore_mem>> -> memref<!tpu.dma_semaphore, #tpu.memory_space<semaphore_mem>>
      tpu.enqueue_dma source(%213 : memref<128x128xbf16, #tpu.memory_space<any>>) target(%215 : memref<128x128xbf16, #tpu.memory_space<vmem>>) target_semaphore(%217 : memref<!tpu.dma_semaphore, #tpu.memory_space<semaphore_mem>>)
      %c1_i32_155 = arith.constant 1 : i32
      %c0_i32_156 = arith.constant 0 : i32
      %c0_i32_157 = arith.constant 0 : i32
      %218 = tpu.memref_slice %arg30[%210, %c0_i32_156, %c0_i32_157] : memref<1x128x128xbf16, #tpu.memory_space<any>> -> memref<1x128x128xbf16, #tpu.memory_space<any>>
      %219 = tpu.memref_squeeze %218 : memref<1x128x128xbf16, #tpu.memory_space<any>> -> memref<128x128xbf16, #tpu.memory_space<any>>
      %c0_i32_158 = arith.constant 0 : i32
      %c0_i32_159 = arith.constant 0 : i32
      %220 = tpu.memref_slice %arg35[%211, %c0_i32_158, %c0_i32_159] : memref<2x128x128xbf16, #tpu.memory_space<vmem>> -> memref<1x128x128xbf16, #tpu.memory_space<vmem>>
      %221 = tpu.memref_squeeze %220 : memref<1x128x128xbf16, #tpu.memory_space<vmem>> -> memref<128x128xbf16, #tpu.memory_space<vmem>>
      %222 = tpu.memref_slice %arg37[%c1_i32_155, %211] : memref<3x2x!tpu.dma_semaphore, #tpu.memory_space<semaphore_mem>> -> memref<1x1x!tpu.dma_semaphore, #tpu.memory_space<semaphore_mem>>
      %223 = tpu.memref_squeeze %222 : memref<1x1x!tpu.dma_semaphore, #tpu.memory_space<semaphore_mem>> -> memref<!tpu.dma_semaphore, #tpu.memory_space<semaphore_mem>>
      tpu.enqueue_dma source(%219 : memref<128x128xbf16, #tpu.memory_space<any>>) target(%221 : memref<128x128xbf16, #tpu.memory_space<vmem>>) target_semaphore(%223 : memref<!tpu.dma_semaphore, #tpu.memory_space<semaphore_mem>>)
      %c2_i32_160 = arith.constant 2 : i32
      %c0_i32_161 = arith.constant 0 : i32
      %c0_i32_162 = arith.constant 0 : i32
      %224 = tpu.memref_slice %arg31[%210, %c0_i32_161, %c0_i32_162] : memref<1x128x128xbf16, #tpu.memory_space<any>> -> memref<1x128x128xbf16, #tpu.memory_space<any>>
      %225 = tpu.memref_squeeze %224 : memref<1x128x128xbf16, #tpu.memory_space<any>> -> memref<128x128xbf16, #tpu.memory_space<any>>
      %c0_i32_163 = arith.constant 0 : i32
      %c0_i32_164 = arith.constant 0 : i32
      %226 = tpu.memref_slice %arg36[%211, %c0_i32_163, %c0_i32_164] : memref<2x128x128xbf16, #tpu.memory_space<vmem>> -> memref<1x128x128xbf16, #tpu.memory_space<vmem>>
      %227 = tpu.memref_squeeze %226 : memref<1x128x128xbf16, #tpu.memory_space<vmem>> -> memref<128x128xbf16, #tpu.memory_space<vmem>>
      %228 = tpu.memref_slice %arg37[%c2_i32_160, %211] : memref<3x2x!tpu.dma_semaphore, #tpu.memory_space<semaphore_mem>> -> memref<1x1x!tpu.dma_semaphore, #tpu.memory_space<semaphore_mem>>
      %229 = tpu.memref_squeeze %228 : memref<1x1x!tpu.dma_semaphore, #tpu.memory_space<semaphore_mem>> -> memref<!tpu.dma_semaphore, #tpu.memory_space<semaphore_mem>>
      tpu.enqueue_dma source(%225 : memref<128x128xbf16, #tpu.memory_space<any>>) target(%227 : memref<128x128xbf16, #tpu.memory_space<vmem>>) target_semaphore(%229 : memref<!tpu.dma_semaphore, #tpu.memory_space<semaphore_mem>>)
    } else {
    }
    %160 = arith.index_cast %137 : i32 to index
    %c0_115 = arith.constant 0 : index
    %c0_116 = arith.constant 0 : index
    %161 = vector.load %arg34[%160, %c0_115, %c0_116] : memref<2x128x128xbf16, #tpu.memory_space<vmem>>, vector<1x128x128xbf16>
    %162 = vector.shape_cast %161 : vector<1x128x128xbf16> to vector<128x128xbf16>
    %cst_117 = arith.constant dense<0.000000e+00> : vector<256x128xf32>
    %163 = tpu.matmul %134, %162, %cst_117 {dimension_numbers = #tpu.dot_dimension_numbers<[1], [0], [0], [1], [0, 0, 1, 1], [], []>} : vector<256x128xbf16>, vector<128x128xbf16>, vector<256x128xf32> -> vector<256x128xf32>
    %164 = arith.index_cast %c0_i32_92 : i32 to index
    %c0_118 = arith.constant 0 : index
    %c0_119 = arith.constant 0 : index
    %165 = vector.load %arg24[%164, %c0_118, %c0_119] : memref<1x1x128xf32, #tpu.memory_space<vmem>>, vector<1x1x128xf32>
    %166 = vector.shape_cast %165 : vector<1x1x128xf32> to vector<1x128xf32>
    %167 = vector.broadcast %166 : vector<1x128xf32> to vector<256x128xf32>
    %168 = arith.addf %163, %167 : vector<256x128xf32>
    %169 = arith.index_cast %137 : i32 to index
    %c0_120 = arith.constant 0 : index
    %c0_121 = arith.constant 0 : index
    %170 = vector.load %arg35[%169, %c0_120, %c0_121] : memref<2x128x128xbf16, #tpu.memory_space<vmem>>, vector<1x128x128xbf16>
    %171 = vector.shape_cast %170 : vector<1x128x128xbf16> to vector<128x128xbf16>
    %cst_122 = arith.constant dense<0.000000e+00> : vector<256x128xf32>
    %172 = tpu.matmul %134, %171, %cst_122 {dimension_numbers = #tpu.dot_dimension_numbers<[1], [0], [0], [1], [0, 0, 1, 1], [], []>} : vector<256x128xbf16>, vector<128x128xbf16>, vector<256x128xf32> -> vector<256x128xf32>
    %173 = arith.index_cast %c0_i32_92 : i32 to index
    %c0_123 = arith.constant 0 : index
    %c0_124 = arith.constant 0 : index
    %174 = vector.load %arg25[%173, %c0_123, %c0_124] : memref<1x1x128xf32, #tpu.memory_space<vmem>>, vector<1x1x128xf32>
    %175 = vector.shape_cast %174 : vector<1x1x128xf32> to vector<1x128xf32>
    %176 = vector.broadcast %175 : vector<1x128xf32> to vector<256x128xf32>
    %177 = arith.addf %172, %176 : vector<256x128xf32>
    %cst_125 = arith.constant 5.000000e-01 : f32
    %178 = vector.broadcast %cst_125 : f32 to vector<256x128xf32>
    %179 = arith.mulf %178, %177 : vector<256x128xf32>
    %cst_126 = arith.constant 0.707106769 : f32
    %180 = vector.broadcast %cst_126 : f32 to vector<256x128xf32>
    %181 = arith.mulf %177, %180 : vector<256x128xf32>
    %182 = math.erf %181 : vector<256x128xf32>
    %cst_127 = arith.constant 1.000000e+00 : f32
    %183 = vector.broadcast %cst_127 : f32 to vector<256x128xf32>
    %184 = arith.addf %183, %182 : vector<256x128xf32>
    %185 = arith.mulf %179, %184 : vector<256x128xf32>
    %c0_128 = arith.constant 0 : index
    %c0_129 = arith.constant 0 : index
    %186 = vector.load %arg33[%c0_128, %c0_129] : memref<256x128xf32, #tpu.memory_space<vmem>>, vector<256x128xf32>
    %187 = arith.mulf %168, %185 : vector<256x128xf32>
    %188 = arith.truncf %187 : vector<256x128xf32> to vector<256x128xbf16>
    %189 = arith.index_cast %137 : i32 to index
    %c0_130 = arith.constant 0 : index
    %c0_131 = arith.constant 0 : index
    %190 = vector.load %arg36[%189, %c0_130, %c0_131] : memref<2x128x128xbf16, #tpu.memory_space<vmem>>, vector<1x128x128xbf16>
    %191 = vector.shape_cast %190 : vector<1x128x128xbf16> to vector<128x128xbf16>
    %cst_132 = arith.constant dense<0.000000e+00> : vector<256x128xf32>
    %192 = tpu.matmul %188, %191, %cst_132 {dimension_numbers = #tpu.dot_dimension_numbers<[1], [0], [0], [1], [0, 0, 1, 1], [], []>} : vector<256x128xbf16>, vector<128x128xbf16>, vector<256x128xf32> -> vector<256x128xf32>
    %193 = arith.addf %186, %192 : vector<256x128xf32>
    %c0_133 = arith.constant 0 : index
    %c0_134 = arith.constant 0 : index
    %194 = vector.load %arg33[%c0_133, %c0_134] : memref<256x128xf32, #tpu.memory_space<vmem>>, vector<256x128xf32>
    tpu.vector_store %arg33[%c0_133, %c0_134], %193 {strides = array<i32>} : memref<256x128xf32, #tpu.memory_space<vmem>>, vector<256x128xf32>,
    %c1_i32_135 = arith.constant 1 : i32
    %c0_136 = arith.constant 0 : index
    %c0_137 = arith.constant 0 : index
    %195 = vector.load %arg33[%c0_136, %c0_137] : memref<256x128xf32, #tpu.memory_space<vmem>>, vector<256x128xf32>
    %196 = arith.addf %107, %195 : vector<256x128xf32>
    %c0_138 = arith.constant 0 : index
    %c0_139 = arith.constant 0 : index
    %197 = vector.load %arg26[%c0_138, %c0_139] : memref<1x128xf32, #tpu.memory_space<vmem>>, vector<1x128xf32>
    %198 = vector.broadcast %197 : vector<1x128xf32> to vector<256x128xf32>
    %199 = arith.addf %196, %198 : vector<256x128xf32>
    %200 = arith.truncf %199 : vector<256x128xf32> to vector<256x128xbf16>
    %c0_140 = arith.constant 0 : index
    %c0_141 = arith.constant 0 : index
    %201 = vector.load %arg27[%c0_140, %c0_141] : memref<128x128xbf16, #tpu.memory_space<vmem>>, vector<128x128xbf16>
    %cst_142 = arith.constant dense<0.000000e+00> : vector<256x128xf32>
    %202 = tpu.matmul %200, %201, %cst_142 {dimension_numbers = #tpu.dot_dimension_numbers<[1], [0], [0], [1], [0, 0, 1, 1], [], []>} : vector<256x128xbf16>, vector<128x128xbf16>, vector<256x128xf32> -> vector<256x128xf32>
    %203 = arith.addf %1, %202 : vector<256x128xf32>
    %c0_143 = arith.constant 0 : index
    %c0_144 = arith.constant 0 : index
    %204 = vector.load %arg28[%c0_143, %c0_144] : memref<1x128xf32, #tpu.memory_space<vmem>>, vector<1x128xf32>
    %205 = vector.broadcast %204 : vector<1x128xf32> to vector<256x128xf32>
    %206 = arith.addf %203, %205 : vector<256x128xf32>
    %c0_145 = arith.constant 0 : index
    %c0_146 = arith.constant 0 : index
    %c0_147 = arith.constant 0 : index
    %207 = vector.load %arg32[%c0_145, %c0_146, %c0_147] : memref<1x256x128xf32, #tpu.memory_space<vmem>>, vector<1x256x128xf32>
    %208 = vector.shape_cast %207 : vector<1x256x128xf32> to vector<256x128xf32>
    %209 = vector.shape_cast %206 : vector<256x128xf32> to vector<1x256x128xf32>
    tpu.vector_store %arg32[%c0_145, %c0_146, %c0_147], %209 {strides = array<i32>} : memref<1x256x128xf32, #tpu.memory_space<vmem>>, vector<1x256x128xf32>,
    return
  }
  func.func @transform_0(%arg0: i32) -> (i32, i32, i32) {
    %c0_i32 = arith.constant 0 : i32
    %c0_i32_0 = arith.constant 0 : i32
    %c0_i32_1 = arith.constant 0 : i32
    return %arg0, %c0_i32, %c0_i32_0 : i32, i32, i32
  }
  func.func @transform_1(%arg0: i32) -> (i32, i32, i32) {
    %c0_i32 = arith.constant 0 : i32
    %c0_i32_0 = arith.constant 0 : i32
    %c0_i32_1 = arith.constant 0 : i32
    return %arg0, %c0_i32, %c0_i32_0 : i32, i32, i32
  }
  func.func @transform_2(%arg0: i32) -> (i32, i32, i32) {
    %c0_i32 = arith.constant 0 : i32
    %c0_i32_0 = arith.constant 0 : i32
    %c0_i32_1 = arith.constant 0 : i32
    return %arg0, %c0_i32, %c0_i32_0 : i32, i32, i32
  }
  func.func @transform_3(%arg0: i32) -> (i32, i32, i32) {
    %c0_i32 = arith.constant 0 : i32
    %c0_i32_0 = arith.constant 0 : i32
    %c0_i32_1 = arith.constant 0 : i32
    return %arg0, %c0_i32, %c0_i32_0 : i32, i32, i32
  }
  func.func @transform_4(%arg0: i32) -> (i32, i32) {
    %c0_i32 = arith.constant 0 : i32
    %c0_i32_0 = arith.constant 0 : i32
    %c0_i32_1 = arith.constant 0 : i32
    return %c0_i32, %c0_i32_0 : i32, i32
  }
  func.func @transform_5(%arg0: i32) -> (i32, i32) {
    %c0_i32 = arith.constant 0 : i32
    %c0_i32_0 = arith.constant 0 : i32
    %c0_i32_1 = arith.constant 0 : i32
    return %c0_i32, %c0_i32_0 : i32, i32
  }
  func.func @transform_6(%arg0: i32) -> (i32, i32) {
    %c0_i32 = arith.constant 0 : i32
    %c0_i32_0 = arith.constant 0 : i32
    %c0_i32_1 = arith.constant 0 : i32
    return %c0_i32, %c0_i32_0 : i32, i32
  }
  func.func @transform_7(%arg0: i32) -> (i32, i32) {
    %c0_i32 = arith.constant 0 : i32
    %c0_i32_0 = arith.constant 0 : i32
    %c0_i32_1 = arith.constant 0 : i32
    return %c0_i32, %c0_i32_0 : i32, i32
  }
  func.func @transform_8(%arg0: i32) -> (i32, i32) {
    %c0_i32 = arith.constant 0 : i32
    %c0_i32_0 = arith.constant 0 : i32
    %c0_i32_1 = arith.constant 0 : i32
    return %c0_i32, %c0_i32_0 : i32, i32
  }
  func.func @transform_9(%arg0: i32) -> (i32, i32, i32) {
    %c0_i32 = arith.constant 0 : i32
    %c0_i32_0 = arith.constant 0 : i32
    %c0_i32_1 = arith.constant 0 : i32
    %c0_i32_2 = arith.constant 0 : i32
    return %c0_i32, %c0_i32_0, %c0_i32_1 : i32, i32, i32
  }
  func.func @transform_10(%arg0: i32) -> (i32, i32, i32) {
    %c0_i32 = arith.constant 0 : i32
    %c0_i32_0 = arith.constant 0 : i32
    %c0_i32_1 = arith.constant 0 : i32
    %c0_i32_2 = arith.constant 0 : i32
    return %c0_i32, %c0_i32_0, %c0_i32_1 : i32, i32, i32
  }
  func.func @transform_11(%arg0: i32) -> (i32, i32, i32) {
    %c0_i32 = arith.constant 0 : i32
    %c0_i32_0 = arith.constant 0 : i32
    %c0_i32_1 = arith.constant 0 : i32
    %c0_i32_2 = arith.constant 0 : i32
    return %c0_i32, %c0_i32_0, %c0_i32_1 : i32, i32, i32
  }
  func.func @transform_12(%arg0: i32) -> (i32, i32, i32) {
    %c0_i32 = arith.constant 0 : i32
    %c0_i32_0 = arith.constant 0 : i32
    %c0_i32_1 = arith.constant 0 : i32
    %c0_i32_2 = arith.constant 0 : i32
    return %c0_i32, %c0_i32_0, %c0_i32_1 : i32, i32, i32
  }
  func.func @transform_13(%arg0: i32) -> (i32, i32) {
    %c0_i32 = arith.constant 0 : i32
    %c0_i32_0 = arith.constant 0 : i32
    %c0_i32_1 = arith.constant 0 : i32
    return %c0_i32, %c0_i32_0 : i32, i32
  }
  func.func @transform_14(%arg0: i32) -> (i32, i32) {
    %c0_i32 = arith.constant 0 : i32
    %c0_i32_0 = arith.constant 0 : i32
    %c0_i32_1 = arith.constant 0 : i32
    return %c0_i32, %c0_i32_0 : i32, i32
  }
  func.func @transform_15(%arg0: i32) -> (i32, i32) {
    %c0_i32 = arith.constant 0 : i32
    %c0_i32_0 = arith.constant 0 : i32
    %c0_i32_1 = arith.constant 0 : i32
    return %c0_i32, %c0_i32_0 : i32, i32
  }
  func.func @transform_16(%arg0: i32) -> (i32, i32, i32) {
    %c0_i32 = arith.constant 0 : i32
    %c0_i32_0 = arith.constant 0 : i32
    %c0_i32_1 = arith.constant 0 : i32
    %c0_i32_2 = arith.constant 0 : i32
    return %c0_i32, %c0_i32_0, %c0_i32_1 : i32, i32, i32
  }
  func.func @transform_17(%arg0: i32) -> (i32, i32, i32) {
    %c0_i32 = arith.constant 0 : i32
    %c0_i32_0 = arith.constant 0 : i32
    %c0_i32_1 = arith.constant 0 : i32
    %c0_i32_2 = arith.constant 0 : i32
    return %c0_i32, %c0_i32_0, %c0_i32_1 : i32, i32, i32
  }
  func.func @transform_18(%arg0: i32) -> (i32, i32, i32) {
    %c0_i32 = arith.constant 0 : i32
    %c0_i32_0 = arith.constant 0 : i32
    %c0_i32_1 = arith.constant 0 : i32
    %c0_i32_2 = arith.constant 0 : i32
    return %c0_i32, %c0_i32_0, %c0_i32_1 : i32, i32, i32
  }
  func.func @transform_19(%arg0: i32) -> (i32, i32, i32) {
    %c0_i32 = arith.constant 0 : i32
    %c0_i32_0 = arith.constant 0 : i32
    %c0_i32_1 = arith.constant 0 : i32
    %c0_i32_2 = arith.constant 0 : i32
    return %c0_i32, %c0_i32_0, %c0_i32_1 : i32, i32, i32
  }
  func.func @transform_20(%arg0: i32) -> (i32, i32) {
    %c0_i32 = arith.constant 0 : i32
    %c0_i32_0 = arith.constant 0 : i32
    %c0_i32_1 = arith.constant 0 : i32
    return %c0_i32, %c0_i32_0 : i32, i32
  }
  func.func @transform_21(%arg0: i32) -> (i32, i32) {
    %c0_i32 = arith.constant 0 : i32
    %c0_i32_0 = arith.constant 0 : i32
    %c0_i32_1 = arith.constant 0 : i32
    return %c0_i32, %c0_i32_0 : i32, i32
  }
  func.func @transform_22(%arg0: i32) -> (i32, i32) {
    %c0_i32 = arith.constant 0 : i32
    %c0_i32_0 = arith.constant 0 : i32
    %c0_i32_1 = arith.constant 0 : i32
    return %c0_i32, %c0_i32_0 : i32, i32
  }
  func.func @transform_23(%arg0: i32) -> (i32, i32, i32) {
    %c0_i32 = arith.constant 0 : i32
    %c0_i32_0 = arith.constant 0 : i32
    %c0_i32_1 = arith.constant 0 : i32
    %c0_i32_2 = arith.constant 0 : i32
    return %c0_i32, %c0_i32_0, %c0_i32_1 : i32, i32, i32
  }
  func.func @transform_24(%arg0: i32) -> (i32, i32, i32) {
    %c0_i32 = arith.constant 0 : i32
    %c0_i32_0 = arith.constant 0 : i32
    %c0_i32_1 = arith.constant 0 : i32
    %c0_i32_2 = arith.constant 0 : i32
    return %c0_i32, %c0_i32_0, %c0_i32_1 : i32, i32, i32
  }
  func.func @transform_25(%arg0: i32) -> (i32, i32) {
    %c0_i32 = arith.constant 0 : i32
    %c0_i32_0 = arith.constant 0 : i32
    %c0_i32_1 = arith.constant 0 : i32
    return %c0_i32, %c0_i32_0 : i32, i32
  }
  func.func @transform_26(%arg0: i32) -> (i32, i32) {
    %c0_i32 = arith.constant 0 : i32
    %c0_i32_0 = arith.constant 0 : i32
    %c0_i32_1 = arith.constant 0 : i32
    return %c0_i32, %c0_i32_0 : i32, i32
  }
  func.func @transform_27(%arg0: i32) -> (i32, i32) {
    %c0_i32 = arith.constant 0 : i32
    %c0_i32_0 = arith.constant 0 : i32
    %c0_i32_1 = arith.constant 0 : i32
    return %c0_i32, %c0_i32_0 : i32, i32
  }
  func.func @transform_31(%arg0: i32) -> (i32, i32, i32) {
    %c0_i32 = arith.constant 0 : i32
    %c0_i32_0 = arith.constant 0 : i32
    %c0_i32_1 = arith.constant 0 : i32
    return %arg0, %c0_i32, %c0_i32_0 : i32, i32, i32
  }
}

</mosaic_0001>

<llo_original>
// kernel: unet_attention_block.1
$region0: #{unet_attention_block.1}
  #allocation0 [shape = 'u32[]', space=smem, size = 0x4, offset = 0x4, fixed_abs, tag = 'smem constant byte address 0x4 - core index']
  #allocation1 [shape = 'u32[144,128]{1,0:T(1,128)}', space=vmem, size = 0x12000, scoped, tag = 'internal scratch']
  #allocation2 [shape = 'f32[256,128]{1,0:T(8,128)}', space=vmem, size = 0x20000, scoped, tag = 'scratch operand']
  #allocation3 [shape = 'bf16[2,128,128]{2,1,0:T(16,128)(2,1)}', space=vmem, size = 0x10000, scoped, tag = 'scratch operand']
  #allocation4 [shape = 'bf16[2,128,128]{2,1,0:T(16,128)(2,1)}', space=vmem, size = 0x10000, scoped, tag = 'scratch operand']
  #allocation5 [shape = 'bf16[2,128,128]{2,1,0:T(16,128)(2,1)}', space=vmem, size = 0x10000, scoped, tag = 'scratch operand']
  #allocation6 [shape = 's32[6]{0}', space=sflag, size = 0x18, scoped, tag = 'scratch operand']
  #allocation9 [shape = 's32[]', space=sflag, size = 0x4, offset = 0, fixed_abs, tag = 'sflag constant byte address 0x0 - dummy sync flag']
  #allocation10 [shape = 's32[]', space=sflag, size = 0x4, offset = 0, fixed_abs, tag = 'sflag constant byte address 0x0 - dummy sync flag']
  #allocation11 [shape = 's32[]', space=sflag, size = 0x4, offset = 0, fixed_abs, tag = 'sflag constant byte address 0x0 - dummy sync flag']
  %s0 = inlined_call_operand.smem [shape: u32[32], index: -1, kind: input, shape index: {}]
  %s1 = sld [smem:[%s0]]
  %s2 = scalar_lea.smem %s0, 1
  %s3 = sld [smem:[%s2]]
  %s4 = scalar_lea.smem %s0, 2
  %s5 = sld [smem:[%s4]]
  %s6 = scalar_lea.smem %s0, 3
  %s7 = sld [smem:[%s6]]
  %s8 = scalar_lea.smem %s0, 4
  %s9 = sld [smem:[%s8]]
  %s10 = scalar_lea.smem %s0, 5
  %s11 = sld [smem:[%s10]]
  %s12 = scalar_lea.smem %s0, 6
  %s13 = sld [smem:[%s12]]
  %s14 = scalar_lea.smem %s0, 7
  %s15 = sld [smem:[%s14]]
  %s16 = scalar_lea.smem %s0, 8
  %s17 = sld [smem:[%s16]]
  %s18 = scalar_lea.smem %s0, 9
  %s19 = sld [smem:[%s18]]
  %s20 = scalar_lea.smem %s0, 10
  %s21 = sld [smem:[%s20]]
  %s22 = scalar_lea.smem %s0, 11
  %s23 = sld [smem:[%s22]]
  %s24 = scalar_lea.smem %s0, 12
  %s25 = sld [smem:[%s24]]
  %s26 = scalar_lea.smem %s0, 13
  %s27 = sld [smem:[%s26]]
  %s28 = scalar_lea.smem %s0, 14
  %s29 = sld [smem:[%s28]]
  %s30 = scalar_lea.smem %s0, 15
  %s31 = sld [smem:[%s30]]
  %s32 = scalar_lea.smem %s0, 16
  %s33 = sld [smem:[%s32]]
  %s34 = scalar_lea.smem %s0, 17
  %s35 = sld [smem:[%s34]]
  %s36 = scalar_lea.smem %s0, 18
  %s37 = sld [smem:[%s36]]
  %s38 = scalar_lea.smem %s0, 19
  %s39 = sld [smem:[%s38]]
  %s40 = scalar_lea.smem %s0, 20
  %s41 = sld [smem:[%s40]]
  %s42 = scalar_lea.smem %s0, 21
  %s43 = sld [smem:[%s42]]
  %s44 = scalar_lea.smem %s0, 22
  %s45 = sld [smem:[%s44]]
  %s46 = scalar_lea.smem %s0, 23
  %s47 = sld [smem:[%s46]]
  %s48 = scalar_lea.smem %s0, 24
  %s49 = sld [smem:[%s48]]
  %s50 = scalar_lea.smem %s0, 25
  %s51 = sld [smem:[%s50]]
  %s52 = scalar_lea.smem %s0, 26
  %s53 = sld [smem:[%s52]]
  %s54 = scalar_lea.smem %s0, 27
  %s55 = sld [smem:[%s54]]
  %s56 = scalar_lea.smem %s0, 28
  %s57 = sld [smem:[%s56]]
  %s58 = scalar_lea.smem %s0, 29
  %s59 = sld [smem:[%s58]]
  %s60 = scalar_lea.smem %s0, 30
  %s61 = sld [smem:[%s60]]
  %s62 = scalar_lea.smem %s0, 31
  %s63 = sld [smem:[%s62]]
  %s64 = sld [smem:[#allocation0]]
  $region261: #{unet_attention_block.1} parent=0
    _
  %s66 = ssub.s32 1, %s64
  %s67 = scalar_select 0, %s66, %s64
  $region1: #{unet_attention_block.1} parent=0
    #allocation7 [shape = 'u8[262144]{0}', space=vmem, size = 0x40000, scoped, tag = 'output window, operand 0']
    #allocation8 [shape = 's32[2]{0}', space=sflag, size = 0x8, scoped, tag = 'scoped memory for unet_attention_block.1']
    %68 = vsyncpa [#allocation8], 0
    %s69 = scalar_lea.sflag [#allocation8], 1
    %70 = vsyncpa %s69, 0
    loop: start=0, step=1, limit=4
    $region2: #{unet_attention_block.1} parent=1 // loop_pre_header
      _
    $region3: #{unet_attention_block.1} parent=1 // loop_header
      %s72 = sphi 0, %s76
      %p73 = scmp.ge.s32.totalorder %s72, 4
      %s82 = sphi 0, %s84
      %s85 = sphi 0, %s82
      %s86 = sphi 0, %s85
      %s102 = sphi 0, %s86
      %s108 = sphi 0, %s110
      %s111 = sphi 0, %s108
      %s112 = sphi 0, %s111
      %s128 = sphi 0, %s112
      %s134 = sphi 0, %s136
      %s137 = sphi 0, %s134
      %s138 = sphi 0, %s137
      %s154 = sphi 0, %s138
      %s160 = sphi 0, %s162
      %s163 = sphi 0, %s160
      %s164 = sphi 0, %s163
      %s180 = sphi 0, %s164
      %s184 = sphi 0, %s184
      %s186 = sphi 0, %s184
      %s187 = sphi 0, %s186
      %s201 = sphi 0, %s187
      %s205 = sphi 0, %s205
      %s207 = sphi 0, %s205
      %s208 = sphi 0, %s207
      %s222 = sphi 0, %s208
      %s226 = sphi 0, %s226
      %s228 = sphi 0, %s226
      %s229 = sphi 0, %s228
      %s243 = sphi 0, %s229
      %s247 = sphi 0, %s247
      %s249 = sphi 0, %s247
      %s250 = sphi 0, %s249
      %s264 = sphi 0, %s250
      %s268 = sphi 0, %s268
      %s270 = sphi 0, %s268
      %s271 = sphi 0, %s270
      %s285 = sphi 0, %s271
      %s289 = sphi 0, %s289
      %s291 = sphi 0, %s289
      %s292 = sphi 0, %s291
      %s306 = sphi 0, %s292
      %s310 = sphi 0, %s310
      %s312 = sphi 0, %s310
      %s313 = sphi 0, %s312
      %s327 = sphi 0, %s313
      %s331 = sphi 0, %s331
      %s333 = sphi 0, %s331
      %s334 = sphi 0, %s333
      %s348 = sphi 0, %s334
      %s352 = sphi 0, %s352
      %s354 = sphi 0, %s352
      %s355 = sphi 0, %s354
      %s369 = sphi 0, %s355
      %s373 = sphi 0, %s373
      %s375 = sphi 0, %s373
      %s376 = sphi 0, %s375
      %s390 = sphi 0, %s376
      %s394 = sphi 0, %s394
      %s396 = sphi 0, %s394
      %s397 = sphi 0, %s396
      %s411 = sphi 0, %s397
      %s415 = sphi 0, %s415
      %s417 = sphi 0, %s415
      %s418 = sphi 0, %s417
      %s432 = sphi 0, %s418
      %s436 = sphi 0, %s436
      %s438 = sphi 0, %s436
      %s439 = sphi 0, %s438
      %s453 = sphi 0, %s439
      %s457 = sphi 0, %s457
      %s459 = sphi 0, %s457
      %s460 = sphi 0, %s459
      %s474 = sphi 0, %s460
      %s478 = sphi 0, %s478
      %s480 = sphi 0, %s478
      %s481 = sphi 0, %s480
      %s495 = sphi 0, %s481
      %s499 = sphi 0, %s499
      %s501 = sphi 0, %s499
      %s502 = sphi 0, %s501
      %s516 = sphi 0, %s502
      %s520 = sphi 0, %s520
      %s522 = sphi 0, %s520
      %s523 = sphi 0, %s522
      %s537 = sphi 0, %s523
      %s541 = sphi 0, %s541
      %s543 = sphi 0, %s541
      %s544 = sphi 0, %s543
      %s558 = sphi 0, %s544
      %s562 = sphi 0, %s562
      %s564 = sphi 0, %s562
      %s565 = sphi 0, %s564
      %s579 = sphi 0, %s565
      %s583 = sphi 0, %s583
      %s585 = sphi 0, %s583
      %s586 = sphi 0, %s585
      %s600 = sphi 0, %s586
      %s604 = sphi 0, %s604
      %s606 = sphi 0, %s604
      %s607 = sphi 0, %s606
      %s621 = sphi 0, %s607
      %s625 = sphi 0, %s625
      %s627 = sphi 0, %s625
      %s628 = sphi 0, %s627
      %s642 = sphi 0, %s628
      %s646 = sphi 0, %s646
      %s648 = sphi 0, %s646
      %s649 = sphi 0, %s648
      %s663 = sphi 0, %s649
      %s667 = sphi 0, %s667
      %s669 = sphi 0, %s667
      %s670 = sphi 0, %s669
      %s684 = sphi 0, %s670
      %s690 = sphi 0, %s692
      %s693 = sphi 0, %s690
      %s694 = sphi 0, %s693
      %s710 = sphi 0, %s694
    $region4: #{unet_attention_block.1} parent=1 // loop_header_branch
      %75 = sbr.rel (%p73) target = $region8
    $region5: #{unet_attention_block.1} parent=1 // loop_body
      %s77 = ssub.s32 %s72, 1
      %s78 = ssub.s32 %s72, 2
      %s79 = sadd.s32 %s72, 1
      %s80 = ssub.s32 %s72, %s79
      %p81 = scmp.eq.s32.totalorder %s80, 0
      %s83 = sadd.s32 %s82, 1
      %s84 = scalar_select %p81, %s82, %s83
      %p87 = pneg %p81
      %p88 = scmp.eq.s32.totalorder %s72, 1
      %p89 = por %p87, %p88
      %p90 = scmp.ne.s32.totalorder %s82, %s85
      %p91 = scmp.eq.s32.totalorder %s72, 0
      %p92 = por %p90, %p91
      %p93 = scmp.ne.s32.totalorder %s82, %s85
      %p94 = scmp.eq.s32.totalorder %s77, 1
      %p95 = por %p93, %p94
      %p96 = scmp.ne.s32.totalorder %s85, %s86
      %p97 = scmp.eq.s32.totalorder %s77, 0
      %p98 = por %p96, %p97
      %p99 = scmp.ne.s32.totalorder %s85, %s86
      %p100 = scmp.eq.s32.totalorder %s78, 1
      %p101 = por %p99, %p100
      %p103 = scmp.ne.s32.totalorder %s86, %s102
      %p104 = scmp.eq.s32.totalorder %s78, 0
      %p105 = por %p103, %p104
      %s106 = ssub.s32 %s72, %s79
      %p107 = scmp.eq.s32.totalorder %s106, 0
      %s109 = sadd.s32 %s108, 1
      %s110 = scalar_select %p107, %s108, %s109
      %p113 = pneg %p107
      %p114 = scmp.eq.s32.totalorder %s72, 1
      %p115 = por %p113, %p114
      %p116 = scmp.ne.s32.totalorder %s108, %s111
      %p117 = scmp.eq.s32.totalorder %s72, 0
      %p118 = por %p116, %p117
      %p119 = scmp.ne.s32.totalorder %s108, %s111
      %p120 = scmp.eq.s32.totalorder %s77, 1
      %p121 = por %p119, %p120
      %p122 = scmp.ne.s32.totalorder %s111, %s112
      %p123 = scmp.eq.s32.totalorder %s77, 0
      %p124 = por %p122, %p123
      %p125 = scmp.ne.s32.totalorder %s111, %s112
      %p126 = scmp.eq.s32.totalorder %s78, 1
      %p127 = por %p125, %p126
      %p129 = scmp.ne.s32.totalorder %s112, %s128
      %p130 = scmp.eq.s32.totalorder %s78, 0
      %p131 = por %p129, %p130
      %s132 = ssub.s32 %s72, %s79
      %p133 = scmp.eq.s32.totalorder %s132, 0
      %s135 = sadd.s32 %s134, 1
      %s136 = scalar_select %p133, %s134, %s135
      %p139 = pneg %p133
      %p140 = scmp.eq.s32.totalorder %s72, 1
      %p141 = por %p139, %p140
      %p142 = scmp.ne.s32.totalorder %s134, %s137
      %p143 = scmp.eq.s32.totalorder %s72, 0
      %p144 = por %p142, %p143
      %p145 = scmp.ne.s32.totalorder %s134, %s137
      %p146 = scmp.eq.s32.totalorder %s77, 1
      %p147 = por %p145, %p146
      %p148 = scmp.ne.s32.totalorder %s137, %s138
      %p149 = scmp.eq.s32.totalorder %s77, 0
      %p150 = por %p148, %p149
      %p151 = scmp.ne.s32.totalorder %s137, %s138
      %p152 = scmp.eq.s32.totalorder %s78, 1
      %p153 = por %p151, %p152
      %p155 = scmp.ne.s32.totalorder %s138, %s154
      %p156 = scmp.eq.s32.totalorder %s78, 0
      %p157 = por %p155, %p156
      %s158 = ssub.s32 %s72, %s79
      %p159 = scmp.eq.s32.totalorder %s158, 0
      %s161 = sadd.s32 %s160, 1
      %s162 = scalar_select %p159, %s160, %s161
      %p165 = pneg %p159
      %p166 = scmp.eq.s32.totalorder %s72, 1
      %p167 = por %p165, %p166
      %p168 = scmp.ne.s32.totalorder %s160, %s163
      %p169 = scmp.eq.s32.totalorder %s72, 0
      %p170 = por %p168, %p169
      %p171 = scmp.ne.s32.totalorder %s160, %s163
      %p172 = scmp.eq.s32.totalorder %s77, 1
      %p173 = por %p171, %p172
      %p174 = scmp.ne.s32.totalorder %s163, %s164
      %p175 = scmp.eq.s32.totalorder %s77, 0
      %p176 = por %p174, %p175
      %p177 = scmp.ne.s32.totalorder %s163, %s164
      %p178 = scmp.eq.s32.totalorder %s78, 1
      %p179 = por %p177, %p178
      %p181 = scmp.ne.s32.totalorder %s164, %s180
      %p182 = scmp.eq.s32.totalorder %s78, 0
      %p183 = por %p181, %p182
      %s185 = sadd.s32 %s184, 1
      %p188 = scmp.eq.s32.totalorder %s72, 1
      %p189 = scmp.ne.s32.totalorder %s184, %s186
      %p190 = scmp.eq.s32.totalorder %s72, 0
      %p191 = por %p189, %p190
      %p192 = scmp.ne.s32.totalorder %s184, %s186
      %p193 = scmp.eq.s32.totalorder %s77, 1
      %p194 = por %p192, %p193
      %p195 = scmp.ne.s32.totalorder %s186, %s187
      %p196 = scmp.eq.s32.totalorder %s77, 0
      %p197 = por %p195, %p196
      %p198 = scmp.ne.s32.totalorder %s186, %s187
      %p199 = scmp.eq.s32.totalorder %s78, 1
      %p200 = por %p198, %p199
      %p202 = scmp.ne.s32.totalorder %s187, %s201
      %p203 = scmp.eq.s32.totalorder %s78, 0
      %p204 = por %p202, %p203
      %s206 = sadd.s32 %s205, 1
      %p209 = scmp.eq.s32.totalorder %s72, 1
      %p210 = scmp.ne.s32.totalorder %s205, %s207
      %p211 = scmp.eq.s32.totalorder %s72, 0
      %p212 = por %p210, %p211
      %p213 = scmp.ne.s32.totalorder %s205, %s207
      %p214 = scmp.eq.s32.totalorder %s77, 1
      %p215 = por %p213, %p214
      %p216 = scmp.ne.s32.totalorder %s207, %s208
      %p217 = scmp.eq.s32.totalorder %s77, 0
      %p218 = por %p216, %p217
      %p219 = scmp.ne.s32.totalorder %s207, %s208
      %p220 = scmp.eq.s32.totalorder %s78, 1
      %p221 = por %p219, %p220
      %p223 = scmp.ne.s32.totalorder %s208, %s222
      %p224 = scmp.eq.s32.totalorder %s78, 0
      %p225 = por %p223, %p224
      %s227 = sadd.s32 %s226, 1
      %p230 = scmp.eq.s32.totalorder %s72, 1
      %p231 = scmp.ne.s32.totalorder %s226, %s228
      %p232 = scmp.eq.s32.totalorder %s72, 0
      %p233 = por %p231, %p232
      %p234 = scmp.ne.s32.totalorder %s226, %s228
      %p235 = scmp.eq.s32.totalorder %s77, 1
      %p236 = por %p234, %p235
      %p237 = scmp.ne.s32.totalorder %s228, %s229
      %p238 = scmp.eq.s32.totalorder %s77, 0
      %p239 = por %p237, %p238
      %p240 = scmp.ne.s32.totalorder %s228, %s229
      %p241 = scmp.eq.s32.totalorder %s78, 1
      %p242 = por %p240, %p241
      %p244 = scmp.ne.s32.totalorder %s229, %s243
      %p245 = scmp.eq.s32.totalorder %s78, 0
      %p246 = por %p244, %p245
      %s248 = sadd.s32 %s247, 1
      %p251 = scmp.eq.s32.totalorder %s72, 1
      %p252 = scmp.ne.s32.totalorder %s247, %s249
      %p253 = scmp.eq.s32.totalorder %s72, 0
      %p254 = por %p252, %p253
      %p255 = scmp.ne.s32.totalorder %s247, %s249
      %p256 = scmp.eq.s32.totalorder %s77, 1
      %p257 = por %p255, %p256
      %p258 = scmp.ne.s32.totalorder %s249, %s250
      %p259 = scmp.eq.s32.totalorder %s77, 0
      %p260 = por %p258, %p259
      %p261 = scmp.ne.s32.totalorder %s249, %s250
      %p262 = scmp.eq.s32.totalorder %s78, 1
      %p263 = por %p261, %p262
      %p265 = scmp.ne.s32.totalorder %s250, %s264
      %p266 = scmp.eq.s32.totalorder %s78, 0
      %p267 = por %p265, %p266
      %s269 = sadd.s32 %s268, 1
      %p272 = scmp.eq.s32.totalorder %s72, 1
      %p273 = scmp.ne.s32.totalorder %s268, %s270
      %p274 = scmp.eq.s32.totalorder %s72, 0
      %p275 = por %p273, %p274
      %p276 = scmp.ne.s32.totalorder %s268, %s270
      %p277 = scmp.eq.s32.totalorder %s77, 1
      %p278 = por %p276, %p277
      %p279 = scmp.ne.s32.totalorder %s270, %s271
      %p280 = scmp.eq.s32.totalorder %s77, 0
      %p281 = por %p279, %p280
      %p282 = scmp.ne.s32.totalorder %s270, %s271
      %p283 = scmp.eq.s32.totalorder %s78, 1
      %p284 = por %p282, %p283
      %p286 = scmp.ne.s32.totalorder %s271, %s285
      %p287 = scmp.eq.s32.totalorder %s78, 0
      %p288 = por %p286, %p287
      %s290 = sadd.s32 %s289, 1
      %p293 = scmp.eq.s32.totalorder %s72, 1
      %p294 = scmp.ne.s32.totalorder %s289, %s291
      %p295 = scmp.eq.s32.totalorder %s72, 0
      %p296 = por %p294, %p295
      %p297 = scmp.ne.s32.totalorder %s289, %s291
      %p298 = scmp.eq.s32.totalorder %s77, 1
      %p299 = por %p297, %p298
      %p300 = scmp.ne.s32.totalorder %s291, %s292
      %p301 = scmp.eq.s32.totalorder %s77, 0
      %p302 = por %p300, %p301
      %p303 = scmp.ne.s32.totalorder %s291, %s292
      %p304 = scmp.eq.s32.totalorder %s78, 1
      %p305 = por %p303, %p304
      %p307 = scmp.ne.s32.totalorder %s292, %s306
      %p308 = scmp.eq.s32.totalorder %s78, 0
      %p309 = por %p307, %p308
      %s311 = sadd.s32 %s310, 1
      %p314 = scmp.eq.s32.totalorder %s72, 1
      %p315 = scmp.ne.s32.totalorder %s310, %s312
      %p316 = scmp.eq.s32.totalorder %s72, 0
      %p317 = por %p315, %p316
      %p318 = scmp.ne.s32.totalorder %s310, %s312
      %p319 = scmp.eq.s32.totalorder %s77, 1
      %p320 = por %p318, %p319
      %p321 = scmp.ne.s32.totalorder %s312, %s313
      %p322 = scmp.eq.s32.totalorder %s77, 0
      %p323 = por %p321, %p322
      %p324 = scmp.ne.s32.totalorder %s312, %s313
      %p325 = scmp.eq.s32.totalorder %s78, 1
      %p326 = por %p324, %p325
      %p328 = scmp.ne.s32.totalorder %s313, %s327
      %p329 = scmp.eq.s32.totalorder %s78, 0
      %p330 = por %p328, %p329
      %s332 = sadd.s32 %s331, 1
      %p335 = scmp.eq.s32.totalorder %s72, 1
      %p336 = scmp.ne.s32.totalorder %s331, %s333
      %p337 = scmp.eq.s32.totalorder %s72, 0
      %p338 = por %p336, %p337
      %p339 = scmp.ne.s32.totalorder %s331, %s333
      %p340 = scmp.eq.s32.totalorder %s77, 1
      %p341 = por %p339, %p340
      %p342 = scmp.ne.s32.totalorder %s333, %s334
      %p343 = scmp.eq.s32.totalorder %s77, 0
      %p344 = por %p342, %p343
      %p345 = scmp.ne.s32.totalorder %s333, %s334
      %p346 = scmp.eq.s32.totalorder %s78, 1
      %p347 = por %p345, %p346
      %p349 = scmp.ne.s32.totalorder %s334, %s348
      %p350 = scmp.eq.s32.totalorder %s78, 0
      %p351 = por %p349, %p350
      %s353 = sadd.s32 %s352, 1
      %p356 = scmp.eq.s32.totalorder %s72, 1
      %p357 = scmp.ne.s32.totalorder %s352, %s354
      %p358 = scmp.eq.s32.totalorder %s72, 0
      %p359 = por %p357, %p358
      %p360 = scmp.ne.s32.totalorder %s352, %s354
      %p361 = scmp.eq.s32.totalorder %s77, 1
      %p362 = por %p360, %p361
      %p363 = scmp.ne.s32.totalorder %s354, %s355
      %p364 = scmp.eq.s32.totalorder %s77, 0
      %p365 = por %p363, %p364
      %p366 = scmp.ne.s32.totalorder %s354, %s355
      %p367 = scmp.eq.s32.totalorder %s78, 1
      %p368 = por %p366, %p367
      %p370 = scmp.ne.s32.totalorder %s355, %s369
      %p371 = scmp.eq.s32.totalorder %s78, 0
      %p372 = por %p370, %p371
      %s374 = sadd.s32 %s373, 1
      %p377 = scmp.eq.s32.totalorder %s72, 1
      %p378 = scmp.ne.s32.totalorder %s373, %s375
      %p379 = scmp.eq.s32.totalorder %s72, 0
      %p380 = por %p378, %p379
      %p381 = scmp.ne.s32.totalorder %s373, %s375
      %p382 = scmp.eq.s32.totalorder %s77, 1
      %p383 = por %p381, %p382
      %p384 = scmp.ne.s32.totalorder %s375, %s376
      %p385 = scmp.eq.s32.totalorder %s77, 0
      %p386 = por %p384, %p385
      %p387 = scmp.ne.s32.totalorder %s375, %s376
      %p388 = scmp.eq.s32.totalorder %s78, 1
      %p389 = por %p387, %p388
      %p391 = scmp.ne.s32.totalorder %s376, %s390
      %p392 = scmp.eq.s32.totalorder %s78, 0
      %p393 = por %p391, %p392
      %s395 = sadd.s32 %s394, 1
      %p398 = scmp.eq.s32.totalorder %s72, 1
      %p399 = scmp.ne.s32.totalorder %s394, %s396
      %p400 = scmp.eq.s32.totalorder %s72, 0
      %p401 = por %p399, %p400
      %p402 = scmp.ne.s32.totalorder %s394, %s396
      %p403 = scmp.eq.s32.totalorder %s77, 1
      %p404 = por %p402, %p403
      %p405 = scmp.ne.s32.totalorder %s396, %s397
      %p406 = scmp.eq.s32.totalorder %s77, 0
      %p407 = por %p405, %p406
      %p408 = scmp.ne.s32.totalorder %s396, %s397
      %p409 = scmp.eq.s32.totalorder %s78, 1
      %p410 = por %p408, %p409
      %p412 = scmp.ne.s32.totalorder %s397, %s411
      %p413 = scmp.eq.s32.totalorder %s78, 0
      %p414 = por %p412, %p413
      %s416 = sadd.s32 %s415, 1
      %p419 = scmp.eq.s32.totalorder %s72, 1
      %p420 = scmp.ne.s32.totalorder %s415, %s417
      %p421 = scmp.eq.s32.totalorder %s72, 0
      %p422 = por %p420, %p421
      %p423 = scmp.ne.s32.totalorder %s415, %s417
      %p424 = scmp.eq.s32.totalorder %s77, 1
      %p425 = por %p423, %p424
      %p426 = scmp.ne.s32.totalorder %s417, %s418
      %p427 = scmp.eq.s32.totalorder %s77, 0
      %p428 = por %p426, %p427
      %p429 = scmp.ne.s32.totalorder %s417, %s418
      %p430 = scmp.eq.s32.totalorder %s78, 1
      %p431 = por %p429, %p430
      %p433 = scmp.ne.s32.totalorder %s418, %s432
      %p434 = scmp.eq.s32.totalorder %s78, 0
      %p435 = por %p433, %p434
      %s437 = sadd.s32 %s436, 1
      %p440 = scmp.eq.s32.totalorder %s72, 1
      %p441 = scmp.ne.s32.totalorder %s436, %s438
      %p442 = scmp.eq.s32.totalorder %s72, 0
      %p443 = por %p441, %p442
      %p444 = scmp.ne.s32.totalorder %s436, %s438
      %p445 = scmp.eq.s32.totalorder %s77, 1
      %p446 = por %p444, %p445
      %p447 = scmp.ne.s32.totalorder %s438, %s439
      %p448 = scmp.eq.s32.totalorder %s77, 0
      %p449 = por %p447, %p448
      %p450 = scmp.ne.s32.totalorder %s438, %s439
      %p451 = scmp.eq.s32.totalorder %s78, 1
      %p452 = por %p450, %p451
      %p454 = scmp.ne.s32.totalorder %s439, %s453
      %p455 = scmp.eq.s32.totalorder %s78, 0
      %p456 = por %p454, %p455
      %s458 = sadd.s32 %s457, 1
      %p461 = scmp.eq.s32.totalorder %s72, 1
      %p462 = scmp.ne.s32.totalorder %s457, %s459
      %p463 = scmp.eq.s32.totalorder %s72, 0
      %p464 = por %p462, %p463
      %p465 = scmp.ne.s32.totalorder %s457, %s459
      %p466 = scmp.eq.s32.totalorder %s77, 1
      %p467 = por %p465, %p466
      %p468 = scmp.ne.s32.totalorder %s459, %s460
      %p469 = scmp.eq.s32.totalorder %s77, 0
      %p470 = por %p468, %p469
      %p471 = scmp.ne.s32.totalorder %s459, %s460
      %p472 = scmp.eq.s32.totalorder %s78, 1
      %p473 = por %p471, %p472
      %p475 = scmp.ne.s32.totalorder %s460, %s474
      %p476 = scmp.eq.s32.totalorder %s78, 0
      %p477 = por %p475, %p476
      %s479 = sadd.s32 %s478, 1
      %p482 = scmp.eq.s32.totalorder %s72, 1
      %p483 = scmp.ne.s32.totalorder %s478, %s480
      %p484 = scmp.eq.s32.totalorder %s72, 0
      %p485 = por %p483, %p484
      %p486 = scmp.ne.s32.totalorder %s478, %s480
      %p487 = scmp.eq.s32.totalorder %s77, 1
      %p488 = por %p486, %p487
      %p489 = scmp.ne.s32.totalorder %s480, %s481
      %p490 = scmp.eq.s32.totalorder %s77, 0
      %p491 = por %p489, %p490
      %p492 = scmp.ne.s32.totalorder %s480, %s481
      %p493 = scmp.eq.s32.totalorder %s78, 1
      %p494 = por %p492, %p493
      %p496 = scmp.ne.s32.totalorder %s481, %s495
      %p497 = scmp.eq.s32.totalorder %s78, 0
      %p498 = por %p496, %p497
      %s500 = sadd.s32 %s499, 1
      %p503 = scmp.eq.s32.totalorder %s72, 1
      %p504 = scmp.ne.s32.totalorder %s499, %s501
      %p505 = scmp.eq.s32.totalorder %s72, 0
      %p506 = por %p504, %p505
      %p507 = scmp.ne.s32.totalorder %s499, %s501
      %p508 = scmp.eq.s32.totalorder %s77, 1
      %p509 = por %p507, %p508
      %p510 = scmp.ne.s32.totalorder %s501, %s502
      %p511 = scmp.eq.s32.totalorder %s77, 0
      %p512 = por %p510, %p511
      %p513 = scmp.ne.s32.totalorder %s501, %s502
      %p514 = scmp.eq.s32.totalorder %s78, 1
      %p515 = por %p513, %p514
      %p517 = scmp.ne.s32.totalorder %s502, %s516
      %p518 = scmp.eq.s32.totalorder %s78, 0
      %p519 = por %p517, %p518
      %s521 = sadd.s32 %s520, 1
      %p524 = scmp.eq.s32.totalorder %s72, 1
      %p525 = scmp.ne.s32.totalorder %s520, %s522
      %p526 = scmp.eq.s32.totalorder %s72, 0
      %p527 = por %p525, %p526
      %p528 = scmp.ne.s32.totalorder %s520, %s522
      %p529 = scmp.eq.s32.totalorder %s77, 1
      %p530 = por %p528, %p529
      %p531 = scmp.ne.s32.totalorder %s522, %s523
      %p532 = scmp.eq.s32.totalorder %s77, 0
      %p533 = por %p531, %p532
      %p534 = scmp.ne.s32.totalorder %s522, %s523
      %p535 = scmp.eq.s32.totalorder %s78, 1
      %p536 = por %p534, %p535
      %p538 = scmp.ne.s32.totalorder %s523, %s537
      %p539 = scmp.eq.s32.totalorder %s78, 0
      %p540 = por %p538, %p539
      %s542 = sadd.s32 %s541, 1
      %p545 = scmp.eq.s32.totalorder %s72, 1
      %p546 = scmp.ne.s32.totalorder %s541, %s543
      %p547 = scmp.eq.s32.totalorder %s72, 0
      %p548 = por %p546, %p547
      %p549 = scmp.ne.s32.totalorder %s541, %s543
      %p550 = scmp.eq.s32.totalorder %s77, 1
      %p551 = por %p549, %p550
      %p552 = scmp.ne.s32.totalorder %s543, %s544
      %p553 = scmp.eq.s32.totalorder %s77, 0
      %p554 = por %p552, %p553
      %p555 = scmp.ne.s32.totalorder %s543, %s544
      %p556 = scmp.eq.s32.totalorder %s78, 1
      %p557 = por %p555, %p556
      %p559 = scmp.ne.s32.totalorder %s544, %s558
      %p560 = scmp.eq.s32.totalorder %s78, 0
      %p561 = por %p559, %p560
      %s563 = sadd.s32 %s562, 1
      %p566 = scmp.eq.s32.totalorder %s72, 1
      %p567 = scmp.ne.s32.totalorder %s562, %s564
      %p568 = scmp.eq.s32.totalorder %s72, 0
      %p569 = por %p567, %p568
      %p570 = scmp.ne.s32.totalorder %s562, %s564
      %p571 = scmp.eq.s32.totalorder %s77, 1
      %p572 = por %p570, %p571
      %p573 = scmp.ne.s32.totalorder %s564, %s565
      %p574 = scmp.eq.s32.totalorder %s77, 0
      %p575 = por %p573, %p574
      %p576 = scmp.ne.s32.totalorder %s564, %s565
      %p577 = scmp.eq.s32.totalorder %s78, 1
      %p578 = por %p576, %p577
      %p580 = scmp.ne.s32.totalorder %s565, %s579
      %p581 = scmp.eq.s32.totalorder %s78, 0
      %p582 = por %p580, %p581
      %s584 = sadd.s32 %s583, 1
      %p587 = scmp.eq.s32.totalorder %s72, 1
      %p588 = scmp.ne.s32.totalorder %s583, %s585
      %p589 = scmp.eq.s32.totalorder %s72, 0
      %p590 = por %p588, %p589
      %p591 = scmp.ne.s32.totalorder %s583, %s585
      %p592 = scmp.eq.s32.totalorder %s77, 1
      %p593 = por %p591, %p592
      %p594 = scmp.ne.s32.totalorder %s585, %s586
      %p595 = scmp.eq.s32.totalorder %s77, 0
      %p596 = por %p594, %p595
      %p597 = scmp.ne.s32.totalorder %s585, %s586
      %p598 = scmp.eq.s32.totalorder %s78, 1
      %p599 = por %p597, %p598
      %p601 = scmp.ne.s32.totalorder %s586, %s600
      %p602 = scmp.eq.s32.totalorder %s78, 0
      %p603 = por %p601, %p602
      %s605 = sadd.s32 %s604, 1
      %p608 = scmp.eq.s32.totalorder %s72, 1
      %p609 = scmp.ne.s32.totalorder %s604, %s606
      %p610 = scmp.eq.s32.totalorder %s72, 0
      %p611 = por %p609, %p610
      %p612 = scmp.ne.s32.totalorder %s604, %s606
      %p613 = scmp.eq.s32.totalorder %s77, 1
      %p614 = por %p612, %p613
      %p615 = scmp.ne.s32.totalorder %s606, %s607
      %p616 = scmp.eq.s32.totalorder %s77, 0
      %p617 = por %p615, %p616
      %p618 = scmp.ne.s32.totalorder %s606, %s607
      %p619 = scmp.eq.s32.totalorder %s78, 1
      %p620 = por %p618, %p619
      %p622 = scmp.ne.s32.totalorder %s607, %s621
      %p623 = scmp.eq.s32.totalorder %s78, 0
      %p624 = por %p622, %p623
      %s626 = sadd.s32 %s625, 1
      %p629 = scmp.eq.s32.totalorder %s72, 1
      %p630 = scmp.ne.s32.totalorder %s625, %s627
      %p631 = scmp.eq.s32.totalorder %s72, 0
      %p632 = por %p630, %p631
      %p633 = scmp.ne.s32.totalorder %s625, %s627
      %p634 = scmp.eq.s32.totalorder %s77, 1
      %p635 = por %p633, %p634
      %p636 = scmp.ne.s32.totalorder %s627, %s628
      %p637 = scmp.eq.s32.totalorder %s77, 0
      %p638 = por %p636, %p637
      %p639 = scmp.ne.s32.totalorder %s627, %s628
      %p640 = scmp.eq.s32.totalorder %s78, 1
      %p641 = por %p639, %p640
      %p643 = scmp.ne.s32.totalorder %s628, %s642
      %p644 = scmp.eq.s32.totalorder %s78, 0
      %p645 = por %p643, %p644
      %s647 = sadd.s32 %s646, 1
      %p650 = scmp.eq.s32.totalorder %s72, 1
      %p651 = scmp.ne.s32.totalorder %s646, %s648
      %p652 = scmp.eq.s32.totalorder %s72, 0
      %p653 = por %p651, %p652
      %p654 = scmp.ne.s32.totalorder %s646, %s648
      %p655 = scmp.eq.s32.totalorder %s77, 1
      %p656 = por %p654, %p655
      %p657 = scmp.ne.s32.totalorder %s648, %s649
      %p658 = scmp.eq.s32.totalorder %s77, 0
      %p659 = por %p657, %p658
      %p660 = scmp.ne.s32.totalorder %s648, %s649
      %p661 = scmp.eq.s32.totalorder %s78, 1
      %p662 = por %p660, %p661
      %p664 = scmp.ne.s32.totalorder %s649, %s663
      %p665 = scmp.eq.s32.totalorder %s78, 0
      %p666 = por %p664, %p665
      %s668 = sadd.s32 %s667, 1
      %p671 = scmp.eq.s32.totalorder %s72, 1
      %p672 = scmp.ne.s32.totalorder %s667, %s669
      %p673 = scmp.eq.s32.totalorder %s72, 0
      %p674 = por %p672, %p673
      %p675 = scmp.ne.s32.totalorder %s667, %s669
      %p676 = scmp.eq.s32.totalorder %s77, 1
      %p677 = por %p675, %p676
      %p678 = scmp.ne.s32.totalorder %s669, %s670
      %p679 = scmp.eq.s32.totalorder %s77, 0
      %p680 = por %p678, %p679
      %p681 = scmp.ne.s32.totalorder %s669, %s670
      %p682 = scmp.eq.s32.totalorder %s78, 1
      %p683 = por %p681, %p682
      %p685 = scmp.ne.s32.totalorder %s670, %s684
      %p686 = scmp.eq.s32.totalorder %s78, 0
      %p687 = por %p685, %p686
      %s688 = ssub.s32 %s72, %s79
      %p689 = scmp.eq.s32.totalorder %s688, 0
      %s691 = sadd.s32 %s690, 1
      %s692 = scalar_select %p689, %s690, %s691
      %p695 = pneg %p689
      %p696 = scmp.eq.s32.totalorder %s72, 1
      %p697 = por %p695, %p696
      %p698 = scmp.ne.s32.totalorder %s690, %s693
      %p699 = scmp.eq.s32.totalorder %s72, 0
      %p700 = por %p698, %p699
      %p701 = scmp.ne.s32.totalorder %s690, %s693
      %p702 = scmp.eq.s32.totalorder %s77, 1
      %p703 = por %p701, %p702
      %p704 = scmp.ne.s32.totalorder %s693, %s694
      %p705 = scmp.eq.s32.totalorder %s77, 0
      %p706 = por %p704, %p705
      %p707 = scmp.ne.s32.totalorder %s693, %s694
      %p708 = scmp.eq.s32.totalorder %s78, 1
      %p709 = por %p707, %p708
      %p711 = scmp.ne.s32.totalorder %s694, %s710
      %p712 = scmp.eq.s32.totalorder %s78, 0
      %p713 = por %p711, %p712
      %p714 = scmp.le.s32.totalorder 1, %s72
      %p715 = scmp.lt.s32.totalorder %s72, 3
      %p716 = pnand %p714, %p715
      %p717 = pneg %p716
      // Predicated region
      $region9: #{unet_attention_block.1} parent=5 // pred_check
        _
      $region10: #{unet_attention_block.1} parent=5 // pred_check_branch
        %719 = sbr.rel (%p716) target = $region12
      $region11: #{unet_attention_block.1} parent=5 // pred_region
        %s720 = ssub.s32 %s72, 1
        // Predicated region
        $region13: #{unet_attention_block.1} parent=11 // pred_check
          %p721 = pneg %p197
        $region14: #{unet_attention_block.1} parent=11 // pred_check_branch
          %723 = sbr.rel (%p721) target = $region16
        $region15: #{unet_attention_block.1} parent=11 // pred_region
          _
        $region16: #{unet_attention_block.1} parent=11 // pred_fallthru
          _
        // Predicated region
        $region17: #{unet_attention_block.1} parent=11 // pred_check
          %p724 = pneg %p218
        $region18: #{unet_attention_block.1} parent=11 // pred_check_branch
          %726 = sbr.rel (%p724) target = $region20
        $region19: #{unet_attention_block.1} parent=11 // pred_region
          _
        $region20: #{unet_attention_block.1} parent=11 // pred_fallthru
          _
        // Predicated region
        $region21: #{unet_attention_block.1} parent=11 // pred_check
          %p727 = pneg %p239
        $region22: #{unet_attention_block.1} parent=11 // pred_check_branch
          %729 = sbr.rel (%p727) target = $region24
        $region23: #{unet_attention_block.1} parent=11 // pred_region
          _
        $region24: #{unet_attention_block.1} parent=11 // pred_fallthru
          _
        // Predicated region
        $region25: #{unet_attention_block.1} parent=11 // pred_check
          %p730 = pneg %p260
        $region26: #{unet_attention_block.1} parent=11 // pred_check_branch
          %732 = sbr.rel (%p730) target = $region28
        $region27: #{unet_attention_block.1} parent=11 // pred_region
          _
        $region28: #{unet_attention_block.1} parent=11 // pred_fallthru
          _
        // Predicated region
        $region29: #{unet_attention_block.1} parent=11 // pred_check
          %p733 = pneg %p281
        $region30: #{unet_attention_block.1} parent=11 // pred_check_branch
          %735 = sbr.rel (%p733) target = $region32
        $region31: #{unet_attention_block.1} parent=11 // pred_region
          _
        $region32: #{unet_attention_block.1} parent=11 // pred_fallthru
          _
        // Predicated region
        $region33: #{unet_attention_block.1} parent=11 // pred_check
          %p736 = pneg %p302
        $region34: #{unet_attention_block.1} parent=11 // pred_check_branch
          %738 = sbr.rel (%p736) target = $region36
        $region35: #{unet_attention_block.1} parent=11 // pred_region
          _
        $region36: #{unet_attention_block.1} parent=11 // pred_fallthru
          _
        // Predicated region
        $region37: #{unet_attention_block.1} parent=11 // pred_check
          %p739 = pneg %p323
        $region38: #{unet_attention_block.1} parent=11 // pred_check_branch
          %741 = sbr.rel (%p739) target = $region40
        $region39: #{unet_attention_block.1} parent=11 // pred_region
          _
        $region40: #{unet_attention_block.1} parent=11 // pred_fallthru
          _
        // Predicated region
        $region41: #{unet_attention_block.1} parent=11 // pred_check
          %p742 = pneg %p344
        $region42: #{unet_attention_block.1} parent=11 // pred_check_branch
          %744 = sbr.rel (%p742) target = $region44
        $region43: #{unet_attention_block.1} parent=11 // pred_region
          _
        $region44: #{unet_attention_block.1} parent=11 // pred_fallthru
          _
        // Predicated region
        $region45: #{unet_attention_block.1} parent=11 // pred_check
          %p745 = pneg %p365
        $region46: #{unet_attention_block.1} parent=11 // pred_check_branch
          %747 = sbr.rel (%p745) target = $region48
        $region47: #{unet_attention_block.1} parent=11 // pred_region
          _
        $region48: #{unet_attention_block.1} parent=11 // pred_fallthru
          _
        // Predicated region
        $region49: #{unet_attention_block.1} parent=11 // pred_check
          %p748 = pneg %p386
        $region50: #{unet_attention_block.1} parent=11 // pred_check_branch
          %750 = sbr.rel (%p748) target = $region52
        $region51: #{unet_attention_block.1} parent=11 // pred_region
          _
        $region52: #{unet_attention_block.1} parent=11 // pred_fallthru
          _
        // Predicated region
        $region53: #{unet_attention_block.1} parent=11 // pred_check
          %p751 = pneg %p407
        $region54: #{unet_attention_block.1} parent=11 // pred_check_branch
          %753 = sbr.rel (%p751) target = $region56
        $region55: #{unet_attention_block.1} parent=11 // pred_region
          _
        $region56: #{unet_attention_block.1} parent=11 // pred_fallthru
          _
        // Predicated region
        $region57: #{unet_attention_block.1} parent=11 // pred_check
          %p754 = pneg %p428
        $region58: #{unet_attention_block.1} parent=11 // pred_check_branch
          %756 = sbr.rel (%p754) target = $region60
        $region59: #{unet_attention_block.1} parent=11 // pred_region
          _
        $region60: #{unet_attention_block.1} parent=11 // pred_fallthru
          _
        // Predicated region
        $region61: #{unet_attention_block.1} parent=11 // pred_check
          %p757 = pneg %p449
        $region62: #{unet_attention_block.1} parent=11 // pred_check_branch
          %759 = sbr.rel (%p757) target = $region64
        $region63: #{unet_attention_block.1} parent=11 // pred_region
          _
        $region64: #{unet_attention_block.1} parent=11 // pred_fallthru
          _
        // Predicated region
        $region65: #{unet_attention_block.1} parent=11 // pred_check
          %p760 = pneg %p470
        $region66: #{unet_attention_block.1} parent=11 // pred_check_branch
          %762 = sbr.rel (%p760) target = $region68
        $region67: #{unet_attention_block.1} parent=11 // pred_region
          _
        $region68: #{unet_attention_block.1} parent=11 // pred_fallthru
          _
        // Predicated region
        $region69: #{unet_attention_block.1} parent=11 // pred_check
          %p763 = pneg %p491
        $region70: #{unet_attention_block.1} parent=11 // pred_check_branch
          %765 = sbr.rel (%p763) target = $region72
        $region71: #{unet_attention_block.1} parent=11 // pred_region
          _
        $region72: #{unet_attention_block.1} parent=11 // pred_fallthru
          _
        // Predicated region
        $region73: #{unet_attention_block.1} parent=11 // pred_check
          %p766 = pneg %p512
        $region74: #{unet_attention_block.1} parent=11 // pred_check_branch
          %768 = sbr.rel (%p766) target = $region76
        $region75: #{unet_attention_block.1} parent=11 // pred_region
          _
        $region76: #{unet_attention_block.1} parent=11 // pred_fallthru
          _
        // Predicated region
        $region77: #{unet_attention_block.1} parent=11 // pred_check
          %p769 = pneg %p533
        $region78: #{unet_attention_block.1} parent=11 // pred_check_branch
          %771 = sbr.rel (%p769) target = $region80
        $region79: #{unet_attention_block.1} parent=11 // pred_region
          _
        $region80: #{unet_attention_block.1} parent=11 // pred_fallthru
          _
        // Predicated region
        $region81: #{unet_attention_block.1} parent=11 // pred_check
          %p772 = pneg %p554
        $region82: #{unet_attention_block.1} parent=11 // pred_check_branch
          %774 = sbr.rel (%p772) target = $region84
        $region83: #{unet_attention_block.1} parent=11 // pred_region
          _
        $region84: #{unet_attention_block.1} parent=11 // pred_fallthru
          _
        // Predicated region
        $region85: #{unet_attention_block.1} parent=11 // pred_check
          %p775 = pneg %p575
        $region86: #{unet_attention_block.1} parent=11 // pred_check_branch
          %777 = sbr.rel (%p775) target = $region88
        $region87: #{unet_attention_block.1} parent=11 // pred_region
          _
        $region88: #{unet_attention_block.1} parent=11 // pred_fallthru
          _
        // Predicated region
        $region89: #{unet_attention_block.1} parent=11 // pred_check
          %p778 = pneg %p596
        $region90: #{unet_attention_block.1} parent=11 // pred_check_branch
          %780 = sbr.rel (%p778) target = $region92
        $region91: #{unet_attention_block.1} parent=11 // pred_region
          _
        $region92: #{unet_attention_block.1} parent=11 // pred_fallthru
          _
        // Predicated region
        $region93: #{unet_attention_block.1} parent=11 // pred_check
          %p781 = pneg %p617
        $region94: #{unet_attention_block.1} parent=11 // pred_check_branch
          %783 = sbr.rel (%p781) target = $region96
        $region95: #{unet_attention_block.1} parent=11 // pred_region
          _
        $region96: #{unet_attention_block.1} parent=11 // pred_fallthru
          _
        // Predicated region
        $region97: #{unet_attention_block.1} parent=11 // pred_check
          %p784 = pneg %p638
        $region98: #{unet_attention_block.1} parent=11 // pred_check_branch
          %786 = sbr.rel (%p784) target = $region100
        $region99: #{unet_attention_block.1} parent=11 // pred_region
          _
        $region100: #{unet_attention_block.1} parent=11 // pred_fallthru
          _
        // Predicated region
        $region101: #{unet_attention_block.1} parent=11 // pred_check
          %p787 = pneg %p659
        $region102: #{unet_attention_block.1} parent=11 // pred_check_branch
          %789 = sbr.rel (%p787) target = $region104
        $region103: #{unet_attention_block.1} parent=11 // pred_region
          _
        $region104: #{unet_attention_block.1} parent=11 // pred_fallthru
          _
        // Predicated region
        $region105: #{unet_attention_block.1} parent=11 // pred_check
          %p790 = pneg %p680
        $region106: #{unet_attention_block.1} parent=11 // pred_check_branch
          %792 = sbr.rel (%p790) target = $region108
        $region107: #{unet_attention_block.1} parent=11 // pred_region
          _
        $region108: #{unet_attention_block.1} parent=11 // pred_fallthru
          _
      $region12: #{unet_attention_block.1} parent=5 // pred_fallthru
        _
      %p793 = scmp.lt.s32.totalorder %s72, 2
      // Predicated region
      $region109: #{unet_attention_block.1} parent=5 // pred_check
        %p794 = pneg %p793
      $region110: #{unet_attention_block.1} parent=5 // pred_check_branch
        %796 = sbr.rel (%p794) target = $region112
      $region111: #{unet_attention_block.1} parent=5 // pred_region
        // Predicated region
        $region113: #{unet_attention_block.1} parent=111 // pred_check
          %p797 = pneg %p92
        $region114: #{unet_attention_block.1} parent=111 // pred_check_branch
          %799 = sbr.rel (%p797) target = $region116
        $region115: #{unet_attention_block.1} parent=111 // pred_region
          %p800 = scmp.lt.s32.totalorder %s72, 1
          %s801 = scalar_select %p800, %s72, 1
          %s802 = smul.addr %s801, 32
          %s803 = smul.addr %s802, 8
          %s804 = scalar_lea.vmem %s1, %s803
        $region116: #{unet_attention_block.1} parent=111 // pred_fallthru
          _
        // Predicated region
        $region117: #{unet_attention_block.1} parent=111 // pred_check
          %p805 = pneg %p118
        $region118: #{unet_attention_block.1} parent=111 // pred_check_branch
          %807 = sbr.rel (%p805) target = $region120
        $region119: #{unet_attention_block.1} parent=111 // pred_region
          %p808 = scmp.lt.s32.totalorder %s72, 1
          %s809 = scalar_select %p808, %s72, 1
          %s810 = smul.addr %s809, 16
          %s811 = smul.addr %s810, 8
          %s812 = scalar_lea.vmem %s3, %s811
        $region120: #{unet_attention_block.1} parent=111 // pred_fallthru
          _
        // Predicated region
        $region121: #{unet_attention_block.1} parent=111 // pred_check
          %p813 = pneg %p144
        $region122: #{unet_attention_block.1} parent=111 // pred_check_branch
          %815 = sbr.rel (%p813) target = $region124
        $region123: #{unet_attention_block.1} parent=111 // pred_region
          %p816 = scmp.lt.s32.totalorder %s72, 1
          %s817 = scalar_select %p816, %s72, 1
          %s818 = scalar_lea.vmem %s5, %s817
        $region124: #{unet_attention_block.1} parent=111 // pred_fallthru
          _
        // Predicated region
        $region125: #{unet_attention_block.1} parent=111 // pred_check
          %p819 = pneg %p170
        $region126: #{unet_attention_block.1} parent=111 // pred_check_branch
          %821 = sbr.rel (%p819) target = $region128
        $region127: #{unet_attention_block.1} parent=111 // pred_region
          %p822 = scmp.lt.s32.totalorder %s72, 1
          %s823 = scalar_select %p822, %s72, 1
          %s824 = scalar_lea.vmem %s7, %s823
        $region128: #{unet_attention_block.1} parent=111 // pred_fallthru
          _
      $region112: #{unet_attention_block.1} parent=5 // pred_fallthru
        _
      %p825 = scmp.le.s32.totalorder 1, %s72
      %p826 = scmp.lt.s32.totalorder %s72, 3
      %p827 = pnand %p825, %p826
      %p828 = pneg %p827
      // Predicated region
      $region129: #{unet_attention_block.1} parent=5 // pred_check
        _
      $region130: #{unet_attention_block.1} parent=5 // pred_check_branch
        %830 = sbr.rel (%p827) target = $region132
      $region131: #{unet_attention_block.1} parent=5 // pred_region
        %s831 = ssub.s32 %s72, 1
        %p832 = scmp.lt.s32.totalorder %s77, 1
        %s833 = scalar_select %p832, %s77, 1
        %s834 = smul.addr %s833, 32
        %s835 = smul.addr %s834, 8
        %s836 = scalar_lea.vmem %s1, %s835
        %p837 = pneg %p98
        %p838 = pneg %p95
        %p839 = scmp.lt.s32.totalorder %s77, 1
        %s840 = scalar_select %p839, %s77, 1
        %s841 = smul.addr %s840, 16
        %s842 = smul.addr %s841, 8
        %s843 = scalar_lea.vmem %s3, %s842
        %p844 = pneg %p124
        %p845 = pneg %p121
        %p846 = scmp.lt.s32.totalorder %s77, 1
        %s847 = scalar_select %p846, %s77, 1
        %s848 = scalar_lea.vmem %s5, %s847
        %p849 = pneg %p150
        %p850 = pneg %p147
        %p851 = scmp.lt.s32.totalorder %s77, 1
        %s852 = scalar_select %p851, %s77, 1
        %s853 = scalar_lea.vmem %s7, %s852
        %p854 = pneg %p176
        %p855 = pneg %p173
        %p856 = pneg %p197
        %p857 = pneg %p194
        %p858 = pneg %p218
        %p859 = pneg %p215
        %p860 = pneg %p239
        %p861 = pneg %p236
        %p862 = pneg %p260
        %p863 = pneg %p257
        %p864 = pneg %p281
        %p865 = pneg %p278
        %p866 = pneg %p302
        %p867 = pneg %p299
        %p868 = pneg %p323
        %p869 = pneg %p320
        %p870 = pneg %p344
        %p871 = pneg %p341
        %p872 = pneg %p365
        %p873 = pneg %p362
        %p874 = pneg %p386
        %p875 = pneg %p383
        %p876 = pneg %p407
        %p877 = pneg %p404
        %p878 = pneg %p428
        %p879 = pneg %p425
        %p880 = pneg %p449
        %p881 = pneg %p446
        %p882 = pneg %p470
        %p883 = pneg %p467
        %p884 = pneg %p491
        %p885 = pneg %p488
        %p886 = pneg %p512
        %p887 = pneg %p509
        %p888 = pneg %p533
        %p889 = pneg %p530
        %p890 = pneg %p554
        %p891 = pneg %p551
        %p892 = pneg %p575
        %p893 = pneg %p572
        %p894 = pneg %p596
        %p895 = pneg %p593
        %p896 = pneg %p617
        %p897 = pneg %p614
        %p898 = pneg %p638
        %p899 = pneg %p635
        %p900 = pneg %p659
        %p901 = pneg %p656
        %p902 = pneg %p680
        %p903 = pneg %p677
        %p904 = pneg %p706
        %p905 = pneg %p703
        %s906 = sand.u32 %s693, 1
        %s907 = scalar_lea.sflag [#allocation8], %s906
        %s908 = sand.u32 %s693, 1
        %s909 = smul.addr %s908, 256
        %s910 = scalar_lea.vmem [#allocation7], %s909
        %p911 = scmp.lt.s32.totalorder %s77, 1
        %s912 = scalar_select %p911, %s77, 1
        %s913 = smul.addr %s912, 32
        %s914 = smul.addr %s913, 8
        %s915 = scalar_lea.vmem %s1, %s914
        %p916 = scmp.lt.s32.totalorder %s77, 1
        %s917 = scalar_select %p916, %s77, 1
        %s918 = smul.addr %s917, 16
        %s919 = smul.addr %s918, 8
        %s920 = scalar_lea.vmem %s3, %s919
        %p921 = scmp.lt.s32.totalorder %s77, 1
        %s922 = scalar_select %p921, %s77, 1
        %s923 = scalar_lea.vmem %s5, %s922
        %p924 = scmp.lt.s32.totalorder %s77, 1
        %s925 = scalar_select %p924, %s77, 1
        %s926 = scalar_lea.vmem %s7, %s925
        %v928 = vld [vmem:[%s915] sm:$0xff]
        %v929 = vld [vmem:[%s915 + $0x8] sm:$0xff]
        %v930 = vld [vmem:[%s915 + $0x10] sm:$0xff]
        %v931 = vld [vmem:[%s915 + $0x18] sm:$0xff]
        %v932 = vld [vmem:[%s915 + $0x20] sm:$0xff]
        %v933 = vld [vmem:[%s915 + $0x28] sm:$0xff]
        %v934 = vld [vmem:[%s915 + $0x30] sm:$0xff]
        %v935 = vld [vmem:[%s915 + $0x38] sm:$0xff]
        %v936 = vld [vmem:[%s915 + $0x40] sm:$0xff]
        %v937 = vld [vmem:[%s915 + $0x48] sm:$0xff]
        %v938 = vld [vmem:[%s915 + $0x50] sm:$0xff]
        %v939 = vld [vmem:[%s915 + $0x58] sm:$0xff]
        %v940 = vld [vmem:[%s915 + $0x60] sm:$0xff]
        %v941 = vld [vmem:[%s915 + $0x68] sm:$0xff]
        %v942 = vld [vmem:[%s915 + $0x70] sm:$0xff]
        %v943 = vld [vmem:[%s915 + $0x78] sm:$0xff]
        %v944 = vld [vmem:[%s915 + $0x80] sm:$0xff]
        %v945 = vld [vmem:[%s915 + $0x88] sm:$0xff]
        %v946 = vld [vmem:[%s915 + $0x90] sm:$0xff]
        %v947 = vld [vmem:[%s915 + $0x98] sm:$0xff]
        %v948 = vld [vmem:[%s915 + $0xa0] sm:$0xff]
        %v949 = vld [vmem:[%s915 + $0xa8] sm:$0xff]
        %v950 = vld [vmem:[%s915 + $0xb0] sm:$0xff]
        %v951 = vld [vmem:[%s915 + $0xb8] sm:$0xff]
        %v952 = vld [vmem:[%s915 + $0xc0] sm:$0xff]
        %v953 = vld [vmem:[%s915 + $0xc8] sm:$0xff]
        %v954 = vld [vmem:[%s915 + $0xd0] sm:$0xff]
        %v955 = vld [vmem:[%s915 + $0xd8] sm:$0xff]
        %v956 = vld [vmem:[%s915 + $0xe0] sm:$0xff]
        %v957 = vld [vmem:[%s915 + $0xe8] sm:$0xff]
        %v958 = vld [vmem:[%s915 + $0xf0] sm:$0xff]
        %v959 = vld [vmem:[%s915 + $0xf8] sm:$0xff]
        %v960 = vld [vmem:[%s920] sm:$0xff]
        %v961 = vld [vmem:[%s920 + $0x8] sm:$0xff]
        %v962 = vld [vmem:[%s920 + $0x10] sm:$0xff]
        %v963 = vld [vmem:[%s920 + $0x18] sm:$0xff]
        %v964 = vld [vmem:[%s920 + $0x20] sm:$0xff]
        %v965 = vld [vmem:[%s920 + $0x28] sm:$0xff]
        %v966 = vld [vmem:[%s920 + $0x30] sm:$0xff]
        %v967 = vld [vmem:[%s920 + $0x38] sm:$0xff]
        %v968 = vld [vmem:[%s920 + $0x40] sm:$0xff]
        %v969 = vld [vmem:[%s920 + $0x48] sm:$0xff]
        %v970 = vld [vmem:[%s920 + $0x50] sm:$0xff]
        %v971 = vld [vmem:[%s920 + $0x58] sm:$0xff]
        %v972 = vld [vmem:[%s920 + $0x60] sm:$0xff]
        %v973 = vld [vmem:[%s920 + $0x68] sm:$0xff]
        %v974 = vld [vmem:[%s920 + $0x70] sm:$0xff]
        %v975 = vld [vmem:[%s920 + $0x78] sm:$0xff]
        %v976 = vpack.c.bf16 %v961, %v960
        %v977 = vpack.c.bf16 %v963, %v962
        %v978 = vpack.c.bf16 %v965, %v964
        %v979 = vpack.c.bf16 %v967, %v966
        %v980 = vpack.c.bf16 %v969, %v968
        %v981 = vpack.c.bf16 %v971, %v970
        %v982 = vpack.c.bf16 %v973, %v972
        %v983 = vpack.c.bf16 %v975, %v974
        %p985 = scmp.lt.u32.totalorder 64, 8
        %p986 = pneg %p985
        // Predicated region
        $region133: #{unet_attention_block.1} parent=131 // pred_check
          _
        $region134: #{unet_attention_block.1} parent=131 // pred_check_branch
          %988 = sbr.rel (%p985) target = $region136
        $region135: #{unet_attention_block.1} parent=131 // pred_region
          %s1003 = sand.u32 64, 7
          %p1004 = scmp.eq.s32.totalorder %s1003, 0
          // Predicated region
          $region148: #{unet_attention_block.1} parent=135 // pred_check
            %p1005 = pneg %p1004
          $region149: #{unet_attention_block.1} parent=135 // pred_check_branch
            %1007 = sbr.rel (%p1005) target = $region151
          $region150: #{unet_attention_block.1} parent=135 // pred_region
            loop: start=0, step=1, limit=1
            $region152: #{unet_attention_block.1} parent=150 // loop_pre_header
              _
            $region153: #{unet_attention_block.1} parent=150 // loop_header
              %s1009 = sphi 0, %s1013
              %p1010 = scmp.ge.s32.totalorder %s1009, 1
              %s1014 = sphi %s57, %s57
              %s1015 = sphi [#allocation3], [#allocation3]
            $region154: #{unet_attention_block.1} parent=150 // loop_header_branch
              %1012 = sbr.rel (%p1010) target = $region158
            $region155: #{unet_attention_block.1} parent=150 // loop_body
              %v1016 = vld [vmem:[%s1014] sm:$0xff]
              %1017 = vst [vmem:[%s1015] sm:$0xff] %v1016
              %v1018 = vld [vmem:[%s1014 + $0x8] sm:$0xff]
              %1019 = vst [vmem:[%s1015 + $0x8] sm:$0xff] %v1018
              %v1020 = vld [vmem:[%s1014 + $0x10] sm:$0xff]
              %1021 = vst [vmem:[%s1015 + $0x10] sm:$0xff] %v1020
              %v1022 = vld [vmem:[%s1014 + $0x18] sm:$0xff]
              %1023 = vst [vmem:[%s1015 + $0x18] sm:$0xff] %v1022
              %v1024 = vld [vmem:[%s1014 + $0x20] sm:$0xff]
              %1025 = vst [vmem:[%s1015 + $0x20] sm:$0xff] %v1024
              %v1026 = vld [vmem:[%s1014 + $0x28] sm:$0xff]
              %1027 = vst [vmem:[%s1015 + $0x28] sm:$0xff] %v1026
              %v1028 = vld [vmem:[%s1014 + $0x30] sm:$0xff]
              %1029 = vst [vmem:[%s1015 + $0x30] sm:$0xff] %v1028
              %v1030 = vld [vmem:[%s1014 + $0x38] sm:$0xff]
              %1031 = vst [vmem:[%s1015 + $0x38] sm:$0xff] %v1030
            $region156: #{unet_attention_block.1} parent=150 // loop_footer
              %s1013 = sadd.s32 1, %s1009
            $region157: #{unet_attention_block.1} parent=150 // loop_footer_branch
              %1008 = sbr.rel target = $region153
            $region158: #{unet_attention_block.1} parent=150 // loop_exit
              _
          $region151: #{unet_attention_block.1} parent=135 // pred_fallthru
            _
          %p1032 = pneg %p1004
          // Predicated region
          $region159: #{unet_attention_block.1} parent=135 // pred_check
            _
          $region160: #{unet_attention_block.1} parent=135 // pred_check_branch
            %1034 = sbr.rel (%p1004) target = $region162
          $region161: #{unet_attention_block.1} parent=135 // pred_region
            %s1035 = sand.u32 64, 7
          $region162: #{unet_attention_block.1} parent=135 // pred_fallthru
            _
        $region136: #{unet_attention_block.1} parent=131 // pred_fallthru
          _
        // Predicated region
        $region137: #{unet_attention_block.1} parent=131 // pred_check
          %p989 = pneg %p985
        $region138: #{unet_attention_block.1} parent=131 // pred_check_branch
          %991 = sbr.rel (%p989) target = $region140
        $region139: #{unet_attention_block.1} parent=131 // pred_region
          %s992 = sshllo.u32 0, 64
          loop: start=0, step=1, limit=1
          $region141: #{unet_attention_block.1} parent=139 // loop_pre_header
            _
          $region142: #{unet_attention_block.1} parent=139 // loop_header
            %s994 = sphi 0, %s998
            %p995 = scmp.ge.s32.totalorder %s994, 1
            %s999 = sphi %s57, %s57
            %s1000 = sphi [#allocation3], [#allocation3]
          $region143: #{unet_attention_block.1} parent=139 // loop_header_branch
            %997 = sbr.rel (%p995) target = $region147
          $region144: #{unet_attention_block.1} parent=139 // loop_body
            %v1001 = vld [vmem:[%s999] sm:%s992]
            %1002 = vst [vmem:[%s1000] sm:%s992] %v1001
          $region145: #{unet_attention_block.1} parent=139 // loop_footer
            %s998 = sadd.s32 1, %s994
          $region146: #{unet_attention_block.1} parent=139 // loop_footer_branch
            %993 = sbr.rel target = $region142
          $region147: #{unet_attention_block.1} parent=139 // loop_exit
            _
        $region140: #{unet_attention_block.1} parent=131 // pred_fallthru
          _
        // Predicated region
        $region163: #{unet_attention_block.1} parent=131 // pred_check
          _
        $region164: #{unet_attention_block.1} parent=131 // pred_check_branch
          %1038 = sbr.rel (0) target = $region166
        $region165: #{unet_attention_block.1} parent=131 // pred_region
          %1039 = vsyncadd [#allocation6], 1024
        $region166: #{unet_attention_block.1} parent=131 // pred_fallthru
          _
        %s1040 = scalar_lea.sflag [#allocation6], 2
        %p1042 = scmp.lt.u32.totalorder 64, 8
        %p1043 = pneg %p1042
        // Predicated region
        $region167: #{unet_attention_block.1} parent=131 // pred_check
          _
        $region168: #{unet_attention_block.1} parent=131 // pred_check_branch
          %1045 = sbr.rel (%p1042) target = $region170
        $region169: #{unet_attention_block.1} parent=131 // pred_region
          %s1060 = sand.u32 64, 7
          %p1061 = scmp.eq.s32.totalorder %s1060, 0
          // Predicated region
          $region182: #{unet_attention_block.1} parent=169 // pred_check
            %p1062 = pneg %p1061
          $region183: #{unet_attention_block.1} parent=169 // pred_check_branch
            %1064 = sbr.rel (%p1062) target = $region185
          $region184: #{unet_attention_block.1} parent=169 // pred_region
            loop: start=0, step=1, limit=1
            $region186: #{unet_attention_block.1} parent=184 // loop_pre_header
              _
            $region187: #{unet_attention_block.1} parent=184 // loop_header
              %s1066 = sphi 0, %s1070
              %p1067 = scmp.ge.s32.totalorder %s1066, 1
              %s1071 = sphi %s59, %s59
              %s1072 = sphi [#allocation4], [#allocation4]
            $region188: #{unet_attention_block.1} parent=184 // loop_header_branch
              %1069 = sbr.rel (%p1067) target = $region192
            $region189: #{unet_attention_block.1} parent=184 // loop_body
              %v1073 = vld [vmem:[%s1071] sm:$0xff]
              %1074 = vst [vmem:[%s1072] sm:$0xff] %v1073
              %v1075 = vld [vmem:[%s1071 + $0x8] sm:$0xff]
              %1076 = vst [vmem:[%s1072 + $0x8] sm:$0xff] %v1075
              %v1077 = vld [vmem:[%s1071 + $0x10] sm:$0xff]
              %1078 = vst [vmem:[%s1072 + $0x10] sm:$0xff] %v1077
              %v1079 = vld [vmem:[%s1071 + $0x18] sm:$0xff]
              %1080 = vst [vmem:[%s1072 + $0x18] sm:$0xff] %v1079
              %v1081 = vld [vmem:[%s1071 + $0x20] sm:$0xff]
              %1082 = vst [vmem:[%s1072 + $0x20] sm:$0xff] %v1081
              %v1083 = vld [vmem:[%s1071 + $0x28] sm:$0xff]
              %1084 = vst [vmem:[%s1072 + $0x28] sm:$0xff] %v1083
              %v1085 = vld [vmem:[%s1071 + $0x30] sm:$0xff]
              %1086 = vst [vmem:[%s1072 + $0x30] sm:$0xff] %v1085
              %v1087 = vld [vmem:[%s1071 + $0x38] sm:$0xff]
              %1088 = vst [vmem:[%s1072 + $0x38] sm:$0xff] %v1087
            $region190: #{unet_attention_block.1} parent=184 // loop_footer
              %s1070 = sadd.s32 1, %s1066
            $region191: #{unet_attention_block.1} parent=184 // loop_footer_branch
              %1065 = sbr.rel target = $region187
            $region192: #{unet_attention_block.1} parent=184 // loop_exit
              _
          $region185: #{unet_attention_block.1} parent=169 // pred_fallthru
            _
          %p1089 = pneg %p1061
          // Predicated region
          $region193: #{unet_attention_block.1} parent=169 // pred_check
            _
          $region194: #{unet_attention_block.1} parent=169 // pred_check_branch
            %1091 = sbr.rel (%p1061) target = $region196
          $region195: #{unet_attention_block.1} parent=169 // pred_region
            %s1092 = sand.u32 64, 7
          $region196: #{unet_attention_block.1} parent=169 // pred_fallthru
            _
        $region170: #{unet_attention_block.1} parent=131 // pred_fallthru
          _
        // Predicated region
        $region171: #{unet_attention_block.1} parent=131 // pred_check
          %p1046 = pneg %p1042
        $region172: #{unet_attention_block.1} parent=131 // pred_check_branch
          %1048 = sbr.rel (%p1046) target = $region174
        $region173: #{unet_attention_block.1} parent=131 // pred_region
          %s1049 = sshllo.u32 0, 64
          loop: start=0, step=1, limit=1
          $region175: #{unet_attention_block.1} parent=173 // loop_pre_header
            _
          $region176: #{unet_attention_block.1} parent=173 // loop_header
            %s1051 = sphi 0, %s1055
            %p1052 = scmp.ge.s32.totalorder %s1051, 1
            %s1056 = sphi %s59, %s59
            %s1057 = sphi [#allocation4], [#allocation4]
          $region177: #{unet_attention_block.1} parent=173 // loop_header_branch
            %1054 = sbr.rel (%p1052) target = $region181
          $region178: #{unet_attention_block.1} parent=173 // loop_body
            %v1058 = vld [vmem:[%s1056] sm:%s1049]
            %1059 = vst [vmem:[%s1057] sm:%s1049] %v1058
          $region179: #{unet_attention_block.1} parent=173 // loop_footer
            %s1055 = sadd.s32 1, %s1051
          $region180: #{unet_attention_block.1} parent=173 // loop_footer_branch
            %1050 = sbr.rel target = $region176
          $region181: #{unet_attention_block.1} parent=173 // loop_exit
            _
        $region174: #{unet_attention_block.1} parent=131 // pred_fallthru
          _
        // Predicated region
        $region197: #{unet_attention_block.1} parent=131 // pred_check
          _
        $region198: #{unet_attention_block.1} parent=131 // pred_check_branch
          %1095 = sbr.rel (0) target = $region200
        $region199: #{unet_attention_block.1} parent=131 // pred_region
          %1096 = vsyncadd %s1040, 1024
        $region200: #{unet_attention_block.1} parent=131 // pred_fallthru
          _
        %s1097 = scalar_lea.sflag [#allocation6], 4
        %p1099 = scmp.lt.u32.totalorder 64, 8
        %p1100 = pneg %p1099
        // Predicated region
        $region201: #{unet_attention_block.1} parent=131 // pred_check
          _
        $region202: #{unet_attention_block.1} parent=131 // pred_check_branch
          %1102 = sbr.rel (%p1099) target = $region204
        $region203: #{unet_attention_block.1} parent=131 // pred_region
          %s1117 = sand.u32 64, 7
          %p1118 = scmp.eq.s32.totalorder %s1117, 0
          // Predicated region
          $region216: #{unet_attention_block.1} parent=203 // pred_check
            %p1119 = pneg %p1118
          $region217: #{unet_attention_block.1} parent=203 // pred_check_branch
            %1121 = sbr.rel (%p1119) target = $region219
          $region218: #{unet_attention_block.1} parent=203 // pred_region
            loop: start=0, step=1, limit=1
            $region220: #{unet_attention_block.1} parent=218 // loop_pre_header
              _
            $region221: #{unet_attention_block.1} parent=218 // loop_header
              %s1123 = sphi 0, %s1127
              %p1124 = scmp.ge.s32.totalorder %s1123, 1
              %s1128 = sphi %s61, %s61
              %s1129 = sphi [#allocation5], [#allocation5]
            $region222: #{unet_attention_block.1} parent=218 // loop_header_branch
              %1126 = sbr.rel (%p1124) target = $region226
            $region223: #{unet_attention_block.1} parent=218 // loop_body
              %v1130 = vld [vmem:[%s1128] sm:$0xff]
              %1131 = vst [vmem:[%s1129] sm:$0xff] %v1130
              %v1132 = vld [vmem:[%s1128 + $0x8] sm:$0xff]
              %1133 = vst [vmem:[%s1129 + $0x8] sm:$0xff] %v1132
              %v1134 = vld [vmem:[%s1128 + $0x10] sm:$0xff]
              %1135 = vst [vmem:[%s1129 + $0x10] sm:$0xff] %v1134
              %v1136 = vld [vmem:[%s1128 + $0x18] sm:$0xff]
              %1137 = vst [vmem:[%s1129 + $0x18] sm:$0xff] %v1136
              %v1138 = vld [vmem:[%s1128 + $0x20] sm:$0xff]
              %1139 = vst [vmem:[%s1129 + $0x20] sm:$0xff] %v1138
              %v1140 = vld [vmem:[%s1128 + $0x28] sm:$0xff]
              %1141 = vst [vmem:[%s1129 + $0x28] sm:$0xff] %v1140
              %v1142 = vld [vmem:[%s1128 + $0x30] sm:$0xff]
              %1143 = vst [vmem:[%s1129 + $0x30] sm:$0xff] %v1142
              %v1144 = vld [vmem:[%s1128 + $0x38] sm:$0xff]
              %1145 = vst [vmem:[%s1129 + $0x38] sm:$0xff] %v1144
            $region224: #{unet_attention_block.1} parent=218 // loop_footer
              %s1127 = sadd.s32 1, %s1123
            $region225: #{unet_attention_block.1} parent=218 // loop_footer_branch
              %1122 = sbr.rel target = $region221
            $region226: #{unet_attention_block.1} parent=218 // loop_exit
              _
          $region219: #{unet_attention_block.1} parent=203 // pred_fallthru
            _
          %p1146 = pneg %p1118
          // Predicated region
          $region227: #{unet_attention_block.1} parent=203 // pred_check
            _
          $region228: #{unet_attention_block.1} parent=203 // pred_check_branch
            %1148 = sbr.rel (%p1118) target = $region230
          $region229: #{unet_attention_block.1} parent=203 // pred_region
            %s1149 = sand.u32 64, 7
          $region230: #{unet_attention_block.1} parent=203 // pred_fallthru
            _
        $region204: #{unet_attention_block.1} parent=131 // pred_fallthru
          _
        // Predicated region
        $region205: #{unet_attention_block.1} parent=131 // pred_check
          %p1103 = pneg %p1099
        $region206: #{unet_attention_block.1} parent=131 // pred_check_branch
          %1105 = sbr.rel (%p1103) target = $region208
        $region207: #{unet_attention_block.1} parent=131 // pred_region
          %s1106 = sshllo.u32 0, 64
          loop: start=0, step=1, limit=1
          $region209: #{unet_attention_block.1} parent=207 // loop_pre_header
            _
          $region210: #{unet_attention_block.1} parent=207 // loop_header
            %s1108 = sphi 0, %s1112
            %p1109 = scmp.ge.s32.totalorder %s1108, 1
            %s1113 = sphi %s61, %s61
            %s1114 = sphi [#allocation5], [#allocation5]
          $region211: #{unet_attention_block.1} parent=207 // loop_header_branch
            %1111 = sbr.rel (%p1109) target = $region215
          $region212: #{unet_attention_block.1} parent=207 // loop_body
            %v1115 = vld [vmem:[%s1113] sm:%s1106]
            %1116 = vst [vmem:[%s1114] sm:%s1106] %v1115
          $region213: #{unet_attention_block.1} parent=207 // loop_footer
            %s1112 = sadd.s32 1, %s1108
          $region214: #{unet_attention_block.1} parent=207 // loop_footer_branch
            %1107 = sbr.rel target = $region210
          $region215: #{unet_attention_block.1} parent=207 // loop_exit
            _
        $region208: #{unet_attention_block.1} parent=131 // pred_fallthru
          _
        // Predicated region
        $region231: #{unet_attention_block.1} parent=131 // pred_check
          _
        $region232: #{unet_attention_block.1} parent=131 // pred_check_branch
          %1152 = sbr.rel (0) target = $region234
        $region233: #{unet_attention_block.1} parent=131 // pred_region
          %1153 = vsyncadd %s1097, 1024
        $region234: #{unet_attention_block.1} parent=131 // pred_fallthru
          _
        %v1154 = vld [vmem:[%s923] sm:$0x1]
        %v1156 = vlaneseq
        %v1157 = vshrl.u32 %v1156, 7
        %v1158 = vsub.s32 0, %v1157
        %v1159 = vrot.slane %v1154, %v1158
        %v1161 = vmul.f32 %v928, %v1159
        %v1162 = vmul.f32 %v929, %v1159
        %v1163 = vmul.f32 %v930, %v1159
        %v1164 = vmul.f32 %v931, %v1159
        %v1165 = vmul.f32 %v932, %v1159
        %v1166 = vmul.f32 %v933, %v1159
        %v1167 = vmul.f32 %v934, %v1159
        %v1168 = vmul.f32 %v935, %v1159
        %v1169 = vmul.f32 %v936, %v1159
        %v1170 = vmul.f32 %v937, %v1159
        %v1171 = vmul.f32 %v938, %v1159
        %v1172 = vmul.f32 %v939, %v1159
        %v1173 = vmul.f32 %v940, %v1159
        %v1174 = vmul.f32 %v941, %v1159
        %v1175 = vmul.f32 %v942, %v1159
        %v1176 = vmul.f32 %v943, %v1159
        %v1177 = vmul.f32 %v944, %v1159
        %v1178 = vmul.f32 %v945, %v1159
        %v1179 = vmul.f32 %v946, %v1159
        %v1180 = vmul.f32 %v947, %v1159
        %v1181 = vmul.f32 %v948, %v1159
        %v1182 = vmul.f32 %v949, %v1159
        %v1183 = vmul.f32 %v950, %v1159
        %v1184 = vmul.f32 %v951, %v1159
        %v1185 = vmul.f32 %v952, %v1159
        %v1186 = vmul.f32 %v953, %v1159
        %v1187 = vmul.f32 %v954, %v1159
        %v1188 = vmul.f32 %v955, %v1159
        %v1189 = vmul.f32 %v956, %v1159
        %v1190 = vmul.f32 %v957, %v1159
        %v1191 = vmul.f32 %v958, %v1159
        %v1192 = vmul.f32 %v959, %v1159
        %v1193 = vld [vmem:[%s926] sm:$0x1]
        %v1195 = vlaneseq
        %v1196 = vshrl.u32 %v1195, 7
        %v1197 = vsub.s32 0, %v1196
        %v1198 = vrot.slane %v1193, %v1197
        %v1200 = vadd.f32 %v1161, %v1198
        %v1201 = vadd.f32 %v1162, %v1198
        %v1202 = vadd.f32 %v1163, %v1198
        %v1203 = vadd.f32 %v1164, %v1198
        %v1204 = vadd.f32 %v1165, %v1198
        %v1205 = vadd.f32 %v1166, %v1198
        %v1206 = vadd.f32 %v1167, %v1198
        %v1207 = vadd.f32 %v1168, %v1198
        %v1208 = vadd.f32 %v1169, %v1198
        %v1209 = vadd.f32 %v1170, %v1198
        %v1210 = vadd.f32 %v1171, %v1198
        %v1211 = vadd.f32 %v1172, %v1198
        %v1212 = vadd.f32 %v1173, %v1198
        %v1213 = vadd.f32 %v1174, %v1198
        %v1214 = vadd.f32 %v1175, %v1198
        %v1215 = vadd.f32 %v1176, %v1198
        %v1216 = vadd.f32 %v1177, %v1198
        %v1217 = vadd.f32 %v1178, %v1198
        %v1218 = vadd.f32 %v1179, %v1198
        %v1219 = vadd.f32 %v1180, %v1198
        %v1220 = vadd.f32 %v1181, %v1198
        %v1221 = vadd.f32 %v1182, %v1198
        %v1222 = vadd.f32 %v1183, %v1198
        %v1223 = vadd.f32 %v1184, %v1198
        %v1224 = vadd.f32 %v1185, %v1198
        %v1225 = vadd.f32 %v1186, %v1198
        %v1226 = vadd.f32 %v1187, %v1198
        %v1227 = vadd.f32 %v1188, %v1198
        %v1228 = vadd.f32 %v1189, %v1198
        %v1229 = vadd.f32 %v1190, %v1198
        %v1230 = vadd.f32 %v1191, %v1198
        %v1231 = vadd.f32 %v1192, %v1198
        %v1232 = vpack.c.bf16 %v1201, %v1200
        %v1233 = vpack.c.bf16 %v1203, %v1202
        %v1234 = vpack.c.bf16 %v1205, %v1204
        %v1235 = vpack.c.bf16 %v1207, %v1206
        %v1236 = vpack.c.bf16 %v1209, %v1208
        %v1237 = vpack.c.bf16 %v1211, %v1210
        %v1238 = vpack.c.bf16 %v1213, %v1212
        %v1239 = vpack.c.bf16 %v1215, %v1214
        %v1240 = vpack.c.bf16 %v1217, %v1216
        %v1241 = vpack.c.bf16 %v1219, %v1218
        %v1242 = vpack.c.bf16 %v1221, %v1220
        %v1243 = vpack.c.bf16 %v1223, %v1222
        %v1244 = vpack.c.bf16 %v1225, %v1224
        %v1245 = vpack.c.bf16 %v1227, %v1226
        %v1246 = vpack.c.bf16 %v1229, %v1228
        %v1247 = vpack.c.bf16 %v1231, %v1230
        %v1248 = vld [vmem:[%s11] sm:$0xf]
        %v1249 = vld [vmem:[%s11 + $0x4] sm:$0xf]
        %v1250 = vld [vmem:[%s11 + $0x8] sm:$0xf]
        %v1251 = vld [vmem:[%s11 + $0xc] sm:$0xf]
        %v1252 = vld [vmem:[%s11 + $0x10] sm:$0xf]
        %v1253 = vld [vmem:[%s11 + $0x14] sm:$0xf]
        %v1254 = vld [vmem:[%s11 + $0x18] sm:$0xf]
        %v1255 = vld [vmem:[%s11 + $0x1c] sm:$0xf]
        %v1256 = vld [vmem:[%s11 + $0x20] sm:$0xf]
        %v1257 = vld [vmem:[%s11 + $0x24] sm:$0xf]
        %v1258 = vld [vmem:[%s11 + $0x28] sm:$0xf]
        %v1259 = vld [vmem:[%s11 + $0x2c] sm:$0xf]
        %v1260 = vld [vmem:[%s11 + $0x30] sm:$0xf]
        %v1261 = vld [vmem:[%s11 + $0x34] sm:$0xf]
        %v1262 = vld [vmem:[%s11 + $0x38] sm:$0xf]
        %v1263 = vld [vmem:[%s11 + $0x3c] sm:$0xf]
        %v1264 = vld [vmem:[%s13] sm:$0x1]
        %v1266 = vlaneseq
        %v1267 = vshrl.u32 %v1266, 7
        %v1268 = vsub.s32 0, %v1267
        %v1269 = vrot.slane %v1264, %v1268
        %v1287 = vunpack.c.l.b16 %v1248
        %v1288 = vunpack.c.l.b16 %v1249
        %v1289 = vunpack.c.l.b16 %v1250
        %v1290 = vunpack.c.l.b16 %v1251
        %v1291 = vunpack.c.l.b16 %v1252
        %v1292 = vunpack.c.l.b16 %v1253
        %v1293 = vunpack.c.l.b16 %v1254
        %v1294 = vunpack.c.l.b16 %v1255
        %v1295 = vunpack.c.l.b16 %v1256
        %v1296 = vunpack.c.l.b16 %v1257
        %v1297 = vunpack.c.l.b16 %v1258
        %v1298 = vunpack.c.l.b16 %v1259
        %v1299 = vunpack.c.l.b16 %v1260
        %v1300 = vunpack.c.l.b16 %v1261
        %v1301 = vunpack.c.l.b16 %v1262
        %v1302 = vunpack.c.l.b16 %v1263
        %v1303 = vpack.c.b16 %v1288, %v1287
        %v1304 = vpack.c.b16 %v1290, %v1289
        %v1305 = vpack.c.b16 %v1292, %v1291
        %v1306 = vpack.c.b16 %v1294, %v1293
        %v1307 = vpack.c.b16 %v1296, %v1295
        %v1308 = vpack.c.b16 %v1298, %v1297
        %v1309 = vpack.c.b16 %v1300, %v1299
        %v1310 = vpack.c.b16 %v1302, %v1301
        %1319 = vmatprep.subr.bf16.mxu0 0
        %1320 = vmatpush1.bf16.msra.mxu0 %v1303
        %1321 = vmatprep.subr.bf16.mxu0 0
        %1322 = vmatpush1.bf16.msra.mxu0 %v1304
        %1323 = vmatprep.subr.bf16.mxu0 0
        %1324 = vmatpush1.bf16.msra.mxu0 %v1305
        %1325 = vmatprep.subr.bf16.mxu0 0
        %1326 = vmatpush1.bf16.msra.mxu0 %v1306
        %1327 = vmatprep.subr.bf16.mxu0 0
        %1328 = vmatpush1.bf16.msra.mxu0 %v1307
        %1329 = vmatprep.subr.bf16.mxu0 0
        %1330 = vmatpush1.bf16.msra.mxu0 %v1308
        %1331 = vmatprep.subr.bf16.mxu0 0
        %1332 = vmatpush1.bf16.msra.mxu0 %v1309
        %1333 = vmatprep.subr.bf16.mxu0 0
        %1334 = vmatpush1.bf16.msra.mxu0 %v1310
        %1335 = vmatprep.subr.bf16.mxu0 0
        %1336 = vmatpush1.bf16.msra.mxu0 0
        %1337 = vmatprep.subr.bf16.mxu0 0
        %1338 = vmatpush1.bf16.msra.mxu0 0
        %1339 = vmatprep.subr.bf16.mxu0 0
        %1340 = vmatpush1.bf16.msra.mxu0 0
        %1341 = vmatprep.subr.bf16.mxu0 0
        %1342 = vmatpush1.bf16.msra.mxu0 0
        %1343 = vmatprep.subr.bf16.mxu0 0
        %1344 = vmatpush1.bf16.msra.mxu0 0
        %1345 = vmatprep.subr.bf16.mxu0 0
        %1346 = vmatpush1.bf16.msra.mxu0 0
        %1347 = vmatprep.subr.bf16.mxu0 0
        %1348 = vmatpush1.bf16.msra.mxu0 0
        %1349 = vmatprep.subr.bf16.mxu0 0
        %1350 = vmatpush1.bf16.msra.mxu0 0
        %1351 = vmatprep.mubr.bf16.mxu0 0
        %1352 = vmatmul.mubr.bf16.gmra.mrb[0].mxu0 %v1232
        %v1353 = vpop.f32.mrb[0].mxu0
        %v1354 = vadd.f32 %v1269, %v1353
        %v1355 = vpop.f32.mrb[0].mxu0
        %v1356 = vpop.f32.mrb[0].mxu0
        %v1357 = vadd.f32 %v1269, %v1356
        %v1358 = vpop.f32.mrb[0].mxu0
        %1359 = vmatprep.mubr.bf16.mxu0 0
        %1360 = vmatmul.mubr.bf16.gmra.mrb[0].mxu0 %v1233
        %v1361 = vpop.f32.mrb[0].mxu0
        %v1362 = vadd.f32 %v1269, %v1361
        %v1363 = vpop.f32.mrb[0].mxu0
        %v1364 = vpop.f32.mrb[0].mxu0
        %v1365 = vadd.f32 %v1269, %v1364
        %v1366 = vpop.f32.mrb[0].mxu0
        %1367 = vmatprep.mubr.bf16.mxu0 0
        %1368 = vmatmul.mubr.bf16.gmra.mrb[0].mxu0 %v1234
        %v1369 = vpop.f32.mrb[0].mxu0
        %v1370 = vadd.f32 %v1269, %v1369
        %v1371 = vpop.f32.mrb[0].mxu0
        %v1372 = vpop.f32.mrb[0].mxu0
        %v1373 = vadd.f32 %v1269, %v1372
        %v1374 = vpop.f32.mrb[0].mxu0
        %1375 = vmatprep.mubr.bf16.mxu0 0
        %1376 = vmatmul.mubr.bf16.gmra.mrb[0].mxu0 %v1235
        %v1377 = vpop.f32.mrb[0].mxu0
        %v1378 = vadd.f32 %v1269, %v1377
        %v1379 = vpop.f32.mrb[0].mxu0
        %v1380 = vpop.f32.mrb[0].mxu0
        %v1381 = vadd.f32 %v1269, %v1380
        %v1382 = vpop.f32.mrb[0].mxu0
        %1383 = vmatprep.mubr.bf16.mxu0 0
        %1384 = vmatmul.mubr.bf16.gmra.mrb[0].mxu0 %v1236
        %v1385 = vpop.f32.mrb[0].mxu0
        %v1386 = vadd.f32 %v1269, %v1385
        %v1387 = vpop.f32.mrb[0].mxu0
        %v1388 = vpop.f32.mrb[0].mxu0
        %v1389 = vadd.f32 %v1269, %v1388
        %v1390 = vpop.f32.mrb[0].mxu0
        %1391 = vmatprep.mubr.bf16.mxu0 0
        %1392 = vmatmul.mubr.bf16.gmra.mrb[0].mxu0 %v1237
        %v1393 = vpop.f32.mrb[0].mxu0
        %v1394 = vadd.f32 %v1269, %v1393
        %v1395 = vpop.f32.mrb[0].mxu0
        %v1396 = vpop.f32.mrb[0].mxu0
        %v1397 = vadd.f32 %v1269, %v1396
        %v1398 = vpop.f32.mrb[0].mxu0
        %1399 = vmatprep.mubr.bf16.mxu0 0
        %1400 = vmatmul.mubr.bf16.gmra.mrb[0].mxu0 %v1238
        %v1401 = vpop.f32.mrb[0].mxu0
        %v1402 = vadd.f32 %v1269, %v1401
        %v1403 = vpop.f32.mrb[0].mxu0
        %v1404 = vpop.f32.mrb[0].mxu0
        %v1405 = vadd.f32 %v1269, %v1404
        %v1406 = vpop.f32.mrb[0].mxu0
        %1407 = vmatprep.mubr.bf16.mxu0 0
        %1408 = vmatmul.mubr.bf16.gmra.mrb[0].mxu0 %v1239
        %v1409 = vpop.f32.mrb[0].mxu0
        %v1410 = vadd.f32 %v1269, %v1409
        %v1411 = vpop.f32.mrb[0].mxu0
        %v1412 = vpop.f32.mrb[0].mxu0
        %v1413 = vadd.f32 %v1269, %v1412
        %v1414 = vpop.f32.mrb[0].mxu0
        %1415 = vmatprep.mubr.bf16.mxu0 0
        %1416 = vmatmul.mubr.bf16.gmra.mrb[0].mxu0 %v1240
        %v1417 = vpop.f32.mrb[0].mxu0
        %v1418 = vadd.f32 %v1269, %v1417
        %v1419 = vpop.f32.mrb[0].mxu0
        %v1420 = vpop.f32.mrb[0].mxu0
        %v1421 = vadd.f32 %v1269, %v1420
        %v1422 = vpop.f32.mrb[0].mxu0
        %1423 = vmatprep.mubr.bf16.mxu0 0
        %1424 = vmatmul.mubr.bf16.gmra.mrb[0].mxu0 %v1241
        %v1425 = vpop.f32.mrb[0].mxu0
        %v1426 = vadd.f32 %v1269, %v1425
        %v1427 = vpop.f32.mrb[0].mxu0
        %v1428 = vpop.f32.mrb[0].mxu0
        %v1429 = vadd.f32 %v1269, %v1428
        %v1430 = vpop.f32.mrb[0].mxu0
        %1431 = vmatprep.mubr.bf16.mxu0 0
        %1432 = vmatmul.mubr.bf16.gmra.mrb[0].mxu0 %v1242
        %v1433 = vpop.f32.mrb[0].mxu0
        %v1434 = vadd.f32 %v1269, %v1433
        %v1435 = vpop.f32.mrb[0].mxu0
        %v1436 = vpop.f32.mrb[0].mxu0
        %v1437 = vadd.f32 %v1269, %v1436
        %v1438 = vpop.f32.mrb[0].mxu0
        %1439 = vmatprep.mubr.bf16.mxu0 0
        %1440 = vmatmul.mubr.bf16.gmra.mrb[0].mxu0 %v1243
        %v1441 = vpop.f32.mrb[0].mxu0
        %v1442 = vadd.f32 %v1269, %v1441
        %v1443 = vpop.f32.mrb[0].mxu0
        %v1444 = vpop.f32.mrb[0].mxu0
        %v1445 = vadd.f32 %v1269, %v1444
        %v1446 = vpop.f32.mrb[0].mxu0
        %1447 = vmatprep.mubr.bf16.mxu0 0
        %1448 = vmatmul.mubr.bf16.gmra.mrb[0].mxu0 %v1244
        %v1449 = vpop.f32.mrb[0].mxu0
        %v1450 = vadd.f32 %v1269, %v1449
        %v1451 = vpop.f32.mrb[0].mxu0
        %v1452 = vpop.f32.mrb[0].mxu0
        %v1453 = vadd.f32 %v1269, %v1452
        %v1454 = vpop.f32.mrb[0].mxu0
        %1455 = vmatprep.mubr.bf16.mxu0 0
        %1456 = vmatmul.mubr.bf16.gmra.mrb[0].mxu0 %v1245
        %v1457 = vpop.f32.mrb[0].mxu0
        %v1458 = vadd.f32 %v1269, %v1457
        %v1459 = vpop.f32.mrb[0].mxu0
        %v1460 = vpop.f32.mrb[0].mxu0
        %v1461 = vadd.f32 %v1269, %v1460
        %v1462 = vpop.f32.mrb[0].mxu0
        %1463 = vmatprep.mubr.bf16.mxu0 0
        %1464 = vmatmul.mubr.bf16.gmra.mrb[0].mxu0 %v1246
        %v1465 = vpop.f32.mrb[0].mxu0
        %v1466 = vadd.f32 %v1269, %v1465
        %v1467 = vpop.f32.mrb[0].mxu0
        %v1468 = vpop.f32.mrb[0].mxu0
        %v1469 = vadd.f32 %v1269, %v1468
        %v1470 = vpop.f32.mrb[0].mxu0
        %1471 = vmatprep.mubr.bf16.mxu0 0
        %1472 = vmatmul.mubr.bf16.gmra.mrb[0].mxu0 %v1247
        %v1473 = vpop.f32.mrb[0].mxu0
        %v1474 = vadd.f32 %v1269, %v1473
        %v1475 = vpop.f32.mrb[0].mxu0
        %v1476 = vpop.f32.mrb[0].mxu0
        %v1477 = vadd.f32 %v1269, %v1476
        %v1478 = vpop.f32.mrb[0].mxu0
        %1479 = vdwg.mxu0
        %1480 = vadd.xlane.f32.xlu0 %v1354
        %v1481 = vpop.xlane.xlu0 %1480
        %1482 = vadd.xlane.f32.xlu0 %v1357
        %v1483 = vpop.xlane.xlu0 %1482
        %1484 = vadd.xlane.f32.xlu0 %v1362
        %v1485 = vpop.xlane.xlu0 %1484
        %1486 = vadd.xlane.f32.xlu0 %v1365
        %v1487 = vpop.xlane.xlu0 %1486
        %1488 = vadd.xlane.f32.xlu0 %v1370
        %v1489 = vpop.xlane.xlu0 %1488
        %1490 = vadd.xlane.f32.xlu0 %v1373
        %v1491 = vpop.xlane.xlu0 %1490
        %1492 = vadd.xlane.f32.xlu0 %v1378
        %v1493 = vpop.xlane.xlu0 %1492
        %1494 = vadd.xlane.f32.xlu0 %v1381
        %v1495 = vpop.xlane.xlu0 %1494
        %1496 = vadd.xlane.f32.xlu0 %v1386
        %v1497 = vpop.xlane.xlu0 %1496
        %1498 = vadd.xlane.f32.xlu0 %v1389
        %v1499 = vpop.xlane.xlu0 %1498
        %1500 = vadd.xlane.f32.xlu0 %v1394
        %v1501 = vpop.xlane.xlu0 %1500
        %1502 = vadd.xlane.f32.xlu0 %v1397
        %v1503 = vpop.xlane.xlu0 %1502
        %1504 = vadd.xlane.f32.xlu0 %v1402
        %v1505 = vpop.xlane.xlu0 %1504
        %1506 = vadd.xlane.f32.xlu0 %v1405
        %v1507 = vpop.xlane.xlu0 %1506
        %1508 = vadd.xlane.f32.xlu0 %v1410
        %v1509 = vpop.xlane.xlu0 %1508
        %1510 = vadd.xlane.f32.xlu0 %v1413
        %v1511 = vpop.xlane.xlu0 %1510
        %1512 = vadd.xlane.f32.xlu0 %v1418
        %v1513 = vpop.xlane.xlu0 %1512
        %1514 = vadd.xlane.f32.xlu0 %v1421
        %v1515 = vpop.xlane.xlu0 %1514
        %1516 = vadd.xlane.f32.xlu0 %v1426
        %v1517 = vpop.xlane.xlu0 %1516
        %1518 = vadd.xlane.f32.xlu0 %v1429
        %v1519 = vpop.xlane.xlu0 %1518
        %1520 = vadd.xlane.f32.xlu0 %v1434
        %v1521 = vpop.xlane.xlu0 %1520
        %1522 = vadd.xlane.f32.xlu0 %v1437
        %v1523 = vpop.xlane.xlu0 %1522
        %1524 = vadd.xlane.f32.xlu0 %v1442
        %v1525 = vpop.xlane.xlu0 %1524
        %1526 = vadd.xlane.f32.xlu0 %v1445
        %v1527 = vpop.xlane.xlu0 %1526
        %1528 = vadd.xlane.f32.xlu0 %v1450
        %v1529 = vpop.xlane.xlu0 %1528
        %1530 = vadd.xlane.f32.xlu0 %v1453
        %v1531 = vpop.xlane.xlu0 %1530
        %1532 = vadd.xlane.f32.xlu0 %v1458
        %v1533 = vpop.xlane.xlu0 %1532
        %1534 = vadd.xlane.f32.xlu0 %v1461
        %v1535 = vpop.xlane.xlu0 %1534
        %1536 = vadd.xlane.f32.xlu0 %v1466
        %v1537 = vpop.xlane.xlu0 %1536
        %1538 = vadd.xlane.f32.xlu0 %v1469
        %v1539 = vpop.xlane.xlu0 %1538
        %1540 = vadd.xlane.f32.xlu0 %v1474
        %v1541 = vpop.xlane.xlu0 %1540
        %1542 = vadd.xlane.f32.xlu0 %v1477
        %v1543 = vpop.xlane.xlu0 %1542
        %v1544 = vmul.f32 %v1481, 0.03125
        %v1545 = vmul.f32 %v1483, 0.03125
        %v1546 = vmul.f32 %v1485, 0.03125
        %v1547 = vmul.f32 %v1487, 0.03125
        %v1548 = vmul.f32 %v1489, 0.03125
        %v1549 = vmul.f32 %v1491, 0.03125
        %v1550 = vmul.f32 %v1493, 0.03125
        %v1551 = vmul.f32 %v1495, 0.03125
        %v1552 = vmul.f32 %v1497, 0.03125
        %v1553 = vmul.f32 %v1499, 0.03125
        %v1554 = vmul.f32 %v1501, 0.03125
        %v1555 = vmul.f32 %v1503, 0.03125
        %v1556 = vmul.f32 %v1505, 0.03125
        %v1557 = vmul.f32 %v1507, 0.03125
        %v1558 = vmul.f32 %v1509, 0.03125
        %v1559 = vmul.f32 %v1511, 0.03125
        %v1560 = vmul.f32 %v1513, 0.03125
        %v1561 = vmul.f32 %v1515, 0.03125
        %v1562 = vmul.f32 %v1517, 0.03125
        %v1563 = vmul.f32 %v1519, 0.03125
        %v1564 = vmul.f32 %v1521, 0.03125
        %v1565 = vmul.f32 %v1523, 0.03125
        %v1566 = vmul.f32 %v1525, 0.03125
        %v1567 = vmul.f32 %v1527, 0.03125
        %v1568 = vmul.f32 %v1529, 0.03125
        %v1569 = vmul.f32 %v1531, 0.03125
        %v1570 = vmul.f32 %v1533, 0.03125
        %v1571 = vmul.f32 %v1535, 0.03125
        %v1572 = vmul.f32 %v1537, 0.03125
        %v1573 = vmul.f32 %v1539, 0.03125
        %v1574 = vmul.f32 %v1541, 0.03125
        %v1575 = vmul.f32 %v1543, 0.03125
        %v1576 = vsub.f32 %v1354, %v1544
        %v1577 = vsub.f32 %v1357, %v1545
        %v1578 = vsub.f32 %v1362, %v1546
        %v1579 = vsub.f32 %v1365, %v1547
        %v1580 = vsub.f32 %v1370, %v1548
        %v1581 = vsub.f32 %v1373, %v1549
        %v1582 = vsub.f32 %v1378, %v1550
        %v1583 = vsub.f32 %v1381, %v1551
        %v1584 = vsub.f32 %v1386, %v1552
        %v1585 = vsub.f32 %v1389, %v1553
        %v1586 = vsub.f32 %v1394, %v1554
        %v1587 = vsub.f32 %v1397, %v1555
        %v1588 = vsub.f32 %v1402, %v1556
        %v1589 = vsub.f32 %v1405, %v1557
        %v1590 = vsub.f32 %v1410, %v1558
        %v1591 = vsub.f32 %v1413, %v1559
        %v1592 = vsub.f32 %v1418, %v1560
        %v1593 = vsub.f32 %v1421, %v1561
        %v1594 = vsub.f32 %v1426, %v1562
        %v1595 = vsub.f32 %v1429, %v1563
        %v1596 = vsub.f32 %v1434, %v1564
        %v1597 = vsub.f32 %v1437, %v1565
        %v1598 = vsub.f32 %v1442, %v1566
        %v1599 = vsub.f32 %v1445, %v1567
        %v1600 = vsub.f32 %v1450, %v1568
        %v1601 = vsub.f32 %v1453, %v1569
        %v1602 = vsub.f32 %v1458, %v1570
        %v1603 = vsub.f32 %v1461, %v1571
        %v1604 = vsub.f32 %v1466, %v1572
        %v1605 = vsub.f32 %v1469, %v1573
        %v1606 = vsub.f32 %v1474, %v1574
        %v1607 = vsub.f32 %v1477, %v1575
        %v1608 = vmul.f32 %v1576, %v1576
        %v1609 = vmul.f32 %v1577, %v1577
        %v1610 = vmul.f32 %v1578, %v1578
        %v1611 = vmul.f32 %v1579, %v1579
        %v1612 = vmul.f32 %v1580, %v1580
        %v1613 = vmul.f32 %v1581, %v1581
        %v1614 = vmul.f32 %v1582, %v1582
        %v1615 = vmul.f32 %v1583, %v1583
        %v1616 = vmul.f32 %v1584, %v1584
        %v1617 = vmul.f32 %v1585, %v1585
        %v1618 = vmul.f32 %v1586, %v1586
        %v1619 = vmul.f32 %v1587, %v1587
        %v1620 = vmul.f32 %v1588, %v1588
        %v1621 = vmul.f32 %v1589, %v1589
        %v1622 = vmul.f32 %v1590, %v1590
        %v1623 = vmul.f32 %v1591, %v1591
        %v1624 = vmul.f32 %v1592, %v1592
        %v1625 = vmul.f32 %v1593, %v1593
        %v1626 = vmul.f32 %v1594, %v1594
        %v1627 = vmul.f32 %v1595, %v1595
        %v1628 = vmul.f32 %v1596, %v1596
        %v1629 = vmul.f32 %v1597, %v1597
        %v1630 = vmul.f32 %v1598, %v1598
        %v1631 = vmul.f32 %v1599, %v1599
        %v1632 = vmul.f32 %v1600, %v1600
        %v1633 = vmul.f32 %v1601, %v1601
        %v1634 = vmul.f32 %v1602, %v1602
        %v1635 = vmul.f32 %v1603, %v1603
        %v1636 = vmul.f32 %v1604, %v1604
        %v1637 = vmul.f32 %v1605, %v1605
        %v1638 = vmul.f32 %v1606, %v1606
        %v1639 = vmul.f32 %v1607, %v1607
        %1640 = vadd.xlane.f32.xlu0 %v1608
        %v1641 = vpop.xlane.xlu0 %1640
        %1642 = vadd.xlane.f32.xlu0 %v1609
        %v1643 = vpop.xlane.xlu0 %1642
        %1644 = vadd.xlane.f32.xlu0 %v1610
        %v1645 = vpop.xlane.xlu0 %1644
        %1646 = vadd.xlane.f32.xlu0 %v1611
        %v1647 = vpop.xlane.xlu0 %1646
        %1648 = vadd.xlane.f32.xlu0 %v1612
        %v1649 = vpop.xlane.xlu0 %1648
        %1650 = vadd.xlane.f32.xlu0 %v1613
        %v1651 = vpop.xlane.xlu0 %1650
        %1652 = vadd.xlane.f32.xlu0 %v1614
        %v1653 = vpop.xlane.xlu0 %1652
        %1654 = vadd.xlane.f32.xlu0 %v1615
        %v1655 = vpop.xlane.xlu0 %1654
        %1656 = vadd.xlane.f32.xlu0 %v1616
        %v1657 = vpop.xlane.xlu0 %1656
        %1658 = vadd.xlane.f32.xlu0 %v1617
        %v1659 = vpop.xlane.xlu0 %1658
        %1660 = vadd.xlane.f32.xlu0 %v1618
        %v1661 = vpop.xlane.xlu0 %1660
        %1662 = vadd.xlane.f32.xlu0 %v1619
        %v1663 = vpop.xlane.xlu0 %1662
        %1664 = vadd.xlane.f32.xlu0 %v1620
        %v1665 = vpop.xlane.xlu0 %1664
        %1666 = vadd.xlane.f32.xlu0 %v1621
        %v1667 = vpop.xlane.xlu0 %1666
        %1668 = vadd.xlane.f32.xlu0 %v1622
        %v1669 = vpop.xlane.xlu0 %1668
        %1670 = vadd.xlane.f32.xlu0 %v1623
        %v1671 = vpop.xlane.xlu0 %1670
        %1672 = vadd.xlane.f32.xlu0 %v1624
        %v1673 = vpop.xlane.xlu0 %1672
        %1674 = vadd.xlane.f32.xlu0 %v1625
        %v1675 = vpop.xlane.xlu0 %1674
        %1676 = vadd.xlane.f32.xlu0 %v1626
        %v1677 = vpop.xlane.xlu0 %1676
        %1678 = vadd.xlane.f32.xlu0 %v1627
        %v1679 = vpop.xlane.xlu0 %1678
        %1680 = vadd.xlane.f32.xlu0 %v1628
        %v1681 = vpop.xlane.xlu0 %1680
        %1682 = vadd.xlane.f32.xlu0 %v1629
        %v1683 = vpop.xlane.xlu0 %1682
        %1684 = vadd.xlane.f32.xlu0 %v1630
        %v1685 = vpop.xlane.xlu0 %1684
        %1686 = vadd.xlane.f32.xlu0 %v1631
        %v1687 = vpop.xlane.xlu0 %1686
        %1688 = vadd.xlane.f32.xlu0 %v1632
        %v1689 = vpop.xlane.xlu0 %1688
        %1690 = vadd.xlane.f32.xlu0 %v1633
        %v1691 = vpop.xlane.xlu0 %1690
        %1692 = vadd.xlane.f32.xlu0 %v1634
        %v1693 = vpop.xlane.xlu0 %1692
        %1694 = vadd.xlane.f32.xlu0 %v1635
        %v1695 = vpop.xlane.xlu0 %1694
        %1696 = vadd.xlane.f32.xlu0 %v1636
        %v1697 = vpop.xlane.xlu0 %1696
        %1698 = vadd.xlane.f32.xlu0 %v1637
        %v1699 = vpop.xlane.xlu0 %1698
        %1700 = vadd.xlane.f32.xlu0 %v1638
        %v1701 = vpop.xlane.xlu0 %1700
        %1702 = vadd.xlane.f32.xlu0 %v1639
        %v1703 = vpop.xlane.xlu0 %1702
        %v1704 = vmul.f32 %v1544, %v1544
        %v1705 = vmul.f32 %v1545, %v1545
        %v1706 = vmul.f32 %v1546, %v1546
        %v1707 = vmul.f32 %v1547, %v1547
        %v1708 = vmul.f32 %v1548, %v1548
        %v1709 = vmul.f32 %v1549, %v1549
        %v1710 = vmul.f32 %v1550, %v1550
        %v1711 = vmul.f32 %v1551, %v1551
        %v1712 = vmul.f32 %v1552, %v1552
        %v1713 = vmul.f32 %v1553, %v1553
        %v1714 = vmul.f32 %v1554, %v1554
        %v1715 = vmul.f32 %v1555, %v1555
        %v1716 = vmul.f32 %v1556, %v1556
        %v1717 = vmul.f32 %v1557, %v1557
        %v1718 = vmul.f32 %v1558, %v1558
        %v1719 = vmul.f32 %v1559, %v1559
        %v1720 = vmul.f32 %v1560, %v1560
        %v1721 = vmul.f32 %v1561, %v1561
        %v1722 = vmul.f32 %v1562, %v1562
        %v1723 = vmul.f32 %v1563, %v1563
        %v1724 = vmul.f32 %v1564, %v1564
        %v1725 = vmul.f32 %v1565, %v1565
        %v1726 = vmul.f32 %v1566, %v1566
        %v1727 = vmul.f32 %v1567, %v1567
        %v1728 = vmul.f32 %v1568, %v1568
        %v1729 = vmul.f32 %v1569, %v1569
        %v1730 = vmul.f32 %v1570, %v1570
        %v1731 = vmul.f32 %v1571, %v1571
        %v1732 = vmul.f32 %v1572, %v1572
        %v1733 = vmul.f32 %v1573, %v1573
        %v1734 = vmul.f32 %v1574, %v1574
        %v1735 = vmul.f32 %v1575, %v1575
        %v1736 = vmul.f32 %v1704, 96.0
        %v1737 = vmul.f32 %v1705, 96.0
        %v1738 = vmul.f32 %v1706, 96.0
        %v1739 = vmul.f32 %v1707, 96.0
        %v1740 = vmul.f32 %v1708, 96.0
        %v1741 = vmul.f32 %v1709, 96.0
        %v1742 = vmul.f32 %v1710, 96.0
        %v1743 = vmul.f32 %v1711, 96.0
        %v1744 = vmul.f32 %v1712, 96.0
        %v1745 = vmul.f32 %v1713, 96.0
        %v1746 = vmul.f32 %v1714, 96.0
        %v1747 = vmul.f32 %v1715, 96.0
        %v1748 = vmul.f32 %v1716, 96.0
        %v1749 = vmul.f32 %v1717, 96.0
        %v1750 = vmul.f32 %v1718, 96.0
        %v1751 = vmul.f32 %v1719, 96.0
        %v1752 = vmul.f32 %v1720, 96.0
        %v1753 = vmul.f32 %v1721, 96.0
        %v1754 = vmul.f32 %v1722, 96.0
        %v1755 = vmul.f32 %v1723, 96.0
        %v1756 = vmul.f32 %v1724, 96.0
        %v1757 = vmul.f32 %v1725, 96.0
        %v1758 = vmul.f32 %v1726, 96.0
        %v1759 = vmul.f32 %v1727, 96.0
        %v1760 = vmul.f32 %v1728, 96.0
        %v1761 = vmul.f32 %v1729, 96.0
        %v1762 = vmul.f32 %v1730, 96.0
        %v1763 = vmul.f32 %v1731, 96.0
        %v1764 = vmul.f32 %v1732, 96.0
        %v1765 = vmul.f32 %v1733, 96.0
        %v1766 = vmul.f32 %v1734, 96.0
        %v1767 = vmul.f32 %v1735, 96.0
        %v1768 = vsub.f32 %v1641, %v1736
        %v1769 = vsub.f32 %v1643, %v1737
        %v1770 = vsub.f32 %v1645, %v1738
        %v1771 = vsub.f32 %v1647, %v1739
        %v1772 = vsub.f32 %v1649, %v1740
        %v1773 = vsub.f32 %v1651, %v1741
        %v1774 = vsub.f32 %v1653, %v1742
        %v1775 = vsub.f32 %v1655, %v1743
        %v1776 = vsub.f32 %v1657, %v1744
        %v1777 = vsub.f32 %v1659, %v1745
        %v1778 = vsub.f32 %v1661, %v1746
        %v1779 = vsub.f32 %v1663, %v1747
        %v1780 = vsub.f32 %v1665, %v1748
        %v1781 = vsub.f32 %v1667, %v1749
        %v1782 = vsub.f32 %v1669, %v1750
        %v1783 = vsub.f32 %v1671, %v1751
        %v1784 = vsub.f32 %v1673, %v1752
        %v1785 = vsub.f32 %v1675, %v1753
        %v1786 = vsub.f32 %v1677, %v1754
        %v1787 = vsub.f32 %v1679, %v1755
        %v1788 = vsub.f32 %v1681, %v1756
        %v1789 = vsub.f32 %v1683, %v1757
        %v1790 = vsub.f32 %v1685, %v1758
        %v1791 = vsub.f32 %v1687, %v1759
        %v1792 = vsub.f32 %v1689, %v1760
        %v1793 = vsub.f32 %v1691, %v1761
        %v1794 = vsub.f32 %v1693, %v1762
        %v1795 = vsub.f32 %v1695, %v1763
        %v1796 = vsub.f32 %v1697, %v1764
        %v1797 = vsub.f32 %v1699, %v1765
        %v1798 = vsub.f32 %v1701, %v1766
        %v1799 = vsub.f32 %v1703, %v1767
        %v1800 = vmul.f32 %v1768, 0.03125
        %v1801 = vmul.f32 %v1769, 0.03125
        %v1802 = vmul.f32 %v1770, 0.03125
        %v1803 = vmul.f32 %v1771, 0.03125
        %v1804 = vmul.f32 %v1772, 0.03125
        %v1805 = vmul.f32 %v1773, 0.03125
        %v1806 = vmul.f32 %v1774, 0.03125
        %v1807 = vmul.f32 %v1775, 0.03125
        %v1808 = vmul.f32 %v1776, 0.03125
        %v1809 = vmul.f32 %v1777, 0.03125
        %v1810 = vmul.f32 %v1778, 0.03125
        %v1811 = vmul.f32 %v1779, 0.03125
        %v1812 = vmul.f32 %v1780, 0.03125
        %v1813 = vmul.f32 %v1781, 0.03125
        %v1814 = vmul.f32 %v1782, 0.03125
        %v1815 = vmul.f32 %v1783, 0.03125
        %v1816 = vmul.f32 %v1784, 0.03125
        %v1817 = vmul.f32 %v1785, 0.03125
        %v1818 = vmul.f32 %v1786, 0.03125
        %v1819 = vmul.f32 %v1787, 0.03125
        %v1820 = vmul.f32 %v1788, 0.03125
        %v1821 = vmul.f32 %v1789, 0.03125
        %v1822 = vmul.f32 %v1790, 0.03125
        %v1823 = vmul.f32 %v1791, 0.03125
        %v1824 = vmul.f32 %v1792, 0.03125
        %v1825 = vmul.f32 %v1793, 0.03125
        %v1826 = vmul.f32 %v1794, 0.03125
        %v1827 = vmul.f32 %v1795, 0.03125
        %v1828 = vmul.f32 %v1796, 0.03125
        %v1829 = vmul.f32 %v1797, 0.03125
        %v1830 = vmul.f32 %v1798, 0.03125
        %v1831 = vmul.f32 %v1799, 0.03125
        %v1832 = vadd.f32 %v1800, 1e-05
        %v1833 = vadd.f32 %v1801, 1e-05
        %v1834 = vadd.f32 %v1802, 1e-05
        %v1835 = vadd.f32 %v1803, 1e-05
        %v1836 = vadd.f32 %v1804, 1e-05
        %v1837 = vadd.f32 %v1805, 1e-05
        %v1838 = vadd.f32 %v1806, 1e-05
        %v1839 = vadd.f32 %v1807, 1e-05
        %v1840 = vadd.f32 %v1808, 1e-05
        %v1841 = vadd.f32 %v1809, 1e-05
        %v1842 = vadd.f32 %v1810, 1e-05
        %v1843 = vadd.f32 %v1811, 1e-05
        %v1844 = vadd.f32 %v1812, 1e-05
        %v1845 = vadd.f32 %v1813, 1e-05
        %v1846 = vadd.f32 %v1814, 1e-05
        %v1847 = vadd.f32 %v1815, 1e-05
        %v1848 = vadd.f32 %v1816, 1e-05
        %v1849 = vadd.f32 %v1817, 1e-05
        %v1850 = vadd.f32 %v1818, 1e-05
        %v1851 = vadd.f32 %v1819, 1e-05
        %v1852 = vadd.f32 %v1820, 1e-05
        %v1853 = vadd.f32 %v1821, 1e-05
        %v1854 = vadd.f32 %v1822, 1e-05
        %v1855 = vadd.f32 %v1823, 1e-05
        %v1856 = vadd.f32 %v1824, 1e-05
        %v1857 = vadd.f32 %v1825, 1e-05
        %v1858 = vadd.f32 %v1826, 1e-05
        %v1859 = vadd.f32 %v1827, 1e-05
        %v1860 = vadd.f32 %v1828, 1e-05
        %v1861 = vadd.f32 %v1829, 1e-05
        %v1862 = vadd.f32 %v1830, 1e-05
        %v1863 = vadd.f32 %v1831, 1e-05
        %v1864 = vrsqrt.pop %v1832
        %v1865 = vrsqrt.pop %v1833
        %v1866 = vrsqrt.pop %v1834
        %v1867 = vrsqrt.pop %v1835
        %v1868 = vrsqrt.pop %v1836
        %v1869 = vrsqrt.pop %v1837
        %v1870 = vrsqrt.pop %v1838
        %v1871 = vrsqrt.pop %v1839
        %v1872 = vrsqrt.pop %v1840
        %v1873 = vrsqrt.pop %v1841
        %v1874 = vrsqrt.pop %v1842
        %v1875 = vrsqrt.pop %v1843
        %v1876 = vrsqrt.pop %v1844
        %v1877 = vrsqrt.pop %v1845
        %v1878 = vrsqrt.pop %v1846
        %v1879 = vrsqrt.pop %v1847
        %v1880 = vrsqrt.pop %v1848
        %v1881 = vrsqrt.pop %v1849
        %v1882 = vrsqrt.pop %v1850
        %v1883 = vrsqrt.pop %v1851
        %v1884 = vrsqrt.pop %v1852
        %v1885 = vrsqrt.pop %v1853
        %v1886 = vrsqrt.pop %v1854
        %v1887 = vrsqrt.pop %v1855
        %v1888 = vrsqrt.pop %v1856
        %v1889 = vrsqrt.pop %v1857
        %v1890 = vrsqrt.pop %v1858
        %v1891 = vrsqrt.pop %v1859
        %v1892 = vrsqrt.pop %v1860
        %v1893 = vrsqrt.pop %v1861
        %v1894 = vrsqrt.pop %v1862
        %v1895 = vrsqrt.pop %v1863
        %v1896 = vld [vmem:[%s15] sm:$0x1]
        %v1898 = vlaneseq
        %v1899 = vshrl.u32 %v1898, 7
        %v1900 = vsub.s32 0, %v1899
        %v1901 = vrot.slane %v1896, %v1900
        %v1903 = vmul.f32 %v1864, %v1901
        %v1904 = vmul.f32 %v1865, %v1901
        %v1905 = vmul.f32 %v1866, %v1901
        %v1906 = vmul.f32 %v1867, %v1901
        %v1907 = vmul.f32 %v1868, %v1901
        %v1908 = vmul.f32 %v1869, %v1901
        %v1909 = vmul.f32 %v1870, %v1901
        %v1910 = vmul.f32 %v1871, %v1901
        %v1911 = vmul.f32 %v1872, %v1901
        %v1912 = vmul.f32 %v1873, %v1901
        %v1913 = vmul.f32 %v1874, %v1901
        %v1914 = vmul.f32 %v1875, %v1901
        %v1915 = vmul.f32 %v1876, %v1901
        %v1916 = vmul.f32 %v1877, %v1901
        %v1917 = vmul.f32 %v1878, %v1901
        %v1918 = vmul.f32 %v1879, %v1901
        %v1919 = vmul.f32 %v1880, %v1901
        %v1920 = vmul.f32 %v1881, %v1901
        %v1921 = vmul.f32 %v1882, %v1901
        %v1922 = vmul.f32 %v1883, %v1901
        %v1923 = vmul.f32 %v1884, %v1901
        %v1924 = vmul.f32 %v1885, %v1901
        %v1925 = vmul.f32 %v1886, %v1901
        %v1926 = vmul.f32 %v1887, %v1901
        %v1927 = vmul.f32 %v1888, %v1901
        %v1928 = vmul.f32 %v1889, %v1901
        %v1929 = vmul.f32 %v1890, %v1901
        %v1930 = vmul.f32 %v1891, %v1901
        %v1931 = vmul.f32 %v1892, %v1901
        %v1932 = vmul.f32 %v1893, %v1901
        %v1933 = vmul.f32 %v1894, %v1901
        %v1934 = vmul.f32 %v1895, %v1901
        %v1935 = vmul.f32 %v1576, %v1903
        %v1936 = vmul.f32 %v1577, %v1904
        %v1937 = vmul.f32 %v1578, %v1905
        %v1938 = vmul.f32 %v1579, %v1906
        %v1939 = vmul.f32 %v1580, %v1907
        %v1940 = vmul.f32 %v1581, %v1908
        %v1941 = vmul.f32 %v1582, %v1909
        %v1942 = vmul.f32 %v1583, %v1910
        %v1943 = vmul.f32 %v1584, %v1911
        %v1944 = vmul.f32 %v1585, %v1912
        %v1945 = vmul.f32 %v1586, %v1913
        %v1946 = vmul.f32 %v1587, %v1914
        %v1947 = vmul.f32 %v1588, %v1915
        %v1948 = vmul.f32 %v1589, %v1916
        %v1949 = vmul.f32 %v1590, %v1917
        %v1950 = vmul.f32 %v1591, %v1918
        %v1951 = vmul.f32 %v1592, %v1919
        %v1952 = vmul.f32 %v1593, %v1920
        %v1953 = vmul.f32 %v1594, %v1921
        %v1954 = vmul.f32 %v1595, %v1922
        %v1955 = vmul.f32 %v1596, %v1923
        %v1956 = vmul.f32 %v1597, %v1924
        %v1957 = vmul.f32 %v1598, %v1925
        %v1958 = vmul.f32 %v1599, %v1926
        %v1959 = vmul.f32 %v1600, %v1927
        %v1960 = vmul.f32 %v1601, %v1928
        %v1961 = vmul.f32 %v1602, %v1929
        %v1962 = vmul.f32 %v1603, %v1930
        %v1963 = vmul.f32 %v1604, %v1931
        %v1964 = vmul.f32 %v1605, %v1932
        %v1965 = vmul.f32 %v1606, %v1933
        %v1966 = vmul.f32 %v1607, %v1934
        %v1967 = vld [vmem:[%s17] sm:$0x1]
        %v1969 = vlaneseq
        %v1970 = vshrl.u32 %v1969, 7
        %v1971 = vsub.s32 0, %v1970
        %v1972 = vrot.slane %v1967, %v1971
        %v1974 = vadd.f32 %v1935, %v1972
        %v1975 = vadd.f32 %v1936, %v1972
        %v1976 = vadd.f32 %v1937, %v1972
        %v1977 = vadd.f32 %v1938, %v1972
        %v1978 = vadd.f32 %v1939, %v1972
        %v1979 = vadd.f32 %v1940, %v1972
        %v1980 = vadd.f32 %v1941, %v1972
        %v1981 = vadd.f32 %v1942, %v1972
        %v1982 = vadd.f32 %v1943, %v1972
        %v1983 = vadd.f32 %v1944, %v1972
        %v1984 = vadd.f32 %v1945, %v1972
        %v1985 = vadd.f32 %v1946, %v1972
        %v1986 = vadd.f32 %v1947, %v1972
        %v1987 = vadd.f32 %v1948, %v1972
        %v1988 = vadd.f32 %v1949, %v1972
        %v1989 = vadd.f32 %v1950, %v1972
        %v1990 = vadd.f32 %v1951, %v1972
        %v1991 = vadd.f32 %v1952, %v1972
        %v1992 = vadd.f32 %v1953, %v1972
        %v1993 = vadd.f32 %v1954, %v1972
        %v1994 = vadd.f32 %v1955, %v1972
        %v1995 = vadd.f32 %v1956, %v1972
        %v1996 = vadd.f32 %v1957, %v1972
        %v1997 = vadd.f32 %v1958, %v1972
        %v1998 = vadd.f32 %v1959, %v1972
        %v1999 = vadd.f32 %v1960, %v1972
        %v2000 = vadd.f32 %v1961, %v1972
        %v2001 = vadd.f32 %v1962, %v1972
        %v2002 = vadd.f32 %v1963, %v1972
        %v2003 = vadd.f32 %v1964, %v1972
        %v2004 = vadd.f32 %v1965, %v1972
        %v2005 = vadd.f32 %v1966, %v1972
        %v2006 = vpack.c.bf16 %v1975, %v1974
        %v2007 = vpack.c.bf16 %v1977, %v1976
        %v2008 = vpack.c.bf16 %v1979, %v1978
        %v2009 = vpack.c.bf16 %v1981, %v1980
        %v2010 = vpack.c.bf16 %v1983, %v1982
        %v2011 = vpack.c.bf16 %v1985, %v1984
        %v2012 = vpack.c.bf16 %v1987, %v1986
        %v2013 = vpack.c.bf16 %v1989, %v1988
        %v2014 = vpack.c.bf16 %v1991, %v1990
        %v2015 = vpack.c.bf16 %v1993, %v1992
        %v2016 = vpack.c.bf16 %v1995, %v1994
        %v2017 = vpack.c.bf16 %v1997, %v1996
        %v2018 = vpack.c.bf16 %v1999, %v1998
        %v2019 = vpack.c.bf16 %v2001, %v2000
        %v2020 = vpack.c.bf16 %v2003, %v2002
        %v2021 = vpack.c.bf16 %v2005, %v2004
        %2022 = vst [vmem:[#allocation2] sm:$0xff] 0.0
        %2023 = vst [vmem:[#allocation2 + $0x8] sm:$0xff] 0.0
        %2024 = vst [vmem:[#allocation2 + $0x10] sm:$0xff] 0.0
        %2025 = vst [vmem:[#allocation2 + $0x18] sm:$0xff] 0.0
        %2026 = vst [vmem:[#allocation2 + $0x20] sm:$0xff] 0.0
        %2027 = vst [vmem:[#allocation2 + $0x28] sm:$0xff] 0.0
        %2028 = vst [vmem:[#allocation2 + $0x30] sm:$0xff] 0.0
        %2029 = vst [vmem:[#allocation2 + $0x38] sm:$0xff] 0.0
        %2030 = vst [vmem:[#allocation2 + $0x40] sm:$0xff] 0.0
        %2031 = vst [vmem:[#allocation2 + $0x48] sm:$0xff] 0.0
        %2032 = vst [vmem:[#allocation2 + $0x50] sm:$0xff] 0.0
        %2033 = vst [vmem:[#allocation2 + $0x58] sm:$0xff] 0.0
        %2034 = vst [vmem:[#allocation2 + $0x60] sm:$0xff] 0.0
        %2035 = vst [vmem:[#allocation2 + $0x68] sm:$0xff] 0.0
        %2036 = vst [vmem:[#allocation2 + $0x70] sm:$0xff] 0.0
        %2037 = vst [vmem:[#allocation2 + $0x78] sm:$0xff] 0.0
        %2038 = vst [vmem:[#allocation2 + $0x80] sm:$0xff] 0.0
        %2039 = vst [vmem:[#allocation2 + $0x88] sm:$0xff] 0.0
        %2040 = vst [vmem:[#allocation2 + $0x90] sm:$0xff] 0.0
        %2041 = vst [vmem:[#allocation2 + $0x98] sm:$0xff] 0.0
        %2042 = vst [vmem:[#allocation2 + $0xa0] sm:$0xff] 0.0
        %2043 = vst [vmem:[#allocation2 + $0xa8] sm:$0xff] 0.0
        %2044 = vst [vmem:[#allocation2 + $0xb0] sm:$0xff] 0.0
        %2045 = vst [vmem:[#allocation2 + $0xb8] sm:$0xff] 0.0
        %2046 = vst [vmem:[#allocation2 + $0xc0] sm:$0xff] 0.0
        %2047 = vst [vmem:[#allocation2 + $0xc8] sm:$0xff] 0.0
        %2048 = vst [vmem:[#allocation2 + $0xd0] sm:$0xff] 0.0
        %2049 = vst [vmem:[#allocation2 + $0xd8] sm:$0xff] 0.0
        %2050 = vst [vmem:[#allocation2 + $0xe0] sm:$0xff] 0.0
        %2051 = vst [vmem:[#allocation2 + $0xe8] sm:$0xff] 0.0
        %2052 = vst [vmem:[#allocation2 + $0xf0] sm:$0xff] 0.0
        %2053 = vst [vmem:[#allocation2 + $0xf8] sm:$0xff] 0.0
        loop: start=0, step=1, limit=4
        $region235: #{unet_attention_block.1} parent=131 // loop_pre_header
          _
        $region236: #{unet_attention_block.1} parent=131 // loop_header
          %s2055 = sphi 0, %s2059
          %p2056 = scmp.ge.s32.totalorder %s2055, 4
        $region237: #{unet_attention_block.1} parent=131 // loop_header_branch
          %2058 = sbr.rel (%p2056) target = $region241
        $region238: #{unet_attention_block.1} parent=131 // loop_body
          %s2060 = smul.u32 %s2055, 16
          %s2061 = smul.addr %s2060, 4
          %s2062 = scalar_lea.vmem %s19, %s2061
          %v2063 = vld [vmem:[%s2062] sm:$0xf]
          %v2064 = vld [vmem:[%s2062 + $0x4] sm:$0xf]
          %v2065 = vld [vmem:[%s2062 + $0x8] sm:$0xf]
          %v2066 = vld [vmem:[%s2062 + $0xc] sm:$0xf]
          %v2067 = vld [vmem:[%s2062 + $0x10] sm:$0xf]
          %v2068 = vld [vmem:[%s2062 + $0x14] sm:$0xf]
          %v2069 = vld [vmem:[%s2062 + $0x18] sm:$0xf]
          %v2070 = vld [vmem:[%s2062 + $0x1c] sm:$0xf]
          %v2071 = vld [vmem:[%s2062 + $0x20] sm:$0xf]
          %v2072 = vld [vmem:[%s2062 + $0x24] sm:$0xf]
          %v2073 = vld [vmem:[%s2062 + $0x28] sm:$0xf]
          %v2074 = vld [vmem:[%s2062 + $0x2c] sm:$0xf]
          %v2075 = vld [vmem:[%s2062 + $0x30] sm:$0xf]
          %v2076 = vld [vmem:[%s2062 + $0x34] sm:$0xf]
          %v2077 = vld [vmem:[%s2062 + $0x38] sm:$0xf]
          %v2078 = vld [vmem:[%s2062 + $0x3c] sm:$0xf]
          %v2095 = vunpack.c.l.b16 %v2063
          %v2096 = vunpack.c.l.b16 %v2064
          %v2097 = vunpack.c.l.b16 %v2065
          %v2098 = vunpack.c.l.b16 %v2066
          %v2099 = vunpack.c.l.b16 %v2067
          %v2100 = vunpack.c.l.b16 %v2068
          %v2101 = vunpack.c.l.b16 %v2069
          %v2102 = vunpack.c.l.b16 %v2070
          %v2103 = vunpack.c.l.b16 %v2071
          %v2104 = vunpack.c.l.b16 %v2072
          %v2105 = vunpack.c.l.b16 %v2073
          %v2106 = vunpack.c.l.b16 %v2074
          %v2107 = vunpack.c.l.b16 %v2075
          %v2108 = vunpack.c.l.b16 %v2076
          %v2109 = vunpack.c.l.b16 %v2077
          %v2110 = vunpack.c.l.b16 %v2078
          %v2111 = vpack.c.b16 %v2096, %v2095
          %v2112 = vpack.c.b16 %v2098, %v2097
          %v2113 = vpack.c.b16 %v2100, %v2099
          %v2114 = vpack.c.b16 %v2102, %v2101
          %v2115 = vpack.c.b16 %v2104, %v2103
          %v2116 = vpack.c.b16 %v2106, %v2105
          %v2117 = vpack.c.b16 %v2108, %v2107
          %v2118 = vpack.c.b16 %v2110, %v2109
          %2127 = vmatprep.subr.bf16.mxu0 0
          %2128 = vmatpush1.bf16.msra.mxu0 %v2111
          %2129 = vmatprep.subr.bf16.mxu0 0
          %2130 = vmatpush1.bf16.msra.mxu0 %v2112
          %2131 = vmatprep.subr.bf16.mxu0 0
          %2132 = vmatpush1.bf16.msra.mxu0 %v2113
          %2133 = vmatprep.subr.bf16.mxu0 0
          %2134 = vmatpush1.bf16.msra.mxu0 %v2114
          %2135 = vmatprep.subr.bf16.mxu0 0
          %2136 = vmatpush1.bf16.msra.mxu0 %v2115
          %2137 = vmatprep.subr.bf16.mxu0 0
          %2138 = vmatpush1.bf16.msra.mxu0 %v2116
          %2139 = vmatprep.subr.bf16.mxu0 0
          %2140 = vmatpush1.bf16.msra.mxu0 %v2117
          %2141 = vmatprep.subr.bf16.mxu0 0
          %2142 = vmatpush1.bf16.msra.mxu0 %v2118
          %2143 = vmatprep.subr.bf16.mxu0 0
          %2144 = vmatpush1.bf16.msra.mxu0 0
          %2145 = vmatprep.subr.bf16.mxu0 0
          %2146 = vmatpush1.bf16.msra.mxu0 0
          %2147 = vmatprep.subr.bf16.mxu0 0
          %2148 = vmatpush1.bf16.msra.mxu0 0
          %2149 = vmatprep.subr.bf16.mxu0 0
          %2150 = vmatpush1.bf16.msra.mxu0 0
          %2151 = vmatprep.subr.bf16.mxu0 0
          %2152 = vmatpush1.bf16.msra.mxu0 0
          %2153 = vmatprep.subr.bf16.mxu0 0
          %2154 = vmatpush1.bf16.msra.mxu0 0
          %2155 = vmatprep.subr.bf16.mxu0 0
          %2156 = vmatpush1.bf16.msra.mxu0 0
          %2157 = vmatprep.subr.bf16.mxu0 0
          %2158 = vmatpush1.bf16.msra.mxu0 0
          %2159 = vmatprep.mubr.bf16.mxu0 0
          %2160 = vmatmul.mubr.bf16.gmra.mrb[0].mxu0 %v2006
          %v2161 = vpop.f32.mrb[0].mxu0
          %v2162 = vadd.f32 0.0, %v2161
          %v2163 = vpop.f32.mrb[0].mxu0
          %v2164 = vpop.f32.mrb[0].mxu0
          %v2165 = vadd.f32 0.0, %v2164
          %v2166 = vpop.f32.mrb[0].mxu0
          %2167 = vmatprep.mubr.bf16.mxu0 0
          %2168 = vmatmul.mubr.bf16.gmra.mrb[0].mxu0 %v2007
          %v2169 = vpop.f32.mrb[0].mxu0
          %v2170 = vadd.f32 0.0, %v2169
          %v2171 = vpop.f32.mrb[0].mxu0
          %v2172 = vpop.f32.mrb[0].mxu0
          %v2173 = vadd.f32 0.0, %v2172
          %v2174 = vpop.f32.mrb[0].mxu0
          %2175 = vmatprep.mubr.bf16.mxu0 0
          %2176 = vmatmul.mubr.bf16.gmra.mrb[0].mxu0 %v2008
          %v2177 = vpop.f32.mrb[0].mxu0
          %v2178 = vadd.f32 0.0, %v2177
          %v2179 = vpop.f32.mrb[0].mxu0
          %v2180 = vpop.f32.mrb[0].mxu0
          %v2181 = vadd.f32 0.0, %v2180
          %v2182 = vpop.f32.mrb[0].mxu0
          %2183 = vmatprep.mubr.bf16.mxu0 0
          %2184 = vmatmul.mubr.bf16.gmra.mrb[0].mxu0 %v2009
          %v2185 = vpop.f32.mrb[0].mxu0
          %v2186 = vadd.f32 0.0, %v2185
          %v2187 = vpop.f32.mrb[0].mxu0
          %v2188 = vpop.f32.mrb[0].mxu0
          %v2189 = vadd.f32 0.0, %v2188
          %v2190 = vpop.f32.mrb[0].mxu0
          %2191 = vmatprep.mubr.bf16.mxu0 0
          %2192 = vmatmul.mubr.bf16.gmra.mrb[0].mxu0 %v2010
          %v2193 = vpop.f32.mrb[0].mxu0
          %v2194 = vadd.f32 0.0, %v2193
          %v2195 = vpop.f32.mrb[0].mxu0
          %v2196 = vpop.f32.mrb[0].mxu0
          %v2197 = vadd.f32 0.0, %v2196
          %v2198 = vpop.f32.mrb[0].mxu0
          %2199 = vmatprep.mubr.bf16.mxu0 0
          %2200 = vmatmul.mubr.bf16.gmra.mrb[0].mxu0 %v2011
          %v2201 = vpop.f32.mrb[0].mxu0
          %v2202 = vadd.f32 0.0, %v2201
          %v2203 = vpop.f32.mrb[0].mxu0
          %v2204 = vpop.f32.mrb[0].mxu0
          %v2205 = vadd.f32 0.0, %v2204
          %v2206 = vpop.f32.mrb[0].mxu0
          %2207 = vmatprep.mubr.bf16.mxu0 0
          %2208 = vmatmul.mubr.bf16.gmra.mrb[0].mxu0 %v2012
          %v2209 = vpop.f32.mrb[0].mxu0
          %v2210 = vadd.f32 0.0, %v2209
          %v2211 = vpop.f32.mrb[0].mxu0
          %v2212 = vpop.f32.mrb[0].mxu0
          %v2213 = vadd.f32 0.0, %v2212
          %v2214 = vpop.f32.mrb[0].mxu0
          %2215 = vmatprep.mubr.bf16.mxu0 0
          %2216 = vmatmul.mubr.bf16.gmra.mrb[0].mxu0 %v2013
          %v2217 = vpop.f32.mrb[0].mxu0
          %v2218 = vadd.f32 0.0, %v2217
          %v2219 = vpop.f32.mrb[0].mxu0
          %v2220 = vpop.f32.mrb[0].mxu0
          %v2221 = vadd.f32 0.0, %v2220
          %v2222 = vpop.f32.mrb[0].mxu0
          %2223 = vmatprep.mubr.bf16.mxu0 0
          %2224 = vmatmul.mubr.bf16.gmra.mrb[0].mxu0 %v2014
          %v2225 = vpop.f32.mrb[0].mxu0
          %v2226 = vadd.f32 0.0, %v2225
          %v2227 = vpop.f32.mrb[0].mxu0
          %v2228 = vpop.f32.mrb[0].mxu0
          %v2229 = vadd.f32 0.0, %v2228
          %v2230 = vpop.f32.mrb[0].mxu0
          %2231 = vmatprep.mubr.bf16.mxu0 0
          %2232 = vmatmul.mubr.bf16.gmra.mrb[0].mxu0 %v2015
          %v2233 = vpop.f32.mrb[0].mxu0
          %v2234 = vadd.f32 0.0, %v2233
          %v2235 = vpop.f32.mrb[0].mxu0
          %v2236 = vpop.f32.mrb[0].mxu0
          %v2237 = vadd.f32 0.0, %v2236
          %v2238 = vpop.f32.mrb[0].mxu0
          %2239 = vmatprep.mubr.bf16.mxu0 0
          %2240 = vmatmul.mubr.bf16.gmra.mrb[0].mxu0 %v2016
          %v2241 = vpop.f32.mrb[0].mxu0
          %v2242 = vadd.f32 0.0, %v2241
          %v2243 = vpop.f32.mrb[0].mxu0
          %v2244 = vpop.f32.mrb[0].mxu0
          %v2245 = vadd.f32 0.0, %v2244
          %v2246 = vpop.f32.mrb[0].mxu0
          %2247 = vmatprep.mubr.bf16.mxu0 0
          %2248 = vmatmul.mubr.bf16.gmra.mrb[0].mxu0 %v2017
          %v2249 = vpop.f32.mrb[0].mxu0
          %v2250 = vadd.f32 0.0, %v2249
          %v2251 = vpop.f32.mrb[0].mxu0
          %v2252 = vpop.f32.mrb[0].mxu0
          %v2253 = vadd.f32 0.0, %v2252
          %v2254 = vpop.f32.mrb[0].mxu0
          %2255 = vmatprep.mubr.bf16.mxu0 0
          %2256 = vmatmul.mubr.bf16.gmra.mrb[0].mxu0 %v2018
          %v2257 = vpop.f32.mrb[0].mxu0
          %v2258 = vadd.f32 0.0, %v2257
          %v2259 = vpop.f32.mrb[0].mxu0
          %v2260 = vpop.f32.mrb[0].mxu0
          %v2261 = vadd.f32 0.0, %v2260
          %v2262 = vpop.f32.mrb[0].mxu0
          %2263 = vmatprep.mubr.bf16.mxu0 0
          %2264 = vmatmul.mubr.bf16.gmra.mrb[0].mxu0 %v2019
          %v2265 = vpop.f32.mrb[0].mxu0
          %v2266 = vadd.f32 0.0, %v2265
          %v2267 = vpop.f32.mrb[0].mxu0
          %v2268 = vpop.f32.mrb[0].mxu0
          %v2269 = vadd.f32 0.0, %v2268
          %v2270 = vpop.f32.mrb[0].mxu0
          %2271 = vmatprep.mubr.bf16.mxu0 0
          %2272 = vmatmul.mubr.bf16.gmra.mrb[0].mxu0 %v2020
          %v2273 = vpop.f32.mrb[0].mxu0
          %v2274 = vadd.f32 0.0, %v2273
          %v2275 = vpop.f32.mrb[0].mxu0
          %v2276 = vpop.f32.mrb[0].mxu0
          %v2277 = vadd.f32 0.0, %v2276
          %v2278 = vpop.f32.mrb[0].mxu0
          %2279 = vmatprep.mubr.bf16.mxu0 0
          %2280 = vmatmul.mubr.bf16.gmra.mrb[0].mxu0 %v2021
          %v2281 = vpop.f32.mrb[0].mxu0
          %v2282 = vadd.f32 0.0, %v2281
          %v2283 = vpop.f32.mrb[0].mxu0
          %v2284 = vpop.f32.mrb[0].mxu0
          %v2285 = vadd.f32 0.0, %v2284
          %v2286 = vpop.f32.mrb[0].mxu0
          %2287 = vdwg.mxu0
          %v2288 = vpack.c.bf16 %v2165, %v2162
          %v2289 = vpack.c.bf16 %v2173, %v2170
          %v2290 = vpack.c.bf16 %v2181, %v2178
          %v2291 = vpack.c.bf16 %v2189, %v2186
          %v2292 = vpack.c.bf16 %v2197, %v2194
          %v2293 = vpack.c.bf16 %v2205, %v2202
          %v2294 = vpack.c.bf16 %v2213, %v2210
          %v2295 = vpack.c.bf16 %v2221, %v2218
          %v2296 = vpack.c.bf16 %v2229, %v2226
          %v2297 = vpack.c.bf16 %v2237, %v2234
          %v2298 = vpack.c.bf16 %v2245, %v2242
          %v2299 = vpack.c.bf16 %v2253, %v2250
          %v2300 = vpack.c.bf16 %v2261, %v2258
          %v2301 = vpack.c.bf16 %v2269, %v2266
          %v2302 = vpack.c.bf16 %v2277, %v2274
          %v2303 = vpack.c.bf16 %v2285, %v2282
          %s2304 = smul.addr %s2060, 4
          %s2305 = scalar_lea.vmem %s21, %s2304
          %v2306 = vld [vmem:[%s2305] sm:$0xf]
          %v2307 = vld [vmem:[%s2305 + $0x4] sm:$0xf]
          %v2308 = vld [vmem:[%s2305 + $0x8] sm:$0xf]
          %v2309 = vld [vmem:[%s2305 + $0xc] sm:$0xf]
          %v2310 = vld [vmem:[%s2305 + $0x10] sm:$0xf]
          %v2311 = vld [vmem:[%s2305 + $0x14] sm:$0xf]
          %v2312 = vld [vmem:[%s2305 + $0x18] sm:$0xf]
          %v2313 = vld [vmem:[%s2305 + $0x1c] sm:$0xf]
          %v2314 = vld [vmem:[%s2305 + $0x20] sm:$0xf]
          %v2315 = vld [vmem:[%s2305 + $0x24] sm:$0xf]
          %v2316 = vld [vmem:[%s2305 + $0x28] sm:$0xf]
          %v2317 = vld [vmem:[%s2305 + $0x2c] sm:$0xf]
          %v2318 = vld [vmem:[%s2305 + $0x30] sm:$0xf]
          %v2319 = vld [vmem:[%s2305 + $0x34] sm:$0xf]
          %v2320 = vld [vmem:[%s2305 + $0x38] sm:$0xf]
          %v2321 = vld [vmem:[%s2305 + $0x3c] sm:$0xf]
          %v2338 = vunpack.c.l.b16 %v2306
          %v2339 = vunpack.c.l.b16 %v2307
          %v2340 = vunpack.c.l.b16 %v2308
          %v2341 = vunpack.c.l.b16 %v2309
          %v2342 = vunpack.c.l.b16 %v2310
          %v2343 = vunpack.c.l.b16 %v2311
          %v2344 = vunpack.c.l.b16 %v2312
          %v2345 = vunpack.c.l.b16 %v2313
          %v2346 = vunpack.c.l.b16 %v2314
          %v2347 = vunpack.c.l.b16 %v2315
          %v2348 = vunpack.c.l.b16 %v2316
          %v2349 = vunpack.c.l.b16 %v2317
          %v2350 = vunpack.c.l.b16 %v2318
          %v2351 = vunpack.c.l.b16 %v2319
          %v2352 = vunpack.c.l.b16 %v2320
          %v2353 = vunpack.c.l.b16 %v2321
          %v2354 = vpack.c.b16 %v2339, %v2338
          %v2355 = vpack.c.b16 %v2341, %v2340
          %v2356 = vpack.c.b16 %v2343, %v2342
          %v2357 = vpack.c.b16 %v2345, %v2344
          %v2358 = vpack.c.b16 %v2347, %v2346
          %v2359 = vpack.c.b16 %v2349, %v2348
          %v2360 = vpack.c.b16 %v2351, %v2350
          %v2361 = vpack.c.b16 %v2353, %v2352
          %2370 = vmatprep.subr.bf16.mxu0 0
          %2371 = vmatpush1.bf16.msra.mxu0 %v2354
          %2372 = vmatprep.subr.bf16.mxu0 0
          %2373 = vmatpush1.bf16.msra.mxu0 %v2355
          %2374 = vmatprep.subr.bf16.mxu0 0
          %2375 = vmatpush1.bf16.msra.mxu0 %v2356
          %2376 = vmatprep.subr.bf16.mxu0 0
          %2377 = vmatpush1.bf16.msra.mxu0 %v2357
          %2378 = vmatprep.subr.bf16.mxu0 0
          %2379 = vmatpush1.bf16.msra.mxu0 %v2358
          %2380 = vmatprep.subr.bf16.mxu0 0
          %2381 = vmatpush1.bf16.msra.mxu0 %v2359
          %2382 = vmatprep.subr.bf16.mxu0 0
          %2383 = vmatpush1.bf16.msra.mxu0 %v2360
          %2384 = vmatprep.subr.bf16.mxu0 0
          %2385 = vmatpush1.bf16.msra.mxu0 %v2361
          %2386 = vmatprep.subr.bf16.mxu0 0
          %2387 = vmatpush1.bf16.msra.mxu0 0
          %2388 = vmatprep.subr.bf16.mxu0 0
          %2389 = vmatpush1.bf16.msra.mxu0 0
          %2390 = vmatprep.subr.bf16.mxu0 0
          %2391 = vmatpush1.bf16.msra.mxu0 0
          %2392 = vmatprep.subr.bf16.mxu0 0
          %2393 = vmatpush1.bf16.msra.mxu0 0
          %2394 = vmatprep.subr.bf16.mxu0 0
          %2395 = vmatpush1.bf16.msra.mxu0 0
          %2396 = vmatprep.subr.bf16.mxu0 0
          %2397 = vmatpush1.bf16.msra.mxu0 0
          %2398 = vmatprep.subr.bf16.mxu0 0
          %2399 = vmatpush1.bf16.msra.mxu0 0
          %2400 = vmatprep.subr.bf16.mxu0 0
          %2401 = vmatpush1.bf16.msra.mxu0 0
          %2402 = vmatprep.mubr.bf16.mxu0 0
          %2403 = vmatmul.mubr.bf16.gmra.mrb[0].mxu0 %v2006
          %v2404 = vpop.f32.mrb[0].mxu0
          %v2405 = vadd.f32 0.0, %v2404
          %v2406 = vpop.f32.mrb[0].mxu0
          %v2407 = vpop.f32.mrb[0].mxu0
          %v2408 = vadd.f32 0.0, %v2407
          %v2409 = vpop.f32.mrb[0].mxu0
          %2410 = vmatprep.mubr.bf16.mxu0 0
          %2411 = vmatmul.mubr.bf16.gmra.mrb[0].mxu0 %v2007
          %v2412 = vpop.f32.mrb[0].mxu0
          %v2413 = vadd.f32 0.0, %v2412
          %v2414 = vpop.f32.mrb[0].mxu0
          %v2415 = vpop.f32.mrb[0].mxu0
          %v2416 = vadd.f32 0.0, %v2415
          %v2417 = vpop.f32.mrb[0].mxu0
          %2418 = vmatprep.mubr.bf16.mxu0 0
          %2419 = vmatmul.mubr.bf16.gmra.mrb[0].mxu0 %v2008
          %v2420 = vpop.f32.mrb[0].mxu0
          %v2421 = vadd.f32 0.0, %v2420
          %v2422 = vpop.f32.mrb[0].mxu0
          %v2423 = vpop.f32.mrb[0].mxu0
          %v2424 = vadd.f32 0.0, %v2423
          %v2425 = vpop.f32.mrb[0].mxu0
          %2426 = vmatprep.mubr.bf16.mxu0 0
          %2427 = vmatmul.mubr.bf16.gmra.mrb[0].mxu0 %v2009
          %v2428 = vpop.f32.mrb[0].mxu0
          %v2429 = vadd.f32 0.0, %v2428
          %v2430 = vpop.f32.mrb[0].mxu0
          %v2431 = vpop.f32.mrb[0].mxu0
          %v2432 = vadd.f32 0.0, %v2431
          %v2433 = vpop.f32.mrb[0].mxu0
          %2434 = vmatprep.mubr.bf16.mxu0 0
          %2435 = vmatmul.mubr.bf16.gmra.mrb[0].mxu0 %v2010
          %v2436 = vpop.f32.mrb[0].mxu0
          %v2437 = vadd.f32 0.0, %v2436
          %v2438 = vpop.f32.mrb[0].mxu0
          %v2439 = vpop.f32.mrb[0].mxu0
          %v2440 = vadd.f32 0.0, %v2439
          %v2441 = vpop.f32.mrb[0].mxu0
          %2442 = vmatprep.mubr.bf16.mxu0 0
          %2443 = vmatmul.mubr.bf16.gmra.mrb[0].mxu0 %v2011
          %v2444 = vpop.f32.mrb[0].mxu0
          %v2445 = vadd.f32 0.0, %v2444
          %v2446 = vpop.f32.mrb[0].mxu0
          %v2447 = vpop.f32.mrb[0].mxu0
          %v2448 = vadd.f32 0.0, %v2447
          %v2449 = vpop.f32.mrb[0].mxu0
          %2450 = vmatprep.mubr.bf16.mxu0 0
          %2451 = vmatmul.mubr.bf16.gmra.mrb[0].mxu0 %v2012
          %v2452 = vpop.f32.mrb[0].mxu0
          %v2453 = vadd.f32 0.0, %v2452
          %v2454 = vpop.f32.mrb[0].mxu0
          %v2455 = vpop.f32.mrb[0].mxu0
          %v2456 = vadd.f32 0.0, %v2455
          %v2457 = vpop.f32.mrb[0].mxu0
          %2458 = vmatprep.mubr.bf16.mxu0 0
          %2459 = vmatmul.mubr.bf16.gmra.mrb[0].mxu0 %v2013
          %v2460 = vpop.f32.mrb[0].mxu0
          %v2461 = vadd.f32 0.0, %v2460
          %v2462 = vpop.f32.mrb[0].mxu0
          %v2463 = vpop.f32.mrb[0].mxu0
          %v2464 = vadd.f32 0.0, %v2463
          %v2465 = vpop.f32.mrb[0].mxu0
          %2466 = vmatprep.mubr.bf16.mxu0 0
          %2467 = vmatmul.mubr.bf16.gmra.mrb[0].mxu0 %v2014
          %v2468 = vpop.f32.mrb[0].mxu0
          %v2469 = vadd.f32 0.0, %v2468
          %v2470 = vpop.f32.mrb[0].mxu0
          %v2471 = vpop.f32.mrb[0].mxu0
          %v2472 = vadd.f32 0.0, %v2471
          %v2473 = vpop.f32.mrb[0].mxu0
          %2474 = vmatprep.mubr.bf16.mxu0 0
          %2475 = vmatmul.mubr.bf16.gmra.mrb[0].mxu0 %v2015
          %v2476 = vpop.f32.mrb[0].mxu0
          %v2477 = vadd.f32 0.0, %v2476
          %v2478 = vpop.f32.mrb[0].mxu0
          %v2479 = vpop.f32.mrb[0].mxu0
          %v2480 = vadd.f32 0.0, %v2479
          %v2481 = vpop.f32.mrb[0].mxu0
          %2482 = vmatprep.mubr.bf16.mxu0 0
          %2483 = vmatmul.mubr.bf16.gmra.mrb[0].mxu0 %v2016
          %v2484 = vpop.f32.mrb[0].mxu0
          %v2485 = vadd.f32 0.0, %v2484
          %v2486 = vpop.f32.mrb[0].mxu0
          %v2487 = vpop.f32.mrb[0].mxu0
          %v2488 = vadd.f32 0.0, %v2487
          %v2489 = vpop.f32.mrb[0].mxu0
          %2490 = vmatprep.mubr.bf16.mxu0 0
          %2491 = vmatmul.mubr.bf16.gmra.mrb[0].mxu0 %v2017
          %v2492 = vpop.f32.mrb[0].mxu0
          %v2493 = vadd.f32 0.0, %v2492
          %v2494 = vpop.f32.mrb[0].mxu0
          %v2495 = vpop.f32.mrb[0].mxu0
          %v2496 = vadd.f32 0.0, %v2495
          %v2497 = vpop.f32.mrb[0].mxu0
          %2498 = vmatprep.mubr.bf16.mxu0 0
          %2499 = vmatmul.mubr.bf16.gmra.mrb[0].mxu0 %v2018
          %v2500 = vpop.f32.mrb[0].mxu0
          %v2501 = vadd.f32 0.0, %v2500
          %v2502 = vpop.f32.mrb[0].mxu0
          %v2503 = vpop.f32.mrb[0].mxu0
          %v2504 = vadd.f32 0.0, %v2503
          %v2505 = vpop.f32.mrb[0].mxu0
          %2506 = vmatprep.mubr.bf16.mxu0 0
          %2507 = vmatmul.mubr.bf16.gmra.mrb[0].mxu0 %v2019
          %v2508 = vpop.f32.mrb[0].mxu0
          %v2509 = vadd.f32 0.0, %v2508
          %v2510 = vpop.f32.mrb[0].mxu0
          %v2511 = vpop.f32.mrb[0].mxu0
          %v2512 = vadd.f32 0.0, %v2511
          %v2513 = vpop.f32.mrb[0].mxu0
          %2514 = vmatprep.mubr.bf16.mxu0 0
          %2515 = vmatmul.mubr.bf16.gmra.mrb[0].mxu0 %v2020
          %v2516 = vpop.f32.mrb[0].mxu0
          %v2517 = vadd.f32 0.0, %v2516
          %v2518 = vpop.f32.mrb[0].mxu0
          %v2519 = vpop.f32.mrb[0].mxu0
          %v2520 = vadd.f32 0.0, %v2519
          %v2521 = vpop.f32.mrb[0].mxu0
          %2522 = vmatprep.mubr.bf16.mxu0 0
          %2523 = vmatmul.mubr.bf16.gmra.mrb[0].mxu0 %v2021
          %v2524 = vpop.f32.mrb[0].mxu0
          %v2525 = vadd.f32 0.0, %v2524
          %v2526 = vpop.f32.mrb[0].mxu0
          %v2527 = vpop.f32.mrb[0].mxu0
          %v2528 = vadd.f32 0.0, %v2527
          %v2529 = vpop.f32.mrb[0].mxu0
          %2530 = vdwg.mxu0
          %v2531 = vpack.c.bf16 %v2408, %v2405
          %v2532 = vpack.c.bf16 %v2416, %v2413
          %v2533 = vpack.c.bf16 %v2424, %v2421
          %v2534 = vpack.c.bf16 %v2432, %v2429
          %v2535 = vpack.c.bf16 %v2440, %v2437
          %v2536 = vpack.c.bf16 %v2448, %v2445
          %v2537 = vpack.c.bf16 %v2456, %v2453
          %v2538 = vpack.c.bf16 %v2464, %v2461
          %v2539 = vpack.c.bf16 %v2472, %v2469
          %v2540 = vpack.c.bf16 %v2480, %v2477
          %v2541 = vpack.c.bf16 %v2488, %v2485
          %v2542 = vpack.c.bf16 %v2496, %v2493
          %v2543 = vpack.c.bf16 %v2504, %v2501
          %v2544 = vpack.c.bf16 %v2512, %v2509
          %v2545 = vpack.c.bf16 %v2520, %v2517
          %v2546 = vpack.c.bf16 %v2528, %v2525
          %s2547 = smul.addr %s2060, 4
          %s2548 = scalar_lea.vmem %s23, %s2547
          %v2549 = vld [vmem:[%s2548] sm:$0xf]
          %v2550 = vld [vmem:[%s2548 + $0x4] sm:$0xf]
          %v2551 = vld [vmem:[%s2548 + $0x8] sm:$0xf]
          %v2552 = vld [vmem:[%s2548 + $0xc] sm:$0xf]
          %v2553 = vld [vmem:[%s2548 + $0x10] sm:$0xf]
          %v2554 = vld [vmem:[%s2548 + $0x14] sm:$0xf]
          %v2555 = vld [vmem:[%s2548 + $0x18] sm:$0xf]
          %v2556 = vld [vmem:[%s2548 + $0x1c] sm:$0xf]
          %v2557 = vld [vmem:[%s2548 + $0x20] sm:$0xf]
          %v2558 = vld [vmem:[%s2548 + $0x24] sm:$0xf]
          %v2559 = vld [vmem:[%s2548 + $0x28] sm:$0xf]
          %v2560 = vld [vmem:[%s2548 + $0x2c] sm:$0xf]
          %v2561 = vld [vmem:[%s2548 + $0x30] sm:$0xf]
          %v2562 = vld [vmem:[%s2548 + $0x34] sm:$0xf]
          %v2563 = vld [vmem:[%s2548 + $0x38] sm:$0xf]
          %v2564 = vld [vmem:[%s2548 + $0x3c] sm:$0xf]
          %v2581 = vunpack.c.l.b16 %v2549
          %v2582 = vunpack.c.l.b16 %v2550
          %v2583 = vunpack.c.l.b16 %v2551
          %v2584 = vunpack.c.l.b16 %v2552
          %v2585 = vunpack.c.l.b16 %v2553
          %v2586 = vunpack.c.l.b16 %v2554
          %v2587 = vunpack.c.l.b16 %v2555
          %v2588 = vunpack.c.l.b16 %v2556
          %v2589 = vunpack.c.l.b16 %v2557
          %v2590 = vunpack.c.l.b16 %v2558
          %v2591 = vunpack.c.l.b16 %v2559
          %v2592 = vunpack.c.l.b16 %v2560
          %v2593 = vunpack.c.l.b16 %v2561
          %v2594 = vunpack.c.l.b16 %v2562
          %v2595 = vunpack.c.l.b16 %v2563
          %v2596 = vunpack.c.l.b16 %v2564
          %v2597 = vpack.c.b16 %v2582, %v2581
          %v2598 = vpack.c.b16 %v2584, %v2583
          %v2599 = vpack.c.b16 %v2586, %v2585
          %v2600 = vpack.c.b16 %v2588, %v2587
          %v2601 = vpack.c.b16 %v2590, %v2589
          %v2602 = vpack.c.b16 %v2592, %v2591
          %v2603 = vpack.c.b16 %v2594, %v2593
          %v2604 = vpack.c.b16 %v2596, %v2595
          %2613 = vmatprep.subr.bf16.mxu0 0
          %2614 = vmatpush1.bf16.msra.mxu0 %v2597
          %2615 = vmatprep.subr.bf16.mxu0 0
          %2616 = vmatpush1.bf16.msra.mxu0 %v2598
          %2617 = vmatprep.subr.bf16.mxu0 0
          %2618 = vmatpush1.bf16.msra.mxu0 %v2599
          %2619 = vmatprep.subr.bf16.mxu0 0
          %2620 = vmatpush1.bf16.msra.mxu0 %v2600
          %2621 = vmatprep.subr.bf16.mxu0 0
          %2622 = vmatpush1.bf16.msra.mxu0 %v2601
          %2623 = vmatprep.subr.bf16.mxu0 0
          %2624 = vmatpush1.bf16.msra.mxu0 %v2602
          %2625 = vmatprep.subr.bf16.mxu0 0
          %2626 = vmatpush1.bf16.msra.mxu0 %v2603
          %2627 = vmatprep.subr.bf16.mxu0 0
          %2628 = vmatpush1.bf16.msra.mxu0 %v2604
          %2629 = vmatprep.subr.bf16.mxu0 0
          %2630 = vmatpush1.bf16.msra.mxu0 0
          %2631 = vmatprep.subr.bf16.mxu0 0
          %2632 = vmatpush1.bf16.msra.mxu0 0
          %2633 = vmatprep.subr.bf16.mxu0 0
          %2634 = vmatpush1.bf16.msra.mxu0 0
          %2635 = vmatprep.subr.bf16.mxu0 0
          %2636 = vmatpush1.bf16.msra.mxu0 0
          %2637 = vmatprep.subr.bf16.mxu0 0
          %2638 = vmatpush1.bf16.msra.mxu0 0
          %2639 = vmatprep.subr.bf16.mxu0 0
          %2640 = vmatpush1.bf16.msra.mxu0 0
          %2641 = vmatprep.subr.bf16.mxu0 0
          %2642 = vmatpush1.bf16.msra.mxu0 0
          %2643 = vmatprep.subr.bf16.mxu0 0
          %2644 = vmatpush1.bf16.msra.mxu0 0
          %2645 = vmatprep.mubr.bf16.mxu0 0
          %2646 = vmatmul.mubr.bf16.gmra.mrb[0].mxu0 %v2006
          %v2647 = vpop.f32.mrb[0].mxu0
          %v2648 = vadd.f32 0.0, %v2647
          %v2649 = vpop.f32.mrb[0].mxu0
          %v2650 = vpop.f32.mrb[0].mxu0
          %v2651 = vadd.f32 0.0, %v2650
          %v2652 = vpop.f32.mrb[0].mxu0
          %2653 = vmatprep.mubr.bf16.mxu0 0
          %2654 = vmatmul.mubr.bf16.gmra.mrb[0].mxu0 %v2007
          %v2655 = vpop.f32.mrb[0].mxu0
          %v2656 = vadd.f32 0.0, %v2655
          %v2657 = vpop.f32.mrb[0].mxu0
          %v2658 = vpop.f32.mrb[0].mxu0
          %v2659 = vadd.f32 0.0, %v2658
          %v2660 = vpop.f32.mrb[0].mxu0
          %2661 = vmatprep.mubr.bf16.mxu0 0
          %2662 = vmatmul.mubr.bf16.gmra.mrb[0].mxu0 %v2008
          %v2663 = vpop.f32.mrb[0].mxu0
          %v2664 = vadd.f32 0.0, %v2663
          %v2665 = vpop.f32.mrb[0].mxu0
          %v2666 = vpop.f32.mrb[0].mxu0
          %v2667 = vadd.f32 0.0, %v2666
          %v2668 = vpop.f32.mrb[0].mxu0
          %2669 = vmatprep.mubr.bf16.mxu0 0
          %2670 = vmatmul.mubr.bf16.gmra.mrb[0].mxu0 %v2009
          %v2671 = vpop.f32.mrb[0].mxu0
          %v2672 = vadd.f32 0.0, %v2671
          %v2673 = vpop.f32.mrb[0].mxu0
          %v2674 = vpop.f32.mrb[0].mxu0
          %v2675 = vadd.f32 0.0, %v2674
          %v2676 = vpop.f32.mrb[0].mxu0
          %2677 = vmatprep.mubr.bf16.mxu0 0
          %2678 = vmatmul.mubr.bf16.gmra.mrb[0].mxu0 %v2010
          %v2679 = vpop.f32.mrb[0].mxu0
          %v2680 = vadd.f32 0.0, %v2679
          %v2681 = vpop.f32.mrb[0].mxu0
          %v2682 = vpop.f32.mrb[0].mxu0
          %v2683 = vadd.f32 0.0, %v2682
          %v2684 = vpop.f32.mrb[0].mxu0
          %2685 = vmatprep.mubr.bf16.mxu0 0
          %2686 = vmatmul.mubr.bf16.gmra.mrb[0].mxu0 %v2011
          %v2687 = vpop.f32.mrb[0].mxu0
          %v2688 = vadd.f32 0.0, %v2687
          %v2689 = vpop.f32.mrb[0].mxu0
          %v2690 = vpop.f32.mrb[0].mxu0
          %v2691 = vadd.f32 0.0, %v2690
          %v2692 = vpop.f32.mrb[0].mxu0
          %2693 = vmatprep.mubr.bf16.mxu0 0
          %2694 = vmatmul.mubr.bf16.gmra.mrb[0].mxu0 %v2012
          %v2695 = vpop.f32.mrb[0].mxu0
          %v2696 = vadd.f32 0.0, %v2695
          %v2697 = vpop.f32.mrb[0].mxu0
          %v2698 = vpop.f32.mrb[0].mxu0
          %v2699 = vadd.f32 0.0, %v2698
          %v2700 = vpop.f32.mrb[0].mxu0
          %2701 = vmatprep.mubr.bf16.mxu0 0
          %2702 = vmatmul.mubr.bf16.gmra.mrb[0].mxu0 %v2013
          %v2703 = vpop.f32.mrb[0].mxu0
          %v2704 = vadd.f32 0.0, %v2703
          %v2705 = vpop.f32.mrb[0].mxu0
          %v2706 = vpop.f32.mrb[0].mxu0
          %v2707 = vadd.f32 0.0, %v2706
          %v2708 = vpop.f32.mrb[0].mxu0
          %2709 = vmatprep.mubr.bf16.mxu0 0
          %2710 = vmatmul.mubr.bf16.gmra.mrb[0].mxu0 %v2014
          %v2711 = vpop.f32.mrb[0].mxu0
          %v2712 = vadd.f32 0.0, %v2711
          %v2713 = vpop.f32.mrb[0].mxu0
          %v2714 = vpop.f32.mrb[0].mxu0
          %v2715 = vadd.f32 0.0, %v2714
          %v2716 = vpop.f32.mrb[0].mxu0
          %2717 = vmatprep.mubr.bf16.mxu0 0
          %2718 = vmatmul.mubr.bf16.gmra.mrb[0].mxu0 %v2015
          %v2719 = vpop.f32.mrb[0].mxu0
          %v2720 = vadd.f32 0.0, %v2719
          %v2721 = vpop.f32.mrb[0].mxu0
          %v2722 = vpop.f32.mrb[0].mxu0
          %v2723 = vadd.f32 0.0, %v2722
          %v2724 = vpop.f32.mrb[0].mxu0
          %2725 = vmatprep.mubr.bf16.mxu0 0
          %2726 = vmatmul.mubr.bf16.gmra.mrb[0].mxu0 %v2016
          %v2727 = vpop.f32.mrb[0].mxu0
          %v2728 = vadd.f32 0.0, %v2727
          %v2729 = vpop.f32.mrb[0].mxu0
          %v2730 = vpop.f32.mrb[0].mxu0
          %v2731 = vadd.f32 0.0, %v2730
          %v2732 = vpop.f32.mrb[0].mxu0
          %2733 = vmatprep.mubr.bf16.mxu0 0
          %2734 = vmatmul.mubr.bf16.gmra.mrb[0].mxu0 %v2017
          %v2735 = vpop.f32.mrb[0].mxu0
          %v2736 = vadd.f32 0.0, %v2735
          %v2737 = vpop.f32.mrb[0].mxu0
          %v2738 = vpop.f32.mrb[0].mxu0
          %v2739 = vadd.f32 0.0, %v2738
          %v2740 = vpop.f32.mrb[0].mxu0
          %2741 = vmatprep.mubr.bf16.mxu0 0
          %2742 = vmatmul.mubr.bf16.gmra.mrb[0].mxu0 %v2018
          %v2743 = vpop.f32.mrb[0].mxu0
          %v2744 = vadd.f32 0.0, %v2743
          %v2745 = vpop.f32.mrb[0].mxu0
          %v2746 = vpop.f32.mrb[0].mxu0
          %v2747 = vadd.f32 0.0, %v2746
          %v2748 = vpop.f32.mrb[0].mxu0
          %2749 = vmatprep.mubr.bf16.mxu0 0
          %2750 = vmatmul.mubr.bf16.gmra.mrb[0].mxu0 %v2019
          %v2751 = vpop.f32.mrb[0].mxu0
          %v2752 = vadd.f32 0.0, %v2751
          %v2753 = vpop.f32.mrb[0].mxu0
          %v2754 = vpop.f32.mrb[0].mxu0
          %v2755 = vadd.f32 0.0, %v2754
          %v2756 = vpop.f32.mrb[0].mxu0
          %2757 = vmatprep.mubr.bf16.mxu0 0
          %2758 = vmatmul.mubr.bf16.gmra.mrb[0].mxu0 %v2020
          %v2759 = vpop.f32.mrb[0].mxu0
          %v2760 = vadd.f32 0.0, %v2759
          %v2761 = vpop.f32.mrb[0].mxu0
          %v2762 = vpop.f32.mrb[0].mxu0
          %v2763 = vadd.f32 0.0, %v2762
          %v2764 = vpop.f32.mrb[0].mxu0
          %2765 = vmatprep.mubr.bf16.mxu0 0
          %2766 = vmatmul.mubr.bf16.gmra.mrb[0].mxu0 %v2021
          %v2767 = vpop.f32.mrb[0].mxu0
          %v2768 = vadd.f32 0.0, %v2767
          %v2769 = vpop.f32.mrb[0].mxu0
          %v2770 = vpop.f32.mrb[0].mxu0
          %v2771 = vadd.f32 0.0, %v2770
          %v2772 = vpop.f32.mrb[0].mxu0
          %2773 = vdwg.mxu0
          %v2774 = vpack.c.bf16 %v2651, %v2648
          %v2775 = vpack.c.bf16 %v2659, %v2656
          %v2776 = vpack.c.bf16 %v2667, %v2664
          %v2777 = vpack.c.bf16 %v2675, %v2672
          %v2778 = vpack.c.bf16 %v2683, %v2680
          %v2779 = vpack.c.bf16 %v2691, %v2688
          %v2780 = vpack.c.bf16 %v2699, %v2696
          %v2781 = vpack.c.bf16 %v2707, %v2704
          %v2782 = vpack.c.bf16 %v2715, %v2712
          %v2783 = vpack.c.bf16 %v2723, %v2720
          %v2784 = vpack.c.bf16 %v2731, %v2728
          %v2785 = vpack.c.bf16 %v2739, %v2736
          %v2786 = vpack.c.bf16 %v2747, %v2744
          %v2787 = vpack.c.bf16 %v2755, %v2752
          %v2788 = vpack.c.bf16 %v2763, %v2760
          %v2789 = vpack.c.bf16 %v2771, %v2768
          %2790 = vmatprep.subr.bf16.mxu0 0
          %2791 = vmatpush1.bf16.xpose.msra.mxu0 %v2531
          %2792 = vmatprep.subr.bf16.mxu0 0
          %2793 = vmatpush1.bf16.xpose.msra.mxu0 %v2532
          %2794 = vmatprep.subr.bf16.mxu0 0
          %2795 = vmatpush1.bf16.xpose.msra.mxu0 %v2533
          %2796 = vmatprep.subr.bf16.mxu0 0
          %2797 = vmatpush1.bf16.xpose.msra.mxu0 %v2534
          %2798 = vmatprep.subr.bf16.mxu0 0
          %2799 = vmatpush1.bf16.xpose.msra.mxu0 %v2535
          %2800 = vmatprep.subr.bf16.mxu0 0
          %2801 = vmatpush1.bf16.xpose.msra.mxu0 %v2536
          %2802 = vmatprep.subr.bf16.mxu0 0
          %2803 = vmatpush1.bf16.xpose.msra.mxu0 %v2537
          %2804 = vmatprep.subr.bf16.mxu0 0
          %2805 = vmatpush1.bf16.xpose.msra.mxu0 %v2538
          %2806 = vmatprep.subr.bf16.mxu0 0
          %2807 = vmatpush1.bf16.xpose.msra.mxu0 %v2539
          %2808 = vmatprep.subr.bf16.mxu0 0
          %2809 = vmatpush1.bf16.xpose.msra.mxu0 %v2540
          %2810 = vmatprep.subr.bf16.mxu0 0
          %2811 = vmatpush1.bf16.xpose.msra.mxu0 %v2541
          %2812 = vmatprep.subr.bf16.mxu0 0
          %2813 = vmatpush1.bf16.xpose.msra.mxu0 %v2542
          %2814 = vmatprep.subr.bf16.mxu0 0
          %2815 = vmatpush1.bf16.xpose.msra.mxu0 %v2543
          %2816 = vmatprep.subr.bf16.mxu0 0
          %2817 = vmatpush1.bf16.xpose.msra.mxu0 %v2544
          %2818 = vmatprep.subr.bf16.mxu0 0
          %2819 = vmatpush1.bf16.xpose.msra.mxu0 %v2545
          %2820 = vmatprep.subr.bf16.mxu0 0
          %2821 = vmatpush1.bf16.xpose.msra.mxu0 %v2546
          %2822 = vmatprep.mubr.bf16.mxu0 0
          %2823 = vmatmul.mubr.bf16.gmra.mrb[0].mxu0 %v2288
          %v2824 = vpop.f32.mrb[0].mxu0
          %v2825 = vadd.f32 0.0, %v2824
          %v2826 = vpop.f32.mrb[0].mxu0
          %v2827 = vadd.f32 0.0, %v2826
          %v2828 = vpop.f32.mrb[0].mxu0
          %v2829 = vadd.f32 0.0, %v2828
          %v2830 = vpop.f32.mrb[0].mxu0
          %v2831 = vadd.f32 0.0, %v2830
          %2832 = vmatprep.mubr.bf16.mxu0 0
          %2833 = vmatmul.mubr.bf16.gmra.mrb[0].mxu0 %v2289
          %v2834 = vpop.f32.mrb[0].mxu0
          %v2835 = vadd.f32 0.0, %v2834
          %v2836 = vpop.f32.mrb[0].mxu0
          %v2837 = vadd.f32 0.0, %v2836
          %v2838 = vpop.f32.mrb[0].mxu0
          %v2839 = vadd.f32 0.0, %v2838
          %v2840 = vpop.f32.mrb[0].mxu0
          %v2841 = vadd.f32 0.0, %v2840
          %2842 = vmatprep.mubr.bf16.mxu0 0
          %2843 = vmatmul.mubr.bf16.gmra.mrb[0].mxu0 %v2290
          %v2844 = vpop.f32.mrb[0].mxu0
          %v2845 = vadd.f32 0.0, %v2844
          %v2846 = vpop.f32.mrb[0].mxu0
          %v2847 = vadd.f32 0.0, %v2846
          %v2848 = vpop.f32.mrb[0].mxu0
          %v2849 = vadd.f32 0.0, %v2848
          %v2850 = vpop.f32.mrb[0].mxu0
          %v2851 = vadd.f32 0.0, %v2850
          %2852 = vmatprep.mubr.bf16.mxu0 0
          %2853 = vmatmul.mubr.bf16.gmra.mrb[0].mxu0 %v2291
          %v2854 = vpop.f32.mrb[0].mxu0
          %v2855 = vadd.f32 0.0, %v2854
          %v2856 = vpop.f32.mrb[0].mxu0
          %v2857 = vadd.f32 0.0, %v2856
          %v2858 = vpop.f32.mrb[0].mxu0
          %v2859 = vadd.f32 0.0, %v2858
          %v2860 = vpop.f32.mrb[0].mxu0
          %v2861 = vadd.f32 0.0, %v2860
          %2862 = vmatprep.mubr.bf16.mxu0 0
          %2863 = vmatmul.mubr.bf16.gmra.mrb[0].mxu0 %v2292
          %v2864 = vpop.f32.mrb[0].mxu0
          %v2865 = vadd.f32 0.0, %v2864
          %v2866 = vpop.f32.mrb[0].mxu0
          %v2867 = vadd.f32 0.0, %v2866
          %v2868 = vpop.f32.mrb[0].mxu0
          %v2869 = vadd.f32 0.0, %v2868
          %v2870 = vpop.f32.mrb[0].mxu0
          %v2871 = vadd.f32 0.0, %v2870
          %2872 = vmatprep.mubr.bf16.mxu0 0
          %2873 = vmatmul.mubr.bf16.gmra.mrb[0].mxu0 %v2293
          %v2874 = vpop.f32.mrb[0].mxu0
          %v2875 = vadd.f32 0.0, %v2874
          %v2876 = vpop.f32.mrb[0].mxu0
          %v2877 = vadd.f32 0.0, %v2876
          %v2878 = vpop.f32.mrb[0].mxu0
          %v2879 = vadd.f32 0.0, %v2878
          %v2880 = vpop.f32.mrb[0].mxu0
          %v2881 = vadd.f32 0.0, %v2880
          %2882 = vmatprep.mubr.bf16.mxu0 0
          %2883 = vmatmul.mubr.bf16.gmra.mrb[0].mxu0 %v2294
          %v2884 = vpop.f32.mrb[0].mxu0
          %v2885 = vadd.f32 0.0, %v2884
          %v2886 = vpop.f32.mrb[0].mxu0
          %v2887 = vadd.f32 0.0, %v2886
          %v2888 = vpop.f32.mrb[0].mxu0
          %v2889 = vadd.f32 0.0, %v2888
          %v2890 = vpop.f32.mrb[0].mxu0
          %v2891 = vadd.f32 0.0, %v2890
          %2892 = vmatprep.mubr.bf16.mxu0 0
          %2893 = vmatmul.mubr.bf16.gmra.mrb[0].mxu0 %v2295
          %v2894 = vpop.f32.mrb[0].mxu0
          %v2895 = vadd.f32 0.0, %v2894
          %v2896 = vpop.f32.mrb[0].mxu0
          %v2897 = vadd.f32 0.0, %v2896
          %v2898 = vpop.f32.mrb[0].mxu0
          %v2899 = vadd.f32 0.0, %v2898
          %v2900 = vpop.f32.mrb[0].mxu0
          %v2901 = vadd.f32 0.0, %v2900
          %2902 = vmatprep.mubr.bf16.mxu0 0
          %2903 = vmatmul.mubr.bf16.gmra.mrb[0].mxu0 %v2296
          %v2904 = vpop.f32.mrb[0].mxu0
          %v2905 = vadd.f32 0.0, %v2904
          %v2906 = vpop.f32.mrb[0].mxu0
          %v2907 = vadd.f32 0.0, %v2906
          %v2908 = vpop.f32.mrb[0].mxu0
          %v2909 = vadd.f32 0.0, %v2908
          %v2910 = vpop.f32.mrb[0].mxu0
          %v2911 = vadd.f32 0.0, %v2910
          %2912 = vmatprep.mubr.bf16.mxu0 0
          %2913 = vmatmul.mubr.bf16.gmra.mrb[0].mxu0 %v2297
          %v2914 = vpop.f32.mrb[0].mxu0
          %v2915 = vadd.f32 0.0, %v2914
          %v2916 = vpop.f32.mrb[0].mxu0
          %v2917 = vadd.f32 0.0, %v2916
          %v2918 = vpop.f32.mrb[0].mxu0
          %v2919 = vadd.f32 0.0, %v2918
          %v2920 = vpop.f32.mrb[0].mxu0
          %v2921 = vadd.f32 0.0, %v2920
          %2922 = vmatprep.mubr.bf16.mxu0 0
          %2923 = vmatmul.mubr.bf16.gmra.mrb[0].mxu0 %v2298
          %v2924 = vpop.f32.mrb[0].mxu0
          %v2925 = vadd.f32 0.0, %v2924
          %v2926 = vpop.f32.mrb[0].mxu0
          %v2927 = vadd.f32 0.0, %v2926
          %v2928 = vpop.f32.mrb[0].mxu0
          %v2929 = vadd.f32 0.0, %v2928
          %v2930 = vpop.f32.mrb[0].mxu0
          %v2931 = vadd.f32 0.0, %v2930
          %2932 = vmatprep.mubr.bf16.mxu0 0
          %2933 = vmatmul.mubr.bf16.gmra.mrb[0].mxu0 %v2299
          %v2934 = vpop.f32.mrb[0].mxu0
          %v2935 = vadd.f32 0.0, %v2934
          %v2936 = vpop.f32.mrb[0].mxu0
          %v2937 = vadd.f32 0.0, %v2936
          %v2938 = vpop.f32.mrb[0].mxu0
          %v2939 = vadd.f32 0.0, %v2938
          %v2940 = vpop.f32.mrb[0].mxu0
          %v2941 = vadd.f32 0.0, %v2940
          %2942 = vmatprep.mubr.bf16.mxu0 0
          %2943 = vmatmul.mubr.bf16.gmra.mrb[0].mxu0 %v2300
          %v2944 = vpop.f32.mrb[0].mxu0
          %v2945 = vadd.f32 0.0, %v2944
          %v2946 = vpop.f32.mrb[0].mxu0
          %v2947 = vadd.f32 0.0, %v2946
          %v2948 = vpop.f32.mrb[0].mxu0
          %v2949 = vadd.f32 0.0, %v2948
          %v2950 = vpop.f32.mrb[0].mxu0
          %v2951 = vadd.f32 0.0, %v2950
          %2952 = vmatprep.mubr.bf16.mxu0 0
          %2953 = vmatmul.mubr.bf16.gmra.mrb[0].mxu0 %v2301
          %v2954 = vpop.f32.mrb[0].mxu0
          %v2955 = vadd.f32 0.0, %v2954
          %v2956 = vpop.f32.mrb[0].mxu0
          %v2957 = vadd.f32 0.0, %v2956
          %v2958 = vpop.f32.mrb[0].mxu0
          %v2959 = vadd.f32 0.0, %v2958
          %v2960 = vpop.f32.mrb[0].mxu0
          %v2961 = vadd.f32 0.0, %v2960
          %2962 = vmatprep.mubr.bf16.mxu0 0
          %2963 = vmatmul.mubr.bf16.gmra.mrb[0].mxu0 %v2302
          %v2964 = vpop.f32.mrb[0].mxu0
          %v2965 = vadd.f32 0.0, %v2964
          %v2966 = vpop.f32.mrb[0].mxu0
          %v2967 = vadd.f32 0.0, %v2966
          %v2968 = vpop.f32.mrb[0].mxu0
          %v2969 = vadd.f32 0.0, %v2968
          %v2970 = vpop.f32.mrb[0].mxu0
          %v2971 = vadd.f32 0.0, %v2970
          %2972 = vmatprep.mubr.bf16.mxu0 0
          %2973 = vmatmul.mubr.bf16.gmra.mrb[0].mxu0 %v2303
          %v2974 = vpop.f32.mrb[0].mxu0
          %v2975 = vadd.f32 0.0, %v2974
          %v2976 = vpop.f32.mrb[0].mxu0
          %v2977 = vadd.f32 0.0, %v2976
          %v2978 = vpop.f32.mrb[0].mxu0
          %v2979 = vadd.f32 0.0, %v2978
          %v2980 = vpop.f32.mrb[0].mxu0
          %v2981 = vadd.f32 0.0, %v2980
          %2982 = vdwg.mxu0
          %v2983 = vmax.f32 %v2825, %v2827
          %2984 = vmax.xlane.f32.xlu0 %v2983
          %v2985 = vpop.xlane.xlu0 %2984
          %v2986 = vmax.f32 %v2829, %v2831
          %2987 = vmax.xlane.f32.xlu0 %v2986
          %v2988 = vpop.xlane.xlu0 %2987
          %v2989 = vmax.f32 %v2835, %v2837
          %2990 = vmax.xlane.f32.xlu0 %v2989
          %v2991 = vpop.xlane.xlu0 %2990
          %v2992 = vmax.f32 %v2839, %v2841
          %2993 = vmax.xlane.f32.xlu0 %v2992
          %v2994 = vpop.xlane.xlu0 %2993
          %v2995 = vmax.f32 %v2845, %v2847
          %2996 = vmax.xlane.f32.xlu0 %v2995
          %v2997 = vpop.xlane.xlu0 %2996
          %v2998 = vmax.f32 %v2849, %v2851
          %2999 = vmax.xlane.f32.xlu0 %v2998
          %v3000 = vpop.xlane.xlu0 %2999
          %v3001 = vmax.f32 %v2855, %v2857
          %3002 = vmax.xlane.f32.xlu0 %v3001
          %v3003 = vpop.xlane.xlu0 %3002
          %v3004 = vmax.f32 %v2859, %v2861
          %3005 = vmax.xlane.f32.xlu0 %v3004
          %v3006 = vpop.xlane.xlu0 %3005
          %v3007 = vmax.f32 %v2865, %v2867
          %3008 = vmax.xlane.f32.xlu0 %v3007
          %v3009 = vpop.xlane.xlu0 %3008
          %v3010 = vmax.f32 %v2869, %v2871
          %3011 = vmax.xlane.f32.xlu0 %v3010
          %v3012 = vpop.xlane.xlu0 %3011
          %v3013 = vmax.f32 %v2875, %v2877
          %3014 = vmax.xlane.f32.xlu0 %v3013
          %v3015 = vpop.xlane.xlu0 %3014
          %v3016 = vmax.f32 %v2879, %v2881
          %3017 = vmax.xlane.f32.xlu0 %v3016
          %v3018 = vpop.xlane.xlu0 %3017
          %v3019 = vmax.f32 %v2885, %v2887
          %3020 = vmax.xlane.f32.xlu0 %v3019
          %v3021 = vpop.xlane.xlu0 %3020
          %v3022 = vmax.f32 %v2889, %v2891
          %3023 = vmax.xlane.f32.xlu0 %v3022
          %v3024 = vpop.xlane.xlu0 %3023
          %v3025 = vmax.f32 %v2895, %v2897
          %3026 = vmax.xlane.f32.xlu0 %v3025
          %v3027 = vpop.xlane.xlu0 %3026
          %v3028 = vmax.f32 %v2899, %v2901
          %3029 = vmax.xlane.f32.xlu0 %v3028
          %v3030 = vpop.xlane.xlu0 %3029
          %v3031 = vmax.f32 %v2905, %v2907
          %3032 = vmax.xlane.f32.xlu0 %v3031
          %v3033 = vpop.xlane.xlu0 %3032
          %v3034 = vmax.f32 %v2909, %v2911
          %3035 = vmax.xlane.f32.xlu0 %v3034
          %v3036 = vpop.xlane.xlu0 %3035
          %v3037 = vmax.f32 %v2915, %v2917
          %3038 = vmax.xlane.f32.xlu0 %v3037
          %v3039 = vpop.xlane.xlu0 %3038
          %v3040 = vmax.f32 %v2919, %v2921
          %3041 = vmax.xlane.f32.xlu0 %v3040
          %v3042 = vpop.xlane.xlu0 %3041
          %v3043 = vmax.f32 %v2925, %v2927
          %3044 = vmax.xlane.f32.xlu0 %v3043
          %v3045 = vpop.xlane.xlu0 %3044
          %v3046 = vmax.f32 %v2929, %v2931
          %3047 = vmax.xlane.f32.xlu0 %v3046
          %v3048 = vpop.xlane.xlu0 %3047
          %v3049 = vmax.f32 %v2935, %v2937
          %3050 = vmax.xlane.f32.xlu0 %v3049
          %v3051 = vpop.xlane.xlu0 %3050
          %v3052 = vmax.f32 %v2939, %v2941
          %3053 = vmax.xlane.f32.xlu0 %v3052
          %v3054 = vpop.xlane.xlu0 %3053
          %v3055 = vmax.f32 %v2945, %v2947
          %3056 = vmax.xlane.f32.xlu0 %v3055
          %v3057 = vpop.xlane.xlu0 %3056
          %v3058 = vmax.f32 %v2949, %v2951
          %3059 = vmax.xlane.f32.xlu0 %v3058
          %v3060 = vpop.xlane.xlu0 %3059
          %v3061 = vmax.f32 %v2955, %v2957
          %3062 = vmax.xlane.f32.xlu0 %v3061
          %v3063 = vpop.xlane.xlu0 %3062
          %v3064 = vmax.f32 %v2959, %v2961
          %3065 = vmax.xlane.f32.xlu0 %v3064
          %v3066 = vpop.xlane.xlu0 %3065
          %v3067 = vmax.f32 %v2965, %v2967
          %3068 = vmax.xlane.f32.xlu0 %v3067
          %v3069 = vpop.xlane.xlu0 %3068
          %v3070 = vmax.f32 %v2969, %v2971
          %3071 = vmax.xlane.f32.xlu0 %v3070
          %v3072 = vpop.xlane.xlu0 %3071
          %v3073 = vmax.f32 %v2975, %v2977
          %3074 = vmax.xlane.f32.xlu0 %v3073
          %v3075 = vpop.xlane.xlu0 %3074
          %v3076 = vmax.f32 %v2979, %v2981
          %3077 = vmax.xlane.f32.xlu0 %v3076
          %v3078 = vpop.xlane.xlu0 %3077
          %v3079 = vsub.f32 %v2825, %v2985
          %v3080 = vsub.f32 %v2827, %v2985
          %v3081 = vsub.f32 %v2829, %v2988
          %v3082 = vsub.f32 %v2831, %v2988
          %v3083 = vsub.f32 %v2835, %v2991
          %v3084 = vsub.f32 %v2837, %v2991
          %v3085 = vsub.f32 %v2839, %v2994
          %v3086 = vsub.f32 %v2841, %v2994
          %v3087 = vsub.f32 %v2845, %v2997
          %v3088 = vsub.f32 %v2847, %v2997
          %v3089 = vsub.f32 %v2849, %v3000
          %v3090 = vsub.f32 %v2851, %v3000
          %v3091 = vsub.f32 %v2855, %v3003
          %v3092 = vsub.f32 %v2857, %v3003
          %v3093 = vsub.f32 %v2859, %v3006
          %v3094 = vsub.f32 %v2861, %v3006
          %v3095 = vsub.f32 %v2865, %v3009
          %v3096 = vsub.f32 %v2867, %v3009
          %v3097 = vsub.f32 %v2869, %v3012
          %v3098 = vsub.f32 %v2871, %v3012
          %v3099 = vsub.f32 %v2875, %v3015
          %v3100 = vsub.f32 %v2877, %v3015
          %v3101 = vsub.f32 %v2879, %v3018
          %v3102 = vsub.f32 %v2881, %v3018
          %v3103 = vsub.f32 %v2885, %v3021
          %v3104 = vsub.f32 %v2887, %v3021
          %v3105 = vsub.f32 %v2889, %v3024
          %v3106 = vsub.f32 %v2891, %v3024
          %v3107 = vsub.f32 %v2895, %v3027
          %v3108 = vsub.f32 %v2897, %v3027
          %v3109 = vsub.f32 %v2899, %v3030
          %v3110 = vsub.f32 %v2901, %v3030
          %v3111 = vsub.f32 %v2905, %v3033
          %v3112 = vsub.f32 %v2907, %v3033
          %v3113 = vsub.f32 %v2909, %v3036
          %v3114 = vsub.f32 %v2911, %v3036
          %v3115 = vsub.f32 %v2915, %v3039
          %v3116 = vsub.f32 %v2917, %v3039
          %v3117 = vsub.f32 %v2919, %v3042
          %v3118 = vsub.f32 %v2921, %v3042
          %v3119 = vsub.f32 %v2925, %v3045
          %v3120 = vsub.f32 %v2927, %v3045
          %v3121 = vsub.f32 %v2929, %v3048
          %v3122 = vsub.f32 %v2931, %v3048
          %v3123 = vsub.f32 %v2935, %v3051
          %v3124 = vsub.f32 %v2937, %v3051
          %v3125 = vsub.f32 %v2939, %v3054
          %v3126 = vsub.f32 %v2941, %v3054
          %v3127 = vsub.f32 %v2945, %v3057
          %v3128 = vsub.f32 %v2947, %v3057
          %v3129 = vsub.f32 %v2949, %v3060
          %v3130 = vsub.f32 %v2951, %v3060
          %v3131 = vsub.f32 %v2955, %v3063
          %v3132 = vsub.f32 %v2957, %v3063
          %v3133 = vsub.f32 %v2959, %v3066
          %v3134 = vsub.f32 %v2961, %v3066
          %v3135 = vsub.f32 %v2965, %v3069
          %v3136 = vsub.f32 %v2967, %v3069
          %v3137 = vsub.f32 %v2969, %v3072
          %v3138 = vsub.f32 %v2971, %v3072
          %v3139 = vsub.f32 %v2975, %v3075
          %v3140 = vsub.f32 %v2977, %v3075
          %v3141 = vsub.f32 %v2979, %v3078
          %v3142 = vsub.f32 %v2981, %v3078
          %v3143 = vmul.f32 %v3079, 1.442695
          %v3144 = vpow.pop %v3143
          %v3145 = vmul.f32 %v3080, 1.442695
          %v3146 = vpow.pop %v3145
          %v3147 = vmul.f32 %v3081, 1.442695
          %v3148 = vpow.pop %v3147
          %v3149 = vmul.f32 %v3082, 1.442695
          %v3150 = vpow.pop %v3149
          %v3151 = vmul.f32 %v3083, 1.442695
          %v3152 = vpow.pop %v3151
          %v3153 = vmul.f32 %v3084, 1.442695
          %v3154 = vpow.pop %v3153
          %v3155 = vmul.f32 %v3085, 1.442695
          %v3156 = vpow.pop %v3155
          %v3157 = vmul.f32 %v3086, 1.442695
          %v3158 = vpow.pop %v3157
          %v3159 = vmul.f32 %v3087, 1.442695
          %v3160 = vpow.pop %v3159
          %v3161 = vmul.f32 %v3088, 1.442695
          %v3162 = vpow.pop %v3161
          %v3163 = vmul.f32 %v3089, 1.442695
          %v3164 = vpow.pop %v3163
          %v3165 = vmul.f32 %v3090, 1.442695
          %v3166 = vpow.pop %v3165
          %v3167 = vmul.f32 %v3091, 1.442695
          %v3168 = vpow.pop %v3167
          %v3169 = vmul.f32 %v3092, 1.442695
          %v3170 = vpow.pop %v3169
          %v3171 = vmul.f32 %v3093, 1.442695
          %v3172 = vpow.pop %v3171
          %v3173 = vmul.f32 %v3094, 1.442695
          %v3174 = vpow.pop %v3173
          %v3175 = vmul.f32 %v3095, 1.442695
          %v3176 = vpow.pop %v3175
          %v3177 = vmul.f32 %v3096, 1.442695
          %v3178 = vpow.pop %v3177
          %v3179 = vmul.f32 %v3097, 1.442695
          %v3180 = vpow.pop %v3179
          %v3181 = vmul.f32 %v3098, 1.442695
          %v3182 = vpow.pop %v3181
          %v3183 = vmul.f32 %v3099, 1.442695
          %v3184 = vpow.pop %v3183
          %v3185 = vmul.f32 %v3100, 1.442695
          %v3186 = vpow.pop %v3185
          %v3187 = vmul.f32 %v3101, 1.442695
          %v3188 = vpow.pop %v3187
          %v3189 = vmul.f32 %v3102, 1.442695
          %v3190 = vpow.pop %v3189
          %v3191 = vmul.f32 %v3103, 1.442695
          %v3192 = vpow.pop %v3191
          %v3193 = vmul.f32 %v3104, 1.442695
          %v3194 = vpow.pop %v3193
          %v3195 = vmul.f32 %v3105, 1.442695
          %v3196 = vpow.pop %v3195
          %v3197 = vmul.f32 %v3106, 1.442695
          %v3198 = vpow.pop %v3197
          %v3199 = vmul.f32 %v3107, 1.442695
          %v3200 = vpow.pop %v3199
          %v3201 = vmul.f32 %v3108, 1.442695
          %v3202 = vpow.pop %v3201
          %v3203 = vmul.f32 %v3109, 1.442695
          %v3204 = vpow.pop %v3203
          %v3205 = vmul.f32 %v3110, 1.442695
          %v3206 = vpow.pop %v3205
          %v3207 = vmul.f32 %v3111, 1.442695
          %v3208 = vpow.pop %v3207
          %v3209 = vmul.f32 %v3112, 1.442695
          %v3210 = vpow.pop %v3209
          %v3211 = vmul.f32 %v3113, 1.442695
          %v3212 = vpow.pop %v3211
          %v3213 = vmul.f32 %v3114, 1.442695
          %v3214 = vpow.pop %v3213
          %v3215 = vmul.f32 %v3115, 1.442695
          %v3216 = vpow.pop %v3215
          %v3217 = vmul.f32 %v3116, 1.442695
          %v3218 = vpow.pop %v3217
          %v3219 = vmul.f32 %v3117, 1.442695
          %v3220 = vpow.pop %v3219
          %v3221 = vmul.f32 %v3118, 1.442695
          %v3222 = vpow.pop %v3221
          %v3223 = vmul.f32 %v3119, 1.442695
          %v3224 = vpow.pop %v3223
          %v3225 = vmul.f32 %v3120, 1.442695
          %v3226 = vpow.pop %v3225
          %v3227 = vmul.f32 %v3121, 1.442695
          %v3228 = vpow.pop %v3227
          %v3229 = vmul.f32 %v3122, 1.442695
          %v3230 = vpow.pop %v3229
          %v3231 = vmul.f32 %v3123, 1.442695
          %v3232 = vpow.pop %v3231
          %v3233 = vmul.f32 %v3124, 1.442695
          %v3234 = vpow.pop %v3233
          %v3235 = vmul.f32 %v3125, 1.442695
          %v3236 = vpow.pop %v3235
          %v3237 = vmul.f32 %v3126, 1.442695
          %v3238 = vpow.pop %v3237
          %v3239 = vmul.f32 %v3127, 1.442695
          %v3240 = vpow.pop %v3239
          %v3241 = vmul.f32 %v3128, 1.442695
          %v3242 = vpow.pop %v3241
          %v3243 = vmul.f32 %v3129, 1.442695
          %v3244 = vpow.pop %v3243
          %v3245 = vmul.f32 %v3130, 1.442695
          %v3246 = vpow.pop %v3245
          %v3247 = vmul.f32 %v3131, 1.442695
          %v3248 = vpow.pop %v3247
          %v3249 = vmul.f32 %v3132, 1.442695
          %v3250 = vpow.pop %v3249
          %v3251 = vmul.f32 %v3133, 1.442695
          %v3252 = vpow.pop %v3251
          %v3253 = vmul.f32 %v3134, 1.442695
          %v3254 = vpow.pop %v3253
          %v3255 = vmul.f32 %v3135, 1.442695
          %v3256 = vpow.pop %v3255
          %v3257 = vmul.f32 %v3136, 1.442695
          %v3258 = vpow.pop %v3257
          %v3259 = vmul.f32 %v3137, 1.442695
          %v3260 = vpow.pop %v3259
          %v3261 = vmul.f32 %v3138, 1.442695
          %v3262 = vpow.pop %v3261
          %v3263 = vmul.f32 %v3139, 1.442695
          %v3264 = vpow.pop %v3263
          %v3265 = vmul.f32 %v3140, 1.442695
          %v3266 = vpow.pop %v3265
          %v3267 = vmul.f32 %v3141, 1.442695
          %v3268 = vpow.pop %v3267
          %v3269 = vmul.f32 %v3142, 1.442695
          %v3270 = vpow.pop %v3269
          %v3271 = vadd.f32 %v3144, %v3146
          %3272 = vadd.xlane.f32.xlu0 %v3271
          %v3273 = vpop.xlane.xlu0 %3272
          %v3274 = vadd.f32 %v3148, %v3150
          %3275 = vadd.xlane.f32.xlu0 %v3274
          %v3276 = vpop.xlane.xlu0 %3275
          %v3277 = vadd.f32 %v3152, %v3154
          %3278 = vadd.xlane.f32.xlu0 %v3277
          %v3279 = vpop.xlane.xlu0 %3278
          %v3280 = vadd.f32 %v3156, %v3158
          %3281 = vadd.xlane.f32.xlu0 %v3280
          %v3282 = vpop.xlane.xlu0 %3281
          %v3283 = vadd.f32 %v3160, %v3162
          %3284 = vadd.xlane.f32.xlu0 %v3283
          %v3285 = vpop.xlane.xlu0 %3284
          %v3286 = vadd.f32 %v3164, %v3166
          %3287 = vadd.xlane.f32.xlu0 %v3286
          %v3288 = vpop.xlane.xlu0 %3287
          %v3289 = vadd.f32 %v3168, %v3170
          %3290 = vadd.xlane.f32.xlu0 %v3289
          %v3291 = vpop.xlane.xlu0 %3290
          %v3292 = vadd.f32 %v3172, %v3174
          %3293 = vadd.xlane.f32.xlu0 %v3292
          %v3294 = vpop.xlane.xlu0 %3293
          %v3295 = vadd.f32 %v3176, %v3178
          %3296 = vadd.xlane.f32.xlu0 %v3295
          %v3297 = vpop.xlane.xlu0 %3296
          %v3298 = vadd.f32 %v3180, %v3182
          %3299 = vadd.xlane.f32.xlu0 %v3298
          %v3300 = vpop.xlane.xlu0 %3299
          %v3301 = vadd.f32 %v3184, %v3186
          %3302 = vadd.xlane.f32.xlu0 %v3301
          %v3303 = vpop.xlane.xlu0 %3302
          %v3304 = vadd.f32 %v3188, %v3190
          %3305 = vadd.xlane.f32.xlu0 %v3304
          %v3306 = vpop.xlane.xlu0 %3305
          %v3307 = vadd.f32 %v3192, %v3194
          %3308 = vadd.xlane.f32.xlu0 %v3307
          %v3309 = vpop.xlane.xlu0 %3308
          %v3310 = vadd.f32 %v3196, %v3198
          %3311 = vadd.xlane.f32.xlu0 %v3310
          %v3312 = vpop.xlane.xlu0 %3311
          %v3313 = vadd.f32 %v3200, %v3202
          %3314 = vadd.xlane.f32.xlu0 %v3313
          %v3315 = vpop.xlane.xlu0 %3314
          %v3316 = vadd.f32 %v3204, %v3206
          %3317 = vadd.xlane.f32.xlu0 %v3316
          %v3318 = vpop.xlane.xlu0 %3317
          %v3319 = vadd.f32 %v3208, %v3210
          %3320 = vadd.xlane.f32.xlu0 %v3319
          %v3321 = vpop.xlane.xlu0 %3320
          %v3322 = vadd.f32 %v3212, %v3214
          %3323 = vadd.xlane.f32.xlu0 %v3322
          %v3324 = vpop.xlane.xlu0 %3323
          %v3325 = vadd.f32 %v3216, %v3218
          %3326 = vadd.xlane.f32.xlu0 %v3325
          %v3327 = vpop.xlane.xlu0 %3326
          %v3328 = vadd.f32 %v3220, %v3222
          %3329 = vadd.xlane.f32.xlu0 %v3328
          %v3330 = vpop.xlane.xlu0 %3329
          %v3331 = vadd.f32 %v3224, %v3226
          %3332 = vadd.xlane.f32.xlu0 %v3331
          %v3333 = vpop.xlane.xlu0 %3332
          %v3334 = vadd.f32 %v3228, %v3230
          %3335 = vadd.xlane.f32.xlu0 %v3334
          %v3336 = vpop.xlane.xlu0 %3335
          %v3337 = vadd.f32 %v3232, %v3234
          %3338 = vadd.xlane.f32.xlu0 %v3337
          %v3339 = vpop.xlane.xlu0 %3338
          %v3340 = vadd.f32 %v3236, %v3238
          %3341 = vadd.xlane.f32.xlu0 %v3340
          %v3342 = vpop.xlane.xlu0 %3341
          %v3343 = vadd.f32 %v3240, %v3242
          %3344 = vadd.xlane.f32.xlu0 %v3343
          %v3345 = vpop.xlane.xlu0 %3344
          %v3346 = vadd.f32 %v3244, %v3246
          %3347 = vadd.xlane.f32.xlu0 %v3346
          %v3348 = vpop.xlane.xlu0 %3347
          %v3349 = vadd.f32 %v3248, %v3250
          %3350 = vadd.xlane.f32.xlu0 %v3349
          %v3351 = vpop.xlane.xlu0 %3350
          %v3352 = vadd.f32 %v3252, %v3254
          %3353 = vadd.xlane.f32.xlu0 %v3352
          %v3354 = vpop.xlane.xlu0 %3353
          %v3355 = vadd.f32 %v3256, %v3258
          %3356 = vadd.xlane.f32.xlu0 %v3355
          %v3357 = vpop.xlane.xlu0 %3356
          %v3358 = vadd.f32 %v3260, %v3262
          %3359 = vadd.xlane.f32.xlu0 %v3358
          %v3360 = vpop.xlane.xlu0 %3359
          %v3361 = vadd.f32 %v3264, %v3266
          %3362 = vadd.xlane.f32.xlu0 %v3361
          %v3363 = vpop.xlane.xlu0 %3362
          %v3364 = vadd.f32 %v3268, %v3270
          %3365 = vadd.xlane.f32.xlu0 %v3364
          %v3366 = vpop.xlane.xlu0 %3365
          %v3367 = vpack.c.bf16 %v3148, %v3144
          %v3368 = vpack.c.bf16 %v3150, %v3146
          %v3369 = vpack.c.bf16 %v3156, %v3152
          %v3370 = vpack.c.bf16 %v3158, %v3154
          %v3371 = vpack.c.bf16 %v3164, %v3160
          %v3372 = vpack.c.bf16 %v3166, %v3162
          %v3373 = vpack.c.bf16 %v3172, %v3168
          %v3374 = vpack.c.bf16 %v3174, %v3170
          %v3375 = vpack.c.bf16 %v3180, %v3176
          %v3376 = vpack.c.bf16 %v3182, %v3178
          %v3377 = vpack.c.bf16 %v3188, %v3184
          %v3378 = vpack.c.bf16 %v3190, %v3186
          %v3379 = vpack.c.bf16 %v3196, %v3192
          %v3380 = vpack.c.bf16 %v3198, %v3194
          %v3381 = vpack.c.bf16 %v3204, %v3200
          %v3382 = vpack.c.bf16 %v3206, %v3202
          %v3383 = vpack.c.bf16 %v3212, %v3208
          %v3384 = vpack.c.bf16 %v3214, %v3210
          %v3385 = vpack.c.bf16 %v3220, %v3216
          %v3386 = vpack.c.bf16 %v3222, %v3218
          %v3387 = vpack.c.bf16 %v3228, %v3224
          %v3388 = vpack.c.bf16 %v3230, %v3226
          %v3389 = vpack.c.bf16 %v3236, %v3232
          %v3390 = vpack.c.bf16 %v3238, %v3234
          %v3391 = vpack.c.bf16 %v3244, %v3240
          %v3392 = vpack.c.bf16 %v3246, %v3242
          %v3393 = vpack.c.bf16 %v3252, %v3248
          %v3394 = vpack.c.bf16 %v3254, %v3250
          %v3395 = vpack.c.bf16 %v3260, %v3256
          %v3396 = vpack.c.bf16 %v3262, %v3258
          %v3397 = vpack.c.bf16 %v3268, %v3264
          %v3398 = vpack.c.bf16 %v3270, %v3266
          %3399 = vmatprep.subr.bf16.mxu0 0
          %3400 = vmatpush1.bf16.msra.mxu0 %v2774
          %3401 = vmatprep.subr.bf16.mxu0 0
          %3402 = vmatpush1.bf16.msra.mxu0 %v2775
          %3403 = vmatprep.subr.bf16.mxu0 0
          %3404 = vmatpush1.bf16.msra.mxu0 %v2776
          %3405 = vmatprep.subr.bf16.mxu0 0
          %3406 = vmatpush1.bf16.msra.mxu0 %v2777
          %3407 = vmatprep.subr.bf16.mxu0 0
          %3408 = vmatpush1.bf16.msra.mxu0 %v2778
          %3409 = vmatprep.subr.bf16.mxu0 0
          %3410 = vmatpush1.bf16.msra.mxu0 %v2779
          %3411 = vmatprep.subr.bf16.mxu0 0
          %3412 = vmatpush1.bf16.msra.mxu0 %v2780
          %3413 = vmatprep.subr.bf16.mxu0 0
          %3414 = vmatpush1.bf16.msra.mxu0 %v2781
          %3415 = vmatprep.subr.bf16.mxu0 0
          %3416 = vmatpush1.bf16.msra.mxu0 %v2782
          %3417 = vmatprep.subr.bf16.mxu0 0
          %3418 = vmatpush1.bf16.msra.mxu0 %v2783
          %3419 = vmatprep.subr.bf16.mxu0 0
          %3420 = vmatpush1.bf16.msra.mxu0 %v2784
          %3421 = vmatprep.subr.bf16.mxu0 0
          %3422 = vmatpush1.bf16.msra.mxu0 %v2785
          %3423 = vmatprep.subr.bf16.mxu0 0
          %3424 = vmatpush1.bf16.msra.mxu0 %v2786
          %3425 = vmatprep.subr.bf16.mxu0 0
          %3426 = vmatpush1.bf16.msra.mxu0 %v2787
          %3427 = vmatprep.subr.bf16.mxu0 0
          %3428 = vmatpush1.bf16.msra.mxu0 %v2788
          %3429 = vmatprep.subr.bf16.mxu0 0
          %3430 = vmatpush1.bf16.msra.mxu0 %v2789
          %3431 = vmatprep.mubr.bf16.mxu0 %v3368
          %3432 = vmatmul.mubr.bf16.gmra.mrb[0].mxu0 %v3367
          %v3433 = vpop.f32.mrb[0].mxu0
          %v3434 = vadd.f32 0.0, %v3433
          %v3435 = vpop.f32.mrb[0].mxu0
          %v3436 = vpop.f32.mrb[0].mxu0
          %v3437 = vadd.f32 0.0, %v3436
          %v3438 = vpop.f32.mrb[0].mxu0
          %3439 = vmatprep.mubr.bf16.mxu0 %v3370
          %3440 = vmatmul.mubr.bf16.gmra.mrb[0].mxu0 %v3369
          %v3441 = vpop.f32.mrb[0].mxu0
          %v3442 = vadd.f32 0.0, %v3441
          %v3443 = vpop.f32.mrb[0].mxu0
          %v3444 = vpop.f32.mrb[0].mxu0
          %v3445 = vadd.f32 0.0, %v3444
          %v3446 = vpop.f32.mrb[0].mxu0
          %3447 = vmatprep.mubr.bf16.mxu0 %v3372
          %3448 = vmatmul.mubr.bf16.gmra.mrb[0].mxu0 %v3371
          %v3449 = vpop.f32.mrb[0].mxu0
          %v3450 = vadd.f32 0.0, %v3449
          %v3451 = vpop.f32.mrb[0].mxu0
          %v3452 = vpop.f32.mrb[0].mxu0
          %v3453 = vadd.f32 0.0, %v3452
          %v3454 = vpop.f32.mrb[0].mxu0
          %3455 = vmatprep.mubr.bf16.mxu0 %v3374
          %3456 = vmatmul.mubr.bf16.gmra.mrb[0].mxu0 %v3373
          %v3457 = vpop.f32.mrb[0].mxu0
          %v3458 = vadd.f32 0.0, %v3457
          %v3459 = vpop.f32.mrb[0].mxu0
          %v3460 = vpop.f32.mrb[0].mxu0
          %v3461 = vadd.f32 0.0, %v3460
          %v3462 = vpop.f32.mrb[0].mxu0
          %3463 = vmatprep.mubr.bf16.mxu0 %v3376
          %3464 = vmatmul.mubr.bf16.gmra.mrb[0].mxu0 %v3375
          %v3465 = vpop.f32.mrb[0].mxu0
          %v3466 = vadd.f32 0.0, %v3465
          %v3467 = vpop.f32.mrb[0].mxu0
          %v3468 = vpop.f32.mrb[0].mxu0
          %v3469 = vadd.f32 0.0, %v3468
          %v3470 = vpop.f32.mrb[0].mxu0
          %3471 = vmatprep.mubr.bf16.mxu0 %v3378
          %3472 = vmatmul.mubr.bf16.gmra.mrb[0].mxu0 %v3377
          %v3473 = vpop.f32.mrb[0].mxu0
          %v3474 = vadd.f32 0.0, %v3473
          %v3475 = vpop.f32.mrb[0].mxu0
          %v3476 = vpop.f32.mrb[0].mxu0
          %v3477 = vadd.f32 0.0, %v3476
          %v3478 = vpop.f32.mrb[0].mxu0
          %3479 = vmatprep.mubr.bf16.mxu0 %v3380
          %3480 = vmatmul.mubr.bf16.gmra.mrb[0].mxu0 %v3379
          %v3481 = vpop.f32.mrb[0].mxu0
          %v3482 = vadd.f32 0.0, %v3481
          %v3483 = vpop.f32.mrb[0].mxu0
          %v3484 = vpop.f32.mrb[0].mxu0
          %v3485 = vadd.f32 0.0, %v3484
          %v3486 = vpop.f32.mrb[0].mxu0
          %3487 = vmatprep.mubr.bf16.mxu0 %v3382
          %3488 = vmatmul.mubr.bf16.gmra.mrb[0].mxu0 %v3381
          %v3489 = vpop.f32.mrb[0].mxu0
          %v3490 = vadd.f32 0.0, %v3489
          %v3491 = vpop.f32.mrb[0].mxu0
          %v3492 = vpop.f32.mrb[0].mxu0
          %v3493 = vadd.f32 0.0, %v3492
          %v3494 = vpop.f32.mrb[0].mxu0
          %3495 = vmatprep.mubr.bf16.mxu0 %v3384
          %3496 = vmatmul.mubr.bf16.gmra.mrb[0].mxu0 %v3383
          %v3497 = vpop.f32.mrb[0].mxu0
          %v3498 = vadd.f32 0.0, %v3497
          %v3499 = vpop.f32.mrb[0].mxu0
          %v3500 = vpop.f32.mrb[0].mxu0
          %v3501 = vadd.f32 0.0, %v3500
          %v3502 = vpop.f32.mrb[0].mxu0
          %3503 = vmatprep.mubr.bf16.mxu0 %v3386
          %3504 = vmatmul.mubr.bf16.gmra.mrb[0].mxu0 %v3385
          %v3505 = vpop.f32.mrb[0].mxu0
          %v3506 = vadd.f32 0.0, %v3505
          %v3507 = vpop.f32.mrb[0].mxu0
          %v3508 = vpop.f32.mrb[0].mxu0
          %v3509 = vadd.f32 0.0, %v3508
          %v3510 = vpop.f32.mrb[0].mxu0
          %3511 = vmatprep.mubr.bf16.mxu0 %v3388
          %3512 = vmatmul.mubr.bf16.gmra.mrb[0].mxu0 %v3387
          %v3513 = vpop.f32.mrb[0].mxu0
          %v3514 = vadd.f32 0.0, %v3513
          %v3515 = vpop.f32.mrb[0].mxu0
          %v3516 = vpop.f32.mrb[0].mxu0
          %v3517 = vadd.f32 0.0, %v3516
          %v3518 = vpop.f32.mrb[0].mxu0
          %3519 = vmatprep.mubr.bf16.mxu0 %v3390
          %3520 = vmatmul.mubr.bf16.gmra.mrb[0].mxu0 %v3389
          %v3521 = vpop.f32.mrb[0].mxu0
          %v3522 = vadd.f32 0.0, %v3521
          %v3523 = vpop.f32.mrb[0].mxu0
          %v3524 = vpop.f32.mrb[0].mxu0
          %v3525 = vadd.f32 0.0, %v3524
          %v3526 = vpop.f32.mrb[0].mxu0
          %3527 = vmatprep.mubr.bf16.mxu0 %v3392
          %3528 = vmatmul.mubr.bf16.gmra.mrb[0].mxu0 %v3391
          %v3529 = vpop.f32.mrb[0].mxu0
          %v3530 = vadd.f32 0.0, %v3529
          %v3531 = vpop.f32.mrb[0].mxu0
          %v3532 = vpop.f32.mrb[0].mxu0
          %v3533 = vadd.f32 0.0, %v3532
          %v3534 = vpop.f32.mrb[0].mxu0
          %3535 = vmatprep.mubr.bf16.mxu0 %v3394
          %3536 = vmatmul.mubr.bf16.gmra.mrb[0].mxu0 %v3393
          %v3537 = vpop.f32.mrb[0].mxu0
          %v3538 = vadd.f32 0.0, %v3537
          %v3539 = vpop.f32.mrb[0].mxu0
          %v3540 = vpop.f32.mrb[0].mxu0
          %v3541 = vadd.f32 0.0, %v3540
          %v3542 = vpop.f32.mrb[0].mxu0
          %3543 = vmatprep.mubr.bf16.mxu0 %v3396
          %3544 = vmatmul.mubr.bf16.gmra.mrb[0].mxu0 %v3395
          %v3545 = vpop.f32.mrb[0].mxu0
          %v3546 = vadd.f32 0.0, %v3545
          %v3547 = vpop.f32.mrb[0].mxu0
          %v3548 = vpop.f32.mrb[0].mxu0
          %v3549 = vadd.f32 0.0, %v3548
          %v3550 = vpop.f32.mrb[0].mxu0
          %3551 = vmatprep.mubr.bf16.mxu0 %v3398
          %3552 = vmatmul.mubr.bf16.gmra.mrb[0].mxu0 %v3397
          %v3553 = vpop.f32.mrb[0].mxu0
          %v3554 = vadd.f32 0.0, %v3553
          %v3555 = vpop.f32.mrb[0].mxu0
          %v3556 = vpop.f32.mrb[0].mxu0
          %v3557 = vadd.f32 0.0, %v3556
          %v3558 = vpop.f32.mrb[0].mxu0
          %3559 = vdwg.mxu0
          %v3560 = vrcp.pop %v3273
          %v3561 = vrcp.pop %v3276
          %v3562 = vrcp.pop %v3279
          %v3563 = vrcp.pop %v3282
          %v3564 = vrcp.pop %v3285
          %v3565 = vrcp.pop %v3288
          %v3566 = vrcp.pop %v3291
          %v3567 = vrcp.pop %v3294
          %v3568 = vrcp.pop %v3297
          %v3569 = vrcp.pop %v3300
          %v3570 = vrcp.pop %v3303
          %v3571 = vrcp.pop %v3306
          %v3572 = vrcp.pop %v3309
          %v3573 = vrcp.pop %v3312
          %v3574 = vrcp.pop %v3315
          %v3575 = vrcp.pop %v3318
          %v3576 = vrcp.pop %v3321
          %v3577 = vrcp.pop %v3324
          %v3578 = vrcp.pop %v3327
          %v3579 = vrcp.pop %v3330
          %v3580 = vrcp.pop %v3333
          %v3581 = vrcp.pop %v3336
          %v3582 = vrcp.pop %v3339
          %v3583 = vrcp.pop %v3342
          %v3584 = vrcp.pop %v3345
          %v3585 = vrcp.pop %v3348
          %v3586 = vrcp.pop %v3351
          %v3587 = vrcp.pop %v3354
          %v3588 = vrcp.pop %v3357
          %v3589 = vrcp.pop %v3360
          %v3590 = vrcp.pop %v3363
          %v3591 = vrcp.pop %v3366
          %v3592 = vmul.f32 %v3434, %v3560
          %v3593 = vmul.f32 %v3437, %v3561
          %v3594 = vmul.f32 %v3442, %v3562
          %v3595 = vmul.f32 %v3445, %v3563
          %v3596 = vmul.f32 %v3450, %v3564
          %v3597 = vmul.f32 %v3453, %v3565
          %v3598 = vmul.f32 %v3458, %v3566
          %v3599 = vmul.f32 %v3461, %v3567
          %v3600 = vmul.f32 %v3466, %v3568
          %v3601 = vmul.f32 %v3469, %v3569
          %v3602 = vmul.f32 %v3474, %v3570
          %v3603 = vmul.f32 %v3477, %v3571
          %v3604 = vmul.f32 %v3482, %v3572
          %v3605 = vmul.f32 %v3485, %v3573
          %v3606 = vmul.f32 %v3490, %v3574
          %v3607 = vmul.f32 %v3493, %v3575
          %v3608 = vmul.f32 %v3498, %v3576
          %v3609 = vmul.f32 %v3501, %v3577
          %v3610 = vmul.f32 %v3506, %v3578
          %v3611 = vmul.f32 %v3509, %v3579
          %v3612 = vmul.f32 %v3514, %v3580
          %v3613 = vmul.f32 %v3517, %v3581
          %v3614 = vmul.f32 %v3522, %v3582
          %v3615 = vmul.f32 %v3525, %v3583
          %v3616 = vmul.f32 %v3530, %v3584
          %v3617 = vmul.f32 %v3533, %v3585
          %v3618 = vmul.f32 %v3538, %v3586
          %v3619 = vmul.f32 %v3541, %v3587
          %v3620 = vmul.f32 %v3546, %v3588
          %v3621 = vmul.f32 %v3549, %v3589
          %v3622 = vmul.f32 %v3554, %v3590
          %v3623 = vmul.f32 %v3557, %v3591
          %v3624 = vpack.c.bf16 %v3593, %v3592
          %v3625 = vpack.c.bf16 %v3595, %v3594
          %v3626 = vpack.c.bf16 %v3597, %v3596
          %v3627 = vpack.c.bf16 %v3599, %v3598
          %v3628 = vpack.c.bf16 %v3601, %v3600
          %v3629 = vpack.c.bf16 %v3603, %v3602
          %v3630 = vpack.c.bf16 %v3605, %v3604
          %v3631 = vpack.c.bf16 %v3607, %v3606
          %v3632 = vpack.c.bf16 %v3609, %v3608
          %v3633 = vpack.c.bf16 %v3611, %v3610
          %v3634 = vpack.c.bf16 %v3613, %v3612
          %v3635 = vpack.c.bf16 %v3615, %v3614
          %v3636 = vpack.c.bf16 %v3617, %v3616
          %v3637 = vpack.c.bf16 %v3619, %v3618
          %v3638 = vpack.c.bf16 %v3621, %v3620
          %v3639 = vpack.c.bf16 %v3623, %v3622
          %v3640 = vld [vmem:[#allocation2] sm:$0xff]
          %v3641 = vld [vmem:[#allocation2 + $0x8] sm:$0xff]
          %v3642 = vld [vmem:[#allocation2 + $0x10] sm:$0xff]
          %v3643 = vld [vmem:[#allocation2 + $0x18] sm:$0xff]
          %v3644 = vld [vmem:[#allocation2 + $0x20] sm:$0xff]
          %v3645 = vld [vmem:[#allocation2 + $0x28] sm:$0xff]
          %v3646 = vld [vmem:[#allocation2 + $0x30] sm:$0xff]
          %v3647 = vld [vmem:[#allocation2 + $0x38] sm:$0xff]
          %v3648 = vld [vmem:[#allocation2 + $0x40] sm:$0xff]
          %v3649 = vld [vmem:[#allocation2 + $0x48] sm:$0xff]
          %v3650 = vld [vmem:[#allocation2 + $0x50] sm:$0xff]
          %v3651 = vld [vmem:[#allocation2 + $0x58] sm:$0xff]
          %v3652 = vld [vmem:[#allocation2 + $0x60] sm:$0xff]
          %v3653 = vld [vmem:[#allocation2 + $0x68] sm:$0xff]
          %v3654 = vld [vmem:[#allocation2 + $0x70] sm:$0xff]
          %v3655 = vld [vmem:[#allocation2 + $0x78] sm:$0xff]
          %v3656 = vld [vmem:[#allocation2 + $0x80] sm:$0xff]
          %v3657 = vld [vmem:[#allocation2 + $0x88] sm:$0xff]
          %v3658 = vld [vmem:[#allocation2 + $0x90] sm:$0xff]
          %v3659 = vld [vmem:[#allocation2 + $0x98] sm:$0xff]
          %v3660 = vld [vmem:[#allocation2 + $0xa0] sm:$0xff]
          %v3661 = vld [vmem:[#allocation2 + $0xa8] sm:$0xff]
          %v3662 = vld [vmem:[#allocation2 + $0xb0] sm:$0xff]
          %v3663 = vld [vmem:[#allocation2 + $0xb8] sm:$0xff]
          %v3664 = vld [vmem:[#allocation2 + $0xc0] sm:$0xff]
          %v3665 = vld [vmem:[#allocation2 + $0xc8] sm:$0xff]
          %v3666 = vld [vmem:[#allocation2 + $0xd0] sm:$0xff]
          %v3667 = vld [vmem:[#allocation2 + $0xd8] sm:$0xff]
          %v3668 = vld [vmem:[#allocation2 + $0xe0] sm:$0xff]
          %v3669 = vld [vmem:[#allocation2 + $0xe8] sm:$0xff]
          %v3670 = vld [vmem:[#allocation2 + $0xf0] sm:$0xff]
          %v3671 = vld [vmem:[#allocation2 + $0xf8] sm:$0xff]
          %s3672 = smul.addr %s2060, 4
          %s3673 = scalar_lea.vmem %s25, %s3672
          %v3674 = vld [vmem:[%s3673] sm:$0xf]
          %v3675 = vld [vmem:[%s3673 + $0x4] sm:$0xf]
          %v3676 = vld [vmem:[%s3673 + $0x8] sm:$0xf]
          %v3677 = vld [vmem:[%s3673 + $0xc] sm:$0xf]
          %v3678 = vld [vmem:[%s3673 + $0x10] sm:$0xf]
          %v3679 = vld [vmem:[%s3673 + $0x14] sm:$0xf]
          %v3680 = vld [vmem:[%s3673 + $0x18] sm:$0xf]
          %v3681 = vld [vmem:[%s3673 + $0x1c] sm:$0xf]
          %v3682 = vld [vmem:[%s3673 + $0x20] sm:$0xf]
          %v3683 = vld [vmem:[%s3673 + $0x24] sm:$0xf]
          %v3684 = vld [vmem:[%s3673 + $0x28] sm:$0xf]
          %v3685 = vld [vmem:[%s3673 + $0x2c] sm:$0xf]
          %v3686 = vld [vmem:[%s3673 + $0x30] sm:$0xf]
          %v3687 = vld [vmem:[%s3673 + $0x34] sm:$0xf]
          %v3688 = vld [vmem:[%s3673 + $0x38] sm:$0xf]
          %v3689 = vld [vmem:[%s3673 + $0x3c] sm:$0xf]
          %v3706 = vunpack.c.l.b16 %v3674
          %v3707 = vunpack.c.l.b16 %v3675
          %v3708 = vunpack.c.l.b16 %v3676
          %v3709 = vunpack.c.l.b16 %v3677
          %v3710 = vunpack.c.l.b16 %v3678
          %v3711 = vunpack.c.l.b16 %v3679
          %v3712 = vunpack.c.l.b16 %v3680
          %v3713 = vunpack.c.l.b16 %v3681
          %v3714 = vunpack.c.l.b16 %v3682
          %v3715 = vunpack.c.l.b16 %v3683
          %v3716 = vunpack.c.l.b16 %v3684
          %v3717 = vunpack.c.l.b16 %v3685
          %v3718 = vunpack.c.l.b16 %v3686
          %v3719 = vunpack.c.l.b16 %v3687
          %v3720 = vunpack.c.l.b16 %v3688
          %v3721 = vunpack.c.l.b16 %v3689
          %v3722 = vpack.c.b16 %v3707, %v3706
          %v3723 = vpack.c.b16 %v3709, %v3708
          %v3724 = vpack.c.b16 %v3711, %v3710
          %v3725 = vpack.c.b16 %v3713, %v3712
          %v3726 = vpack.c.b16 %v3715, %v3714
          %v3727 = vpack.c.b16 %v3717, %v3716
          %v3728 = vpack.c.b16 %v3719, %v3718
          %v3729 = vpack.c.b16 %v3721, %v3720
          %3738 = vmatprep.subr.bf16.mxu0 0
          %3739 = vmatpush1.bf16.msra.mxu0 %v3722
          %3740 = vmatprep.subr.bf16.mxu0 0
          %3741 = vmatpush1.bf16.msra.mxu0 %v3723
          %3742 = vmatprep.subr.bf16.mxu0 0
          %3743 = vmatpush1.bf16.msra.mxu0 %v3724
          %3744 = vmatprep.subr.bf16.mxu0 0
          %3745 = vmatpush1.bf16.msra.mxu0 %v3725
          %3746 = vmatprep.subr.bf16.mxu0 0
          %3747 = vmatpush1.bf16.msra.mxu0 %v3726
          %3748 = vmatprep.subr.bf16.mxu0 0
          %3749 = vmatpush1.bf16.msra.mxu0 %v3727
          %3750 = vmatprep.subr.bf16.mxu0 0
          %3751 = vmatpush1.bf16.msra.mxu0 %v3728
          %3752 = vmatprep.subr.bf16.mxu0 0
          %3753 = vmatpush1.bf16.msra.mxu0 %v3729
          %3754 = vmatprep.subr.bf16.mxu0 0
          %3755 = vmatpush1.bf16.msra.mxu0 0
          %3756 = vmatprep.subr.bf16.mxu0 0
          %3757 = vmatpush1.bf16.msra.mxu0 0
          %3758 = vmatprep.subr.bf16.mxu0 0
          %3759 = vmatpush1.bf16.msra.mxu0 0
          %3760 = vmatprep.subr.bf16.mxu0 0
          %3761 = vmatpush1.bf16.msra.mxu0 0
          %3762 = vmatprep.subr.bf16.mxu0 0
          %3763 = vmatpush1.bf16.msra.mxu0 0
          %3764 = vmatprep.subr.bf16.mxu0 0
          %3765 = vmatpush1.bf16.msra.mxu0 0
          %3766 = vmatprep.subr.bf16.mxu0 0
          %3767 = vmatpush1.bf16.msra.mxu0 0
          %3768 = vmatprep.subr.bf16.mxu0 0
          %3769 = vmatpush1.bf16.msra.mxu0 0
          %3770 = vmatprep.mubr.bf16.mxu0 0
          %3771 = vmatmul.mubr.bf16.gmra.mrb[0].mxu0 %v3624
          %v3772 = vpop.f32.mrb[0].mxu0
          %v3773 = vadd.f32 0.0, %v3772
          %v3774 = vpop.f32.mrb[0].mxu0
          %v3775 = vpop.f32.mrb[0].mxu0
          %v3776 = vadd.f32 0.0, %v3775
          %v3777 = vpop.f32.mrb[0].mxu0
          %3778 = vmatprep.mubr.bf16.mxu0 0
          %3779 = vmatmul.mubr.bf16.gmra.mrb[0].mxu0 %v3625
          %v3780 = vpop.f32.mrb[0].mxu0
          %v3781 = vadd.f32 0.0, %v3780
          %v3782 = vpop.f32.mrb[0].mxu0
          %v3783 = vpop.f32.mrb[0].mxu0
          %v3784 = vadd.f32 0.0, %v3783
          %v3785 = vpop.f32.mrb[0].mxu0
          %3786 = vmatprep.mubr.bf16.mxu0 0
          %3787 = vmatmul.mubr.bf16.gmra.mrb[0].mxu0 %v3626
          %v3788 = vpop.f32.mrb[0].mxu0
          %v3789 = vadd.f32 0.0, %v3788
          %v3790 = vpop.f32.mrb[0].mxu0
          %v3791 = vpop.f32.mrb[0].mxu0
          %v3792 = vadd.f32 0.0, %v3791
          %v3793 = vpop.f32.mrb[0].mxu0
          %3794 = vmatprep.mubr.bf16.mxu0 0
          %3795 = vmatmul.mubr.bf16.gmra.mrb[0].mxu0 %v3627
          %v3796 = vpop.f32.mrb[0].mxu0
          %v3797 = vadd.f32 0.0, %v3796
          %v3798 = vpop.f32.mrb[0].mxu0
          %v3799 = vpop.f32.mrb[0].mxu0
          %v3800 = vadd.f32 0.0, %v3799
          %v3801 = vpop.f32.mrb[0].mxu0
          %3802 = vmatprep.mubr.bf16.mxu0 0
          %3803 = vmatmul.mubr.bf16.gmra.mrb[0].mxu0 %v3628
          %v3804 = vpop.f32.mrb[0].mxu0
          %v3805 = vadd.f32 0.0, %v3804
          %v3806 = vpop.f32.mrb[0].mxu0
          %v3807 = vpop.f32.mrb[0].mxu0
          %v3808 = vadd.f32 0.0, %v3807
          %v3809 = vpop.f32.mrb[0].mxu0
          %3810 = vmatprep.mubr.bf16.mxu0 0
          %3811 = vmatmul.mubr.bf16.gmra.mrb[0].mxu0 %v3629
          %v3812 = vpop.f32.mrb[0].mxu0
          %v3813 = vadd.f32 0.0, %v3812
          %v3814 = vpop.f32.mrb[0].mxu0
          %v3815 = vpop.f32.mrb[0].mxu0
          %v3816 = vadd.f32 0.0, %v3815
          %v3817 = vpop.f32.mrb[0].mxu0
          %3818 = vmatprep.mubr.bf16.mxu0 0
          %3819 = vmatmul.mubr.bf16.gmra.mrb[0].mxu0 %v3630
          %v3820 = vpop.f32.mrb[0].mxu0
          %v3821 = vadd.f32 0.0, %v3820
          %v3822 = vpop.f32.mrb[0].mxu0
          %v3823 = vpop.f32.mrb[0].mxu0
          %v3824 = vadd.f32 0.0, %v3823
          %v3825 = vpop.f32.mrb[0].mxu0
          %3826 = vmatprep.mubr.bf16.mxu0 0
          %3827 = vmatmul.mubr.bf16.gmra.mrb[0].mxu0 %v3631
          %v3828 = vpop.f32.mrb[0].mxu0
          %v3829 = vadd.f32 0.0, %v3828
          %v3830 = vpop.f32.mrb[0].mxu0
          %v3831 = vpop.f32.mrb[0].mxu0
          %v3832 = vadd.f32 0.0, %v3831
          %v3833 = vpop.f32.mrb[0].mxu0
          %3834 = vmatprep.mubr.bf16.mxu0 0
          %3835 = vmatmul.mubr.bf16.gmra.mrb[0].mxu0 %v3632
          %v3836 = vpop.f32.mrb[0].mxu0
          %v3837 = vadd.f32 0.0, %v3836
          %v3838 = vpop.f32.mrb[0].mxu0
          %v3839 = vpop.f32.mrb[0].mxu0
          %v3840 = vadd.f32 0.0, %v3839
          %v3841 = vpop.f32.mrb[0].mxu0
          %3842 = vmatprep.mubr.bf16.mxu0 0
          %3843 = vmatmul.mubr.bf16.gmra.mrb[0].mxu0 %v3633
          %v3844 = vpop.f32.mrb[0].mxu0
          %v3845 = vadd.f32 0.0, %v3844
          %v3846 = vpop.f32.mrb[0].mxu0
          %v3847 = vpop.f32.mrb[0].mxu0
          %v3848 = vadd.f32 0.0, %v3847
          %v3849 = vpop.f32.mrb[0].mxu0
          %3850 = vmatprep.mubr.bf16.mxu0 0
          %3851 = vmatmul.mubr.bf16.gmra.mrb[0].mxu0 %v3634
          %v3852 = vpop.f32.mrb[0].mxu0
          %v3853 = vadd.f32 0.0, %v3852
          %v3854 = vpop.f32.mrb[0].mxu0
          %v3855 = vpop.f32.mrb[0].mxu0
          %v3856 = vadd.f32 0.0, %v3855
          %v3857 = vpop.f32.mrb[0].mxu0
          %3858 = vmatprep.mubr.bf16.mxu0 0
          %3859 = vmatmul.mubr.bf16.gmra.mrb[0].mxu0 %v3635
          %v3860 = vpop.f32.mrb[0].mxu0
          %v3861 = vadd.f32 0.0, %v3860
          %v3862 = vpop.f32.mrb[0].mxu0
          %v3863 = vpop.f32.mrb[0].mxu0
          %v3864 = vadd.f32 0.0, %v3863
          %v3865 = vpop.f32.mrb[0].mxu0
          %3866 = vmatprep.mubr.bf16.mxu0 0
          %3867 = vmatmul.mubr.bf16.gmra.mrb[0].mxu0 %v3636
          %v3868 = vpop.f32.mrb[0].mxu0
          %v3869 = vadd.f32 0.0, %v3868
          %v3870 = vpop.f32.mrb[0].mxu0
          %v3871 = vpop.f32.mrb[0].mxu0
          %v3872 = vadd.f32 0.0, %v3871
          %v3873 = vpop.f32.mrb[0].mxu0
          %3874 = vmatprep.mubr.bf16.mxu0 0
          %3875 = vmatmul.mubr.bf16.gmra.mrb[0].mxu0 %v3637
          %v3876 = vpop.f32.mrb[0].mxu0
          %v3877 = vadd.f32 0.0, %v3876
          %v3878 = vpop.f32.mrb[0].mxu0
          %v3879 = vpop.f32.mrb[0].mxu0
          %v3880 = vadd.f32 0.0, %v3879
          %v3881 = vpop.f32.mrb[0].mxu0
          %3882 = vmatprep.mubr.bf16.mxu0 0
          %3883 = vmatmul.mubr.bf16.gmra.mrb[0].mxu0 %v3638
          %v3884 = vpop.f32.mrb[0].mxu0
          %v3885 = vadd.f32 0.0, %v3884
          %v3886 = vpop.f32.mrb[0].mxu0
          %v3887 = vpop.f32.mrb[0].mxu0
          %v3888 = vadd.f32 0.0, %v3887
          %v3889 = vpop.f32.mrb[0].mxu0
          %3890 = vmatprep.mubr.bf16.mxu0 0
          %3891 = vmatmul.mubr.bf16.gmra.mrb[0].mxu0 %v3639
          %v3892 = vpop.f32.mrb[0].mxu0
          %v3893 = vadd.f32 0.0, %v3892
          %v3894 = vpop.f32.mrb[0].mxu0
          %v3895 = vpop.f32.mrb[0].mxu0
          %v3896 = vadd.f32 0.0, %v3895
          %v3897 = vpop.f32.mrb[0].mxu0
          %3898 = vdwg.mxu0
          %v3899 = vadd.f32 %v3640, %v3773
          %v3900 = vadd.f32 %v3641, %v3776
          %v3901 = vadd.f32 %v3642, %v3781
          %v3902 = vadd.f32 %v3643, %v3784
          %v3903 = vadd.f32 %v3644, %v3789
          %v3904 = vadd.f32 %v3645, %v3792
          %v3905 = vadd.f32 %v3646, %v3797
          %v3906 = vadd.f32 %v3647, %v3800
          %v3907 = vadd.f32 %v3648, %v3805
          %v3908 = vadd.f32 %v3649, %v3808
          %v3909 = vadd.f32 %v3650, %v3813
          %v3910 = vadd.f32 %v3651, %v3816
          %v3911 = vadd.f32 %v3652, %v3821
          %v3912 = vadd.f32 %v3653, %v3824
          %v3913 = vadd.f32 %v3654, %v3829
          %v3914 = vadd.f32 %v3655, %v3832
          %v3915 = vadd.f32 %v3656, %v3837
          %v3916 = vadd.f32 %v3657, %v3840
          %v3917 = vadd.f32 %v3658, %v3845
          %v3918 = vadd.f32 %v3659, %v3848
          %v3919 = vadd.f32 %v3660, %v3853
          %v3920 = vadd.f32 %v3661, %v3856
          %v3921 = vadd.f32 %v3662, %v3861
          %v3922 = vadd.f32 %v3663, %v3864
          %v3923 = vadd.f32 %v3664, %v3869
          %v3924 = vadd.f32 %v3665, %v3872
          %v3925 = vadd.f32 %v3666, %v3877
          %v3926 = vadd.f32 %v3667, %v3880
          %v3927 = vadd.f32 %v3668, %v3885
          %v3928 = vadd.f32 %v3669, %v3888
          %v3929 = vadd.f32 %v3670, %v3893
          %v3930 = vadd.f32 %v3671, %v3896
          %3931 = vst [vmem:[#allocation2] sm:$0xff] %v3899
          %3932 = vst [vmem:[#allocation2 + $0x8] sm:$0xff] %v3900
          %3933 = vst [vmem:[#allocation2 + $0x10] sm:$0xff] %v3901
          %3934 = vst [vmem:[#allocation2 + $0x18] sm:$0xff] %v3902
          %3935 = vst [vmem:[#allocation2 + $0x20] sm:$0xff] %v3903
          %3936 = vst [vmem:[#allocation2 + $0x28] sm:$0xff] %v3904
          %3937 = vst [vmem:[#allocation2 + $0x30] sm:$0xff] %v3905
          %3938 = vst [vmem:[#allocation2 + $0x38] sm:$0xff] %v3906
          %3939 = vst [vmem:[#allocation2 + $0x40] sm:$0xff] %v3907
          %3940 = vst [vmem:[#allocation2 + $0x48] sm:$0xff] %v3908
          %3941 = vst [vmem:[#allocation2 + $0x50] sm:$0xff] %v3909
          %3942 = vst [vmem:[#allocation2 + $0x58] sm:$0xff] %v3910
          %3943 = vst [vmem:[#allocation2 + $0x60] sm:$0xff] %v3911
          %3944 = vst [vmem:[#allocation2 + $0x68] sm:$0xff] %v3912
          %3945 = vst [vmem:[#allocation2 + $0x70] sm:$0xff] %v3913
          %3946 = vst [vmem:[#allocation2 + $0x78] sm:$0xff] %v3914
          %3947 = vst [vmem:[#allocation2 + $0x80] sm:$0xff] %v3915
          %3948 = vst [vmem:[#allocation2 + $0x88] sm:$0xff] %v3916
          %3949 = vst [vmem:[#allocation2 + $0x90] sm:$0xff] %v3917
          %3950 = vst [vmem:[#allocation2 + $0x98] sm:$0xff] %v3918
          %3951 = vst [vmem:[#allocation2 + $0xa0] sm:$0xff] %v3919
          %3952 = vst [vmem:[#allocation2 + $0xa8] sm:$0xff] %v3920
          %3953 = vst [vmem:[#allocation2 + $0xb0] sm:$0xff] %v3921
          %3954 = vst [vmem:[#allocation2 + $0xb8] sm:$0xff] %v3922
          %3955 = vst [vmem:[#allocation2 + $0xc0] sm:$0xff] %v3923
          %3956 = vst [vmem:[#allocation2 + $0xc8] sm:$0xff] %v3924
          %3957 = vst [vmem:[#allocation2 + $0xd0] sm:$0xff] %v3925
          %3958 = vst [vmem:[#allocation2 + $0xd8] sm:$0xff] %v3926
          %3959 = vst [vmem:[#allocation2 + $0xe0] sm:$0xff] %v3927
          %3960 = vst [vmem:[#allocation2 + $0xe8] sm:$0xff] %v3928
          %3961 = vst [vmem:[#allocation2 + $0xf0] sm:$0xff] %v3929
          %3962 = vst [vmem:[#allocation2 + $0xf8] sm:$0xff] %v3930
        $region239: #{unet_attention_block.1} parent=131 // loop_footer
          %s2059 = sadd.s32 1, %s2055
        $region240: #{unet_attention_block.1} parent=131 // loop_footer_branch
          %2054 = sbr.rel target = $region236
        $region241: #{unet_attention_block.1} parent=131 // loop_exit
          _
        %v3963 = vld [vmem:[#allocation2] sm:$0xff]
        %v3964 = vld [vmem:[#allocation2 + $0x8] sm:$0xff]
        %v3965 = vld [vmem:[#allocation2 + $0x10] sm:$0xff]
        %v3966 = vld [vmem:[#allocation2 + $0x18] sm:$0xff]
        %v3967 = vld [vmem:[#allocation2 + $0x20] sm:$0xff]
        %v3968 = vld [vmem:[#allocation2 + $0x28] sm:$0xff]
        %v3969 = vld [vmem:[#allocation2 + $0x30] sm:$0xff]
        %v3970 = vld [vmem:[#allocation2 + $0x38] sm:$0xff]
        %v3971 = vld [vmem:[#allocation2 + $0x40] sm:$0xff]
        %v3972 = vld [vmem:[#allocation2 + $0x48] sm:$0xff]
        %v3973 = vld [vmem:[#allocation2 + $0x50] sm:$0xff]
        %v3974 = vld [vmem:[#allocation2 + $0x58] sm:$0xff]
        %v3975 = vld [vmem:[#allocation2 + $0x60] sm:$0xff]
        %v3976 = vld [vmem:[#allocation2 + $0x68] sm:$0xff]
        %v3977 = vld [vmem:[#allocation2 + $0x70] sm:$0xff]
        %v3978 = vld [vmem:[#allocation2 + $0x78] sm:$0xff]
        %v3979 = vld [vmem:[#allocation2 + $0x80] sm:$0xff]
        %v3980 = vld [vmem:[#allocation2 + $0x88] sm:$0xff]
        %v3981 = vld [vmem:[#allocation2 + $0x90] sm:$0xff]
        %v3982 = vld [vmem:[#allocation2 + $0x98] sm:$0xff]
        %v3983 = vld [vmem:[#allocation2 + $0xa0] sm:$0xff]
        %v3984 = vld [vmem:[#allocation2 + $0xa8] sm:$0xff]
        %v3985 = vld [vmem:[#allocation2 + $0xb0] sm:$0xff]
        %v3986 = vld [vmem:[#allocation2 + $0xb8] sm:$0xff]
        %v3987 = vld [vmem:[#allocation2 + $0xc0] sm:$0xff]
        %v3988 = vld [vmem:[#allocation2 + $0xc8] sm:$0xff]
        %v3989 = vld [vmem:[#allocation2 + $0xd0] sm:$0xff]
        %v3990 = vld [vmem:[#allocation2 + $0xd8] sm:$0xff]
        %v3991 = vld [vmem:[#allocation2 + $0xe0] sm:$0xff]
        %v3992 = vld [vmem:[#allocation2 + $0xe8] sm:$0xff]
        %v3993 = vld [vmem:[#allocation2 + $0xf0] sm:$0xff]
        %v3994 = vld [vmem:[#allocation2 + $0xf8] sm:$0xff]
        %v3995 = vadd.f32 %v1354, %v3963
        %v3996 = vadd.f32 %v1357, %v3964
        %v3997 = vadd.f32 %v1362, %v3965
        %v3998 = vadd.f32 %v1365, %v3966
        %v3999 = vadd.f32 %v1370, %v3967
        %v4000 = vadd.f32 %v1373, %v3968
        %v4001 = vadd.f32 %v1378, %v3969
        %v4002 = vadd.f32 %v1381, %v3970
        %v4003 = vadd.f32 %v1386, %v3971
        %v4004 = vadd.f32 %v1389, %v3972
        %v4005 = vadd.f32 %v1394, %v3973
        %v4006 = vadd.f32 %v1397, %v3974
        %v4007 = vadd.f32 %v1402, %v3975
        %v4008 = vadd.f32 %v1405, %v3976
        %v4009 = vadd.f32 %v1410, %v3977
        %v4010 = vadd.f32 %v1413, %v3978
        %v4011 = vadd.f32 %v1418, %v3979
        %v4012 = vadd.f32 %v1421, %v3980
        %v4013 = vadd.f32 %v1426, %v3981
        %v4014 = vadd.f32 %v1429, %v3982
        %v4015 = vadd.f32 %v1434, %v3983
        %v4016 = vadd.f32 %v1437, %v3984
        %v4017 = vadd.f32 %v1442, %v3985
        %v4018 = vadd.f32 %v1445, %v3986
        %v4019 = vadd.f32 %v1450, %v3987
        %v4020 = vadd.f32 %v1453, %v3988
        %v4021 = vadd.f32 %v1458, %v3989
        %v4022 = vadd.f32 %v1461, %v3990
        %v4023 = vadd.f32 %v1466, %v3991
        %v4024 = vadd.f32 %v1469, %v3992
        %v4025 = vadd.f32 %v1474, %v3993
        %v4026 = vadd.f32 %v1477, %v3994
        %v4027 = vld [vmem:[%s27] sm:$0x1]
        %v4029 = vlaneseq
        %v4030 = vshrl.u32 %v4029, 7
        %v4031 = vsub.s32 0, %v4030
        %v4032 = vrot.slane %v4027, %v4031
        %v4034 = vadd.f32 %v3995, %v4032
        %v4035 = vadd.f32 %v3996, %v4032
        %v4036 = vadd.f32 %v3997, %v4032
        %v4037 = vadd.f32 %v3998, %v4032
        %v4038 = vadd.f32 %v3999, %v4032
        %v4039 = vadd.f32 %v4000, %v4032
        %v4040 = vadd.f32 %v4001, %v4032
        %v4041 = vadd.f32 %v4002, %v4032
        %v4042 = vadd.f32 %v4003, %v4032
        %v4043 = vadd.f32 %v4004, %v4032
        %v4044 = vadd.f32 %v4005, %v4032
        %v4045 = vadd.f32 %v4006, %v4032
        %v4046 = vadd.f32 %v4007, %v4032
        %v4047 = vadd.f32 %v4008, %v4032
        %v4048 = vadd.f32 %v4009, %v4032
        %v4049 = vadd.f32 %v4010, %v4032
        %v4050 = vadd.f32 %v4011, %v4032
        %v4051 = vadd.f32 %v4012, %v4032
        %v4052 = vadd.f32 %v4013, %v4032
        %v4053 = vadd.f32 %v4014, %v4032
        %v4054 = vadd.f32 %v4015, %v4032
        %v4055 = vadd.f32 %v4016, %v4032
        %v4056 = vadd.f32 %v4017, %v4032
        %v4057 = vadd.f32 %v4018, %v4032
        %v4058 = vadd.f32 %v4019, %v4032
        %v4059 = vadd.f32 %v4020, %v4032
        %v4060 = vadd.f32 %v4021, %v4032
        %v4061 = vadd.f32 %v4022, %v4032
        %v4062 = vadd.f32 %v4023, %v4032
        %v4063 = vadd.f32 %v4024, %v4032
        %v4064 = vadd.f32 %v4025, %v4032
        %v4065 = vadd.f32 %v4026, %v4032
        %4066 = vadd.xlane.f32.xlu0 %v4034
        %v4067 = vpop.xlane.xlu0 %4066
        %4068 = vadd.xlane.f32.xlu0 %v4035
        %v4069 = vpop.xlane.xlu0 %4068
        %4070 = vadd.xlane.f32.xlu0 %v4036
        %v4071 = vpop.xlane.xlu0 %4070
        %4072 = vadd.xlane.f32.xlu0 %v4037
        %v4073 = vpop.xlane.xlu0 %4072
        %4074 = vadd.xlane.f32.xlu0 %v4038
        %v4075 = vpop.xlane.xlu0 %4074
        %4076 = vadd.xlane.f32.xlu0 %v4039
        %v4077 = vpop.xlane.xlu0 %4076
        %4078 = vadd.xlane.f32.xlu0 %v4040
        %v4079 = vpop.xlane.xlu0 %4078
        %4080 = vadd.xlane.f32.xlu0 %v4041
        %v4081 = vpop.xlane.xlu0 %4080
        %4082 = vadd.xlane.f32.xlu0 %v4042
        %v4083 = vpop.xlane.xlu0 %4082
        %4084 = vadd.xlane.f32.xlu0 %v4043
        %v4085 = vpop.xlane.xlu0 %4084
        %4086 = vadd.xlane.f32.xlu0 %v4044
        %v4087 = vpop.xlane.xlu0 %4086
        %4088 = vadd.xlane.f32.xlu0 %v4045
        %v4089 = vpop.xlane.xlu0 %4088
        %4090 = vadd.xlane.f32.xlu0 %v4046
        %v4091 = vpop.xlane.xlu0 %4090
        %4092 = vadd.xlane.f32.xlu0 %v4047
        %v4093 = vpop.xlane.xlu0 %4092
        %4094 = vadd.xlane.f32.xlu0 %v4048
        %v4095 = vpop.xlane.xlu0 %4094
        %4096 = vadd.xlane.f32.xlu0 %v4049
        %v4097 = vpop.xlane.xlu0 %4096
        %4098 = vadd.xlane.f32.xlu0 %v4050
        %v4099 = vpop.xlane.xlu0 %4098
        %4100 = vadd.xlane.f32.xlu0 %v4051
        %v4101 = vpop.xlane.xlu0 %4100
        %4102 = vadd.xlane.f32.xlu0 %v4052
        %v4103 = vpop.xlane.xlu0 %4102
        %4104 = vadd.xlane.f32.xlu0 %v4053
        %v4105 = vpop.xlane.xlu0 %4104
        %4106 = vadd.xlane.f32.xlu0 %v4054
        %v4107 = vpop.xlane.xlu0 %4106
        %4108 = vadd.xlane.f32.xlu0 %v4055
        %v4109 = vpop.xlane.xlu0 %4108
        %4110 = vadd.xlane.f32.xlu0 %v4056
        %v4111 = vpop.xlane.xlu0 %4110
        %4112 = vadd.xlane.f32.xlu0 %v4057
        %v4113 = vpop.xlane.xlu0 %4112
        %4114 = vadd.xlane.f32.xlu0 %v4058
        %v4115 = vpop.xlane.xlu0 %4114
        %4116 = vadd.xlane.f32.xlu0 %v4059
        %v4117 = vpop.xlane.xlu0 %4116
        %4118 = vadd.xlane.f32.xlu0 %v4060
        %v4119 = vpop.xlane.xlu0 %4118
        %4120 = vadd.xlane.f32.xlu0 %v4061
        %v4121 = vpop.xlane.xlu0 %4120
        %4122 = vadd.xlane.f32.xlu0 %v4062
        %v4123 = vpop.xlane.xlu0 %4122
        %4124 = vadd.xlane.f32.xlu0 %v4063
        %v4125 = vpop.xlane.xlu0 %4124
        %4126 = vadd.xlane.f32.xlu0 %v4064
        %v4127 = vpop.xlane.xlu0 %4126
        %4128 = vadd.xlane.f32.xlu0 %v4065
        %v4129 = vpop.xlane.xlu0 %4128
        %v4130 = vmul.f32 %v4067, 0.03125
        %v4131 = vmul.f32 %v4069, 0.03125
        %v4132 = vmul.f32 %v4071, 0.03125
        %v4133 = vmul.f32 %v4073, 0.03125
        %v4134 = vmul.f32 %v4075, 0.03125
        %v4135 = vmul.f32 %v4077, 0.03125
        %v4136 = vmul.f32 %v4079, 0.03125
        %v4137 = vmul.f32 %v4081, 0.03125
        %v4138 = vmul.f32 %v4083, 0.03125
        %v4139 = vmul.f32 %v4085, 0.03125
        %v4140 = vmul.f32 %v4087, 0.03125
        %v4141 = vmul.f32 %v4089, 0.03125
        %v4142 = vmul.f32 %v4091, 0.03125
        %v4143 = vmul.f32 %v4093, 0.03125
        %v4144 = vmul.f32 %v4095, 0.03125
        %v4145 = vmul.f32 %v4097, 0.03125
        %v4146 = vmul.f32 %v4099, 0.03125
        %v4147 = vmul.f32 %v4101, 0.03125
        %v4148 = vmul.f32 %v4103, 0.03125
        %v4149 = vmul.f32 %v4105, 0.03125
        %v4150 = vmul.f32 %v4107, 0.03125
        %v4151 = vmul.f32 %v4109, 0.03125
        %v4152 = vmul.f32 %v4111, 0.03125
        %v4153 = vmul.f32 %v4113, 0.03125
        %v4154 = vmul.f32 %v4115, 0.03125
        %v4155 = vmul.f32 %v4117, 0.03125
        %v4156 = vmul.f32 %v4119, 0.03125
        %v4157 = vmul.f32 %v4121, 0.03125
        %v4158 = vmul.f32 %v4123, 0.03125
        %v4159 = vmul.f32 %v4125, 0.03125
        %v4160 = vmul.f32 %v4127, 0.03125
        %v4161 = vmul.f32 %v4129, 0.03125
        %v4162 = vsub.f32 %v4034, %v4130
        %v4163 = vsub.f32 %v4035, %v4131
        %v4164 = vsub.f32 %v4036, %v4132
        %v4165 = vsub.f32 %v4037, %v4133
        %v4166 = vsub.f32 %v4038, %v4134
        %v4167 = vsub.f32 %v4039, %v4135
        %v4168 = vsub.f32 %v4040, %v4136
        %v4169 = vsub.f32 %v4041, %v4137
        %v4170 = vsub.f32 %v4042, %v4138
        %v4171 = vsub.f32 %v4043, %v4139
        %v4172 = vsub.f32 %v4044, %v4140
        %v4173 = vsub.f32 %v4045, %v4141
        %v4174 = vsub.f32 %v4046, %v4142
        %v4175 = vsub.f32 %v4047, %v4143
        %v4176 = vsub.f32 %v4048, %v4144
        %v4177 = vsub.f32 %v4049, %v4145
        %v4178 = vsub.f32 %v4050, %v4146
        %v4179 = vsub.f32 %v4051, %v4147
        %v4180 = vsub.f32 %v4052, %v4148
        %v4181 = vsub.f32 %v4053, %v4149
        %v4182 = vsub.f32 %v4054, %v4150
        %v4183 = vsub.f32 %v4055, %v4151
        %v4184 = vsub.f32 %v4056, %v4152
        %v4185 = vsub.f32 %v4057, %v4153
        %v4186 = vsub.f32 %v4058, %v4154
        %v4187 = vsub.f32 %v4059, %v4155
        %v4188 = vsub.f32 %v4060, %v4156
        %v4189 = vsub.f32 %v4061, %v4157
        %v4190 = vsub.f32 %v4062, %v4158
        %v4191 = vsub.f32 %v4063, %v4159
        %v4192 = vsub.f32 %v4064, %v4160
        %v4193 = vsub.f32 %v4065, %v4161
        %v4194 = vmul.f32 %v4162, %v4162
        %v4195 = vmul.f32 %v4163, %v4163
        %v4196 = vmul.f32 %v4164, %v4164
        %v4197 = vmul.f32 %v4165, %v4165
        %v4198 = vmul.f32 %v4166, %v4166
        %v4199 = vmul.f32 %v4167, %v4167
        %v4200 = vmul.f32 %v4168, %v4168
        %v4201 = vmul.f32 %v4169, %v4169
        %v4202 = vmul.f32 %v4170, %v4170
        %v4203 = vmul.f32 %v4171, %v4171
        %v4204 = vmul.f32 %v4172, %v4172
        %v4205 = vmul.f32 %v4173, %v4173
        %v4206 = vmul.f32 %v4174, %v4174
        %v4207 = vmul.f32 %v4175, %v4175
        %v4208 = vmul.f32 %v4176, %v4176
        %v4209 = vmul.f32 %v4177, %v4177
        %v4210 = vmul.f32 %v4178, %v4178
        %v4211 = vmul.f32 %v4179, %v4179
        %v4212 = vmul.f32 %v4180, %v4180
        %v4213 = vmul.f32 %v4181, %v4181
        %v4214 = vmul.f32 %v4182, %v4182
        %v4215 = vmul.f32 %v4183, %v4183
        %v4216 = vmul.f32 %v4184, %v4184
        %v4217 = vmul.f32 %v4185, %v4185
        %v4218 = vmul.f32 %v4186, %v4186
        %v4219 = vmul.f32 %v4187, %v4187
        %v4220 = vmul.f32 %v4188, %v4188
        %v4221 = vmul.f32 %v4189, %v4189
        %v4222 = vmul.f32 %v4190, %v4190
        %v4223 = vmul.f32 %v4191, %v4191
        %v4224 = vmul.f32 %v4192, %v4192
        %v4225 = vmul.f32 %v4193, %v4193
        %4226 = vadd.xlane.f32.xlu0 %v4194
        %v4227 = vpop.xlane.xlu0 %4226
        %4228 = vadd.xlane.f32.xlu0 %v4195
        %v4229 = vpop.xlane.xlu0 %4228
        %4230 = vadd.xlane.f32.xlu0 %v4196
        %v4231 = vpop.xlane.xlu0 %4230
        %4232 = vadd.xlane.f32.xlu0 %v4197
        %v4233 = vpop.xlane.xlu0 %4232
        %4234 = vadd.xlane.f32.xlu0 %v4198
        %v4235 = vpop.xlane.xlu0 %4234
        %4236 = vadd.xlane.f32.xlu0 %v4199
        %v4237 = vpop.xlane.xlu0 %4236
        %4238 = vadd.xlane.f32.xlu0 %v4200
        %v4239 = vpop.xlane.xlu0 %4238
        %4240 = vadd.xlane.f32.xlu0 %v4201
        %v4241 = vpop.xlane.xlu0 %4240
        %4242 = vadd.xlane.f32.xlu0 %v4202
        %v4243 = vpop.xlane.xlu0 %4242
        %4244 = vadd.xlane.f32.xlu0 %v4203
        %v4245 = vpop.xlane.xlu0 %4244
        %4246 = vadd.xlane.f32.xlu0 %v4204
        %v4247 = vpop.xlane.xlu0 %4246
        %4248 = vadd.xlane.f32.xlu0 %v4205
        %v4249 = vpop.xlane.xlu0 %4248
        %4250 = vadd.xlane.f32.xlu0 %v4206
        %v4251 = vpop.xlane.xlu0 %4250
        %4252 = vadd.xlane.f32.xlu0 %v4207
        %v4253 = vpop.xlane.xlu0 %4252
        %4254 = vadd.xlane.f32.xlu0 %v4208
        %v4255 = vpop.xlane.xlu0 %4254
        %4256 = vadd.xlane.f32.xlu0 %v4209
        %v4257 = vpop.xlane.xlu0 %4256
        %4258 = vadd.xlane.f32.xlu0 %v4210
        %v4259 = vpop.xlane.xlu0 %4258
        %4260 = vadd.xlane.f32.xlu0 %v4211
        %v4261 = vpop.xlane.xlu0 %4260
        %4262 = vadd.xlane.f32.xlu0 %v4212
        %v4263 = vpop.xlane.xlu0 %4262
        %4264 = vadd.xlane.f32.xlu0 %v4213
        %v4265 = vpop.xlane.xlu0 %4264
        %4266 = vadd.xlane.f32.xlu0 %v4214
        %v4267 = vpop.xlane.xlu0 %4266
        %4268 = vadd.xlane.f32.xlu0 %v4215
        %v4269 = vpop.xlane.xlu0 %4268
        %4270 = vadd.xlane.f32.xlu0 %v4216
        %v4271 = vpop.xlane.xlu0 %4270
        %4272 = vadd.xlane.f32.xlu0 %v4217
        %v4273 = vpop.xlane.xlu0 %4272
        %4274 = vadd.xlane.f32.xlu0 %v4218
        %v4275 = vpop.xlane.xlu0 %4274
        %4276 = vadd.xlane.f32.xlu0 %v4219
        %v4277 = vpop.xlane.xlu0 %4276
        %4278 = vadd.xlane.f32.xlu0 %v4220
        %v4279 = vpop.xlane.xlu0 %4278
        %4280 = vadd.xlane.f32.xlu0 %v4221
        %v4281 = vpop.xlane.xlu0 %4280
        %4282 = vadd.xlane.f32.xlu0 %v4222
        %v4283 = vpop.xlane.xlu0 %4282
        %4284 = vadd.xlane.f32.xlu0 %v4223
        %v4285 = vpop.xlane.xlu0 %4284
        %4286 = vadd.xlane.f32.xlu0 %v4224
        %v4287 = vpop.xlane.xlu0 %4286
        %4288 = vadd.xlane.f32.xlu0 %v4225
        %v4289 = vpop.xlane.xlu0 %4288
        %v4290 = vmul.f32 %v4130, %v4130
        %v4291 = vmul.f32 %v4131, %v4131
        %v4292 = vmul.f32 %v4132, %v4132
        %v4293 = vmul.f32 %v4133, %v4133
        %v4294 = vmul.f32 %v4134, %v4134
        %v4295 = vmul.f32 %v4135, %v4135
        %v4296 = vmul.f32 %v4136, %v4136
        %v4297 = vmul.f32 %v4137, %v4137
        %v4298 = vmul.f32 %v4138, %v4138
        %v4299 = vmul.f32 %v4139, %v4139
        %v4300 = vmul.f32 %v4140, %v4140
        %v4301 = vmul.f32 %v4141, %v4141
        %v4302 = vmul.f32 %v4142, %v4142
        %v4303 = vmul.f32 %v4143, %v4143
        %v4304 = vmul.f32 %v4144, %v4144
        %v4305 = vmul.f32 %v4145, %v4145
        %v4306 = vmul.f32 %v4146, %v4146
        %v4307 = vmul.f32 %v4147, %v4147
        %v4308 = vmul.f32 %v4148, %v4148
        %v4309 = vmul.f32 %v4149, %v4149
        %v4310 = vmul.f32 %v4150, %v4150
        %v4311 = vmul.f32 %v4151, %v4151
        %v4312 = vmul.f32 %v4152, %v4152
        %v4313 = vmul.f32 %v4153, %v4153
        %v4314 = vmul.f32 %v4154, %v4154
        %v4315 = vmul.f32 %v4155, %v4155
        %v4316 = vmul.f32 %v4156, %v4156
        %v4317 = vmul.f32 %v4157, %v4157
        %v4318 = vmul.f32 %v4158, %v4158
        %v4319 = vmul.f32 %v4159, %v4159
        %v4320 = vmul.f32 %v4160, %v4160
        %v4321 = vmul.f32 %v4161, %v4161
        %v4322 = vmul.f32 %v4290, 96.0
        %v4323 = vmul.f32 %v4291, 96.0
        %v4324 = vmul.f32 %v4292, 96.0
        %v4325 = vmul.f32 %v4293, 96.0
        %v4326 = vmul.f32 %v4294, 96.0
        %v4327 = vmul.f32 %v4295, 96.0
        %v4328 = vmul.f32 %v4296, 96.0
        %v4329 = vmul.f32 %v4297, 96.0
        %v4330 = vmul.f32 %v4298, 96.0
        %v4331 = vmul.f32 %v4299, 96.0
        %v4332 = vmul.f32 %v4300, 96.0
        %v4333 = vmul.f32 %v4301, 96.0
        %v4334 = vmul.f32 %v4302, 96.0
        %v4335 = vmul.f32 %v4303, 96.0
        %v4336 = vmul.f32 %v4304, 96.0
        %v4337 = vmul.f32 %v4305, 96.0
        %v4338 = vmul.f32 %v4306, 96.0
        %v4339 = vmul.f32 %v4307, 96.0
        %v4340 = vmul.f32 %v4308, 96.0
        %v4341 = vmul.f32 %v4309, 96.0
        %v4342 = vmul.f32 %v4310, 96.0
        %v4343 = vmul.f32 %v4311, 96.0
        %v4344 = vmul.f32 %v4312, 96.0
        %v4345 = vmul.f32 %v4313, 96.0
        %v4346 = vmul.f32 %v4314, 96.0
        %v4347 = vmul.f32 %v4315, 96.0
        %v4348 = vmul.f32 %v4316, 96.0
        %v4349 = vmul.f32 %v4317, 96.0
        %v4350 = vmul.f32 %v4318, 96.0
        %v4351 = vmul.f32 %v4319, 96.0
        %v4352 = vmul.f32 %v4320, 96.0
        %v4353 = vmul.f32 %v4321, 96.0
        %v4354 = vsub.f32 %v4227, %v4322
        %v4355 = vsub.f32 %v4229, %v4323
        %v4356 = vsub.f32 %v4231, %v4324
        %v4357 = vsub.f32 %v4233, %v4325
        %v4358 = vsub.f32 %v4235, %v4326
        %v4359 = vsub.f32 %v4237, %v4327
        %v4360 = vsub.f32 %v4239, %v4328
        %v4361 = vsub.f32 %v4241, %v4329
        %v4362 = vsub.f32 %v4243, %v4330
        %v4363 = vsub.f32 %v4245, %v4331
        %v4364 = vsub.f32 %v4247, %v4332
        %v4365 = vsub.f32 %v4249, %v4333
        %v4366 = vsub.f32 %v4251, %v4334
        %v4367 = vsub.f32 %v4253, %v4335
        %v4368 = vsub.f32 %v4255, %v4336
        %v4369 = vsub.f32 %v4257, %v4337
        %v4370 = vsub.f32 %v4259, %v4338
        %v4371 = vsub.f32 %v4261, %v4339
        %v4372 = vsub.f32 %v4263, %v4340
        %v4373 = vsub.f32 %v4265, %v4341
        %v4374 = vsub.f32 %v4267, %v4342
        %v4375 = vsub.f32 %v4269, %v4343
        %v4376 = vsub.f32 %v4271, %v4344
        %v4377 = vsub.f32 %v4273, %v4345
        %v4378 = vsub.f32 %v4275, %v4346
        %v4379 = vsub.f32 %v4277, %v4347
        %v4380 = vsub.f32 %v4279, %v4348
        %v4381 = vsub.f32 %v4281, %v4349
        %v4382 = vsub.f32 %v4283, %v4350
        %v4383 = vsub.f32 %v4285, %v4351
        %v4384 = vsub.f32 %v4287, %v4352
        %v4385 = vsub.f32 %v4289, %v4353
        %v4386 = vmul.f32 %v4354, 0.03125
        %v4387 = vmul.f32 %v4355, 0.03125
        %v4388 = vmul.f32 %v4356, 0.03125
        %v4389 = vmul.f32 %v4357, 0.03125
        %v4390 = vmul.f32 %v4358, 0.03125
        %v4391 = vmul.f32 %v4359, 0.03125
        %v4392 = vmul.f32 %v4360, 0.03125
        %v4393 = vmul.f32 %v4361, 0.03125
        %v4394 = vmul.f32 %v4362, 0.03125
        %v4395 = vmul.f32 %v4363, 0.03125
        %v4396 = vmul.f32 %v4364, 0.03125
        %v4397 = vmul.f32 %v4365, 0.03125
        %v4398 = vmul.f32 %v4366, 0.03125
        %v4399 = vmul.f32 %v4367, 0.03125
        %v4400 = vmul.f32 %v4368, 0.03125
        %v4401 = vmul.f32 %v4369, 0.03125
        %v4402 = vmul.f32 %v4370, 0.03125
        %v4403 = vmul.f32 %v4371, 0.03125
        %v4404 = vmul.f32 %v4372, 0.03125
        %v4405 = vmul.f32 %v4373, 0.03125
        %v4406 = vmul.f32 %v4374, 0.03125
        %v4407 = vmul.f32 %v4375, 0.03125
        %v4408 = vmul.f32 %v4376, 0.03125
        %v4409 = vmul.f32 %v4377, 0.03125
        %v4410 = vmul.f32 %v4378, 0.03125
        %v4411 = vmul.f32 %v4379, 0.03125
        %v4412 = vmul.f32 %v4380, 0.03125
        %v4413 = vmul.f32 %v4381, 0.03125
        %v4414 = vmul.f32 %v4382, 0.03125
        %v4415 = vmul.f32 %v4383, 0.03125
        %v4416 = vmul.f32 %v4384, 0.03125
        %v4417 = vmul.f32 %v4385, 0.03125
        %v4418 = vadd.f32 %v4386, 1e-05
        %v4419 = vadd.f32 %v4387, 1e-05
        %v4420 = vadd.f32 %v4388, 1e-05
        %v4421 = vadd.f32 %v4389, 1e-05
        %v4422 = vadd.f32 %v4390, 1e-05
        %v4423 = vadd.f32 %v4391, 1e-05
        %v4424 = vadd.f32 %v4392, 1e-05
        %v4425 = vadd.f32 %v4393, 1e-05
        %v4426 = vadd.f32 %v4394, 1e-05
        %v4427 = vadd.f32 %v4395, 1e-05
        %v4428 = vadd.f32 %v4396, 1e-05
        %v4429 = vadd.f32 %v4397, 1e-05
        %v4430 = vadd.f32 %v4398, 1e-05
        %v4431 = vadd.f32 %v4399, 1e-05
        %v4432 = vadd.f32 %v4400, 1e-05
        %v4433 = vadd.f32 %v4401, 1e-05
        %v4434 = vadd.f32 %v4402, 1e-05
        %v4435 = vadd.f32 %v4403, 1e-05
        %v4436 = vadd.f32 %v4404, 1e-05
        %v4437 = vadd.f32 %v4405, 1e-05
        %v4438 = vadd.f32 %v4406, 1e-05
        %v4439 = vadd.f32 %v4407, 1e-05
        %v4440 = vadd.f32 %v4408, 1e-05
        %v4441 = vadd.f32 %v4409, 1e-05
        %v4442 = vadd.f32 %v4410, 1e-05
        %v4443 = vadd.f32 %v4411, 1e-05
        %v4444 = vadd.f32 %v4412, 1e-05
        %v4445 = vadd.f32 %v4413, 1e-05
        %v4446 = vadd.f32 %v4414, 1e-05
        %v4447 = vadd.f32 %v4415, 1e-05
        %v4448 = vadd.f32 %v4416, 1e-05
        %v4449 = vadd.f32 %v4417, 1e-05
        %v4450 = vrsqrt.pop %v4418
        %v4451 = vrsqrt.pop %v4419
        %v4452 = vrsqrt.pop %v4420
        %v4453 = vrsqrt.pop %v4421
        %v4454 = vrsqrt.pop %v4422
        %v4455 = vrsqrt.pop %v4423
        %v4456 = vrsqrt.pop %v4424
        %v4457 = vrsqrt.pop %v4425
        %v4458 = vrsqrt.pop %v4426
        %v4459 = vrsqrt.pop %v4427
        %v4460 = vrsqrt.pop %v4428
        %v4461 = vrsqrt.pop %v4429
        %v4462 = vrsqrt.pop %v4430
        %v4463 = vrsqrt.pop %v4431
        %v4464 = vrsqrt.pop %v4432
        %v4465 = vrsqrt.pop %v4433
        %v4466 = vrsqrt.pop %v4434
        %v4467 = vrsqrt.pop %v4435
        %v4468 = vrsqrt.pop %v4436
        %v4469 = vrsqrt.pop %v4437
        %v4470 = vrsqrt.pop %v4438
        %v4471 = vrsqrt.pop %v4439
        %v4472 = vrsqrt.pop %v4440
        %v4473 = vrsqrt.pop %v4441
        %v4474 = vrsqrt.pop %v4442
        %v4475 = vrsqrt.pop %v4443
        %v4476 = vrsqrt.pop %v4444
        %v4477 = vrsqrt.pop %v4445
        %v4478 = vrsqrt.pop %v4446
        %v4479 = vrsqrt.pop %v4447
        %v4480 = vrsqrt.pop %v4448
        %v4481 = vrsqrt.pop %v4449
        %v4482 = vld [vmem:[%s29] sm:$0x1]
        %v4484 = vlaneseq
        %v4485 = vshrl.u32 %v4484, 7
        %v4486 = vsub.s32 0, %v4485
        %v4487 = vrot.slane %v4482, %v4486
        %v4489 = vmul.f32 %v4450, %v4487
        %v4490 = vmul.f32 %v4451, %v4487
        %v4491 = vmul.f32 %v4452, %v4487
        %v4492 = vmul.f32 %v4453, %v4487
        %v4493 = vmul.f32 %v4454, %v4487
        %v4494 = vmul.f32 %v4455, %v4487
        %v4495 = vmul.f32 %v4456, %v4487
        %v4496 = vmul.f32 %v4457, %v4487
        %v4497 = vmul.f32 %v4458, %v4487
        %v4498 = vmul.f32 %v4459, %v4487
        %v4499 = vmul.f32 %v4460, %v4487
        %v4500 = vmul.f32 %v4461, %v4487
        %v4501 = vmul.f32 %v4462, %v4487
        %v4502 = vmul.f32 %v4463, %v4487
        %v4503 = vmul.f32 %v4464, %v4487
        %v4504 = vmul.f32 %v4465, %v4487
        %v4505 = vmul.f32 %v4466, %v4487
        %v4506 = vmul.f32 %v4467, %v4487
        %v4507 = vmul.f32 %v4468, %v4487
        %v4508 = vmul.f32 %v4469, %v4487
        %v4509 = vmul.f32 %v4470, %v4487
        %v4510 = vmul.f32 %v4471, %v4487
        %v4511 = vmul.f32 %v4472, %v4487
        %v4512 = vmul.f32 %v4473, %v4487
        %v4513 = vmul.f32 %v4474, %v4487
        %v4514 = vmul.f32 %v4475, %v4487
        %v4515 = vmul.f32 %v4476, %v4487
        %v4516 = vmul.f32 %v4477, %v4487
        %v4517 = vmul.f32 %v4478, %v4487
        %v4518 = vmul.f32 %v4479, %v4487
        %v4519 = vmul.f32 %v4480, %v4487
        %v4520 = vmul.f32 %v4481, %v4487
        %v4521 = vmul.f32 %v4162, %v4489
        %v4522 = vmul.f32 %v4163, %v4490
        %v4523 = vmul.f32 %v4164, %v4491
        %v4524 = vmul.f32 %v4165, %v4492
        %v4525 = vmul.f32 %v4166, %v4493
        %v4526 = vmul.f32 %v4167, %v4494
        %v4527 = vmul.f32 %v4168, %v4495
        %v4528 = vmul.f32 %v4169, %v4496
        %v4529 = vmul.f32 %v4170, %v4497
        %v4530 = vmul.f32 %v4171, %v4498
        %v4531 = vmul.f32 %v4172, %v4499
        %v4532 = vmul.f32 %v4173, %v4500
        %v4533 = vmul.f32 %v4174, %v4501
        %v4534 = vmul.f32 %v4175, %v4502
        %v4535 = vmul.f32 %v4176, %v4503
        %v4536 = vmul.f32 %v4177, %v4504
        %v4537 = vmul.f32 %v4178, %v4505
        %v4538 = vmul.f32 %v4179, %v4506
        %v4539 = vmul.f32 %v4180, %v4507
        %v4540 = vmul.f32 %v4181, %v4508
        %v4541 = vmul.f32 %v4182, %v4509
        %v4542 = vmul.f32 %v4183, %v4510
        %v4543 = vmul.f32 %v4184, %v4511
        %v4544 = vmul.f32 %v4185, %v4512
        %v4545 = vmul.f32 %v4186, %v4513
        %v4546 = vmul.f32 %v4187, %v4514
        %v4547 = vmul.f32 %v4188, %v4515
        %v4548 = vmul.f32 %v4189, %v4516
        %v4549 = vmul.f32 %v4190, %v4517
        %v4550 = vmul.f32 %v4191, %v4518
        %v4551 = vmul.f32 %v4192, %v4519
        %v4552 = vmul.f32 %v4193, %v4520
        %v4553 = vld [vmem:[%s31] sm:$0x1]
        %v4555 = vlaneseq
        %v4556 = vshrl.u32 %v4555, 7
        %v4557 = vsub.s32 0, %v4556
        %v4558 = vrot.slane %v4553, %v4557
        %v4560 = vadd.f32 %v4521, %v4558
        %v4561 = vadd.f32 %v4522, %v4558
        %v4562 = vadd.f32 %v4523, %v4558
        %v4563 = vadd.f32 %v4524, %v4558
        %v4564 = vadd.f32 %v4525, %v4558
        %v4565 = vadd.f32 %v4526, %v4558
        %v4566 = vadd.f32 %v4527, %v4558
        %v4567 = vadd.f32 %v4528, %v4558
        %v4568 = vadd.f32 %v4529, %v4558
        %v4569 = vadd.f32 %v4530, %v4558
        %v4570 = vadd.f32 %v4531, %v4558
        %v4571 = vadd.f32 %v4532, %v4558
        %v4572 = vadd.f32 %v4533, %v4558
        %v4573 = vadd.f32 %v4534, %v4558
        %v4574 = vadd.f32 %v4535, %v4558
        %v4575 = vadd.f32 %v4536, %v4558
        %v4576 = vadd.f32 %v4537, %v4558
        %v4577 = vadd.f32 %v4538, %v4558
        %v4578 = vadd.f32 %v4539, %v4558
        %v4579 = vadd.f32 %v4540, %v4558
        %v4580 = vadd.f32 %v4541, %v4558
        %v4581 = vadd.f32 %v4542, %v4558
        %v4582 = vadd.f32 %v4543, %v4558
        %v4583 = vadd.f32 %v4544, %v4558
        %v4584 = vadd.f32 %v4545, %v4558
        %v4585 = vadd.f32 %v4546, %v4558
        %v4586 = vadd.f32 %v4547, %v4558
        %v4587 = vadd.f32 %v4548, %v4558
        %v4588 = vadd.f32 %v4549, %v4558
        %v4589 = vadd.f32 %v4550, %v4558
        %v4590 = vadd.f32 %v4551, %v4558
        %v4591 = vadd.f32 %v4552, %v4558
        %v4592 = vpack.c.bf16 %v4561, %v4560
        %v4593 = vpack.c.bf16 %v4563, %v4562
        %v4594 = vpack.c.bf16 %v4565, %v4564
        %v4595 = vpack.c.bf16 %v4567, %v4566
        %v4596 = vpack.c.bf16 %v4569, %v4568
        %v4597 = vpack.c.bf16 %v4571, %v4570
        %v4598 = vpack.c.bf16 %v4573, %v4572
        %v4599 = vpack.c.bf16 %v4575, %v4574
        %v4600 = vpack.c.bf16 %v4577, %v4576
        %v4601 = vpack.c.bf16 %v4579, %v4578
        %v4602 = vpack.c.bf16 %v4581, %v4580
        %v4603 = vpack.c.bf16 %v4583, %v4582
        %v4604 = vpack.c.bf16 %v4585, %v4584
        %v4605 = vpack.c.bf16 %v4587, %v4586
        %v4606 = vpack.c.bf16 %v4589, %v4588
        %v4607 = vpack.c.bf16 %v4591, %v4590
        %v4608 = vld [vmem:[%s9] sm:$0x1]
        %4609 = vst [vmem:[#allocation2] sm:$0xff] 0.0
        %4610 = vst [vmem:[#allocation2 + $0x8] sm:$0xff] 0.0
        %4611 = vst [vmem:[#allocation2 + $0x10] sm:$0xff] 0.0
        %4612 = vst [vmem:[#allocation2 + $0x18] sm:$0xff] 0.0
        %4613 = vst [vmem:[#allocation2 + $0x20] sm:$0xff] 0.0
        %4614 = vst [vmem:[#allocation2 + $0x28] sm:$0xff] 0.0
        %4615 = vst [vmem:[#allocation2 + $0x30] sm:$0xff] 0.0
        %4616 = vst [vmem:[#allocation2 + $0x38] sm:$0xff] 0.0
        %4617 = vst [vmem:[#allocation2 + $0x40] sm:$0xff] 0.0
        %4618 = vst [vmem:[#allocation2 + $0x48] sm:$0xff] 0.0
        %4619 = vst [vmem:[#allocation2 + $0x50] sm:$0xff] 0.0
        %4620 = vst [vmem:[#allocation2 + $0x58] sm:$0xff] 0.0
        %4621 = vst [vmem:[#allocation2 + $0x60] sm:$0xff] 0.0
        %4622 = vst [vmem:[#allocation2 + $0x68] sm:$0xff] 0.0
        %4623 = vst [vmem:[#allocation2 + $0x70] sm:$0xff] 0.0
        %4624 = vst [vmem:[#allocation2 + $0x78] sm:$0xff] 0.0
        %4625 = vst [vmem:[#allocation2 + $0x80] sm:$0xff] 0.0
        %4626 = vst [vmem:[#allocation2 + $0x88] sm:$0xff] 0.0
        %4627 = vst [vmem:[#allocation2 + $0x90] sm:$0xff] 0.0
        %4628 = vst [vmem:[#allocation2 + $0x98] sm:$0xff] 0.0
        %4629 = vst [vmem:[#allocation2 + $0xa0] sm:$0xff] 0.0
        %4630 = vst [vmem:[#allocation2 + $0xa8] sm:$0xff] 0.0
        %4631 = vst [vmem:[#allocation2 + $0xb0] sm:$0xff] 0.0
        %4632 = vst [vmem:[#allocation2 + $0xb8] sm:$0xff] 0.0
        %4633 = vst [vmem:[#allocation2 + $0xc0] sm:$0xff] 0.0
        %4634 = vst [vmem:[#allocation2 + $0xc8] sm:$0xff] 0.0
        %4635 = vst [vmem:[#allocation2 + $0xd0] sm:$0xff] 0.0
        %4636 = vst [vmem:[#allocation2 + $0xd8] sm:$0xff] 0.0
        %4637 = vst [vmem:[#allocation2 + $0xe0] sm:$0xff] 0.0
        %4638 = vst [vmem:[#allocation2 + $0xe8] sm:$0xff] 0.0
        %4639 = vst [vmem:[#allocation2 + $0xf0] sm:$0xff] 0.0
        %4640 = vst [vmem:[#allocation2 + $0xf8] sm:$0xff] 0.0
        loop: start=0, step=1, limit=4
        $region242: #{unet_attention_block.1} parent=131 // loop_pre_header
          _
        $region243: #{unet_attention_block.1} parent=131 // loop_header
          %s4642 = sphi 0, %s4646
          %p4643 = scmp.ge.s32.totalorder %s4642, 4
        $region244: #{unet_attention_block.1} parent=131 // loop_header_branch
          %4645 = sbr.rel (%p4643) target = $region248
        $region245: #{unet_attention_block.1} parent=131 // loop_body
          %s4647 = smul.u32 %s4642, 16
          %s4648 = smul.addr %s4647, 4
          %s4649 = scalar_lea.vmem %s33, %s4648
          %v4650 = vld [vmem:[%s4649] sm:$0xf]
          %v4651 = vld [vmem:[%s4649 + $0x4] sm:$0xf]
          %v4652 = vld [vmem:[%s4649 + $0x8] sm:$0xf]
          %v4653 = vld [vmem:[%s4649 + $0xc] sm:$0xf]
          %v4654 = vld [vmem:[%s4649 + $0x10] sm:$0xf]
          %v4655 = vld [vmem:[%s4649 + $0x14] sm:$0xf]
          %v4656 = vld [vmem:[%s4649 + $0x18] sm:$0xf]
          %v4657 = vld [vmem:[%s4649 + $0x1c] sm:$0xf]
          %v4658 = vld [vmem:[%s4649 + $0x20] sm:$0xf]
          %v4659 = vld [vmem:[%s4649 + $0x24] sm:$0xf]
          %v4660 = vld [vmem:[%s4649 + $0x28] sm:$0xf]
          %v4661 = vld [vmem:[%s4649 + $0x2c] sm:$0xf]
          %v4662 = vld [vmem:[%s4649 + $0x30] sm:$0xf]
          %v4663 = vld [vmem:[%s4649 + $0x34] sm:$0xf]
          %v4664 = vld [vmem:[%s4649 + $0x38] sm:$0xf]
          %v4665 = vld [vmem:[%s4649 + $0x3c] sm:$0xf]
          %v4682 = vunpack.c.l.b16 %v4650
          %v4683 = vunpack.c.l.b16 %v4651
          %v4684 = vunpack.c.l.b16 %v4652
          %v4685 = vunpack.c.l.b16 %v4653
          %v4686 = vunpack.c.l.b16 %v4654
          %v4687 = vunpack.c.l.b16 %v4655
          %v4688 = vunpack.c.l.b16 %v4656
          %v4689 = vunpack.c.l.b16 %v4657
          %v4690 = vunpack.c.l.b16 %v4658
          %v4691 = vunpack.c.l.b16 %v4659
          %v4692 = vunpack.c.l.b16 %v4660
          %v4693 = vunpack.c.l.b16 %v4661
          %v4694 = vunpack.c.l.b16 %v4662
          %v4695 = vunpack.c.l.b16 %v4663
          %v4696 = vunpack.c.l.b16 %v4664
          %v4697 = vunpack.c.l.b16 %v4665
          %v4698 = vpack.c.b16 %v4683, %v4682
          %v4699 = vpack.c.b16 %v4685, %v4684
          %v4700 = vpack.c.b16 %v4687, %v4686
          %v4701 = vpack.c.b16 %v4689, %v4688
          %v4702 = vpack.c.b16 %v4691, %v4690
          %v4703 = vpack.c.b16 %v4693, %v4692
          %v4704 = vpack.c.b16 %v4695, %v4694
          %v4705 = vpack.c.b16 %v4697, %v4696
          %4714 = vmatprep.subr.bf16.mxu0 0
          %4715 = vmatpush1.bf16.msra.mxu0 %v4698
          %4716 = vmatprep.subr.bf16.mxu0 0
          %4717 = vmatpush1.bf16.msra.mxu0 %v4699
          %4718 = vmatprep.subr.bf16.mxu0 0
          %4719 = vmatpush1.bf16.msra.mxu0 %v4700
          %4720 = vmatprep.subr.bf16.mxu0 0
          %4721 = vmatpush1.bf16.msra.mxu0 %v4701
          %4722 = vmatprep.subr.bf16.mxu0 0
          %4723 = vmatpush1.bf16.msra.mxu0 %v4702
          %4724 = vmatprep.subr.bf16.mxu0 0
          %4725 = vmatpush1.bf16.msra.mxu0 %v4703
          %4726 = vmatprep.subr.bf16.mxu0 0
          %4727 = vmatpush1.bf16.msra.mxu0 %v4704
          %4728 = vmatprep.subr.bf16.mxu0 0
          %4729 = vmatpush1.bf16.msra.mxu0 %v4705
          %4730 = vmatprep.subr.bf16.mxu0 0
          %4731 = vmatpush1.bf16.msra.mxu0 0
          %4732 = vmatprep.subr.bf16.mxu0 0
          %4733 = vmatpush1.bf16.msra.mxu0 0
          %4734 = vmatprep.subr.bf16.mxu0 0
          %4735 = vmatpush1.bf16.msra.mxu0 0
          %4736 = vmatprep.subr.bf16.mxu0 0
          %4737 = vmatpush1.bf16.msra.mxu0 0
          %4738 = vmatprep.subr.bf16.mxu0 0
          %4739 = vmatpush1.bf16.msra.mxu0 0
          %4740 = vmatprep.subr.bf16.mxu0 0
          %4741 = vmatpush1.bf16.msra.mxu0 0
          %4742 = vmatprep.subr.bf16.mxu0 0
          %4743 = vmatpush1.bf16.msra.mxu0 0
          %4744 = vmatprep.subr.bf16.mxu0 0
          %4745 = vmatpush1.bf16.msra.mxu0 0
          %4746 = vmatprep.mubr.bf16.mxu0 0
          %4747 = vmatmul.mubr.bf16.gmra.mrb[0].mxu0 %v4592
          %v4748 = vpop.f32.mrb[0].mxu0
          %v4749 = vadd.f32 0.0, %v4748
          %v4750 = vpop.f32.mrb[0].mxu0
          %v4751 = vpop.f32.mrb[0].mxu0
          %v4752 = vadd.f32 0.0, %v4751
          %v4753 = vpop.f32.mrb[0].mxu0
          %4754 = vmatprep.mubr.bf16.mxu0 0
          %4755 = vmatmul.mubr.bf16.gmra.mrb[0].mxu0 %v4593
          %v4756 = vpop.f32.mrb[0].mxu0
          %v4757 = vadd.f32 0.0, %v4756
          %v4758 = vpop.f32.mrb[0].mxu0
          %v4759 = vpop.f32.mrb[0].mxu0
          %v4760 = vadd.f32 0.0, %v4759
          %v4761 = vpop.f32.mrb[0].mxu0
          %4762 = vmatprep.mubr.bf16.mxu0 0
          %4763 = vmatmul.mubr.bf16.gmra.mrb[0].mxu0 %v4594
          %v4764 = vpop.f32.mrb[0].mxu0
          %v4765 = vadd.f32 0.0, %v4764
          %v4766 = vpop.f32.mrb[0].mxu0
          %v4767 = vpop.f32.mrb[0].mxu0
          %v4768 = vadd.f32 0.0, %v4767
          %v4769 = vpop.f32.mrb[0].mxu0
          %4770 = vmatprep.mubr.bf16.mxu0 0
          %4771 = vmatmul.mubr.bf16.gmra.mrb[0].mxu0 %v4595
          %v4772 = vpop.f32.mrb[0].mxu0
          %v4773 = vadd.f32 0.0, %v4772
          %v4774 = vpop.f32.mrb[0].mxu0
          %v4775 = vpop.f32.mrb[0].mxu0
          %v4776 = vadd.f32 0.0, %v4775
          %v4777 = vpop.f32.mrb[0].mxu0
          %4778 = vmatprep.mubr.bf16.mxu0 0
          %4779 = vmatmul.mubr.bf16.gmra.mrb[0].mxu0 %v4596
          %v4780 = vpop.f32.mrb[0].mxu0
          %v4781 = vadd.f32 0.0, %v4780
          %v4782 = vpop.f32.mrb[0].mxu0
          %v4783 = vpop.f32.mrb[0].mxu0
          %v4784 = vadd.f32 0.0, %v4783
          %v4785 = vpop.f32.mrb[0].mxu0
          %4786 = vmatprep.mubr.bf16.mxu0 0
          %4787 = vmatmul.mubr.bf16.gmra.mrb[0].mxu0 %v4597
          %v4788 = vpop.f32.mrb[0].mxu0
          %v4789 = vadd.f32 0.0, %v4788
          %v4790 = vpop.f32.mrb[0].mxu0
          %v4791 = vpop.f32.mrb[0].mxu0
          %v4792 = vadd.f32 0.0, %v4791
          %v4793 = vpop.f32.mrb[0].mxu0
          %4794 = vmatprep.mubr.bf16.mxu0 0
          %4795 = vmatmul.mubr.bf16.gmra.mrb[0].mxu0 %v4598
          %v4796 = vpop.f32.mrb[0].mxu0
          %v4797 = vadd.f32 0.0, %v4796
          %v4798 = vpop.f32.mrb[0].mxu0
          %v4799 = vpop.f32.mrb[0].mxu0
          %v4800 = vadd.f32 0.0, %v4799
          %v4801 = vpop.f32.mrb[0].mxu0
          %4802 = vmatprep.mubr.bf16.mxu0 0
          %4803 = vmatmul.mubr.bf16.gmra.mrb[0].mxu0 %v4599
          %v4804 = vpop.f32.mrb[0].mxu0
          %v4805 = vadd.f32 0.0, %v4804
          %v4806 = vpop.f32.mrb[0].mxu0
          %v4807 = vpop.f32.mrb[0].mxu0
          %v4808 = vadd.f32 0.0, %v4807
          %v4809 = vpop.f32.mrb[0].mxu0
          %4810 = vmatprep.mubr.bf16.mxu0 0
          %4811 = vmatmul.mubr.bf16.gmra.mrb[0].mxu0 %v4600
          %v4812 = vpop.f32.mrb[0].mxu0
          %v4813 = vadd.f32 0.0, %v4812
          %v4814 = vpop.f32.mrb[0].mxu0
          %v4815 = vpop.f32.mrb[0].mxu0
          %v4816 = vadd.f32 0.0, %v4815
          %v4817 = vpop.f32.mrb[0].mxu0
          %4818 = vmatprep.mubr.bf16.mxu0 0
          %4819 = vmatmul.mubr.bf16.gmra.mrb[0].mxu0 %v4601
          %v4820 = vpop.f32.mrb[0].mxu0
          %v4821 = vadd.f32 0.0, %v4820
          %v4822 = vpop.f32.mrb[0].mxu0
          %v4823 = vpop.f32.mrb[0].mxu0
          %v4824 = vadd.f32 0.0, %v4823
          %v4825 = vpop.f32.mrb[0].mxu0
          %4826 = vmatprep.mubr.bf16.mxu0 0
          %4827 = vmatmul.mubr.bf16.gmra.mrb[0].mxu0 %v4602
          %v4828 = vpop.f32.mrb[0].mxu0
          %v4829 = vadd.f32 0.0, %v4828
          %v4830 = vpop.f32.mrb[0].mxu0
          %v4831 = vpop.f32.mrb[0].mxu0
          %v4832 = vadd.f32 0.0, %v4831
          %v4833 = vpop.f32.mrb[0].mxu0
          %4834 = vmatprep.mubr.bf16.mxu0 0
          %4835 = vmatmul.mubr.bf16.gmra.mrb[0].mxu0 %v4603
          %v4836 = vpop.f32.mrb[0].mxu0
          %v4837 = vadd.f32 0.0, %v4836
          %v4838 = vpop.f32.mrb[0].mxu0
          %v4839 = vpop.f32.mrb[0].mxu0
          %v4840 = vadd.f32 0.0, %v4839
          %v4841 = vpop.f32.mrb[0].mxu0
          %4842 = vmatprep.mubr.bf16.mxu0 0
          %4843 = vmatmul.mubr.bf16.gmra.mrb[0].mxu0 %v4604
          %v4844 = vpop.f32.mrb[0].mxu0
          %v4845 = vadd.f32 0.0, %v4844
          %v4846 = vpop.f32.mrb[0].mxu0
          %v4847 = vpop.f32.mrb[0].mxu0
          %v4848 = vadd.f32 0.0, %v4847
          %v4849 = vpop.f32.mrb[0].mxu0
          %4850 = vmatprep.mubr.bf16.mxu0 0
          %4851 = vmatmul.mubr.bf16.gmra.mrb[0].mxu0 %v4605
          %v4852 = vpop.f32.mrb[0].mxu0
          %v4853 = vadd.f32 0.0, %v4852
          %v4854 = vpop.f32.mrb[0].mxu0
          %v4855 = vpop.f32.mrb[0].mxu0
          %v4856 = vadd.f32 0.0, %v4855
          %v4857 = vpop.f32.mrb[0].mxu0
          %4858 = vmatprep.mubr.bf16.mxu0 0
          %4859 = vmatmul.mubr.bf16.gmra.mrb[0].mxu0 %v4606
          %v4860 = vpop.f32.mrb[0].mxu0
          %v4861 = vadd.f32 0.0, %v4860
          %v4862 = vpop.f32.mrb[0].mxu0
          %v4863 = vpop.f32.mrb[0].mxu0
          %v4864 = vadd.f32 0.0, %v4863
          %v4865 = vpop.f32.mrb[0].mxu0
          %4866 = vmatprep.mubr.bf16.mxu0 0
          %4867 = vmatmul.mubr.bf16.gmra.mrb[0].mxu0 %v4607
          %v4868 = vpop.f32.mrb[0].mxu0
          %v4869 = vadd.f32 0.0, %v4868
          %v4870 = vpop.f32.mrb[0].mxu0
          %v4871 = vpop.f32.mrb[0].mxu0
          %v4872 = vadd.f32 0.0, %v4871
          %v4873 = vpop.f32.mrb[0].mxu0
          %4874 = vdwg.mxu0
          %v4875 = vpack.c.bf16 %v4752, %v4749
          %v4876 = vpack.c.bf16 %v4760, %v4757
          %v4877 = vpack.c.bf16 %v4768, %v4765
          %v4878 = vpack.c.bf16 %v4776, %v4773
          %v4879 = vpack.c.bf16 %v4784, %v4781
          %v4880 = vpack.c.bf16 %v4792, %v4789
          %v4881 = vpack.c.bf16 %v4800, %v4797
          %v4882 = vpack.c.bf16 %v4808, %v4805
          %v4883 = vpack.c.bf16 %v4816, %v4813
          %v4884 = vpack.c.bf16 %v4824, %v4821
          %v4885 = vpack.c.bf16 %v4832, %v4829
          %v4886 = vpack.c.bf16 %v4840, %v4837
          %v4887 = vpack.c.bf16 %v4848, %v4845
          %v4888 = vpack.c.bf16 %v4856, %v4853
          %v4889 = vpack.c.bf16 %v4864, %v4861
          %v4890 = vpack.c.bf16 %v4872, %v4869
          %s4891 = smul.addr %s4647, 4
          %s4892 = scalar_lea.vmem %s35, %s4891
          %v4893 = vld [vmem:[%s4892] sm:$0xf]
          %v4894 = vld [vmem:[%s4892 + $0x4] sm:$0xf]
          %v4895 = vld [vmem:[%s4892 + $0x8] sm:$0xf]
          %v4896 = vld [vmem:[%s4892 + $0xc] sm:$0xf]
          %v4897 = vld [vmem:[%s4892 + $0x10] sm:$0xf]
          %v4898 = vld [vmem:[%s4892 + $0x14] sm:$0xf]
          %v4899 = vld [vmem:[%s4892 + $0x18] sm:$0xf]
          %v4900 = vld [vmem:[%s4892 + $0x1c] sm:$0xf]
          %v4901 = vld [vmem:[%s4892 + $0x20] sm:$0xf]
          %v4902 = vld [vmem:[%s4892 + $0x24] sm:$0xf]
          %v4903 = vld [vmem:[%s4892 + $0x28] sm:$0xf]
          %v4904 = vld [vmem:[%s4892 + $0x2c] sm:$0xf]
          %v4905 = vld [vmem:[%s4892 + $0x30] sm:$0xf]
          %v4906 = vld [vmem:[%s4892 + $0x34] sm:$0xf]
          %v4907 = vld [vmem:[%s4892 + $0x38] sm:$0xf]
          %v4908 = vld [vmem:[%s4892 + $0x3c] sm:$0xf]
          %v4925 = vunpack.c.l.b16 %v4893
          %v4926 = vunpack.c.l.b16 %v4894
          %v4927 = vunpack.c.l.b16 %v4895
          %v4928 = vunpack.c.l.b16 %v4896
          %v4929 = vunpack.c.l.b16 %v4897
          %v4930 = vunpack.c.l.b16 %v4898
          %v4931 = vunpack.c.l.b16 %v4899
          %v4932 = vunpack.c.l.b16 %v4900
          %v4933 = vunpack.c.l.b16 %v4901
          %v4934 = vunpack.c.l.b16 %v4902
          %v4935 = vunpack.c.l.b16 %v4903
          %v4936 = vunpack.c.l.b16 %v4904
          %v4937 = vunpack.c.l.b16 %v4905
          %v4938 = vunpack.c.l.b16 %v4906
          %v4939 = vunpack.c.l.b16 %v4907
          %v4940 = vunpack.c.l.b16 %v4908
          %v4941 = vpack.c.b16 %v4926, %v4925
          %v4942 = vpack.c.b16 %v4928, %v4927
          %v4943 = vpack.c.b16 %v4930, %v4929
          %v4944 = vpack.c.b16 %v4932, %v4931
          %v4945 = vpack.c.b16 %v4934, %v4933
          %v4946 = vpack.c.b16 %v4936, %v4935
          %v4947 = vpack.c.b16 %v4938, %v4937
          %v4948 = vpack.c.b16 %v4940, %v4939
          %4957 = vmatprep.subr.bf16.mxu0 0
          %4958 = vmatpush1.bf16.msra.mxu0 %v4941
          %4959 = vmatprep.subr.bf16.mxu0 0
          %4960 = vmatpush1.bf16.msra.mxu0 %v4942
          %4961 = vmatprep.subr.bf16.mxu0 0
          %4962 = vmatpush1.bf16.msra.mxu0 %v4943
          %4963 = vmatprep.subr.bf16.mxu0 0
          %4964 = vmatpush1.bf16.msra.mxu0 %v4944
          %4965 = vmatprep.subr.bf16.mxu0 0
          %4966 = vmatpush1.bf16.msra.mxu0 %v4945
          %4967 = vmatprep.subr.bf16.mxu0 0
          %4968 = vmatpush1.bf16.msra.mxu0 %v4946
          %4969 = vmatprep.subr.bf16.mxu0 0
          %4970 = vmatpush1.bf16.msra.mxu0 %v4947
          %4971 = vmatprep.subr.bf16.mxu0 0
          %4972 = vmatpush1.bf16.msra.mxu0 %v4948
          %4973 = vmatprep.subr.bf16.mxu0 0
          %4974 = vmatpush1.bf16.msra.mxu0 0
          %4975 = vmatprep.subr.bf16.mxu0 0
          %4976 = vmatpush1.bf16.msra.mxu0 0
          %4977 = vmatprep.subr.bf16.mxu0 0
          %4978 = vmatpush1.bf16.msra.mxu0 0
          %4979 = vmatprep.subr.bf16.mxu0 0
          %4980 = vmatpush1.bf16.msra.mxu0 0
          %4981 = vmatprep.subr.bf16.mxu0 0
          %4982 = vmatpush1.bf16.msra.mxu0 0
          %4983 = vmatprep.subr.bf16.mxu0 0
          %4984 = vmatpush1.bf16.msra.mxu0 0
          %4985 = vmatprep.subr.bf16.mxu0 0
          %4986 = vmatpush1.bf16.msra.mxu0 0
          %4987 = vmatprep.subr.bf16.mxu0 0
          %4988 = vmatpush1.bf16.msra.mxu0 0
          %4989 = vmatprep.mubr.bf16.mxu0 0
          %4990 = vmatmul.mubr.bf16.gmra.mrb[0].mxu0 %v976
          %v4991 = vpop.f32.mrb[0].mxu0
          %v4992 = vadd.f32 0.0, %v4991
          %v4993 = vpop.f32.mrb[0].mxu0
          %v4994 = vpop.f32.mrb[0].mxu0
          %v4995 = vadd.f32 0.0, %v4994
          %v4996 = vpop.f32.mrb[0].mxu0
          %4997 = vmatprep.mubr.bf16.mxu0 0
          %4998 = vmatmul.mubr.bf16.gmra.mrb[0].mxu0 %v977
          %v4999 = vpop.f32.mrb[0].mxu0
          %v5000 = vadd.f32 0.0, %v4999
          %v5001 = vpop.f32.mrb[0].mxu0
          %v5002 = vpop.f32.mrb[0].mxu0
          %v5003 = vadd.f32 0.0, %v5002
          %v5004 = vpop.f32.mrb[0].mxu0
          %5005 = vmatprep.mubr.bf16.mxu0 0
          %5006 = vmatmul.mubr.bf16.gmra.mrb[0].mxu0 %v978
          %v5007 = vpop.f32.mrb[0].mxu0
          %v5008 = vadd.f32 0.0, %v5007
          %v5009 = vpop.f32.mrb[0].mxu0
          %v5010 = vpop.f32.mrb[0].mxu0
          %v5011 = vadd.f32 0.0, %v5010
          %v5012 = vpop.f32.mrb[0].mxu0
          %5013 = vmatprep.mubr.bf16.mxu0 0
          %5014 = vmatmul.mubr.bf16.gmra.mrb[0].mxu0 %v979
          %v5015 = vpop.f32.mrb[0].mxu0
          %v5016 = vadd.f32 0.0, %v5015
          %v5017 = vpop.f32.mrb[0].mxu0
          %v5018 = vpop.f32.mrb[0].mxu0
          %v5019 = vadd.f32 0.0, %v5018
          %v5020 = vpop.f32.mrb[0].mxu0
          %5021 = vmatprep.mubr.bf16.mxu0 0
          %5022 = vmatmul.mubr.bf16.gmra.mrb[0].mxu0 %v980
          %v5023 = vpop.f32.mrb[0].mxu0
          %v5024 = vadd.f32 0.0, %v5023
          %v5025 = vpop.f32.mrb[0].mxu0
          %v5026 = vpop.f32.mrb[0].mxu0
          %v5027 = vadd.f32 0.0, %v5026
          %v5028 = vpop.f32.mrb[0].mxu0
          %5029 = vmatprep.mubr.bf16.mxu0 0
          %5030 = vmatmul.mubr.bf16.gmra.mrb[0].mxu0 %v981
          %v5031 = vpop.f32.mrb[0].mxu0
          %v5032 = vadd.f32 0.0, %v5031
          %v5033 = vpop.f32.mrb[0].mxu0
          %v5034 = vpop.f32.mrb[0].mxu0
          %v5035 = vadd.f32 0.0, %v5034
          %v5036 = vpop.f32.mrb[0].mxu0
          %5037 = vmatprep.mubr.bf16.mxu0 0
          %5038 = vmatmul.mubr.bf16.gmra.mrb[0].mxu0 %v982
          %v5039 = vpop.f32.mrb[0].mxu0
          %v5040 = vadd.f32 0.0, %v5039
          %v5041 = vpop.f32.mrb[0].mxu0
          %v5042 = vpop.f32.mrb[0].mxu0
          %v5043 = vadd.f32 0.0, %v5042
          %v5044 = vpop.f32.mrb[0].mxu0
          %5045 = vmatprep.mubr.bf16.mxu0 0
          %5046 = vmatmul.mubr.bf16.gmra.mrb[0].mxu0 %v983
          %v5047 = vpop.f32.mrb[0].mxu0
          %v5048 = vadd.f32 0.0, %v5047
          %v5049 = vpop.f32.mrb[0].mxu0
          %v5050 = vpop.f32.mrb[0].mxu0
          %v5051 = vadd.f32 0.0, %v5050
          %v5052 = vpop.f32.mrb[0].mxu0
          %5053 = vdwg.mxu0
          %v5054 = vpack.c.bf16 %v4995, %v4992
          %v5055 = vpack.c.bf16 %v5003, %v5000
          %v5056 = vpack.c.bf16 %v5011, %v5008
          %v5057 = vpack.c.bf16 %v5019, %v5016
          %v5058 = vpack.c.bf16 %v5027, %v5024
          %v5059 = vpack.c.bf16 %v5035, %v5032
          %v5060 = vpack.c.bf16 %v5043, %v5040
          %v5061 = vpack.c.bf16 %v5051, %v5048
          %s5062 = smul.addr %s4647, 4
          %s5063 = scalar_lea.vmem %s37, %s5062
          %v5064 = vld [vmem:[%s5063] sm:$0xf]
          %v5065 = vld [vmem:[%s5063 + $0x4] sm:$0xf]
          %v5066 = vld [vmem:[%s5063 + $0x8] sm:$0xf]
          %v5067 = vld [vmem:[%s5063 + $0xc] sm:$0xf]
          %v5068 = vld [vmem:[%s5063 + $0x10] sm:$0xf]
          %v5069 = vld [vmem:[%s5063 + $0x14] sm:$0xf]
          %v5070 = vld [vmem:[%s5063 + $0x18] sm:$0xf]
          %v5071 = vld [vmem:[%s5063 + $0x1c] sm:$0xf]
          %v5072 = vld [vmem:[%s5063 + $0x20] sm:$0xf]
          %v5073 = vld [vmem:[%s5063 + $0x24] sm:$0xf]
          %v5074 = vld [vmem:[%s5063 + $0x28] sm:$0xf]
          %v5075 = vld [vmem:[%s5063 + $0x2c] sm:$0xf]
          %v5076 = vld [vmem:[%s5063 + $0x30] sm:$0xf]
          %v5077 = vld [vmem:[%s5063 + $0x34] sm:$0xf]
          %v5078 = vld [vmem:[%s5063 + $0x38] sm:$0xf]
          %v5079 = vld [vmem:[%s5063 + $0x3c] sm:$0xf]
          %v5096 = vunpack.c.l.b16 %v5064
          %v5097 = vunpack.c.l.b16 %v5065
          %v5098 = vunpack.c.l.b16 %v5066
          %v5099 = vunpack.c.l.b16 %v5067
          %v5100 = vunpack.c.l.b16 %v5068
          %v5101 = vunpack.c.l.b16 %v5069
          %v5102 = vunpack.c.l.b16 %v5070
          %v5103 = vunpack.c.l.b16 %v5071
          %v5104 = vunpack.c.l.b16 %v5072
          %v5105 = vunpack.c.l.b16 %v5073
          %v5106 = vunpack.c.l.b16 %v5074
          %v5107 = vunpack.c.l.b16 %v5075
          %v5108 = vunpack.c.l.b16 %v5076
          %v5109 = vunpack.c.l.b16 %v5077
          %v5110 = vunpack.c.l.b16 %v5078
          %v5111 = vunpack.c.l.b16 %v5079
          %v5112 = vpack.c.b16 %v5097, %v5096
          %v5113 = vpack.c.b16 %v5099, %v5098
          %v5114 = vpack.c.b16 %v5101, %v5100
          %v5115 = vpack.c.b16 %v5103, %v5102
          %v5116 = vpack.c.b16 %v5105, %v5104
          %v5117 = vpack.c.b16 %v5107, %v5106
          %v5118 = vpack.c.b16 %v5109, %v5108
          %v5119 = vpack.c.b16 %v5111, %v5110
          %5128 = vmatprep.subr.bf16.mxu0 0
          %5129 = vmatpush1.bf16.msra.mxu0 %v5112
          %5130 = vmatprep.subr.bf16.mxu0 0
          %5131 = vmatpush1.bf16.msra.mxu0 %v5113
          %5132 = vmatprep.subr.bf16.mxu0 0
          %5133 = vmatpush1.bf16.msra.mxu0 %v5114
          %5134 = vmatprep.subr.bf16.mxu0 0
          %5135 = vmatpush1.bf16.msra.mxu0 %v5115
          %5136 = vmatprep.subr.bf16.mxu0 0
          %5137 = vmatpush1.bf16.msra.mxu0 %v5116
          %5138 = vmatprep.subr.bf16.mxu0 0
          %5139 = vmatpush1.bf16.msra.mxu0 %v5117
          %5140 = vmatprep.subr.bf16.mxu0 0
          %5141 = vmatpush1.bf16.msra.mxu0 %v5118
          %5142 = vmatprep.subr.bf16.mxu0 0
          %5143 = vmatpush1.bf16.msra.mxu0 %v5119
          %5144 = vmatprep.subr.bf16.mxu0 0
          %5145 = vmatpush1.bf16.msra.mxu0 0
          %5146 = vmatprep.subr.bf16.mxu0 0
          %5147 = vmatpush1.bf16.msra.mxu0 0
          %5148 = vmatprep.subr.bf16.mxu0 0
          %5149 = vmatpush1.bf16.msra.mxu0 0
          %5150 = vmatprep.subr.bf16.mxu0 0
          %5151 = vmatpush1.bf16.msra.mxu0 0
          %5152 = vmatprep.subr.bf16.mxu0 0
          %5153 = vmatpush1.bf16.msra.mxu0 0
          %5154 = vmatprep.subr.bf16.mxu0 0
          %5155 = vmatpush1.bf16.msra.mxu0 0
          %5156 = vmatprep.subr.bf16.mxu0 0
          %5157 = vmatpush1.bf16.msra.mxu0 0
          %5158 = vmatprep.subr.bf16.mxu0 0
          %5159 = vmatpush1.bf16.msra.mxu0 0
          %5160 = vmatprep.mubr.bf16.mxu0 0
          %5161 = vmatmul.mubr.bf16.gmra.mrb[0].mxu0 %v976
          %v5162 = vpop.f32.mrb[0].mxu0
          %v5163 = vadd.f32 0.0, %v5162
          %v5164 = vpop.f32.mrb[0].mxu0
          %v5165 = vpop.f32.mrb[0].mxu0
          %v5166 = vadd.f32 0.0, %v5165
          %v5167 = vpop.f32.mrb[0].mxu0
          %5168 = vmatprep.mubr.bf16.mxu0 0
          %5169 = vmatmul.mubr.bf16.gmra.mrb[0].mxu0 %v977
          %v5170 = vpop.f32.mrb[0].mxu0
          %v5171 = vadd.f32 0.0, %v5170
          %v5172 = vpop.f32.mrb[0].mxu0
          %v5173 = vpop.f32.mrb[0].mxu0
          %v5174 = vadd.f32 0.0, %v5173
          %v5175 = vpop.f32.mrb[0].mxu0
          %5176 = vmatprep.mubr.bf16.mxu0 0
          %5177 = vmatmul.mubr.bf16.gmra.mrb[0].mxu0 %v978
          %v5178 = vpop.f32.mrb[0].mxu0
          %v5179 = vadd.f32 0.0, %v5178
          %v5180 = vpop.f32.mrb[0].mxu0
          %v5181 = vpop.f32.mrb[0].mxu0
          %v5182 = vadd.f32 0.0, %v5181
          %v5183 = vpop.f32.mrb[0].mxu0
          %5184 = vmatprep.mubr.bf16.mxu0 0
          %5185 = vmatmul.mubr.bf16.gmra.mrb[0].mxu0 %v979
          %v5186 = vpop.f32.mrb[0].mxu0
          %v5187 = vadd.f32 0.0, %v5186
          %v5188 = vpop.f32.mrb[0].mxu0
          %v5189 = vpop.f32.mrb[0].mxu0
          %v5190 = vadd.f32 0.0, %v5189
          %v5191 = vpop.f32.mrb[0].mxu0
          %5192 = vmatprep.mubr.bf16.mxu0 0
          %5193 = vmatmul.mubr.bf16.gmra.mrb[0].mxu0 %v980
          %v5194 = vpop.f32.mrb[0].mxu0
          %v5195 = vadd.f32 0.0, %v5194
          %v5196 = vpop.f32.mrb[0].mxu0
          %v5197 = vpop.f32.mrb[0].mxu0
          %v5198 = vadd.f32 0.0, %v5197
          %v5199 = vpop.f32.mrb[0].mxu0
          %5200 = vmatprep.mubr.bf16.mxu0 0
          %5201 = vmatmul.mubr.bf16.gmra.mrb[0].mxu0 %v981
          %v5202 = vpop.f32.mrb[0].mxu0
          %v5203 = vadd.f32 0.0, %v5202
          %v5204 = vpop.f32.mrb[0].mxu0
          %v5205 = vpop.f32.mrb[0].mxu0
          %v5206 = vadd.f32 0.0, %v5205
          %v5207 = vpop.f32.mrb[0].mxu0
          %5208 = vmatprep.mubr.bf16.mxu0 0
          %5209 = vmatmul.mubr.bf16.gmra.mrb[0].mxu0 %v982
          %v5210 = vpop.f32.mrb[0].mxu0
          %v5211 = vadd.f32 0.0, %v5210
          %v5212 = vpop.f32.mrb[0].mxu0
          %v5213 = vpop.f32.mrb[0].mxu0
          %v5214 = vadd.f32 0.0, %v5213
          %v5215 = vpop.f32.mrb[0].mxu0
          %5216 = vmatprep.mubr.bf16.mxu0 0
          %5217 = vmatmul.mubr.bf16.gmra.mrb[0].mxu0 %v983
          %v5218 = vpop.f32.mrb[0].mxu0
          %v5219 = vadd.f32 0.0, %v5218
          %v5220 = vpop.f32.mrb[0].mxu0
          %v5221 = vpop.f32.mrb[0].mxu0
          %v5222 = vadd.f32 0.0, %v5221
          %v5223 = vpop.f32.mrb[0].mxu0
          %5224 = vdwg.mxu0
          %v5225 = vpack.c.bf16 %v5166, %v5163
          %v5226 = vpack.c.bf16 %v5174, %v5171
          %v5227 = vpack.c.bf16 %v5182, %v5179
          %v5228 = vpack.c.bf16 %v5190, %v5187
          %v5229 = vpack.c.bf16 %v5198, %v5195
          %v5230 = vpack.c.bf16 %v5206, %v5203
          %v5231 = vpack.c.bf16 %v5214, %v5211
          %v5232 = vpack.c.bf16 %v5222, %v5219
          %v5234 = vlaneseq
          %v5235 = vshrl.u32 %v5234, 7
          %v5236 = vsub.s32 0, %v5235
          %v5237 = vrot.slane %v4608, %v5236
          %5239 = vmatprep.subr.bf16.mxu0 0
          %5240 = vmatpush1.bf16.xpose.msra.mxu0 %v5054
          %5241 = vmatprep.subr.bf16.mxu0 0
          %5242 = vmatpush1.bf16.xpose.msra.mxu0 %v5055
          %5243 = vmatprep.subr.bf16.mxu0 0
          %5244 = vmatpush1.bf16.xpose.msra.mxu0 %v5056
          %5245 = vmatprep.subr.bf16.mxu0 0
          %5246 = vmatpush1.bf16.xpose.msra.mxu0 %v5057
          %5247 = vmatprep.subr.bf16.mxu0 0
          %5248 = vmatpush1.bf16.xpose.msra.mxu0 %v5058
          %5249 = vmatprep.subr.bf16.mxu0 0
          %5250 = vmatpush1.bf16.xpose.msra.mxu0 %v5059
          %5251 = vmatprep.subr.bf16.mxu0 0
          %5252 = vmatpush1.bf16.xpose.msra.mxu0 %v5060
          %5253 = vmatprep.subr.bf16.mxu0 0
          %5254 = vmatpush1.bf16.xpose.msra.mxu0 %v5061
          %5255 = vmatprep.subr.bf16.mxu0 0
          %5256 = vmatpush1.bf16.xpose.msra.mxu0 0
          %5257 = vmatprep.subr.bf16.mxu0 0
          %5258 = vmatpush1.bf16.xpose.msra.mxu0 0
          %5259 = vmatprep.subr.bf16.mxu0 0
          %5260 = vmatpush1.bf16.xpose.msra.mxu0 0
          %5261 = vmatprep.subr.bf16.mxu0 0
          %5262 = vmatpush1.bf16.xpose.msra.mxu0 0
          %5263 = vmatprep.subr.bf16.mxu0 0
          %5264 = vmatpush1.bf16.xpose.msra.mxu0 0
          %5265 = vmatprep.subr.bf16.mxu0 0
          %5266 = vmatpush1.bf16.xpose.msra.mxu0 0
          %5267 = vmatprep.subr.bf16.mxu0 0
          %5268 = vmatpush1.bf16.xpose.msra.mxu0 0
          %5269 = vmatprep.subr.bf16.mxu0 0
          %5270 = vmatpush1.bf16.xpose.msra.mxu0 0
          %5271 = vmatprep.mubr.bf16.mxu0 0
          %5272 = vmatmul.mubr.bf16.gmra.mrb[0].mxu0 %v4875
          %v5273 = vpop.f32.mrb[0].mxu0
          %v5274 = vadd.f32 %v5237, %v5273
          %v5275 = vpop.f32.mrb[0].mxu0
          %v5276 = vpop.f32.mrb[0].mxu0
          %v5277 = vadd.f32 %v5237, %v5276
          %v5278 = vpop.f32.mrb[0].mxu0
          %5279 = vmatprep.mubr.bf16.mxu0 0
          %5280 = vmatmul.mubr.bf16.gmra.mrb[0].mxu0 %v4876
          %v5281 = vpop.f32.mrb[0].mxu0
          %v5282 = vadd.f32 %v5237, %v5281
          %v5283 = vpop.f32.mrb[0].mxu0
          %v5284 = vpop.f32.mrb[0].mxu0
          %v5285 = vadd.f32 %v5237, %v5284
          %v5286 = vpop.f32.mrb[0].mxu0
          %5287 = vmatprep.mubr.bf16.mxu0 0
          %5288 = vmatmul.mubr.bf16.gmra.mrb[0].mxu0 %v4877
          %v5289 = vpop.f32.mrb[0].mxu0
          %v5290 = vadd.f32 %v5237, %v5289
          %v5291 = vpop.f32.mrb[0].mxu0
          %v5292 = vpop.f32.mrb[0].mxu0
          %v5293 = vadd.f32 %v5237, %v5292
          %v5294 = vpop.f32.mrb[0].mxu0
          %5295 = vmatprep.mubr.bf16.mxu0 0
          %5296 = vmatmul.mubr.bf16.gmra.mrb[0].mxu0 %v4878
          %v5297 = vpop.f32.mrb[0].mxu0
          %v5298 = vadd.f32 %v5237, %v5297
          %v5299 = vpop.f32.mrb[0].mxu0
          %v5300 = vpop.f32.mrb[0].mxu0
          %v5301 = vadd.f32 %v5237, %v5300
          %v5302 = vpop.f32.mrb[0].mxu0
          %5303 = vmatprep.mubr.bf16.mxu0 0
          %5304 = vmatmul.mubr.bf16.gmra.mrb[0].mxu0 %v4879
          %v5305 = vpop.f32.mrb[0].mxu0
          %v5306 = vadd.f32 %v5237, %v5305
          %v5307 = vpop.f32.mrb[0].mxu0
          %v5308 = vpop.f32.mrb[0].mxu0
          %v5309 = vadd.f32 %v5237, %v5308
          %v5310 = vpop.f32.mrb[0].mxu0
          %5311 = vmatprep.mubr.bf16.mxu0 0
          %5312 = vmatmul.mubr.bf16.gmra.mrb[0].mxu0 %v4880
          %v5313 = vpop.f32.mrb[0].mxu0
          %v5314 = vadd.f32 %v5237, %v5313
          %v5315 = vpop.f32.mrb[0].mxu0
          %v5316 = vpop.f32.mrb[0].mxu0
          %v5317 = vadd.f32 %v5237, %v5316
          %v5318 = vpop.f32.mrb[0].mxu0
          %5319 = vmatprep.mubr.bf16.mxu0 0
          %5320 = vmatmul.mubr.bf16.gmra.mrb[0].mxu0 %v4881
          %v5321 = vpop.f32.mrb[0].mxu0
          %v5322 = vadd.f32 %v5237, %v5321
          %v5323 = vpop.f32.mrb[0].mxu0
          %v5324 = vpop.f32.mrb[0].mxu0
          %v5325 = vadd.f32 %v5237, %v5324
          %v5326 = vpop.f32.mrb[0].mxu0
          %5327 = vmatprep.mubr.bf16.mxu0 0
          %5328 = vmatmul.mubr.bf16.gmra.mrb[0].mxu0 %v4882
          %v5329 = vpop.f32.mrb[0].mxu0
          %v5330 = vadd.f32 %v5237, %v5329
          %v5331 = vpop.f32.mrb[0].mxu0
          %v5332 = vpop.f32.mrb[0].mxu0
          %v5333 = vadd.f32 %v5237, %v5332
          %v5334 = vpop.f32.mrb[0].mxu0
          %5335 = vmatprep.mubr.bf16.mxu0 0
          %5336 = vmatmul.mubr.bf16.gmra.mrb[0].mxu0 %v4883
          %v5337 = vpop.f32.mrb[0].mxu0
          %v5338 = vadd.f32 %v5237, %v5337
          %v5339 = vpop.f32.mrb[0].mxu0
          %v5340 = vpop.f32.mrb[0].mxu0
          %v5341 = vadd.f32 %v5237, %v5340
          %v5342 = vpop.f32.mrb[0].mxu0
          %5343 = vmatprep.mubr.bf16.mxu0 0
          %5344 = vmatmul.mubr.bf16.gmra.mrb[0].mxu0 %v4884
          %v5345 = vpop.f32.mrb[0].mxu0
          %v5346 = vadd.f32 %v5237, %v5345
          %v5347 = vpop.f32.mrb[0].mxu0
          %v5348 = vpop.f32.mrb[0].mxu0
          %v5349 = vadd.f32 %v5237, %v5348
          %v5350 = vpop.f32.mrb[0].mxu0
          %5351 = vmatprep.mubr.bf16.mxu0 0
          %5352 = vmatmul.mubr.bf16.gmra.mrb[0].mxu0 %v4885
          %v5353 = vpop.f32.mrb[0].mxu0
          %v5354 = vadd.f32 %v5237, %v5353
          %v5355 = vpop.f32.mrb[0].mxu0
          %v5356 = vpop.f32.mrb[0].mxu0
          %v5357 = vadd.f32 %v5237, %v5356
          %v5358 = vpop.f32.mrb[0].mxu0
          %5359 = vmatprep.mubr.bf16.mxu0 0
          %5360 = vmatmul.mubr.bf16.gmra.mrb[0].mxu0 %v4886
          %v5361 = vpop.f32.mrb[0].mxu0
          %v5362 = vadd.f32 %v5237, %v5361
          %v5363 = vpop.f32.mrb[0].mxu0
          %v5364 = vpop.f32.mrb[0].mxu0
          %v5365 = vadd.f32 %v5237, %v5364
          %v5366 = vpop.f32.mrb[0].mxu0
          %5367 = vmatprep.mubr.bf16.mxu0 0
          %5368 = vmatmul.mubr.bf16.gmra.mrb[0].mxu0 %v4887
          %v5369 = vpop.f32.mrb[0].mxu0
          %v5370 = vadd.f32 %v5237, %v5369
          %v5371 = vpop.f32.mrb[0].mxu0
          %v5372 = vpop.f32.mrb[0].mxu0
          %v5373 = vadd.f32 %v5237, %v5372
          %v5374 = vpop.f32.mrb[0].mxu0
          %5375 = vmatprep.mubr.bf16.mxu0 0
          %5376 = vmatmul.mubr.bf16.gmra.mrb[0].mxu0 %v4888
          %v5377 = vpop.f32.mrb[0].mxu0
          %v5378 = vadd.f32 %v5237, %v5377
          %v5379 = vpop.f32.mrb[0].mxu0
          %v5380 = vpop.f32.mrb[0].mxu0
          %v5381 = vadd.f32 %v5237, %v5380
          %v5382 = vpop.f32.mrb[0].mxu0
          %5383 = vmatprep.mubr.bf16.mxu0 0
          %5384 = vmatmul.mubr.bf16.gmra.mrb[0].mxu0 %v4889
          %v5385 = vpop.f32.mrb[0].mxu0
          %v5386 = vadd.f32 %v5237, %v5385
          %v5387 = vpop.f32.mrb[0].mxu0
          %v5388 = vpop.f32.mrb[0].mxu0
          %v5389 = vadd.f32 %v5237, %v5388
          %v5390 = vpop.f32.mrb[0].mxu0
          %5391 = vmatprep.mubr.bf16.mxu0 0
          %5392 = vmatmul.mubr.bf16.gmra.mrb[0].mxu0 %v4890
          %v5393 = vpop.f32.mrb[0].mxu0
          %v5394 = vadd.f32 %v5237, %v5393
          %v5395 = vpop.f32.mrb[0].mxu0
          %v5396 = vpop.f32.mrb[0].mxu0
          %v5397 = vadd.f32 %v5237, %v5396
          %v5398 = vpop.f32.mrb[0].mxu0
          %5399 = vdwg.mxu0
          %5400 = vmax.xlane.f32.xlu0 %v5274
          %v5401 = vpop.xlane.xlu0 %5400
          %5402 = vmax.xlane.f32.xlu0 %v5277
          %v5403 = vpop.xlane.xlu0 %5402
          %5404 = vmax.xlane.f32.xlu0 %v5282
          %v5405 = vpop.xlane.xlu0 %5404
          %5406 = vmax.xlane.f32.xlu0 %v5285
          %v5407 = vpop.xlane.xlu0 %5406
          %5408 = vmax.xlane.f32.xlu0 %v5290
          %v5409 = vpop.xlane.xlu0 %5408
          %5410 = vmax.xlane.f32.xlu0 %v5293
          %v5411 = vpop.xlane.xlu0 %5410
          %5412 = vmax.xlane.f32.xlu0 %v5298
          %v5413 = vpop.xlane.xlu0 %5412
          %5414 = vmax.xlane.f32.xlu0 %v5301
          %v5415 = vpop.xlane.xlu0 %5414
          %5416 = vmax.xlane.f32.xlu0 %v5306
          %v5417 = vpop.xlane.xlu0 %5416
          %5418 = vmax.xlane.f32.xlu0 %v5309
          %v5419 = vpop.xlane.xlu0 %5418
          %5420 = vmax.xlane.f32.xlu0 %v5314
          %v5421 = vpop.xlane.xlu0 %5420
          %5422 = vmax.xlane.f32.xlu0 %v5317
          %v5423 = vpop.xlane.xlu0 %5422
          %5424 = vmax.xlane.f32.xlu0 %v5322
          %v5425 = vpop.xlane.xlu0 %5424
          %5426 = vmax.xlane.f32.xlu0 %v5325
          %v5427 = vpop.xlane.xlu0 %5426
          %5428 = vmax.xlane.f32.xlu0 %v5330
          %v5429 = vpop.xlane.xlu0 %5428
          %5430 = vmax.xlane.f32.xlu0 %v5333
          %v5431 = vpop.xlane.xlu0 %5430
          %5432 = vmax.xlane.f32.xlu0 %v5338
          %v5433 = vpop.xlane.xlu0 %5432
          %5434 = vmax.xlane.f32.xlu0 %v5341
          %v5435 = vpop.xlane.xlu0 %5434
          %5436 = vmax.xlane.f32.xlu0 %v5346
          %v5437 = vpop.xlane.xlu0 %5436
          %5438 = vmax.xlane.f32.xlu0 %v5349
          %v5439 = vpop.xlane.xlu0 %5438
          %5440 = vmax.xlane.f32.xlu0 %v5354
          %v5441 = vpop.xlane.xlu0 %5440
          %5442 = vmax.xlane.f32.xlu0 %v5357
          %v5443 = vpop.xlane.xlu0 %5442
          %5444 = vmax.xlane.f32.xlu0 %v5362
          %v5445 = vpop.xlane.xlu0 %5444
          %5446 = vmax.xlane.f32.xlu0 %v5365
          %v5447 = vpop.xlane.xlu0 %5446
          %5448 = vmax.xlane.f32.xlu0 %v5370
          %v5449 = vpop.xlane.xlu0 %5448
          %5450 = vmax.xlane.f32.xlu0 %v5373
          %v5451 = vpop.xlane.xlu0 %5450
          %5452 = vmax.xlane.f32.xlu0 %v5378
          %v5453 = vpop.xlane.xlu0 %5452
          %5454 = vmax.xlane.f32.xlu0 %v5381
          %v5455 = vpop.xlane.xlu0 %5454
          %5456 = vmax.xlane.f32.xlu0 %v5386
          %v5457 = vpop.xlane.xlu0 %5456
          %5458 = vmax.xlane.f32.xlu0 %v5389
          %v5459 = vpop.xlane.xlu0 %5458
          %5460 = vmax.xlane.f32.xlu0 %v5394
          %v5461 = vpop.xlane.xlu0 %5460
          %5462 = vmax.xlane.f32.xlu0 %v5397
          %v5463 = vpop.xlane.xlu0 %5462
          %v5464 = vsub.f32 %v5274, %v5401
          %v5465 = vsub.f32 %v5277, %v5403
          %v5466 = vsub.f32 %v5282, %v5405
          %v5467 = vsub.f32 %v5285, %v5407
          %v5468 = vsub.f32 %v5290, %v5409
          %v5469 = vsub.f32 %v5293, %v5411
          %v5470 = vsub.f32 %v5298, %v5413
          %v5471 = vsub.f32 %v5301, %v5415
          %v5472 = vsub.f32 %v5306, %v5417
          %v5473 = vsub.f32 %v5309, %v5419
          %v5474 = vsub.f32 %v5314, %v5421
          %v5475 = vsub.f32 %v5317, %v5423
          %v5476 = vsub.f32 %v5322, %v5425
          %v5477 = vsub.f32 %v5325, %v5427
          %v5478 = vsub.f32 %v5330, %v5429
          %v5479 = vsub.f32 %v5333, %v5431
          %v5480 = vsub.f32 %v5338, %v5433
          %v5481 = vsub.f32 %v5341, %v5435
          %v5482 = vsub.f32 %v5346, %v5437
          %v5483 = vsub.f32 %v5349, %v5439
          %v5484 = vsub.f32 %v5354, %v5441
          %v5485 = vsub.f32 %v5357, %v5443
          %v5486 = vsub.f32 %v5362, %v5445
          %v5487 = vsub.f32 %v5365, %v5447
          %v5488 = vsub.f32 %v5370, %v5449
          %v5489 = vsub.f32 %v5373, %v5451
          %v5490 = vsub.f32 %v5378, %v5453
          %v5491 = vsub.f32 %v5381, %v5455
          %v5492 = vsub.f32 %v5386, %v5457
          %v5493 = vsub.f32 %v5389, %v5459
          %v5494 = vsub.f32 %v5394, %v5461
          %v5495 = vsub.f32 %v5397, %v5463
          %v5496 = vmul.f32 %v5464, 1.442695
          %v5497 = vpow.pop %v5496
          %v5498 = vmul.f32 %v5465, 1.442695
          %v5499 = vpow.pop %v5498
          %v5500 = vmul.f32 %v5466, 1.442695
          %v5501 = vpow.pop %v5500
          %v5502 = vmul.f32 %v5467, 1.442695
          %v5503 = vpow.pop %v5502
          %v5504 = vmul.f32 %v5468, 1.442695
          %v5505 = vpow.pop %v5504
          %v5506 = vmul.f32 %v5469, 1.442695
          %v5507 = vpow.pop %v5506
          %v5508 = vmul.f32 %v5470, 1.442695
          %v5509 = vpow.pop %v5508
          %v5510 = vmul.f32 %v5471, 1.442695
          %v5511 = vpow.pop %v5510
          %v5512 = vmul.f32 %v5472, 1.442695
          %v5513 = vpow.pop %v5512
          %v5514 = vmul.f32 %v5473, 1.442695
          %v5515 = vpow.pop %v5514
          %v5516 = vmul.f32 %v5474, 1.442695
          %v5517 = vpow.pop %v5516
          %v5518 = vmul.f32 %v5475, 1.442695
          %v5519 = vpow.pop %v5518
          %v5520 = vmul.f32 %v5476, 1.442695
          %v5521 = vpow.pop %v5520
          %v5522 = vmul.f32 %v5477, 1.442695
          %v5523 = vpow.pop %v5522
          %v5524 = vmul.f32 %v5478, 1.442695
          %v5525 = vpow.pop %v5524
          %v5526 = vmul.f32 %v5479, 1.442695
          %v5527 = vpow.pop %v5526
          %v5528 = vmul.f32 %v5480, 1.442695
          %v5529 = vpow.pop %v5528
          %v5530 = vmul.f32 %v5481, 1.442695
          %v5531 = vpow.pop %v5530
          %v5532 = vmul.f32 %v5482, 1.442695
          %v5533 = vpow.pop %v5532
          %v5534 = vmul.f32 %v5483, 1.442695
          %v5535 = vpow.pop %v5534
          %v5536 = vmul.f32 %v5484, 1.442695
          %v5537 = vpow.pop %v5536
          %v5538 = vmul.f32 %v5485, 1.442695
          %v5539 = vpow.pop %v5538
          %v5540 = vmul.f32 %v5486, 1.442695
          %v5541 = vpow.pop %v5540
          %v5542 = vmul.f32 %v5487, 1.442695
          %v5543 = vpow.pop %v5542
          %v5544 = vmul.f32 %v5488, 1.442695
          %v5545 = vpow.pop %v5544
          %v5546 = vmul.f32 %v5489, 1.442695
          %v5547 = vpow.pop %v5546
          %v5548 = vmul.f32 %v5490, 1.442695
          %v5549 = vpow.pop %v5548
          %v5550 = vmul.f32 %v5491, 1.442695
          %v5551 = vpow.pop %v5550
          %v5552 = vmul.f32 %v5492, 1.442695
          %v5553 = vpow.pop %v5552
          %v5554 = vmul.f32 %v5493, 1.442695
          %v5555 = vpow.pop %v5554
          %v5556 = vmul.f32 %v5494, 1.442695
          %v5557 = vpow.pop %v5556
          %v5558 = vmul.f32 %v5495, 1.442695
          %v5559 = vpow.pop %v5558
          %5560 = vadd.xlane.f32.xlu0 %v5497
          %v5561 = vpop.xlane.xlu0 %5560
          %5562 = vadd.xlane.f32.xlu0 %v5499
          %v5563 = vpop.xlane.xlu0 %5562
          %5564 = vadd.xlane.f32.xlu0 %v5501
          %v5565 = vpop.xlane.xlu0 %5564
          %5566 = vadd.xlane.f32.xlu0 %v5503
          %v5567 = vpop.xlane.xlu0 %5566
          %5568 = vadd.xlane.f32.xlu0 %v5505
          %v5569 = vpop.xlane.xlu0 %5568
          %5570 = vadd.xlane.f32.xlu0 %v5507
          %v5571 = vpop.xlane.xlu0 %5570
          %5572 = vadd.xlane.f32.xlu0 %v5509
          %v5573 = vpop.xlane.xlu0 %5572
          %5574 = vadd.xlane.f32.xlu0 %v5511
          %v5575 = vpop.xlane.xlu0 %5574
          %5576 = vadd.xlane.f32.xlu0 %v5513
          %v5577 = vpop.xlane.xlu0 %5576
          %5578 = vadd.xlane.f32.xlu0 %v5515
          %v5579 = vpop.xlane.xlu0 %5578
          %5580 = vadd.xlane.f32.xlu0 %v5517
          %v5581 = vpop.xlane.xlu0 %5580
          %5582 = vadd.xlane.f32.xlu0 %v5519
          %v5583 = vpop.xlane.xlu0 %5582
          %5584 = vadd.xlane.f32.xlu0 %v5521
          %v5585 = vpop.xlane.xlu0 %5584
          %5586 = vadd.xlane.f32.xlu0 %v5523
          %v5587 = vpop.xlane.xlu0 %5586
          %5588 = vadd.xlane.f32.xlu0 %v5525
          %v5589 = vpop.xlane.xlu0 %5588
          %5590 = vadd.xlane.f32.xlu0 %v5527
          %v5591 = vpop.xlane.xlu0 %5590
          %5592 = vadd.xlane.f32.xlu0 %v5529
          %v5593 = vpop.xlane.xlu0 %5592
          %5594 = vadd.xlane.f32.xlu0 %v5531
          %v5595 = vpop.xlane.xlu0 %5594
          %5596 = vadd.xlane.f32.xlu0 %v5533
          %v5597 = vpop.xlane.xlu0 %5596
          %5598 = vadd.xlane.f32.xlu0 %v5535
          %v5599 = vpop.xlane.xlu0 %5598
          %5600 = vadd.xlane.f32.xlu0 %v5537
          %v5601 = vpop.xlane.xlu0 %5600
          %5602 = vadd.xlane.f32.xlu0 %v5539
          %v5603 = vpop.xlane.xlu0 %5602
          %5604 = vadd.xlane.f32.xlu0 %v5541
          %v5605 = vpop.xlane.xlu0 %5604
          %5606 = vadd.xlane.f32.xlu0 %v5543
          %v5607 = vpop.xlane.xlu0 %5606
          %5608 = vadd.xlane.f32.xlu0 %v5545
          %v5609 = vpop.xlane.xlu0 %5608
          %5610 = vadd.xlane.f32.xlu0 %v5547
          %v5611 = vpop.xlane.xlu0 %5610
          %5612 = vadd.xlane.f32.xlu0 %v5549
          %v5613 = vpop.xlane.xlu0 %5612
          %5614 = vadd.xlane.f32.xlu0 %v5551
          %v5615 = vpop.xlane.xlu0 %5614
          %5616 = vadd.xlane.f32.xlu0 %v5553
          %v5617 = vpop.xlane.xlu0 %5616
          %5618 = vadd.xlane.f32.xlu0 %v5555
          %v5619 = vpop.xlane.xlu0 %5618
          %5620 = vadd.xlane.f32.xlu0 %v5557
          %v5621 = vpop.xlane.xlu0 %5620
          %5622 = vadd.xlane.f32.xlu0 %v5559
          %v5623 = vpop.xlane.xlu0 %5622
          %v5624 = vpack.c.bf16 %v5499, %v5497
          %v5625 = vpack.c.bf16 %v5503, %v5501
          %v5626 = vpack.c.bf16 %v5507, %v5505
          %v5627 = vpack.c.bf16 %v5511, %v5509
          %v5628 = vpack.c.bf16 %v5515, %v5513
          %v5629 = vpack.c.bf16 %v5519, %v5517
          %v5630 = vpack.c.bf16 %v5523, %v5521
          %v5631 = vpack.c.bf16 %v5527, %v5525
          %v5632 = vpack.c.bf16 %v5531, %v5529
          %v5633 = vpack.c.bf16 %v5535, %v5533
          %v5634 = vpack.c.bf16 %v5539, %v5537
          %v5635 = vpack.c.bf16 %v5543, %v5541
          %v5636 = vpack.c.bf16 %v5547, %v5545
          %v5637 = vpack.c.bf16 %v5551, %v5549
          %v5638 = vpack.c.bf16 %v5555, %v5553
          %v5639 = vpack.c.bf16 %v5559, %v5557
          %5640 = vmatprep.subr.bf16.mxu0 0
          %5641 = vmatpush1.bf16.msra.mxu0 %v5225
          %5642 = vmatprep.subr.bf16.mxu0 0
          %5643 = vmatpush1.bf16.msra.mxu0 %v5226
          %5644 = vmatprep.subr.bf16.mxu0 0
          %5645 = vmatpush1.bf16.msra.mxu0 %v5227
          %5646 = vmatprep.subr.bf16.mxu0 0
          %5647 = vmatpush1.bf16.msra.mxu0 %v5228
          %5648 = vmatprep.subr.bf16.mxu0 0
          %5649 = vmatpush1.bf16.msra.mxu0 %v5229
          %5650 = vmatprep.subr.bf16.mxu0 0
          %5651 = vmatpush1.bf16.msra.mxu0 %v5230
          %5652 = vmatprep.subr.bf16.mxu0 0
          %5653 = vmatpush1.bf16.msra.mxu0 %v5231
          %5654 = vmatprep.subr.bf16.mxu0 0
          %5655 = vmatpush1.bf16.msra.mxu0 %v5232
          %5656 = vmatprep.subr.bf16.mxu0 0
          %5657 = vmatpush1.bf16.msra.mxu0 0
          %5658 = vmatprep.subr.bf16.mxu0 0
          %5659 = vmatpush1.bf16.msra.mxu0 0
          %5660 = vmatprep.subr.bf16.mxu0 0
          %5661 = vmatpush1.bf16.msra.mxu0 0
          %5662 = vmatprep.subr.bf16.mxu0 0
          %5663 = vmatpush1.bf16.msra.mxu0 0
          %5664 = vmatprep.subr.bf16.mxu0 0
          %5665 = vmatpush1.bf16.msra.mxu0 0
          %5666 = vmatprep.subr.bf16.mxu0 0
          %5667 = vmatpush1.bf16.msra.mxu0 0
          %5668 = vmatprep.subr.bf16.mxu0 0
          %5669 = vmatpush1.bf16.msra.mxu0 0
          %5670 = vmatprep.subr.bf16.mxu0 0
          %5671 = vmatpush1.bf16.msra.mxu0 0
          %5672 = vmatprep.mubr.bf16.mxu0 0
          %5673 = vmatmul.mubr.bf16.gmra.mrb[0].mxu0 %v5624
          %v5674 = vpop.f32.mrb[0].mxu0
          %v5675 = vadd.f32 0.0, %v5674
          %v5676 = vpop.f32.mrb[0].mxu0
          %v5677 = vpop.f32.mrb[0].mxu0
          %v5678 = vadd.f32 0.0, %v5677
          %v5679 = vpop.f32.mrb[0].mxu0
          %5680 = vmatprep.mubr.bf16.mxu0 0
          %5681 = vmatmul.mubr.bf16.gmra.mrb[0].mxu0 %v5625
          %v5682 = vpop.f32.mrb[0].mxu0
          %v5683 = vadd.f32 0.0, %v5682
          %v5684 = vpop.f32.mrb[0].mxu0
          %v5685 = vpop.f32.mrb[0].mxu0
          %v5686 = vadd.f32 0.0, %v5685
          %v5687 = vpop.f32.mrb[0].mxu0
          %5688 = vmatprep.mubr.bf16.mxu0 0
          %5689 = vmatmul.mubr.bf16.gmra.mrb[0].mxu0 %v5626
          %v5690 = vpop.f32.mrb[0].mxu0
          %v5691 = vadd.f32 0.0, %v5690
          %v5692 = vpop.f32.mrb[0].mxu0
          %v5693 = vpop.f32.mrb[0].mxu0
          %v5694 = vadd.f32 0.0, %v5693
          %v5695 = vpop.f32.mrb[0].mxu0
          %5696 = vmatprep.mubr.bf16.mxu0 0
          %5697 = vmatmul.mubr.bf16.gmra.mrb[0].mxu0 %v5627
          %v5698 = vpop.f32.mrb[0].mxu0
          %v5699 = vadd.f32 0.0, %v5698
          %v5700 = vpop.f32.mrb[0].mxu0
          %v5701 = vpop.f32.mrb[0].mxu0
          %v5702 = vadd.f32 0.0, %v5701
          %v5703 = vpop.f32.mrb[0].mxu0
          %5704 = vmatprep.mubr.bf16.mxu0 0
          %5705 = vmatmul.mubr.bf16.gmra.mrb[0].mxu0 %v5628
          %v5706 = vpop.f32.mrb[0].mxu0
          %v5707 = vadd.f32 0.0, %v5706
          %v5708 = vpop.f32.mrb[0].mxu0
          %v5709 = vpop.f32.mrb[0].mxu0
          %v5710 = vadd.f32 0.0, %v5709
          %v5711 = vpop.f32.mrb[0].mxu0
          %5712 = vmatprep.mubr.bf16.mxu0 0
          %5713 = vmatmul.mubr.bf16.gmra.mrb[0].mxu0 %v5629
          %v5714 = vpop.f32.mrb[0].mxu0
          %v5715 = vadd.f32 0.0, %v5714
          %v5716 = vpop.f32.mrb[0].mxu0
          %v5717 = vpop.f32.mrb[0].mxu0
          %v5718 = vadd.f32 0.0, %v5717
          %v5719 = vpop.f32.mrb[0].mxu0
          %5720 = vmatprep.mubr.bf16.mxu0 0
          %5721 = vmatmul.mubr.bf16.gmra.mrb[0].mxu0 %v5630
          %v5722 = vpop.f32.mrb[0].mxu0
          %v5723 = vadd.f32 0.0, %v5722
          %v5724 = vpop.f32.mrb[0].mxu0
          %v5725 = vpop.f32.mrb[0].mxu0
          %v5726 = vadd.f32 0.0, %v5725
          %v5727 = vpop.f32.mrb[0].mxu0
          %5728 = vmatprep.mubr.bf16.mxu0 0
          %5729 = vmatmul.mubr.bf16.gmra.mrb[0].mxu0 %v5631
          %v5730 = vpop.f32.mrb[0].mxu0
          %v5731 = vadd.f32 0.0, %v5730
          %v5732 = vpop.f32.mrb[0].mxu0
          %v5733 = vpop.f32.mrb[0].mxu0
          %v5734 = vadd.f32 0.0, %v5733
          %v5735 = vpop.f32.mrb[0].mxu0
          %5736 = vmatprep.mubr.bf16.mxu0 0
          %5737 = vmatmul.mubr.bf16.gmra.mrb[0].mxu0 %v5632
          %v5738 = vpop.f32.mrb[0].mxu0
          %v5739 = vadd.f32 0.0, %v5738
          %v5740 = vpop.f32.mrb[0].mxu0
          %v5741 = vpop.f32.mrb[0].mxu0
          %v5742 = vadd.f32 0.0, %v5741
          %v5743 = vpop.f32.mrb[0].mxu0
          %5744 = vmatprep.mubr.bf16.mxu0 0
          %5745 = vmatmul.mubr.bf16.gmra.mrb[0].mxu0 %v5633
          %v5746 = vpop.f32.mrb[0].mxu0
          %v5747 = vadd.f32 0.0, %v5746
          %v5748 = vpop.f32.mrb[0].mxu0
          %v5749 = vpop.f32.mrb[0].mxu0
          %v5750 = vadd.f32 0.0, %v5749
          %v5751 = vpop.f32.mrb[0].mxu0
          %5752 = vmatprep.mubr.bf16.mxu0 0
          %5753 = vmatmul.mubr.bf16.gmra.mrb[0].mxu0 %v5634
          %v5754 = vpop.f32.mrb[0].mxu0
          %v5755 = vadd.f32 0.0, %v5754
          %v5756 = vpop.f32.mrb[0].mxu0
          %v5757 = vpop.f32.mrb[0].mxu0
          %v5758 = vadd.f32 0.0, %v5757
          %v5759 = vpop.f32.mrb[0].mxu0
          %5760 = vmatprep.mubr.bf16.mxu0 0
          %5761 = vmatmul.mubr.bf16.gmra.mrb[0].mxu0 %v5635
          %v5762 = vpop.f32.mrb[0].mxu0
          %v5763 = vadd.f32 0.0, %v5762
          %v5764 = vpop.f32.mrb[0].mxu0
          %v5765 = vpop.f32.mrb[0].mxu0
          %v5766 = vadd.f32 0.0, %v5765
          %v5767 = vpop.f32.mrb[0].mxu0
          %5768 = vmatprep.mubr.bf16.mxu0 0
          %5769 = vmatmul.mubr.bf16.gmra.mrb[0].mxu0 %v5636
          %v5770 = vpop.f32.mrb[0].mxu0
          %v5771 = vadd.f32 0.0, %v5770
          %v5772 = vpop.f32.mrb[0].mxu0
          %v5773 = vpop.f32.mrb[0].mxu0
          %v5774 = vadd.f32 0.0, %v5773
          %v5775 = vpop.f32.mrb[0].mxu0
          %5776 = vmatprep.mubr.bf16.mxu0 0
          %5777 = vmatmul.mubr.bf16.gmra.mrb[0].mxu0 %v5637
          %v5778 = vpop.f32.mrb[0].mxu0
          %v5779 = vadd.f32 0.0, %v5778
          %v5780 = vpop.f32.mrb[0].mxu0
          %v5781 = vpop.f32.mrb[0].mxu0
          %v5782 = vadd.f32 0.0, %v5781
          %v5783 = vpop.f32.mrb[0].mxu0
          %5784 = vmatprep.mubr.bf16.mxu0 0
          %5785 = vmatmul.mubr.bf16.gmra.mrb[0].mxu0 %v5638
          %v5786 = vpop.f32.mrb[0].mxu0
          %v5787 = vadd.f32 0.0, %v5786
          %v5788 = vpop.f32.mrb[0].mxu0
          %v5789 = vpop.f32.mrb[0].mxu0
          %v5790 = vadd.f32 0.0, %v5789
          %v5791 = vpop.f32.mrb[0].mxu0
          %5792 = vmatprep.mubr.bf16.mxu0 0
          %5793 = vmatmul.mubr.bf16.gmra.mrb[0].mxu0 %v5639
          %v5794 = vpop.f32.mrb[0].mxu0
          %v5795 = vadd.f32 0.0, %v5794
          %v5796 = vpop.f32.mrb[0].mxu0
          %v5797 = vpop.f32.mrb[0].mxu0
          %v5798 = vadd.f32 0.0, %v5797
          %v5799 = vpop.f32.mrb[0].mxu0
          %5800 = vdwg.mxu0
          %v5801 = vrcp.pop %v5561
          %v5802 = vrcp.pop %v5563
          %v5803 = vrcp.pop %v5565
          %v5804 = vrcp.pop %v5567
          %v5805 = vrcp.pop %v5569
          %v5806 = vrcp.pop %v5571
          %v5807 = vrcp.pop %v5573
          %v5808 = vrcp.pop %v5575
          %v5809 = vrcp.pop %v5577
          %v5810 = vrcp.pop %v5579
          %v5811 = vrcp.pop %v5581
          %v5812 = vrcp.pop %v5583
          %v5813 = vrcp.pop %v5585
          %v5814 = vrcp.pop %v5587
          %v5815 = vrcp.pop %v5589
          %v5816 = vrcp.pop %v5591
          %v5817 = vrcp.pop %v5593
          %v5818 = vrcp.pop %v5595
          %v5819 = vrcp.pop %v5597
          %v5820 = vrcp.pop %v5599
          %v5821 = vrcp.pop %v5601
          %v5822 = vrcp.pop %v5603
          %v5823 = vrcp.pop %v5605
          %v5824 = vrcp.pop %v5607
          %v5825 = vrcp.pop %v5609
          %v5826 = vrcp.pop %v5611
          %v5827 = vrcp.pop %v5613
          %v5828 = vrcp.pop %v5615
          %v5829 = vrcp.pop %v5617
          %v5830 = vrcp.pop %v5619
          %v5831 = vrcp.pop %v5621
          %v5832 = vrcp.pop %v5623
          %v5833 = vmul.f32 %v5675, %v5801
          %v5834 = vmul.f32 %v5678, %v5802
          %v5835 = vmul.f32 %v5683, %v5803
          %v5836 = vmul.f32 %v5686, %v5804
          %v5837 = vmul.f32 %v5691, %v5805
          %v5838 = vmul.f32 %v5694, %v5806
          %v5839 = vmul.f32 %v5699, %v5807
          %v5840 = vmul.f32 %v5702, %v5808
          %v5841 = vmul.f32 %v5707, %v5809
          %v5842 = vmul.f32 %v5710, %v5810
          %v5843 = vmul.f32 %v5715, %v5811
          %v5844 = vmul.f32 %v5718, %v5812
          %v5845 = vmul.f32 %v5723, %v5813
          %v5846 = vmul.f32 %v5726, %v5814
          %v5847 = vmul.f32 %v5731, %v5815
          %v5848 = vmul.f32 %v5734, %v5816
          %v5849 = vmul.f32 %v5739, %v5817
          %v5850 = vmul.f32 %v5742, %v5818
          %v5851 = vmul.f32 %v5747, %v5819
          %v5852 = vmul.f32 %v5750, %v5820
          %v5853 = vmul.f32 %v5755, %v5821
          %v5854 = vmul.f32 %v5758, %v5822
          %v5855 = vmul.f32 %v5763, %v5823
          %v5856 = vmul.f32 %v5766, %v5824
          %v5857 = vmul.f32 %v5771, %v5825
          %v5858 = vmul.f32 %v5774, %v5826
          %v5859 = vmul.f32 %v5779, %v5827
          %v5860 = vmul.f32 %v5782, %v5828
          %v5861 = vmul.f32 %v5787, %v5829
          %v5862 = vmul.f32 %v5790, %v5830
          %v5863 = vmul.f32 %v5795, %v5831
          %v5864 = vmul.f32 %v5798, %v5832
          %v5865 = vpack.c.bf16 %v5834, %v5833
          %v5866 = vpack.c.bf16 %v5836, %v5835
          %v5867 = vpack.c.bf16 %v5838, %v5837
          %v5868 = vpack.c.bf16 %v5840, %v5839
          %v5869 = vpack.c.bf16 %v5842, %v5841
          %v5870 = vpack.c.bf16 %v5844, %v5843
          %v5871 = vpack.c.bf16 %v5846, %v5845
          %v5872 = vpack.c.bf16 %v5848, %v5847
          %v5873 = vpack.c.bf16 %v5850, %v5849
          %v5874 = vpack.c.bf16 %v5852, %v5851
          %v5875 = vpack.c.bf16 %v5854, %v5853
          %v5876 = vpack.c.bf16 %v5856, %v5855
          %v5877 = vpack.c.bf16 %v5858, %v5857
          %v5878 = vpack.c.bf16 %v5860, %v5859
          %v5879 = vpack.c.bf16 %v5862, %v5861
          %v5880 = vpack.c.bf16 %v5864, %v5863
          %v5881 = vld [vmem:[#allocation2] sm:$0xff]
          %v5882 = vld [vmem:[#allocation2 + $0x8] sm:$0xff]
          %v5883 = vld [vmem:[#allocation2 + $0x10] sm:$0xff]
          %v5884 = vld [vmem:[#allocation2 + $0x18] sm:$0xff]
          %v5885 = vld [vmem:[#allocation2 + $0x20] sm:$0xff]
          %v5886 = vld [vmem:[#allocation2 + $0x28] sm:$0xff]
          %v5887 = vld [vmem:[#allocation2 + $0x30] sm:$0xff]
          %v5888 = vld [vmem:[#allocation2 + $0x38] sm:$0xff]
          %v5889 = vld [vmem:[#allocation2 + $0x40] sm:$0xff]
          %v5890 = vld [vmem:[#allocation2 + $0x48] sm:$0xff]
          %v5891 = vld [vmem:[#allocation2 + $0x50] sm:$0xff]
          %v5892 = vld [vmem:[#allocation2 + $0x58] sm:$0xff]
          %v5893 = vld [vmem:[#allocation2 + $0x60] sm:$0xff]
          %v5894 = vld [vmem:[#allocation2 + $0x68] sm:$0xff]
          %v5895 = vld [vmem:[#allocation2 + $0x70] sm:$0xff]
          %v5896 = vld [vmem:[#allocation2 + $0x78] sm:$0xff]
          %v5897 = vld [vmem:[#allocation2 + $0x80] sm:$0xff]
          %v5898 = vld [vmem:[#allocation2 + $0x88] sm:$0xff]
          %v5899 = vld [vmem:[#allocation2 + $0x90] sm:$0xff]
          %v5900 = vld [vmem:[#allocation2 + $0x98] sm:$0xff]
          %v5901 = vld [vmem:[#allocation2 + $0xa0] sm:$0xff]
          %v5902 = vld [vmem:[#allocation2 + $0xa8] sm:$0xff]
          %v5903 = vld [vmem:[#allocation2 + $0xb0] sm:$0xff]
          %v5904 = vld [vmem:[#allocation2 + $0xb8] sm:$0xff]
          %v5905 = vld [vmem:[#allocation2 + $0xc0] sm:$0xff]
          %v5906 = vld [vmem:[#allocation2 + $0xc8] sm:$0xff]
          %v5907 = vld [vmem:[#allocation2 + $0xd0] sm:$0xff]
          %v5908 = vld [vmem:[#allocation2 + $0xd8] sm:$0xff]
          %v5909 = vld [vmem:[#allocation2 + $0xe0] sm:$0xff]
          %v5910 = vld [vmem:[#allocation2 + $0xe8] sm:$0xff]
          %v5911 = vld [vmem:[#allocation2 + $0xf0] sm:$0xff]
          %v5912 = vld [vmem:[#allocation2 + $0xf8] sm:$0xff]
          %s5913 = smul.addr %s4647, 4
          %s5914 = scalar_lea.vmem %s39, %s5913
          %v5915 = vld [vmem:[%s5914] sm:$0xf]
          %v5916 = vld [vmem:[%s5914 + $0x4] sm:$0xf]
          %v5917 = vld [vmem:[%s5914 + $0x8] sm:$0xf]
          %v5918 = vld [vmem:[%s5914 + $0xc] sm:$0xf]
          %v5919 = vld [vmem:[%s5914 + $0x10] sm:$0xf]
          %v5920 = vld [vmem:[%s5914 + $0x14] sm:$0xf]
          %v5921 = vld [vmem:[%s5914 + $0x18] sm:$0xf]
          %v5922 = vld [vmem:[%s5914 + $0x1c] sm:$0xf]
          %v5923 = vld [vmem:[%s5914 + $0x20] sm:$0xf]
          %v5924 = vld [vmem:[%s5914 + $0x24] sm:$0xf]
          %v5925 = vld [vmem:[%s5914 + $0x28] sm:$0xf]
          %v5926 = vld [vmem:[%s5914 + $0x2c] sm:$0xf]
          %v5927 = vld [vmem:[%s5914 + $0x30] sm:$0xf]
          %v5928 = vld [vmem:[%s5914 + $0x34] sm:$0xf]
          %v5929 = vld [vmem:[%s5914 + $0x38] sm:$0xf]
          %v5930 = vld [vmem:[%s5914 + $0x3c] sm:$0xf]
          %v5947 = vunpack.c.l.b16 %v5915
          %v5948 = vunpack.c.l.b16 %v5916
          %v5949 = vunpack.c.l.b16 %v5917
          %v5950 = vunpack.c.l.b16 %v5918
          %v5951 = vunpack.c.l.b16 %v5919
          %v5952 = vunpack.c.l.b16 %v5920
          %v5953 = vunpack.c.l.b16 %v5921
          %v5954 = vunpack.c.l.b16 %v5922
          %v5955 = vunpack.c.l.b16 %v5923
          %v5956 = vunpack.c.l.b16 %v5924
          %v5957 = vunpack.c.l.b16 %v5925
          %v5958 = vunpack.c.l.b16 %v5926
          %v5959 = vunpack.c.l.b16 %v5927
          %v5960 = vunpack.c.l.b16 %v5928
          %v5961 = vunpack.c.l.b16 %v5929
          %v5962 = vunpack.c.l.b16 %v5930
          %v5963 = vpack.c.b16 %v5948, %v5947
          %v5964 = vpack.c.b16 %v5950, %v5949
          %v5965 = vpack.c.b16 %v5952, %v5951
          %v5966 = vpack.c.b16 %v5954, %v5953
          %v5967 = vpack.c.b16 %v5956, %v5955
          %v5968 = vpack.c.b16 %v5958, %v5957
          %v5969 = vpack.c.b16 %v5960, %v5959
          %v5970 = vpack.c.b16 %v5962, %v5961
          %5979 = vmatprep.subr.bf16.mxu0 0
          %5980 = vmatpush1.bf16.msra.mxu0 %v5963
          %5981 = vmatprep.subr.bf16.mxu0 0
          %5982 = vmatpush1.bf16.msra.mxu0 %v5964
          %5983 = vmatprep.subr.bf16.mxu0 0
          %5984 = vmatpush1.bf16.msra.mxu0 %v5965
          %5985 = vmatprep.subr.bf16.mxu0 0
          %5986 = vmatpush1.bf16.msra.mxu0 %v5966
          %5987 = vmatprep.subr.bf16.mxu0 0
          %5988 = vmatpush1.bf16.msra.mxu0 %v5967
          %5989 = vmatprep.subr.bf16.mxu0 0
          %5990 = vmatpush1.bf16.msra.mxu0 %v5968
          %5991 = vmatprep.subr.bf16.mxu0 0
          %5992 = vmatpush1.bf16.msra.mxu0 %v5969
          %5993 = vmatprep.subr.bf16.mxu0 0
          %5994 = vmatpush1.bf16.msra.mxu0 %v5970
          %5995 = vmatprep.subr.bf16.mxu0 0
          %5996 = vmatpush1.bf16.msra.mxu0 0
          %5997 = vmatprep.subr.bf16.mxu0 0
          %5998 = vmatpush1.bf16.msra.mxu0 0
          %5999 = vmatprep.subr.bf16.mxu0 0
          %6000 = vmatpush1.bf16.msra.mxu0 0
          %6001 = vmatprep.subr.bf16.mxu0 0
          %6002 = vmatpush1.bf16.msra.mxu0 0
          %6003 = vmatprep.subr.bf16.mxu0 0
          %6004 = vmatpush1.bf16.msra.mxu0 0
          %6005 = vmatprep.subr.bf16.mxu0 0
          %6006 = vmatpush1.bf16.msra.mxu0 0
          %6007 = vmatprep.subr.bf16.mxu0 0
          %6008 = vmatpush1.bf16.msra.mxu0 0
          %6009 = vmatprep.subr.bf16.mxu0 0
          %6010 = vmatpush1.bf16.msra.mxu0 0
          %6011 = vmatprep.mubr.bf16.mxu0 0
          %6012 = vmatmul.mubr.bf16.gmra.mrb[0].mxu0 %v5865
          %v6013 = vpop.f32.mrb[0].mxu0
          %v6014 = vadd.f32 0.0, %v6013
          %v6015 = vpop.f32.mrb[0].mxu0
          %v6016 = vpop.f32.mrb[0].mxu0
          %v6017 = vadd.f32 0.0, %v6016
          %v6018 = vpop.f32.mrb[0].mxu0
          %6019 = vmatprep.mubr.bf16.mxu0 0
          %6020 = vmatmul.mubr.bf16.gmra.mrb[0].mxu0 %v5866
          %v6021 = vpop.f32.mrb[0].mxu0
          %v6022 = vadd.f32 0.0, %v6021
          %v6023 = vpop.f32.mrb[0].mxu0
          %v6024 = vpop.f32.mrb[0].mxu0
          %v6025 = vadd.f32 0.0, %v6024
          %v6026 = vpop.f32.mrb[0].mxu0
          %6027 = vmatprep.mubr.bf16.mxu0 0
          %6028 = vmatmul.mubr.bf16.gmra.mrb[0].mxu0 %v5867
          %v6029 = vpop.f32.mrb[0].mxu0
          %v6030 = vadd.f32 0.0, %v6029
          %v6031 = vpop.f32.mrb[0].mxu0
          %v6032 = vpop.f32.mrb[0].mxu0
          %v6033 = vadd.f32 0.0, %v6032
          %v6034 = vpop.f32.mrb[0].mxu0
          %6035 = vmatprep.mubr.bf16.mxu0 0
          %6036 = vmatmul.mubr.bf16.gmra.mrb[0].mxu0 %v5868
          %v6037 = vpop.f32.mrb[0].mxu0
          %v6038 = vadd.f32 0.0, %v6037
          %v6039 = vpop.f32.mrb[0].mxu0
          %v6040 = vpop.f32.mrb[0].mxu0
          %v6041 = vadd.f32 0.0, %v6040
          %v6042 = vpop.f32.mrb[0].mxu0
          %6043 = vmatprep.mubr.bf16.mxu0 0
          %6044 = vmatmul.mubr.bf16.gmra.mrb[0].mxu0 %v5869
          %v6045 = vpop.f32.mrb[0].mxu0
          %v6046 = vadd.f32 0.0, %v6045
          %v6047 = vpop.f32.mrb[0].mxu0
          %v6048 = vpop.f32.mrb[0].mxu0
          %v6049 = vadd.f32 0.0, %v6048
          %v6050 = vpop.f32.mrb[0].mxu0
          %6051 = vmatprep.mubr.bf16.mxu0 0
          %6052 = vmatmul.mubr.bf16.gmra.mrb[0].mxu0 %v5870
          %v6053 = vpop.f32.mrb[0].mxu0
          %v6054 = vadd.f32 0.0, %v6053
          %v6055 = vpop.f32.mrb[0].mxu0
          %v6056 = vpop.f32.mrb[0].mxu0
          %v6057 = vadd.f32 0.0, %v6056
          %v6058 = vpop.f32.mrb[0].mxu0
          %6059 = vmatprep.mubr.bf16.mxu0 0
          %6060 = vmatmul.mubr.bf16.gmra.mrb[0].mxu0 %v5871
          %v6061 = vpop.f32.mrb[0].mxu0
          %v6062 = vadd.f32 0.0, %v6061
          %v6063 = vpop.f32.mrb[0].mxu0
          %v6064 = vpop.f32.mrb[0].mxu0
          %v6065 = vadd.f32 0.0, %v6064
          %v6066 = vpop.f32.mrb[0].mxu0
          %6067 = vmatprep.mubr.bf16.mxu0 0
          %6068 = vmatmul.mubr.bf16.gmra.mrb[0].mxu0 %v5872
          %v6069 = vpop.f32.mrb[0].mxu0
          %v6070 = vadd.f32 0.0, %v6069
          %v6071 = vpop.f32.mrb[0].mxu0
          %v6072 = vpop.f32.mrb[0].mxu0
          %v6073 = vadd.f32 0.0, %v6072
          %v6074 = vpop.f32.mrb[0].mxu0
          %6075 = vmatprep.mubr.bf16.mxu0 0
          %6076 = vmatmul.mubr.bf16.gmra.mrb[0].mxu0 %v5873
          %v6077 = vpop.f32.mrb[0].mxu0
          %v6078 = vadd.f32 0.0, %v6077
          %v6079 = vpop.f32.mrb[0].mxu0
          %v6080 = vpop.f32.mrb[0].mxu0
          %v6081 = vadd.f32 0.0, %v6080
          %v6082 = vpop.f32.mrb[0].mxu0
          %6083 = vmatprep.mubr.bf16.mxu0 0
          %6084 = vmatmul.mubr.bf16.gmra.mrb[0].mxu0 %v5874
          %v6085 = vpop.f32.mrb[0].mxu0
          %v6086 = vadd.f32 0.0, %v6085
          %v6087 = vpop.f32.mrb[0].mxu0
          %v6088 = vpop.f32.mrb[0].mxu0
          %v6089 = vadd.f32 0.0, %v6088
          %v6090 = vpop.f32.mrb[0].mxu0
          %6091 = vmatprep.mubr.bf16.mxu0 0
          %6092 = vmatmul.mubr.bf16.gmra.mrb[0].mxu0 %v5875
          %v6093 = vpop.f32.mrb[0].mxu0
          %v6094 = vadd.f32 0.0, %v6093
          %v6095 = vpop.f32.mrb[0].mxu0
          %v6096 = vpop.f32.mrb[0].mxu0
          %v6097 = vadd.f32 0.0, %v6096
          %v6098 = vpop.f32.mrb[0].mxu0
          %6099 = vmatprep.mubr.bf16.mxu0 0
          %6100 = vmatmul.mubr.bf16.gmra.mrb[0].mxu0 %v5876
          %v6101 = vpop.f32.mrb[0].mxu0
          %v6102 = vadd.f32 0.0, %v6101
          %v6103 = vpop.f32.mrb[0].mxu0
          %v6104 = vpop.f32.mrb[0].mxu0
          %v6105 = vadd.f32 0.0, %v6104
          %v6106 = vpop.f32.mrb[0].mxu0
          %6107 = vmatprep.mubr.bf16.mxu0 0
          %6108 = vmatmul.mubr.bf16.gmra.mrb[0].mxu0 %v5877
          %v6109 = vpop.f32.mrb[0].mxu0
          %v6110 = vadd.f32 0.0, %v6109
          %v6111 = vpop.f32.mrb[0].mxu0
          %v6112 = vpop.f32.mrb[0].mxu0
          %v6113 = vadd.f32 0.0, %v6112
          %v6114 = vpop.f32.mrb[0].mxu0
          %6115 = vmatprep.mubr.bf16.mxu0 0
          %6116 = vmatmul.mubr.bf16.gmra.mrb[0].mxu0 %v5878
          %v6117 = vpop.f32.mrb[0].mxu0
          %v6118 = vadd.f32 0.0, %v6117
          %v6119 = vpop.f32.mrb[0].mxu0
          %v6120 = vpop.f32.mrb[0].mxu0
          %v6121 = vadd.f32 0.0, %v6120
          %v6122 = vpop.f32.mrb[0].mxu0
          %6123 = vmatprep.mubr.bf16.mxu0 0
          %6124 = vmatmul.mubr.bf16.gmra.mrb[0].mxu0 %v5879
          %v6125 = vpop.f32.mrb[0].mxu0
          %v6126 = vadd.f32 0.0, %v6125
          %v6127 = vpop.f32.mrb[0].mxu0
          %v6128 = vpop.f32.mrb[0].mxu0
          %v6129 = vadd.f32 0.0, %v6128
          %v6130 = vpop.f32.mrb[0].mxu0
          %6131 = vmatprep.mubr.bf16.mxu0 0
          %6132 = vmatmul.mubr.bf16.gmra.mrb[0].mxu0 %v5880
          %v6133 = vpop.f32.mrb[0].mxu0
          %v6134 = vadd.f32 0.0, %v6133
          %v6135 = vpop.f32.mrb[0].mxu0
          %v6136 = vpop.f32.mrb[0].mxu0
          %v6137 = vadd.f32 0.0, %v6136
          %v6138 = vpop.f32.mrb[0].mxu0
          %6139 = vdwg.mxu0
          %v6140 = vadd.f32 %v5881, %v6014
          %v6141 = vadd.f32 %v5882, %v6017
          %v6142 = vadd.f32 %v5883, %v6022
          %v6143 = vadd.f32 %v5884, %v6025
          %v6144 = vadd.f32 %v5885, %v6030
          %v6145 = vadd.f32 %v5886, %v6033
          %v6146 = vadd.f32 %v5887, %v6038
          %v6147 = vadd.f32 %v5888, %v6041
          %v6148 = vadd.f32 %v5889, %v6046
          %v6149 = vadd.f32 %v5890, %v6049
          %v6150 = vadd.f32 %v5891, %v6054
          %v6151 = vadd.f32 %v5892, %v6057
          %v6152 = vadd.f32 %v5893, %v6062
          %v6153 = vadd.f32 %v5894, %v6065
          %v6154 = vadd.f32 %v5895, %v6070
          %v6155 = vadd.f32 %v5896, %v6073
          %v6156 = vadd.f32 %v5897, %v6078
          %v6157 = vadd.f32 %v5898, %v6081
          %v6158 = vadd.f32 %v5899, %v6086
          %v6159 = vadd.f32 %v5900, %v6089
          %v6160 = vadd.f32 %v5901, %v6094
          %v6161 = vadd.f32 %v5902, %v6097
          %v6162 = vadd.f32 %v5903, %v6102
          %v6163 = vadd.f32 %v5904, %v6105
          %v6164 = vadd.f32 %v5905, %v6110
          %v6165 = vadd.f32 %v5906, %v6113
          %v6166 = vadd.f32 %v5907, %v6118
          %v6167 = vadd.f32 %v5908, %v6121
          %v6168 = vadd.f32 %v5909, %v6126
          %v6169 = vadd.f32 %v5910, %v6129
          %v6170 = vadd.f32 %v5911, %v6134
          %v6171 = vadd.f32 %v5912, %v6137
          %6172 = vst [vmem:[#allocation2] sm:$0xff] %v6140
          %6173 = vst [vmem:[#allocation2 + $0x8] sm:$0xff] %v6141
          %6174 = vst [vmem:[#allocation2 + $0x10] sm:$0xff] %v6142
          %6175 = vst [vmem:[#allocation2 + $0x18] sm:$0xff] %v6143
          %6176 = vst [vmem:[#allocation2 + $0x20] sm:$0xff] %v6144
          %6177 = vst [vmem:[#allocation2 + $0x28] sm:$0xff] %v6145
          %6178 = vst [vmem:[#allocation2 + $0x30] sm:$0xff] %v6146
          %6179 = vst [vmem:[#allocation2 + $0x38] sm:$0xff] %v6147
          %6180 = vst [vmem:[#allocation2 + $0x40] sm:$0xff] %v6148
          %6181 = vst [vmem:[#allocation2 + $0x48] sm:$0xff] %v6149
          %6182 = vst [vmem:[#allocation2 + $0x50] sm:$0xff] %v6150
          %6183 = vst [vmem:[#allocation2 + $0x58] sm:$0xff] %v6151
          %6184 = vst [vmem:[#allocation2 + $0x60] sm:$0xff] %v6152
          %6185 = vst [vmem:[#allocation2 + $0x68] sm:$0xff] %v6153
          %6186 = vst [vmem:[#allocation2 + $0x70] sm:$0xff] %v6154
          %6187 = vst [vmem:[#allocation2 + $0x78] sm:$0xff] %v6155
          %6188 = vst [vmem:[#allocation2 + $0x80] sm:$0xff] %v6156
          %6189 = vst [vmem:[#allocation2 + $0x88] sm:$0xff] %v6157
          %6190 = vst [vmem:[#allocation2 + $0x90] sm:$0xff] %v6158
          %6191 = vst [vmem:[#allocation2 + $0x98] sm:$0xff] %v6159
          %6192 = vst [vmem:[#allocation2 + $0xa0] sm:$0xff] %v6160
          %6193 = vst [vmem:[#allocation2 + $0xa8] sm:$0xff] %v6161
          %6194 = vst [vmem:[#allocation2 + $0xb0] sm:$0xff] %v6162
          %6195 = vst [vmem:[#allocation2 + $0xb8] sm:$0xff] %v6163
          %6196 = vst [vmem:[#allocation2 + $0xc0] sm:$0xff] %v6164
          %6197 = vst [vmem:[#allocation2 + $0xc8] sm:$0xff] %v6165
          %6198 = vst [vmem:[#allocation2 + $0xd0] sm:$0xff] %v6166
          %6199 = vst [vmem:[#allocation2 + $0xd8] sm:$0xff] %v6167
          %6200 = vst [vmem:[#allocation2 + $0xe0] sm:$0xff] %v6168
          %6201 = vst [vmem:[#allocation2 + $0xe8] sm:$0xff] %v6169
          %6202 = vst [vmem:[#allocation2 + $0xf0] sm:$0xff] %v6170
          %6203 = vst [vmem:[#allocation2 + $0xf8] sm:$0xff] %v6171
        $region246: #{unet_attention_block.1} parent=131 // loop_footer
          %s4646 = sadd.s32 1, %s4642
        $region247: #{unet_attention_block.1} parent=131 // loop_footer_branch
          %4641 = sbr.rel target = $region243
        $region248: #{unet_attention_block.1} parent=131 // loop_exit
          _
        %v6204 = vld [vmem:[#allocation2] sm:$0xff]
        %v6205 = vld [vmem:[#allocation2 + $0x8] sm:$0xff]
        %v6206 = vld [vmem:[#allocation2 + $0x10] sm:$0xff]
        %v6207 = vld [vmem:[#allocation2 + $0x18] sm:$0xff]
        %v6208 = vld [vmem:[#allocation2 + $0x20] sm:$0xff]
        %v6209 = vld [vmem:[#allocation2 + $0x28] sm:$0xff]
        %v6210 = vld [vmem:[#allocation2 + $0x30] sm:$0xff]
        %v6211 = vld [vmem:[#allocation2 + $0x38] sm:$0xff]
        %v6212 = vld [vmem:[#allocation2 + $0x40] sm:$0xff]
        %v6213 = vld [vmem:[#allocation2 + $0x48] sm:$0xff]
        %v6214 = vld [vmem:[#allocation2 + $0x50] sm:$0xff]
        %v6215 = vld [vmem:[#allocation2 + $0x58] sm:$0xff]
        %v6216 = vld [vmem:[#allocation2 + $0x60] sm:$0xff]
        %v6217 = vld [vmem:[#allocation2 + $0x68] sm:$0xff]
        %v6218 = vld [vmem:[#allocation2 + $0x70] sm:$0xff]
        %v6219 = vld [vmem:[#allocation2 + $0x78] sm:$0xff]
        %v6220 = vld [vmem:[#allocation2 + $0x80] sm:$0xff]
        %v6221 = vld [vmem:[#allocation2 + $0x88] sm:$0xff]
        %v6222 = vld [vmem:[#allocation2 + $0x90] sm:$0xff]
        %v6223 = vld [vmem:[#allocation2 + $0x98] sm:$0xff]
        %v6224 = vld [vmem:[#allocation2 + $0xa0] sm:$0xff]
        %v6225 = vld [vmem:[#allocation2 + $0xa8] sm:$0xff]
        %v6226 = vld [vmem:[#allocation2 + $0xb0] sm:$0xff]
        %v6227 = vld [vmem:[#allocation2 + $0xb8] sm:$0xff]
        %v6228 = vld [vmem:[#allocation2 + $0xc0] sm:$0xff]
        %v6229 = vld [vmem:[#allocation2 + $0xc8] sm:$0xff]
        %v6230 = vld [vmem:[#allocation2 + $0xd0] sm:$0xff]
        %v6231 = vld [vmem:[#allocation2 + $0xd8] sm:$0xff]
        %v6232 = vld [vmem:[#allocation2 + $0xe0] sm:$0xff]
        %v6233 = vld [vmem:[#allocation2 + $0xe8] sm:$0xff]
        %v6234 = vld [vmem:[#allocation2 + $0xf0] sm:$0xff]
        %v6235 = vld [vmem:[#allocation2 + $0xf8] sm:$0xff]
        %v6236 = vadd.f32 %v4034, %v6204
        %v6237 = vadd.f32 %v4035, %v6205
        %v6238 = vadd.f32 %v4036, %v6206
        %v6239 = vadd.f32 %v4037, %v6207
        %v6240 = vadd.f32 %v4038, %v6208
        %v6241 = vadd.f32 %v4039, %v6209
        %v6242 = vadd.f32 %v4040, %v6210
        %v6243 = vadd.f32 %v4041, %v6211
        %v6244 = vadd.f32 %v4042, %v6212
        %v6245 = vadd.f32 %v4043, %v6213
        %v6246 = vadd.f32 %v4044, %v6214
        %v6247 = vadd.f32 %v4045, %v6215
        %v6248 = vadd.f32 %v4046, %v6216
        %v6249 = vadd.f32 %v4047, %v6217
        %v6250 = vadd.f32 %v4048, %v6218
        %v6251 = vadd.f32 %v4049, %v6219
        %v6252 = vadd.f32 %v4050, %v6220
        %v6253 = vadd.f32 %v4051, %v6221
        %v6254 = vadd.f32 %v4052, %v6222
        %v6255 = vadd.f32 %v4053, %v6223
        %v6256 = vadd.f32 %v4054, %v6224
        %v6257 = vadd.f32 %v4055, %v6225
        %v6258 = vadd.f32 %v4056, %v6226
        %v6259 = vadd.f32 %v4057, %v6227
        %v6260 = vadd.f32 %v4058, %v6228
        %v6261 = vadd.f32 %v4059, %v6229
        %v6262 = vadd.f32 %v4060, %v6230
        %v6263 = vadd.f32 %v4061, %v6231
        %v6264 = vadd.f32 %v4062, %v6232
        %v6265 = vadd.f32 %v4063, %v6233
        %v6266 = vadd.f32 %v4064, %v6234
        %v6267 = vadd.f32 %v4065, %v6235
        %v6268 = vld [vmem:[%s41] sm:$0x1]
        %v6270 = vlaneseq
        %v6271 = vshrl.u32 %v6270, 7
        %v6272 = vsub.s32 0, %v6271
        %v6273 = vrot.slane %v6268, %v6272
        %v6275 = vadd.f32 %v6236, %v6273
        %v6276 = vadd.f32 %v6237, %v6273
        %v6277 = vadd.f32 %v6238, %v6273
        %v6278 = vadd.f32 %v6239, %v6273
        %v6279 = vadd.f32 %v6240, %v6273
        %v6280 = vadd.f32 %v6241, %v6273
        %v6281 = vadd.f32 %v6242, %v6273
        %v6282 = vadd.f32 %v6243, %v6273
        %v6283 = vadd.f32 %v6244, %v6273
        %v6284 = vadd.f32 %v6245, %v6273
        %v6285 = vadd.f32 %v6246, %v6273
        %v6286 = vadd.f32 %v6247, %v6273
        %v6287 = vadd.f32 %v6248, %v6273
        %v6288 = vadd.f32 %v6249, %v6273
        %v6289 = vadd.f32 %v6250, %v6273
        %v6290 = vadd.f32 %v6251, %v6273
        %v6291 = vadd.f32 %v6252, %v6273
        %v6292 = vadd.f32 %v6253, %v6273
        %v6293 = vadd.f32 %v6254, %v6273
        %v6294 = vadd.f32 %v6255, %v6273
        %v6295 = vadd.f32 %v6256, %v6273
        %v6296 = vadd.f32 %v6257, %v6273
        %v6297 = vadd.f32 %v6258, %v6273
        %v6298 = vadd.f32 %v6259, %v6273
        %v6299 = vadd.f32 %v6260, %v6273
        %v6300 = vadd.f32 %v6261, %v6273
        %v6301 = vadd.f32 %v6262, %v6273
        %v6302 = vadd.f32 %v6263, %v6273
        %v6303 = vadd.f32 %v6264, %v6273
        %v6304 = vadd.f32 %v6265, %v6273
        %v6305 = vadd.f32 %v6266, %v6273
        %v6306 = vadd.f32 %v6267, %v6273
        %6307 = vadd.xlane.f32.xlu0 %v6275
        %v6308 = vpop.xlane.xlu0 %6307
        %6309 = vadd.xlane.f32.xlu0 %v6276
        %v6310 = vpop.xlane.xlu0 %6309
        %6311 = vadd.xlane.f32.xlu0 %v6277
        %v6312 = vpop.xlane.xlu0 %6311
        %6313 = vadd.xlane.f32.xlu0 %v6278
        %v6314 = vpop.xlane.xlu0 %6313
        %6315 = vadd.xlane.f32.xlu0 %v6279
        %v6316 = vpop.xlane.xlu0 %6315
        %6317 = vadd.xlane.f32.xlu0 %v6280
        %v6318 = vpop.xlane.xlu0 %6317
        %6319 = vadd.xlane.f32.xlu0 %v6281
        %v6320 = vpop.xlane.xlu0 %6319
        %6321 = vadd.xlane.f32.xlu0 %v6282
        %v6322 = vpop.xlane.xlu0 %6321
        %6323 = vadd.xlane.f32.xlu0 %v6283
        %v6324 = vpop.xlane.xlu0 %6323
        %6325 = vadd.xlane.f32.xlu0 %v6284
        %v6326 = vpop.xlane.xlu0 %6325
        %6327 = vadd.xlane.f32.xlu0 %v6285
        %v6328 = vpop.xlane.xlu0 %6327
        %6329 = vadd.xlane.f32.xlu0 %v6286
        %v6330 = vpop.xlane.xlu0 %6329
        %6331 = vadd.xlane.f32.xlu0 %v6287
        %v6332 = vpop.xlane.xlu0 %6331
        %6333 = vadd.xlane.f32.xlu0 %v6288
        %v6334 = vpop.xlane.xlu0 %6333
        %6335 = vadd.xlane.f32.xlu0 %v6289
        %v6336 = vpop.xlane.xlu0 %6335
        %6337 = vadd.xlane.f32.xlu0 %v6290
        %v6338 = vpop.xlane.xlu0 %6337
        %6339 = vadd.xlane.f32.xlu0 %v6291
        %v6340 = vpop.xlane.xlu0 %6339
        %6341 = vadd.xlane.f32.xlu0 %v6292
        %v6342 = vpop.xlane.xlu0 %6341
        %6343 = vadd.xlane.f32.xlu0 %v6293
        %v6344 = vpop.xlane.xlu0 %6343
        %6345 = vadd.xlane.f32.xlu0 %v6294
        %v6346 = vpop.xlane.xlu0 %6345
        %6347 = vadd.xlane.f32.xlu0 %v6295
        %v6348 = vpop.xlane.xlu0 %6347
        %6349 = vadd.xlane.f32.xlu0 %v6296
        %v6350 = vpop.xlane.xlu0 %6349
        %6351 = vadd.xlane.f32.xlu0 %v6297
        %v6352 = vpop.xlane.xlu0 %6351
        %6353 = vadd.xlane.f32.xlu0 %v6298
        %v6354 = vpop.xlane.xlu0 %6353
        %6355 = vadd.xlane.f32.xlu0 %v6299
        %v6356 = vpop.xlane.xlu0 %6355
        %6357 = vadd.xlane.f32.xlu0 %v6300
        %v6358 = vpop.xlane.xlu0 %6357
        %6359 = vadd.xlane.f32.xlu0 %v6301
        %v6360 = vpop.xlane.xlu0 %6359
        %6361 = vadd.xlane.f32.xlu0 %v6302
        %v6362 = vpop.xlane.xlu0 %6361
        %6363 = vadd.xlane.f32.xlu0 %v6303
        %v6364 = vpop.xlane.xlu0 %6363
        %6365 = vadd.xlane.f32.xlu0 %v6304
        %v6366 = vpop.xlane.xlu0 %6365
        %6367 = vadd.xlane.f32.xlu0 %v6305
        %v6368 = vpop.xlane.xlu0 %6367
        %6369 = vadd.xlane.f32.xlu0 %v6306
        %v6370 = vpop.xlane.xlu0 %6369
        %v6371 = vmul.f32 %v6308, 0.03125
        %v6372 = vmul.f32 %v6310, 0.03125
        %v6373 = vmul.f32 %v6312, 0.03125
        %v6374 = vmul.f32 %v6314, 0.03125
        %v6375 = vmul.f32 %v6316, 0.03125
        %v6376 = vmul.f32 %v6318, 0.03125
        %v6377 = vmul.f32 %v6320, 0.03125
        %v6378 = vmul.f32 %v6322, 0.03125
        %v6379 = vmul.f32 %v6324, 0.03125
        %v6380 = vmul.f32 %v6326, 0.03125
        %v6381 = vmul.f32 %v6328, 0.03125
        %v6382 = vmul.f32 %v6330, 0.03125
        %v6383 = vmul.f32 %v6332, 0.03125
        %v6384 = vmul.f32 %v6334, 0.03125
        %v6385 = vmul.f32 %v6336, 0.03125
        %v6386 = vmul.f32 %v6338, 0.03125
        %v6387 = vmul.f32 %v6340, 0.03125
        %v6388 = vmul.f32 %v6342, 0.03125
        %v6389 = vmul.f32 %v6344, 0.03125
        %v6390 = vmul.f32 %v6346, 0.03125
        %v6391 = vmul.f32 %v6348, 0.03125
        %v6392 = vmul.f32 %v6350, 0.03125
        %v6393 = vmul.f32 %v6352, 0.03125
        %v6394 = vmul.f32 %v6354, 0.03125
        %v6395 = vmul.f32 %v6356, 0.03125
        %v6396 = vmul.f32 %v6358, 0.03125
        %v6397 = vmul.f32 %v6360, 0.03125
        %v6398 = vmul.f32 %v6362, 0.03125
        %v6399 = vmul.f32 %v6364, 0.03125
        %v6400 = vmul.f32 %v6366, 0.03125
        %v6401 = vmul.f32 %v6368, 0.03125
        %v6402 = vmul.f32 %v6370, 0.03125
        %v6403 = vsub.f32 %v6275, %v6371
        %v6404 = vsub.f32 %v6276, %v6372
        %v6405 = vsub.f32 %v6277, %v6373
        %v6406 = vsub.f32 %v6278, %v6374
        %v6407 = vsub.f32 %v6279, %v6375
        %v6408 = vsub.f32 %v6280, %v6376
        %v6409 = vsub.f32 %v6281, %v6377
        %v6410 = vsub.f32 %v6282, %v6378
        %v6411 = vsub.f32 %v6283, %v6379
        %v6412 = vsub.f32 %v6284, %v6380
        %v6413 = vsub.f32 %v6285, %v6381
        %v6414 = vsub.f32 %v6286, %v6382
        %v6415 = vsub.f32 %v6287, %v6383
        %v6416 = vsub.f32 %v6288, %v6384
        %v6417 = vsub.f32 %v6289, %v6385
        %v6418 = vsub.f32 %v6290, %v6386
        %v6419 = vsub.f32 %v6291, %v6387
        %v6420 = vsub.f32 %v6292, %v6388
        %v6421 = vsub.f32 %v6293, %v6389
        %v6422 = vsub.f32 %v6294, %v6390
        %v6423 = vsub.f32 %v6295, %v6391
        %v6424 = vsub.f32 %v6296, %v6392
        %v6425 = vsub.f32 %v6297, %v6393
        %v6426 = vsub.f32 %v6298, %v6394
        %v6427 = vsub.f32 %v6299, %v6395
        %v6428 = vsub.f32 %v6300, %v6396
        %v6429 = vsub.f32 %v6301, %v6397
        %v6430 = vsub.f32 %v6302, %v6398
        %v6431 = vsub.f32 %v6303, %v6399
        %v6432 = vsub.f32 %v6304, %v6400
        %v6433 = vsub.f32 %v6305, %v6401
        %v6434 = vsub.f32 %v6306, %v6402
        %v6435 = vmul.f32 %v6403, %v6403
        %v6436 = vmul.f32 %v6404, %v6404
        %v6437 = vmul.f32 %v6405, %v6405
        %v6438 = vmul.f32 %v6406, %v6406
        %v6439 = vmul.f32 %v6407, %v6407
        %v6440 = vmul.f32 %v6408, %v6408
        %v6441 = vmul.f32 %v6409, %v6409
        %v6442 = vmul.f32 %v6410, %v6410
        %v6443 = vmul.f32 %v6411, %v6411
        %v6444 = vmul.f32 %v6412, %v6412
        %v6445 = vmul.f32 %v6413, %v6413
        %v6446 = vmul.f32 %v6414, %v6414
        %v6447 = vmul.f32 %v6415, %v6415
        %v6448 = vmul.f32 %v6416, %v6416
        %v6449 = vmul.f32 %v6417, %v6417
        %v6450 = vmul.f32 %v6418, %v6418
        %v6451 = vmul.f32 %v6419, %v6419
        %v6452 = vmul.f32 %v6420, %v6420
        %v6453 = vmul.f32 %v6421, %v6421
        %v6454 = vmul.f32 %v6422, %v6422
        %v6455 = vmul.f32 %v6423, %v6423
        %v6456 = vmul.f32 %v6424, %v6424
        %v6457 = vmul.f32 %v6425, %v6425
        %v6458 = vmul.f32 %v6426, %v6426
        %v6459 = vmul.f32 %v6427, %v6427
        %v6460 = vmul.f32 %v6428, %v6428
        %v6461 = vmul.f32 %v6429, %v6429
        %v6462 = vmul.f32 %v6430, %v6430
        %v6463 = vmul.f32 %v6431, %v6431
        %v6464 = vmul.f32 %v6432, %v6432
        %v6465 = vmul.f32 %v6433, %v6433
        %v6466 = vmul.f32 %v6434, %v6434
        %6467 = vadd.xlane.f32.xlu0 %v6435
        %v6468 = vpop.xlane.xlu0 %6467
        %6469 = vadd.xlane.f32.xlu0 %v6436
        %v6470 = vpop.xlane.xlu0 %6469
        %6471 = vadd.xlane.f32.xlu0 %v6437
        %v6472 = vpop.xlane.xlu0 %6471
        %6473 = vadd.xlane.f32.xlu0 %v6438
        %v6474 = vpop.xlane.xlu0 %6473
        %6475 = vadd.xlane.f32.xlu0 %v6439
        %v6476 = vpop.xlane.xlu0 %6475
        %6477 = vadd.xlane.f32.xlu0 %v6440
        %v6478 = vpop.xlane.xlu0 %6477
        %6479 = vadd.xlane.f32.xlu0 %v6441
        %v6480 = vpop.xlane.xlu0 %6479
        %6481 = vadd.xlane.f32.xlu0 %v6442
        %v6482 = vpop.xlane.xlu0 %6481
        %6483 = vadd.xlane.f32.xlu0 %v6443
        %v6484 = vpop.xlane.xlu0 %6483
        %6485 = vadd.xlane.f32.xlu0 %v6444
        %v6486 = vpop.xlane.xlu0 %6485
        %6487 = vadd.xlane.f32.xlu0 %v6445
        %v6488 = vpop.xlane.xlu0 %6487
        %6489 = vadd.xlane.f32.xlu0 %v6446
        %v6490 = vpop.xlane.xlu0 %6489
        %6491 = vadd.xlane.f32.xlu0 %v6447
        %v6492 = vpop.xlane.xlu0 %6491
        %6493 = vadd.xlane.f32.xlu0 %v6448
        %v6494 = vpop.xlane.xlu0 %6493
        %6495 = vadd.xlane.f32.xlu0 %v6449
        %v6496 = vpop.xlane.xlu0 %6495
        %6497 = vadd.xlane.f32.xlu0 %v6450
        %v6498 = vpop.xlane.xlu0 %6497
        %6499 = vadd.xlane.f32.xlu0 %v6451
        %v6500 = vpop.xlane.xlu0 %6499
        %6501 = vadd.xlane.f32.xlu0 %v6452
        %v6502 = vpop.xlane.xlu0 %6501
        %6503 = vadd.xlane.f32.xlu0 %v6453
        %v6504 = vpop.xlane.xlu0 %6503
        %6505 = vadd.xlane.f32.xlu0 %v6454
        %v6506 = vpop.xlane.xlu0 %6505
        %6507 = vadd.xlane.f32.xlu0 %v6455
        %v6508 = vpop.xlane.xlu0 %6507
        %6509 = vadd.xlane.f32.xlu0 %v6456
        %v6510 = vpop.xlane.xlu0 %6509
        %6511 = vadd.xlane.f32.xlu0 %v6457
        %v6512 = vpop.xlane.xlu0 %6511
        %6513 = vadd.xlane.f32.xlu0 %v6458
        %v6514 = vpop.xlane.xlu0 %6513
        %6515 = vadd.xlane.f32.xlu0 %v6459
        %v6516 = vpop.xlane.xlu0 %6515
        %6517 = vadd.xlane.f32.xlu0 %v6460
        %v6518 = vpop.xlane.xlu0 %6517
        %6519 = vadd.xlane.f32.xlu0 %v6461
        %v6520 = vpop.xlane.xlu0 %6519
        %6521 = vadd.xlane.f32.xlu0 %v6462
        %v6522 = vpop.xlane.xlu0 %6521
        %6523 = vadd.xlane.f32.xlu0 %v6463
        %v6524 = vpop.xlane.xlu0 %6523
        %6525 = vadd.xlane.f32.xlu0 %v6464
        %v6526 = vpop.xlane.xlu0 %6525
        %6527 = vadd.xlane.f32.xlu0 %v6465
        %v6528 = vpop.xlane.xlu0 %6527
        %6529 = vadd.xlane.f32.xlu0 %v6466
        %v6530 = vpop.xlane.xlu0 %6529
        %v6531 = vmul.f32 %v6371, %v6371
        %v6532 = vmul.f32 %v6372, %v6372
        %v6533 = vmul.f32 %v6373, %v6373
        %v6534 = vmul.f32 %v6374, %v6374
        %v6535 = vmul.f32 %v6375, %v6375
        %v6536 = vmul.f32 %v6376, %v6376
        %v6537 = vmul.f32 %v6377, %v6377
        %v6538 = vmul.f32 %v6378, %v6378
        %v6539 = vmul.f32 %v6379, %v6379
        %v6540 = vmul.f32 %v6380, %v6380
        %v6541 = vmul.f32 %v6381, %v6381
        %v6542 = vmul.f32 %v6382, %v6382
        %v6543 = vmul.f32 %v6383, %v6383
        %v6544 = vmul.f32 %v6384, %v6384
        %v6545 = vmul.f32 %v6385, %v6385
        %v6546 = vmul.f32 %v6386, %v6386
        %v6547 = vmul.f32 %v6387, %v6387
        %v6548 = vmul.f32 %v6388, %v6388
        %v6549 = vmul.f32 %v6389, %v6389
        %v6550 = vmul.f32 %v6390, %v6390
        %v6551 = vmul.f32 %v6391, %v6391
        %v6552 = vmul.f32 %v6392, %v6392
        %v6553 = vmul.f32 %v6393, %v6393
        %v6554 = vmul.f32 %v6394, %v6394
        %v6555 = vmul.f32 %v6395, %v6395
        %v6556 = vmul.f32 %v6396, %v6396
        %v6557 = vmul.f32 %v6397, %v6397
        %v6558 = vmul.f32 %v6398, %v6398
        %v6559 = vmul.f32 %v6399, %v6399
        %v6560 = vmul.f32 %v6400, %v6400
        %v6561 = vmul.f32 %v6401, %v6401
        %v6562 = vmul.f32 %v6402, %v6402
        %v6563 = vmul.f32 %v6531, 96.0
        %v6564 = vmul.f32 %v6532, 96.0
        %v6565 = vmul.f32 %v6533, 96.0
        %v6566 = vmul.f32 %v6534, 96.0
        %v6567 = vmul.f32 %v6535, 96.0
        %v6568 = vmul.f32 %v6536, 96.0
        %v6569 = vmul.f32 %v6537, 96.0
        %v6570 = vmul.f32 %v6538, 96.0
        %v6571 = vmul.f32 %v6539, 96.0
        %v6572 = vmul.f32 %v6540, 96.0
        %v6573 = vmul.f32 %v6541, 96.0
        %v6574 = vmul.f32 %v6542, 96.0
        %v6575 = vmul.f32 %v6543, 96.0
        %v6576 = vmul.f32 %v6544, 96.0
        %v6577 = vmul.f32 %v6545, 96.0
        %v6578 = vmul.f32 %v6546, 96.0
        %v6579 = vmul.f32 %v6547, 96.0
        %v6580 = vmul.f32 %v6548, 96.0
        %v6581 = vmul.f32 %v6549, 96.0
        %v6582 = vmul.f32 %v6550, 96.0
        %v6583 = vmul.f32 %v6551, 96.0
        %v6584 = vmul.f32 %v6552, 96.0
        %v6585 = vmul.f32 %v6553, 96.0
        %v6586 = vmul.f32 %v6554, 96.0
        %v6587 = vmul.f32 %v6555, 96.0
        %v6588 = vmul.f32 %v6556, 96.0
        %v6589 = vmul.f32 %v6557, 96.0
        %v6590 = vmul.f32 %v6558, 96.0
        %v6591 = vmul.f32 %v6559, 96.0
        %v6592 = vmul.f32 %v6560, 96.0
        %v6593 = vmul.f32 %v6561, 96.0
        %v6594 = vmul.f32 %v6562, 96.0
        %v6595 = vsub.f32 %v6468, %v6563
        %v6596 = vsub.f32 %v6470, %v6564
        %v6597 = vsub.f32 %v6472, %v6565
        %v6598 = vsub.f32 %v6474, %v6566
        %v6599 = vsub.f32 %v6476, %v6567
        %v6600 = vsub.f32 %v6478, %v6568
        %v6601 = vsub.f32 %v6480, %v6569
        %v6602 = vsub.f32 %v6482, %v6570
        %v6603 = vsub.f32 %v6484, %v6571
        %v6604 = vsub.f32 %v6486, %v6572
        %v6605 = vsub.f32 %v6488, %v6573
        %v6606 = vsub.f32 %v6490, %v6574
        %v6607 = vsub.f32 %v6492, %v6575
        %v6608 = vsub.f32 %v6494, %v6576
        %v6609 = vsub.f32 %v6496, %v6577
        %v6610 = vsub.f32 %v6498, %v6578
        %v6611 = vsub.f32 %v6500, %v6579
        %v6612 = vsub.f32 %v6502, %v6580
        %v6613 = vsub.f32 %v6504, %v6581
        %v6614 = vsub.f32 %v6506, %v6582
        %v6615 = vsub.f32 %v6508, %v6583
        %v6616 = vsub.f32 %v6510, %v6584
        %v6617 = vsub.f32 %v6512, %v6585
        %v6618 = vsub.f32 %v6514, %v6586
        %v6619 = vsub.f32 %v6516, %v6587
        %v6620 = vsub.f32 %v6518, %v6588
        %v6621 = vsub.f32 %v6520, %v6589
        %v6622 = vsub.f32 %v6522, %v6590
        %v6623 = vsub.f32 %v6524, %v6591
        %v6624 = vsub.f32 %v6526, %v6592
        %v6625 = vsub.f32 %v6528, %v6593
        %v6626 = vsub.f32 %v6530, %v6594
        %v6627 = vmul.f32 %v6595, 0.03125
        %v6628 = vmul.f32 %v6596, 0.03125
        %v6629 = vmul.f32 %v6597, 0.03125
        %v6630 = vmul.f32 %v6598, 0.03125
        %v6631 = vmul.f32 %v6599, 0.03125
        %v6632 = vmul.f32 %v6600, 0.03125
        %v6633 = vmul.f32 %v6601, 0.03125
        %v6634 = vmul.f32 %v6602, 0.03125
        %v6635 = vmul.f32 %v6603, 0.03125
        %v6636 = vmul.f32 %v6604, 0.03125
        %v6637 = vmul.f32 %v6605, 0.03125
        %v6638 = vmul.f32 %v6606, 0.03125
        %v6639 = vmul.f32 %v6607, 0.03125
        %v6640 = vmul.f32 %v6608, 0.03125
        %v6641 = vmul.f32 %v6609, 0.03125
        %v6642 = vmul.f32 %v6610, 0.03125
        %v6643 = vmul.f32 %v6611, 0.03125
        %v6644 = vmul.f32 %v6612, 0.03125
        %v6645 = vmul.f32 %v6613, 0.03125
        %v6646 = vmul.f32 %v6614, 0.03125
        %v6647 = vmul.f32 %v6615, 0.03125
        %v6648 = vmul.f32 %v6616, 0.03125
        %v6649 = vmul.f32 %v6617, 0.03125
        %v6650 = vmul.f32 %v6618, 0.03125
        %v6651 = vmul.f32 %v6619, 0.03125
        %v6652 = vmul.f32 %v6620, 0.03125
        %v6653 = vmul.f32 %v6621, 0.03125
        %v6654 = vmul.f32 %v6622, 0.03125
        %v6655 = vmul.f32 %v6623, 0.03125
        %v6656 = vmul.f32 %v6624, 0.03125
        %v6657 = vmul.f32 %v6625, 0.03125
        %v6658 = vmul.f32 %v6626, 0.03125
        %v6659 = vadd.f32 %v6627, 1e-05
        %v6660 = vadd.f32 %v6628, 1e-05
        %v6661 = vadd.f32 %v6629, 1e-05
        %v6662 = vadd.f32 %v6630, 1e-05
        %v6663 = vadd.f32 %v6631, 1e-05
        %v6664 = vadd.f32 %v6632, 1e-05
        %v6665 = vadd.f32 %v6633, 1e-05
        %v6666 = vadd.f32 %v6634, 1e-05
        %v6667 = vadd.f32 %v6635, 1e-05
        %v6668 = vadd.f32 %v6636, 1e-05
        %v6669 = vadd.f32 %v6637, 1e-05
        %v6670 = vadd.f32 %v6638, 1e-05
        %v6671 = vadd.f32 %v6639, 1e-05
        %v6672 = vadd.f32 %v6640, 1e-05
        %v6673 = vadd.f32 %v6641, 1e-05
        %v6674 = vadd.f32 %v6642, 1e-05
        %v6675 = vadd.f32 %v6643, 1e-05
        %v6676 = vadd.f32 %v6644, 1e-05
        %v6677 = vadd.f32 %v6645, 1e-05
        %v6678 = vadd.f32 %v6646, 1e-05
        %v6679 = vadd.f32 %v6647, 1e-05
        %v6680 = vadd.f32 %v6648, 1e-05
        %v6681 = vadd.f32 %v6649, 1e-05
        %v6682 = vadd.f32 %v6650, 1e-05
        %v6683 = vadd.f32 %v6651, 1e-05
        %v6684 = vadd.f32 %v6652, 1e-05
        %v6685 = vadd.f32 %v6653, 1e-05
        %v6686 = vadd.f32 %v6654, 1e-05
        %v6687 = vadd.f32 %v6655, 1e-05
        %v6688 = vadd.f32 %v6656, 1e-05
        %v6689 = vadd.f32 %v6657, 1e-05
        %v6690 = vadd.f32 %v6658, 1e-05
        %v6691 = vrsqrt.pop %v6659
        %v6692 = vrsqrt.pop %v6660
        %v6693 = vrsqrt.pop %v6661
        %v6694 = vrsqrt.pop %v6662
        %v6695 = vrsqrt.pop %v6663
        %v6696 = vrsqrt.pop %v6664
        %v6697 = vrsqrt.pop %v6665
        %v6698 = vrsqrt.pop %v6666
        %v6699 = vrsqrt.pop %v6667
        %v6700 = vrsqrt.pop %v6668
        %v6701 = vrsqrt.pop %v6669
        %v6702 = vrsqrt.pop %v6670
        %v6703 = vrsqrt.pop %v6671
        %v6704 = vrsqrt.pop %v6672
        %v6705 = vrsqrt.pop %v6673
        %v6706 = vrsqrt.pop %v6674
        %v6707 = vrsqrt.pop %v6675
        %v6708 = vrsqrt.pop %v6676
        %v6709 = vrsqrt.pop %v6677
        %v6710 = vrsqrt.pop %v6678
        %v6711 = vrsqrt.pop %v6679
        %v6712 = vrsqrt.pop %v6680
        %v6713 = vrsqrt.pop %v6681
        %v6714 = vrsqrt.pop %v6682
        %v6715 = vrsqrt.pop %v6683
        %v6716 = vrsqrt.pop %v6684
        %v6717 = vrsqrt.pop %v6685
        %v6718 = vrsqrt.pop %v6686
        %v6719 = vrsqrt.pop %v6687
        %v6720 = vrsqrt.pop %v6688
        %v6721 = vrsqrt.pop %v6689
        %v6722 = vrsqrt.pop %v6690
        %v6723 = vld [vmem:[%s43] sm:$0x1]
        %v6725 = vlaneseq
        %v6726 = vshrl.u32 %v6725, 7
        %v6727 = vsub.s32 0, %v6726
        %v6728 = vrot.slane %v6723, %v6727
        %v6730 = vmul.f32 %v6691, %v6728
        %v6731 = vmul.f32 %v6692, %v6728
        %v6732 = vmul.f32 %v6693, %v6728
        %v6733 = vmul.f32 %v6694, %v6728
        %v6734 = vmul.f32 %v6695, %v6728
        %v6735 = vmul.f32 %v6696, %v6728
        %v6736 = vmul.f32 %v6697, %v6728
        %v6737 = vmul.f32 %v6698, %v6728
        %v6738 = vmul.f32 %v6699, %v6728
        %v6739 = vmul.f32 %v6700, %v6728
        %v6740 = vmul.f32 %v6701, %v6728
        %v6741 = vmul.f32 %v6702, %v6728
        %v6742 = vmul.f32 %v6703, %v6728
        %v6743 = vmul.f32 %v6704, %v6728
        %v6744 = vmul.f32 %v6705, %v6728
        %v6745 = vmul.f32 %v6706, %v6728
        %v6746 = vmul.f32 %v6707, %v6728
        %v6747 = vmul.f32 %v6708, %v6728
        %v6748 = vmul.f32 %v6709, %v6728
        %v6749 = vmul.f32 %v6710, %v6728
        %v6750 = vmul.f32 %v6711, %v6728
        %v6751 = vmul.f32 %v6712, %v6728
        %v6752 = vmul.f32 %v6713, %v6728
        %v6753 = vmul.f32 %v6714, %v6728
        %v6754 = vmul.f32 %v6715, %v6728
        %v6755 = vmul.f32 %v6716, %v6728
        %v6756 = vmul.f32 %v6717, %v6728
        %v6757 = vmul.f32 %v6718, %v6728
        %v6758 = vmul.f32 %v6719, %v6728
        %v6759 = vmul.f32 %v6720, %v6728
        %v6760 = vmul.f32 %v6721, %v6728
        %v6761 = vmul.f32 %v6722, %v6728
        %v6762 = vmul.f32 %v6403, %v6730
        %v6763 = vmul.f32 %v6404, %v6731
        %v6764 = vmul.f32 %v6405, %v6732
        %v6765 = vmul.f32 %v6406, %v6733
        %v6766 = vmul.f32 %v6407, %v6734
        %v6767 = vmul.f32 %v6408, %v6735
        %v6768 = vmul.f32 %v6409, %v6736
        %v6769 = vmul.f32 %v6410, %v6737
        %v6770 = vmul.f32 %v6411, %v6738
        %v6771 = vmul.f32 %v6412, %v6739
        %v6772 = vmul.f32 %v6413, %v6740
        %v6773 = vmul.f32 %v6414, %v6741
        %v6774 = vmul.f32 %v6415, %v6742
        %v6775 = vmul.f32 %v6416, %v6743
        %v6776 = vmul.f32 %v6417, %v6744
        %v6777 = vmul.f32 %v6418, %v6745
        %v6778 = vmul.f32 %v6419, %v6746
        %v6779 = vmul.f32 %v6420, %v6747
        %v6780 = vmul.f32 %v6421, %v6748
        %v6781 = vmul.f32 %v6422, %v6749
        %v6782 = vmul.f32 %v6423, %v6750
        %v6783 = vmul.f32 %v6424, %v6751
        %v6784 = vmul.f32 %v6425, %v6752
        %v6785 = vmul.f32 %v6426, %v6753
        %v6786 = vmul.f32 %v6427, %v6754
        %v6787 = vmul.f32 %v6428, %v6755
        %v6788 = vmul.f32 %v6429, %v6756
        %v6789 = vmul.f32 %v6430, %v6757
        %v6790 = vmul.f32 %v6431, %v6758
        %v6791 = vmul.f32 %v6432, %v6759
        %v6792 = vmul.f32 %v6433, %v6760
        %v6793 = vmul.f32 %v6434, %v6761
        %v6794 = vld [vmem:[%s45] sm:$0x1]
        %v6796 = vlaneseq
        %v6797 = vshrl.u32 %v6796, 7
        %v6798 = vsub.s32 0, %v6797
        %v6799 = vrot.slane %v6794, %v6798
        %v6801 = vadd.f32 %v6762, %v6799
        %v6802 = vadd.f32 %v6763, %v6799
        %v6803 = vadd.f32 %v6764, %v6799
        %v6804 = vadd.f32 %v6765, %v6799
        %v6805 = vadd.f32 %v6766, %v6799
        %v6806 = vadd.f32 %v6767, %v6799
        %v6807 = vadd.f32 %v6768, %v6799
        %v6808 = vadd.f32 %v6769, %v6799
        %v6809 = vadd.f32 %v6770, %v6799
        %v6810 = vadd.f32 %v6771, %v6799
        %v6811 = vadd.f32 %v6772, %v6799
        %v6812 = vadd.f32 %v6773, %v6799
        %v6813 = vadd.f32 %v6774, %v6799
        %v6814 = vadd.f32 %v6775, %v6799
        %v6815 = vadd.f32 %v6776, %v6799
        %v6816 = vadd.f32 %v6777, %v6799
        %v6817 = vadd.f32 %v6778, %v6799
        %v6818 = vadd.f32 %v6779, %v6799
        %v6819 = vadd.f32 %v6780, %v6799
        %v6820 = vadd.f32 %v6781, %v6799
        %v6821 = vadd.f32 %v6782, %v6799
        %v6822 = vadd.f32 %v6783, %v6799
        %v6823 = vadd.f32 %v6784, %v6799
        %v6824 = vadd.f32 %v6785, %v6799
        %v6825 = vadd.f32 %v6786, %v6799
        %v6826 = vadd.f32 %v6787, %v6799
        %v6827 = vadd.f32 %v6788, %v6799
        %v6828 = vadd.f32 %v6789, %v6799
        %v6829 = vadd.f32 %v6790, %v6799
        %v6830 = vadd.f32 %v6791, %v6799
        %v6831 = vadd.f32 %v6792, %v6799
        %v6832 = vadd.f32 %v6793, %v6799
        %v6833 = vpack.c.bf16 %v6802, %v6801
        %v6834 = vpack.c.bf16 %v6804, %v6803
        %v6835 = vpack.c.bf16 %v6806, %v6805
        %v6836 = vpack.c.bf16 %v6808, %v6807
        %v6837 = vpack.c.bf16 %v6810, %v6809
        %v6838 = vpack.c.bf16 %v6812, %v6811
        %v6839 = vpack.c.bf16 %v6814, %v6813
        %v6840 = vpack.c.bf16 %v6816, %v6815
        %v6841 = vpack.c.bf16 %v6818, %v6817
        %v6842 = vpack.c.bf16 %v6820, %v6819
        %v6843 = vpack.c.bf16 %v6822, %v6821
        %v6844 = vpack.c.bf16 %v6824, %v6823
        %v6845 = vpack.c.bf16 %v6826, %v6825
        %v6846 = vpack.c.bf16 %v6828, %v6827
        %v6847 = vpack.c.bf16 %v6830, %v6829
        %v6848 = vpack.c.bf16 %v6832, %v6831
        %6849 = vst [vmem:[#allocation2] sm:$0xff] 0.0
        %6850 = vst [vmem:[#allocation2 + $0x8] sm:$0xff] 0.0
        %6851 = vst [vmem:[#allocation2 + $0x10] sm:$0xff] 0.0
        %6852 = vst [vmem:[#allocation2 + $0x18] sm:$0xff] 0.0
        %6853 = vst [vmem:[#allocation2 + $0x20] sm:$0xff] 0.0
        %6854 = vst [vmem:[#allocation2 + $0x28] sm:$0xff] 0.0
        %6855 = vst [vmem:[#allocation2 + $0x30] sm:$0xff] 0.0
        %6856 = vst [vmem:[#allocation2 + $0x38] sm:$0xff] 0.0
        %6857 = vst [vmem:[#allocation2 + $0x40] sm:$0xff] 0.0
        %6858 = vst [vmem:[#allocation2 + $0x48] sm:$0xff] 0.0
        %6859 = vst [vmem:[#allocation2 + $0x50] sm:$0xff] 0.0
        %6860 = vst [vmem:[#allocation2 + $0x58] sm:$0xff] 0.0
        %6861 = vst [vmem:[#allocation2 + $0x60] sm:$0xff] 0.0
        %6862 = vst [vmem:[#allocation2 + $0x68] sm:$0xff] 0.0
        %6863 = vst [vmem:[#allocation2 + $0x70] sm:$0xff] 0.0
        %6864 = vst [vmem:[#allocation2 + $0x78] sm:$0xff] 0.0
        %6865 = vst [vmem:[#allocation2 + $0x80] sm:$0xff] 0.0
        %6866 = vst [vmem:[#allocation2 + $0x88] sm:$0xff] 0.0
        %6867 = vst [vmem:[#allocation2 + $0x90] sm:$0xff] 0.0
        %6868 = vst [vmem:[#allocation2 + $0x98] sm:$0xff] 0.0
        %6869 = vst [vmem:[#allocation2 + $0xa0] sm:$0xff] 0.0
        %6870 = vst [vmem:[#allocation2 + $0xa8] sm:$0xff] 0.0
        %6871 = vst [vmem:[#allocation2 + $0xb0] sm:$0xff] 0.0
        %6872 = vst [vmem:[#allocation2 + $0xb8] sm:$0xff] 0.0
        %6873 = vst [vmem:[#allocation2 + $0xc0] sm:$0xff] 0.0
        %6874 = vst [vmem:[#allocation2 + $0xc8] sm:$0xff] 0.0
        %6875 = vst [vmem:[#allocation2 + $0xd0] sm:$0xff] 0.0
        %6876 = vst [vmem:[#allocation2 + $0xd8] sm:$0xff] 0.0
        %6877 = vst [vmem:[#allocation2 + $0xe0] sm:$0xff] 0.0
        %6878 = vst [vmem:[#allocation2 + $0xe8] sm:$0xff] 0.0
        %6879 = vst [vmem:[#allocation2 + $0xf0] sm:$0xff] 0.0
        %6880 = vst [vmem:[#allocation2 + $0xf8] sm:$0xff] 0.0
        %s6881 = smul.u32 4, 16
        %s6882 = smul.u32 %s6881, 1
        %s6883 = sshll.u32 %s6882, 4
        %6884 = dma.done [#allocation6], %s6883
        %s6885 = sshll.u32 %s6882, 4
        %6886 = dma.done %s1040, %s6885
        %s6887 = sshll.u32 %s6882, 4
        %6888 = dma.done %s1097, %s6887
        %v6889 = vld [vmem:[#allocation3] sm:$0xff]
        %v6890 = vld [vmem:[#allocation3 + $0x8] sm:$0xff]
        %v6891 = vld [vmem:[#allocation3 + $0x10] sm:$0xff]
        %v6892 = vld [vmem:[#allocation3 + $0x18] sm:$0xff]
        %v6893 = vld [vmem:[#allocation3 + $0x20] sm:$0xff]
        %v6894 = vld [vmem:[#allocation3 + $0x28] sm:$0xff]
        %v6895 = vld [vmem:[#allocation3 + $0x30] sm:$0xff]
        %v6896 = vld [vmem:[#allocation3 + $0x38] sm:$0xff]
        %v6897 = vld [vmem:[%s47] sm:$0x1]
        %v6899 = vlaneseq
        %v6900 = vshrl.u32 %v6899, 7
        %v6901 = vsub.s32 0, %v6900
        %v6902 = vrot.slane %v6897, %v6901
        %6904 = vmatprep.subr.bf16.mxu0 0
        %6905 = vmatpush1.bf16.msra.mxu0 %v6889
        %6906 = vmatprep.subr.bf16.mxu0 0
        %6907 = vmatpush1.bf16.msra.mxu0 %v6890
        %6908 = vmatprep.subr.bf16.mxu0 0
        %6909 = vmatpush1.bf16.msra.mxu0 %v6891
        %6910 = vmatprep.subr.bf16.mxu0 0
        %6911 = vmatpush1.bf16.msra.mxu0 %v6892
        %6912 = vmatprep.subr.bf16.mxu0 0
        %6913 = vmatpush1.bf16.msra.mxu0 %v6893
        %6914 = vmatprep.subr.bf16.mxu0 0
        %6915 = vmatpush1.bf16.msra.mxu0 %v6894
        %6916 = vmatprep.subr.bf16.mxu0 0
        %6917 = vmatpush1.bf16.msra.mxu0 %v6895
        %6918 = vmatprep.subr.bf16.mxu0 0
        %6919 = vmatpush1.bf16.msra.mxu0 %v6896
        %6920 = vmatprep.subr.bf16.mxu0 0
        %6921 = vmatpush1.bf16.msra.mxu0 0
        %6922 = vmatprep.subr.bf16.mxu0 0
        %6923 = vmatpush1.bf16.msra.mxu0 0
        %6924 = vmatprep.subr.bf16.mxu0 0
        %6925 = vmatpush1.bf16.msra.mxu0 0
        %6926 = vmatprep.subr.bf16.mxu0 0
        %6927 = vmatpush1.bf16.msra.mxu0 0
        %6928 = vmatprep.subr.bf16.mxu0 0
        %6929 = vmatpush1.bf16.msra.mxu0 0
        %6930 = vmatprep.subr.bf16.mxu0 0
        %6931 = vmatpush1.bf16.msra.mxu0 0
        %6932 = vmatprep.subr.bf16.mxu0 0
        %6933 = vmatpush1.bf16.msra.mxu0 0
        %6934 = vmatprep.subr.bf16.mxu0 0
        %6935 = vmatpush1.bf16.msra.mxu0 0
        %6936 = vmatprep.mubr.bf16.mxu0 0
        %6937 = vmatmul.mubr.bf16.gmra.mrb[0].mxu0 %v6833
        %v6938 = vpop.f32.mrb[0].mxu0
        %v6939 = vadd.f32 %v6902, %v6938
        %v6940 = vpop.f32.mrb[0].mxu0
        %v6941 = vpop.f32.mrb[0].mxu0
        %v6942 = vadd.f32 %v6902, %v6941
        %v6943 = vpop.f32.mrb[0].mxu0
        %6944 = vmatprep.mubr.bf16.mxu0 0
        %6945 = vmatmul.mubr.bf16.gmra.mrb[0].mxu0 %v6834
        %v6946 = vpop.f32.mrb[0].mxu0
        %v6947 = vadd.f32 %v6902, %v6946
        %v6948 = vpop.f32.mrb[0].mxu0
        %v6949 = vpop.f32.mrb[0].mxu0
        %v6950 = vadd.f32 %v6902, %v6949
        %v6951 = vpop.f32.mrb[0].mxu0
        %6952 = vmatprep.mubr.bf16.mxu0 0
        %6953 = vmatmul.mubr.bf16.gmra.mrb[0].mxu0 %v6835
        %v6954 = vpop.f32.mrb[0].mxu0
        %v6955 = vadd.f32 %v6902, %v6954
        %v6956 = vpop.f32.mrb[0].mxu0
        %v6957 = vpop.f32.mrb[0].mxu0
        %v6958 = vadd.f32 %v6902, %v6957
        %v6959 = vpop.f32.mrb[0].mxu0
        %6960 = vmatprep.mubr.bf16.mxu0 0
        %6961 = vmatmul.mubr.bf16.gmra.mrb[0].mxu0 %v6836
        %v6962 = vpop.f32.mrb[0].mxu0
        %v6963 = vadd.f32 %v6902, %v6962
        %v6964 = vpop.f32.mrb[0].mxu0
        %v6965 = vpop.f32.mrb[0].mxu0
        %v6966 = vadd.f32 %v6902, %v6965
        %v6967 = vpop.f32.mrb[0].mxu0
        %6968 = vmatprep.mubr.bf16.mxu0 0
        %6969 = vmatmul.mubr.bf16.gmra.mrb[0].mxu0 %v6837
        %v6970 = vpop.f32.mrb[0].mxu0
        %v6971 = vadd.f32 %v6902, %v6970
        %v6972 = vpop.f32.mrb[0].mxu0
        %v6973 = vpop.f32.mrb[0].mxu0
        %v6974 = vadd.f32 %v6902, %v6973
        %v6975 = vpop.f32.mrb[0].mxu0
        %6976 = vmatprep.mubr.bf16.mxu0 0
        %6977 = vmatmul.mubr.bf16.gmra.mrb[0].mxu0 %v6838
        %v6978 = vpop.f32.mrb[0].mxu0
        %v6979 = vadd.f32 %v6902, %v6978
        %v6980 = vpop.f32.mrb[0].mxu0
        %v6981 = vpop.f32.mrb[0].mxu0
        %v6982 = vadd.f32 %v6902, %v6981
        %v6983 = vpop.f32.mrb[0].mxu0
        %6984 = vmatprep.mubr.bf16.mxu0 0
        %6985 = vmatmul.mubr.bf16.gmra.mrb[0].mxu0 %v6839
        %v6986 = vpop.f32.mrb[0].mxu0
        %v6987 = vadd.f32 %v6902, %v6986
        %v6988 = vpop.f32.mrb[0].mxu0
        %v6989 = vpop.f32.mrb[0].mxu0
        %v6990 = vadd.f32 %v6902, %v6989
        %v6991 = vpop.f32.mrb[0].mxu0
        %6992 = vmatprep.mubr.bf16.mxu0 0
        %6993 = vmatmul.mubr.bf16.gmra.mrb[0].mxu0 %v6840
        %v6994 = vpop.f32.mrb[0].mxu0
        %v6995 = vadd.f32 %v6902, %v6994
        %v6996 = vpop.f32.mrb[0].mxu0
        %v6997 = vpop.f32.mrb[0].mxu0
        %v6998 = vadd.f32 %v6902, %v6997
        %v6999 = vpop.f32.mrb[0].mxu0
        %7000 = vmatprep.mubr.bf16.mxu0 0
        %7001 = vmatmul.mubr.bf16.gmra.mrb[0].mxu0 %v6841
        %v7002 = vpop.f32.mrb[0].mxu0
        %v7003 = vadd.f32 %v6902, %v7002
        %v7004 = vpop.f32.mrb[0].mxu0
        %v7005 = vpop.f32.mrb[0].mxu0
        %v7006 = vadd.f32 %v6902, %v7005
        %v7007 = vpop.f32.mrb[0].mxu0
        %7008 = vmatprep.mubr.bf16.mxu0 0
        %7009 = vmatmul.mubr.bf16.gmra.mrb[0].mxu0 %v6842
        %v7010 = vpop.f32.mrb[0].mxu0
        %v7011 = vadd.f32 %v6902, %v7010
        %v7012 = vpop.f32.mrb[0].mxu0
        %v7013 = vpop.f32.mrb[0].mxu0
        %v7014 = vadd.f32 %v6902, %v7013
        %v7015 = vpop.f32.mrb[0].mxu0
        %7016 = vmatprep.mubr.bf16.mxu0 0
        %7017 = vmatmul.mubr.bf16.gmra.mrb[0].mxu0 %v6843
        %v7018 = vpop.f32.mrb[0].mxu0
        %v7019 = vadd.f32 %v6902, %v7018
        %v7020 = vpop.f32.mrb[0].mxu0
        %v7021 = vpop.f32.mrb[0].mxu0
        %v7022 = vadd.f32 %v6902, %v7021
        %v7023 = vpop.f32.mrb[0].mxu0
        %7024 = vmatprep.mubr.bf16.mxu0 0
        %7025 = vmatmul.mubr.bf16.gmra.mrb[0].mxu0 %v6844
        %v7026 = vpop.f32.mrb[0].mxu0
        %v7027 = vadd.f32 %v6902, %v7026
        %v7028 = vpop.f32.mrb[0].mxu0
        %v7029 = vpop.f32.mrb[0].mxu0
        %v7030 = vadd.f32 %v6902, %v7029
        %v7031 = vpop.f32.mrb[0].mxu0
        %7032 = vmatprep.mubr.bf16.mxu0 0
        %7033 = vmatmul.mubr.bf16.gmra.mrb[0].mxu0 %v6845
        %v7034 = vpop.f32.mrb[0].mxu0
        %v7035 = vadd.f32 %v6902, %v7034
        %v7036 = vpop.f32.mrb[0].mxu0
        %v7037 = vpop.f32.mrb[0].mxu0
        %v7038 = vadd.f32 %v6902, %v7037
        %v7039 = vpop.f32.mrb[0].mxu0
        %7040 = vmatprep.mubr.bf16.mxu0 0
        %7041 = vmatmul.mubr.bf16.gmra.mrb[0].mxu0 %v6846
        %v7042 = vpop.f32.mrb[0].mxu0
        %v7043 = vadd.f32 %v6902, %v7042
        %v7044 = vpop.f32.mrb[0].mxu0
        %v7045 = vpop.f32.mrb[0].mxu0
        %v7046 = vadd.f32 %v6902, %v7045
        %v7047 = vpop.f32.mrb[0].mxu0
        %7048 = vmatprep.mubr.bf16.mxu0 0
        %7049 = vmatmul.mubr.bf16.gmra.mrb[0].mxu0 %v6847
        %v7050 = vpop.f32.mrb[0].mxu0
        %v7051 = vadd.f32 %v6902, %v7050
        %v7052 = vpop.f32.mrb[0].mxu0
        %v7053 = vpop.f32.mrb[0].mxu0
        %v7054 = vadd.f32 %v6902, %v7053
        %v7055 = vpop.f32.mrb[0].mxu0
        %7056 = vmatprep.mubr.bf16.mxu0 0
        %7057 = vmatmul.mubr.bf16.gmra.mrb[0].mxu0 %v6848
        %v7058 = vpop.f32.mrb[0].mxu0
        %v7059 = vadd.f32 %v6902, %v7058
        %v7060 = vpop.f32.mrb[0].mxu0
        %v7061 = vpop.f32.mrb[0].mxu0
        %v7062 = vadd.f32 %v6902, %v7061
        %v7063 = vpop.f32.mrb[0].mxu0
        %7064 = vdwg.mxu0
        %v7065 = vld [vmem:[#allocation4] sm:$0xff]
        %v7066 = vld [vmem:[#allocation4 + $0x8] sm:$0xff]
        %v7067 = vld [vmem:[#allocation4 + $0x10] sm:$0xff]
        %v7068 = vld [vmem:[#allocation4 + $0x18] sm:$0xff]
        %v7069 = vld [vmem:[#allocation4 + $0x20] sm:$0xff]
        %v7070 = vld [vmem:[#allocation4 + $0x28] sm:$0xff]
        %v7071 = vld [vmem:[#allocation4 + $0x30] sm:$0xff]
        %v7072 = vld [vmem:[#allocation4 + $0x38] sm:$0xff]
        %v7073 = vld [vmem:[%s49] sm:$0x1]
        %v7075 = vlaneseq
        %v7076 = vshrl.u32 %v7075, 7
        %v7077 = vsub.s32 0, %v7076
        %v7078 = vrot.slane %v7073, %v7077
        %7080 = vmatprep.subr.bf16.mxu0 0
        %7081 = vmatpush1.bf16.msra.mxu0 %v7065
        %7082 = vmatprep.subr.bf16.mxu0 0
        %7083 = vmatpush1.bf16.msra.mxu0 %v7066
        %7084 = vmatprep.subr.bf16.mxu0 0
        %7085 = vmatpush1.bf16.msra.mxu0 %v7067
        %7086 = vmatprep.subr.bf16.mxu0 0
        %7087 = vmatpush1.bf16.msra.mxu0 %v7068
        %7088 = vmatprep.subr.bf16.mxu0 0
        %7089 = vmatpush1.bf16.msra.mxu0 %v7069
        %7090 = vmatprep.subr.bf16.mxu0 0
        %7091 = vmatpush1.bf16.msra.mxu0 %v7070
        %7092 = vmatprep.subr.bf16.mxu0 0
        %7093 = vmatpush1.bf16.msra.mxu0 %v7071
        %7094 = vmatprep.subr.bf16.mxu0 0
        %7095 = vmatpush1.bf16.msra.mxu0 %v7072
        %7096 = vmatprep.subr.bf16.mxu0 0
        %7097 = vmatpush1.bf16.msra.mxu0 0
        %7098 = vmatprep.subr.bf16.mxu0 0
        %7099 = vmatpush1.bf16.msra.mxu0 0
        %7100 = vmatprep.subr.bf16.mxu0 0
        %7101 = vmatpush1.bf16.msra.mxu0 0
        %7102 = vmatprep.subr.bf16.mxu0 0
        %7103 = vmatpush1.bf16.msra.mxu0 0
        %7104 = vmatprep.subr.bf16.mxu0 0
        %7105 = vmatpush1.bf16.msra.mxu0 0
        %7106 = vmatprep.subr.bf16.mxu0 0
        %7107 = vmatpush1.bf16.msra.mxu0 0
        %7108 = vmatprep.subr.bf16.mxu0 0
        %7109 = vmatpush1.bf16.msra.mxu0 0
        %7110 = vmatprep.subr.bf16.mxu0 0
        %7111 = vmatpush1.bf16.msra.mxu0 0
        %7112 = vmatprep.mubr.bf16.mxu0 0
        %7113 = vmatmul.mubr.bf16.gmra.mrb[0].mxu0 %v6833
        %v7114 = vpop.f32.mrb[0].mxu0
        %v7115 = vadd.f32 %v7078, %v7114
        %v7116 = vpop.f32.mrb[0].mxu0
        %v7117 = vpop.f32.mrb[0].mxu0
        %v7118 = vadd.f32 %v7078, %v7117
        %v7119 = vpop.f32.mrb[0].mxu0
        %7120 = vmatprep.mubr.bf16.mxu0 0
        %7121 = vmatmul.mubr.bf16.gmra.mrb[0].mxu0 %v6834
        %v7122 = vpop.f32.mrb[0].mxu0
        %v7123 = vadd.f32 %v7078, %v7122
        %v7124 = vpop.f32.mrb[0].mxu0
        %v7125 = vpop.f32.mrb[0].mxu0
        %v7126 = vadd.f32 %v7078, %v7125
        %v7127 = vpop.f32.mrb[0].mxu0
        %7128 = vmatprep.mubr.bf16.mxu0 0
        %7129 = vmatmul.mubr.bf16.gmra.mrb[0].mxu0 %v6835
        %v7130 = vpop.f32.mrb[0].mxu0
        %v7131 = vadd.f32 %v7078, %v7130
        %v7132 = vpop.f32.mrb[0].mxu0
        %v7133 = vpop.f32.mrb[0].mxu0
        %v7134 = vadd.f32 %v7078, %v7133
        %v7135 = vpop.f32.mrb[0].mxu0
        %7136 = vmatprep.mubr.bf16.mxu0 0
        %7137 = vmatmul.mubr.bf16.gmra.mrb[0].mxu0 %v6836
        %v7138 = vpop.f32.mrb[0].mxu0
        %v7139 = vadd.f32 %v7078, %v7138
        %v7140 = vpop.f32.mrb[0].mxu0
        %v7141 = vpop.f32.mrb[0].mxu0
        %v7142 = vadd.f32 %v7078, %v7141
        %v7143 = vpop.f32.mrb[0].mxu0
        %7144 = vmatprep.mubr.bf16.mxu0 0
        %7145 = vmatmul.mubr.bf16.gmra.mrb[0].mxu0 %v6837
        %v7146 = vpop.f32.mrb[0].mxu0
        %v7147 = vadd.f32 %v7078, %v7146
        %v7148 = vpop.f32.mrb[0].mxu0
        %v7149 = vpop.f32.mrb[0].mxu0
        %v7150 = vadd.f32 %v7078, %v7149
        %v7151 = vpop.f32.mrb[0].mxu0
        %7152 = vmatprep.mubr.bf16.mxu0 0
        %7153 = vmatmul.mubr.bf16.gmra.mrb[0].mxu0 %v6838
        %v7154 = vpop.f32.mrb[0].mxu0
        %v7155 = vadd.f32 %v7078, %v7154
        %v7156 = vpop.f32.mrb[0].mxu0
        %v7157 = vpop.f32.mrb[0].mxu0
        %v7158 = vadd.f32 %v7078, %v7157
        %v7159 = vpop.f32.mrb[0].mxu0
        %7160 = vmatprep.mubr.bf16.mxu0 0
        %7161 = vmatmul.mubr.bf16.gmra.mrb[0].mxu0 %v6839
        %v7162 = vpop.f32.mrb[0].mxu0
        %v7163 = vadd.f32 %v7078, %v7162
        %v7164 = vpop.f32.mrb[0].mxu0
        %v7165 = vpop.f32.mrb[0].mxu0
        %v7166 = vadd.f32 %v7078, %v7165
        %v7167 = vpop.f32.mrb[0].mxu0
        %7168 = vmatprep.mubr.bf16.mxu0 0
        %7169 = vmatmul.mubr.bf16.gmra.mrb[0].mxu0 %v6840
        %v7170 = vpop.f32.mrb[0].mxu0
        %v7171 = vadd.f32 %v7078, %v7170
        %v7172 = vpop.f32.mrb[0].mxu0
        %v7173 = vpop.f32.mrb[0].mxu0
        %v7174 = vadd.f32 %v7078, %v7173
        %v7175 = vpop.f32.mrb[0].mxu0
        %7176 = vmatprep.mubr.bf16.mxu0 0
        %7177 = vmatmul.mubr.bf16.gmra.mrb[0].mxu0 %v6841
        %v7178 = vpop.f32.mrb[0].mxu0
        %v7179 = vadd.f32 %v7078, %v7178
        %v7180 = vpop.f32.mrb[0].mxu0
        %v7181 = vpop.f32.mrb[0].mxu0
        %v7182 = vadd.f32 %v7078, %v7181
        %v7183 = vpop.f32.mrb[0].mxu0
        %7184 = vmatprep.mubr.bf16.mxu0 0
        %7185 = vmatmul.mubr.bf16.gmra.mrb[0].mxu0 %v6842
        %v7186 = vpop.f32.mrb[0].mxu0
        %v7187 = vadd.f32 %v7078, %v7186
        %v7188 = vpop.f32.mrb[0].mxu0
        %v7189 = vpop.f32.mrb[0].mxu0
        %v7190 = vadd.f32 %v7078, %v7189
        %v7191 = vpop.f32.mrb[0].mxu0
        %7192 = vmatprep.mubr.bf16.mxu0 0
        %7193 = vmatmul.mubr.bf16.gmra.mrb[0].mxu0 %v6843
        %v7194 = vpop.f32.mrb[0].mxu0
        %v7195 = vadd.f32 %v7078, %v7194
        %v7196 = vpop.f32.mrb[0].mxu0
        %v7197 = vpop.f32.mrb[0].mxu0
        %v7198 = vadd.f32 %v7078, %v7197
        %v7199 = vpop.f32.mrb[0].mxu0
        %7200 = vmatprep.mubr.bf16.mxu0 0
        %7201 = vmatmul.mubr.bf16.gmra.mrb[0].mxu0 %v6844
        %v7202 = vpop.f32.mrb[0].mxu0
        %v7203 = vadd.f32 %v7078, %v7202
        %v7204 = vpop.f32.mrb[0].mxu0
        %v7205 = vpop.f32.mrb[0].mxu0
        %v7206 = vadd.f32 %v7078, %v7205
        %v7207 = vpop.f32.mrb[0].mxu0
        %7208 = vmatprep.mubr.bf16.mxu0 0
        %7209 = vmatmul.mubr.bf16.gmra.mrb[0].mxu0 %v6845
        %v7210 = vpop.f32.mrb[0].mxu0
        %v7211 = vadd.f32 %v7078, %v7210
        %v7212 = vpop.f32.mrb[0].mxu0
        %v7213 = vpop.f32.mrb[0].mxu0
        %v7214 = vadd.f32 %v7078, %v7213
        %v7215 = vpop.f32.mrb[0].mxu0
        %7216 = vmatprep.mubr.bf16.mxu0 0
        %7217 = vmatmul.mubr.bf16.gmra.mrb[0].mxu0 %v6846
        %v7218 = vpop.f32.mrb[0].mxu0
        %v7219 = vadd.f32 %v7078, %v7218
        %v7220 = vpop.f32.mrb[0].mxu0
        %v7221 = vpop.f32.mrb[0].mxu0
        %v7222 = vadd.f32 %v7078, %v7221
        %v7223 = vpop.f32.mrb[0].mxu0
        %7224 = vmatprep.mubr.bf16.mxu0 0
        %7225 = vmatmul.mubr.bf16.gmra.mrb[0].mxu0 %v6847
        %v7226 = vpop.f32.mrb[0].mxu0
        %v7227 = vadd.f32 %v7078, %v7226
        %v7228 = vpop.f32.mrb[0].mxu0
        %v7229 = vpop.f32.mrb[0].mxu0
        %v7230 = vadd.f32 %v7078, %v7229
        %v7231 = vpop.f32.mrb[0].mxu0
        %7232 = vmatprep.mubr.bf16.mxu0 0
        %7233 = vmatmul.mubr.bf16.gmra.mrb[0].mxu0 %v6848
        %v7234 = vpop.f32.mrb[0].mxu0
        %v7235 = vadd.f32 %v7078, %v7234
        %v7236 = vpop.f32.mrb[0].mxu0
        %v7237 = vpop.f32.mrb[0].mxu0
        %v7238 = vadd.f32 %v7078, %v7237
        %v7239 = vpop.f32.mrb[0].mxu0
        %7240 = vdwg.mxu0
        %v7241 = vmul.f32 %v7115, 0.5
        %v7242 = vmul.f32 %v7118, 0.5
        %v7243 = vmul.f32 %v7123, 0.5
        %v7244 = vmul.f32 %v7126, 0.5
        %v7245 = vmul.f32 %v7131, 0.5
        %v7246 = vmul.f32 %v7134, 0.5
        %v7247 = vmul.f32 %v7139, 0.5
        %v7248 = vmul.f32 %v7142, 0.5
        %v7249 = vmul.f32 %v7147, 0.5
        %v7250 = vmul.f32 %v7150, 0.5
        %v7251 = vmul.f32 %v7155, 0.5
        %v7252 = vmul.f32 %v7158, 0.5
        %v7253 = vmul.f32 %v7163, 0.5
        %v7254 = vmul.f32 %v7166, 0.5
        %v7255 = vmul.f32 %v7171, 0.5
        %v7256 = vmul.f32 %v7174, 0.5
        %v7257 = vmul.f32 %v7179, 0.5
        %v7258 = vmul.f32 %v7182, 0.5
        %v7259 = vmul.f32 %v7187, 0.5
        %v7260 = vmul.f32 %v7190, 0.5
        %v7261 = vmul.f32 %v7195, 0.5
        %v7262 = vmul.f32 %v7198, 0.5
        %v7263 = vmul.f32 %v7203, 0.5
        %v7264 = vmul.f32 %v7206, 0.5
        %v7265 = vmul.f32 %v7211, 0.5
        %v7266 = vmul.f32 %v7214, 0.5
        %v7267 = vmul.f32 %v7219, 0.5
        %v7268 = vmul.f32 %v7222, 0.5
        %v7269 = vmul.f32 %v7227, 0.5
        %v7270 = vmul.f32 %v7230, 0.5
        %v7271 = vmul.f32 %v7235, 0.5
        %v7272 = vmul.f32 %v7238, 0.5
        %v7273 = vmul.f32 %v7115, 0.70710677
        %v7274 = vmul.f32 %v7118, 0.70710677
        %v7275 = vmul.f32 %v7123, 0.70710677
        %v7276 = vmul.f32 %v7126, 0.70710677
        %v7277 = vmul.f32 %v7131, 0.70710677
        %v7278 = vmul.f32 %v7134, 0.70710677
        %v7279 = vmul.f32 %v7139, 0.70710677
        %v7280 = vmul.f32 %v7142, 0.70710677
        %v7281 = vmul.f32 %v7147, 0.70710677
        %v7282 = vmul.f32 %v7150, 0.70710677
        %v7283 = vmul.f32 %v7155, 0.70710677
        %v7284 = vmul.f32 %v7158, 0.70710677
        %v7285 = vmul.f32 %v7163, 0.70710677
        %v7286 = vmul.f32 %v7166, 0.70710677
        %v7287 = vmul.f32 %v7171, 0.70710677
        %v7288 = vmul.f32 %v7174, 0.70710677
        %v7289 = vmul.f32 %v7179, 0.70710677
        %v7290 = vmul.f32 %v7182, 0.70710677
        %v7291 = vmul.f32 %v7187, 0.70710677
        %v7292 = vmul.f32 %v7190, 0.70710677
        %v7293 = vmul.f32 %v7195, 0.70710677
        %v7294 = vmul.f32 %v7198, 0.70710677
        %v7295 = vmul.f32 %v7203, 0.70710677
        %v7296 = vmul.f32 %v7206, 0.70710677
        %v7297 = vmul.f32 %v7211, 0.70710677
        %v7298 = vmul.f32 %v7214, 0.70710677
        %v7299 = vmul.f32 %v7219, 0.70710677
        %v7300 = vmul.f32 %v7222, 0.70710677
        %v7301 = vmul.f32 %v7227, 0.70710677
        %v7302 = vmul.f32 %v7230, 0.70710677
        %v7303 = vmul.f32 %v7235, 0.70710677
        %v7304 = vmul.f32 %v7238, 0.70710677
        %v7305 = verf.f32.pop %v7273
        %v7306 = verf.f32.pop %v7274
        %v7307 = verf.f32.pop %v7275
        %v7308 = verf.f32.pop %v7276
        %v7309 = verf.f32.pop %v7277
        %v7310 = verf.f32.pop %v7278
        %v7311 = verf.f32.pop %v7279
        %v7312 = verf.f32.pop %v7280
        %v7313 = verf.f32.pop %v7281
        %v7314 = verf.f32.pop %v7282
        %v7315 = verf.f32.pop %v7283
        %v7316 = verf.f32.pop %v7284
        %v7317 = verf.f32.pop %v7285
        %v7318 = verf.f32.pop %v7286
        %v7319 = verf.f32.pop %v7287
        %v7320 = verf.f32.pop %v7288
        %v7321 = verf.f32.pop %v7289
        %v7322 = verf.f32.pop %v7290
        %v7323 = verf.f32.pop %v7291
        %v7324 = verf.f32.pop %v7292
        %v7325 = verf.f32.pop %v7293
        %v7326 = verf.f32.pop %v7294
        %v7327 = verf.f32.pop %v7295
        %v7328 = verf.f32.pop %v7296
        %v7329 = verf.f32.pop %v7297
        %v7330 = verf.f32.pop %v7298
        %v7331 = verf.f32.pop %v7299
        %v7332 = verf.f32.pop %v7300
        %v7333 = verf.f32.pop %v7301
        %v7334 = verf.f32.pop %v7302
        %v7335 = verf.f32.pop %v7303
        %v7336 = verf.f32.pop %v7304
        %v7337 = vadd.f32 %v7305, 1.0
        %v7338 = vadd.f32 %v7306, 1.0
        %v7339 = vadd.f32 %v7307, 1.0
        %v7340 = vadd.f32 %v7308, 1.0
        %v7341 = vadd.f32 %v7309, 1.0
        %v7342 = vadd.f32 %v7310, 1.0
        %v7343 = vadd.f32 %v7311, 1.0
        %v7344 = vadd.f32 %v7312, 1.0
        %v7345 = vadd.f32 %v7313, 1.0
        %v7346 = vadd.f32 %v7314, 1.0
        %v7347 = vadd.f32 %v7315, 1.0
        %v7348 = vadd.f32 %v7316, 1.0
        %v7349 = vadd.f32 %v7317, 1.0
        %v7350 = vadd.f32 %v7318, 1.0
        %v7351 = vadd.f32 %v7319, 1.0
        %v7352 = vadd.f32 %v7320, 1.0
        %v7353 = vadd.f32 %v7321, 1.0
        %v7354 = vadd.f32 %v7322, 1.0
        %v7355 = vadd.f32 %v7323, 1.0
        %v7356 = vadd.f32 %v7324, 1.0
        %v7357 = vadd.f32 %v7325, 1.0
        %v7358 = vadd.f32 %v7326, 1.0
        %v7359 = vadd.f32 %v7327, 1.0
        %v7360 = vadd.f32 %v7328, 1.0
        %v7361 = vadd.f32 %v7329, 1.0
        %v7362 = vadd.f32 %v7330, 1.0
        %v7363 = vadd.f32 %v7331, 1.0
        %v7364 = vadd.f32 %v7332, 1.0
        %v7365 = vadd.f32 %v7333, 1.0
        %v7366 = vadd.f32 %v7334, 1.0
        %v7367 = vadd.f32 %v7335, 1.0
        %v7368 = vadd.f32 %v7336, 1.0
        %v7369 = vmul.f32 %v7241, %v7337
        %v7370 = vmul.f32 %v7242, %v7338
        %v7371 = vmul.f32 %v7243, %v7339
        %v7372 = vmul.f32 %v7244, %v7340
        %v7373 = vmul.f32 %v7245, %v7341
        %v7374 = vmul.f32 %v7246, %v7342
        %v7375 = vmul.f32 %v7247, %v7343
        %v7376 = vmul.f32 %v7248, %v7344
        %v7377 = vmul.f32 %v7249, %v7345
        %v7378 = vmul.f32 %v7250, %v7346
        %v7379 = vmul.f32 %v7251, %v7347
        %v7380 = vmul.f32 %v7252, %v7348
        %v7381 = vmul.f32 %v7253, %v7349
        %v7382 = vmul.f32 %v7254, %v7350
        %v7383 = vmul.f32 %v7255, %v7351
        %v7384 = vmul.f32 %v7256, %v7352
        %v7385 = vmul.f32 %v7257, %v7353
        %v7386 = vmul.f32 %v7258, %v7354
        %v7387 = vmul.f32 %v7259, %v7355
        %v7388 = vmul.f32 %v7260, %v7356
        %v7389 = vmul.f32 %v7261, %v7357
        %v7390 = vmul.f32 %v7262, %v7358
        %v7391 = vmul.f32 %v7263, %v7359
        %v7392 = vmul.f32 %v7264, %v7360
        %v7393 = vmul.f32 %v7265, %v7361
        %v7394 = vmul.f32 %v7266, %v7362
        %v7395 = vmul.f32 %v7267, %v7363
        %v7396 = vmul.f32 %v7268, %v7364
        %v7397 = vmul.f32 %v7269, %v7365
        %v7398 = vmul.f32 %v7270, %v7366
        %v7399 = vmul.f32 %v7271, %v7367
        %v7400 = vmul.f32 %v7272, %v7368
        %v7401 = vld [vmem:[#allocation2] sm:$0xff]
        %v7402 = vld [vmem:[#allocation2 + $0x8] sm:$0xff]
        %v7403 = vld [vmem:[#allocation2 + $0x10] sm:$0xff]
        %v7404 = vld [vmem:[#allocation2 + $0x18] sm:$0xff]
        %v7405 = vld [vmem:[#allocation2 + $0x20] sm:$0xff]
        %v7406 = vld [vmem:[#allocation2 + $0x28] sm:$0xff]
        %v7407 = vld [vmem:[#allocation2 + $0x30] sm:$0xff]
        %v7408 = vld [vmem:[#allocation2 + $0x38] sm:$0xff]
        %v7409 = vld [vmem:[#allocation2 + $0x40] sm:$0xff]
        %v7410 = vld [vmem:[#allocation2 + $0x48] sm:$0xff]
        %v7411 = vld [vmem:[#allocation2 + $0x50] sm:$0xff]
        %v7412 = vld [vmem:[#allocation2 + $0x58] sm:$0xff]
        %v7413 = vld [vmem:[#allocation2 + $0x60] sm:$0xff]
        %v7414 = vld [vmem:[#allocation2 + $0x68] sm:$0xff]
        %v7415 = vld [vmem:[#allocation2 + $0x70] sm:$0xff]
        %v7416 = vld [vmem:[#allocation2 + $0x78] sm:$0xff]
        %v7417 = vld [vmem:[#allocation2 + $0x80] sm:$0xff]
        %v7418 = vld [vmem:[#allocation2 + $0x88] sm:$0xff]
        %v7419 = vld [vmem:[#allocation2 + $0x90] sm:$0xff]
        %v7420 = vld [vmem:[#allocation2 + $0x98] sm:$0xff]
        %v7421 = vld [vmem:[#allocation2 + $0xa0] sm:$0xff]
        %v7422 = vld [vmem:[#allocation2 + $0xa8] sm:$0xff]
        %v7423 = vld [vmem:[#allocation2 + $0xb0] sm:$0xff]
        %v7424 = vld [vmem:[#allocation2 + $0xb8] sm:$0xff]
        %v7425 = vld [vmem:[#allocation2 + $0xc0] sm:$0xff]
        %v7426 = vld [vmem:[#allocation2 + $0xc8] sm:$0xff]
        %v7427 = vld [vmem:[#allocation2 + $0xd0] sm:$0xff]
        %v7428 = vld [vmem:[#allocation2 + $0xd8] sm:$0xff]
        %v7429 = vld [vmem:[#allocation2 + $0xe0] sm:$0xff]
        %v7430 = vld [vmem:[#allocation2 + $0xe8] sm:$0xff]
        %v7431 = vld [vmem:[#allocation2 + $0xf0] sm:$0xff]
        %v7432 = vld [vmem:[#allocation2 + $0xf8] sm:$0xff]
        %v7433 = vmul.f32 %v6939, %v7369
        %v7434 = vmul.f32 %v6942, %v7370
        %v7435 = vmul.f32 %v6947, %v7371
        %v7436 = vmul.f32 %v6950, %v7372
        %v7437 = vmul.f32 %v6955, %v7373
        %v7438 = vmul.f32 %v6958, %v7374
        %v7439 = vmul.f32 %v6963, %v7375
        %v7440 = vmul.f32 %v6966, %v7376
        %v7441 = vmul.f32 %v6971, %v7377
        %v7442 = vmul.f32 %v6974, %v7378
        %v7443 = vmul.f32 %v6979, %v7379
        %v7444 = vmul.f32 %v6982, %v7380
        %v7445 = vmul.f32 %v6987, %v7381
        %v7446 = vmul.f32 %v6990, %v7382
        %v7447 = vmul.f32 %v6995, %v7383
        %v7448 = vmul.f32 %v6998, %v7384
        %v7449 = vmul.f32 %v7003, %v7385
        %v7450 = vmul.f32 %v7006, %v7386
        %v7451 = vmul.f32 %v7011, %v7387
        %v7452 = vmul.f32 %v7014, %v7388
        %v7453 = vmul.f32 %v7019, %v7389
        %v7454 = vmul.f32 %v7022, %v7390
        %v7455 = vmul.f32 %v7027, %v7391
        %v7456 = vmul.f32 %v7030, %v7392
        %v7457 = vmul.f32 %v7035, %v7393
        %v7458 = vmul.f32 %v7038, %v7394
        %v7459 = vmul.f32 %v7043, %v7395
        %v7460 = vmul.f32 %v7046, %v7396
        %v7461 = vmul.f32 %v7051, %v7397
        %v7462 = vmul.f32 %v7054, %v7398
        %v7463 = vmul.f32 %v7059, %v7399
        %v7464 = vmul.f32 %v7062, %v7400
        %v7465 = vpack.c.bf16 %v7434, %v7433
        %v7466 = vpack.c.bf16 %v7436, %v7435
        %v7467 = vpack.c.bf16 %v7438, %v7437
        %v7468 = vpack.c.bf16 %v7440, %v7439
        %v7469 = vpack.c.bf16 %v7442, %v7441
        %v7470 = vpack.c.bf16 %v7444, %v7443
        %v7471 = vpack.c.bf16 %v7446, %v7445
        %v7472 = vpack.c.bf16 %v7448, %v7447
        %v7473 = vpack.c.bf16 %v7450, %v7449
        %v7474 = vpack.c.bf16 %v7452, %v7451
        %v7475 = vpack.c.bf16 %v7454, %v7453
        %v7476 = vpack.c.bf16 %v7456, %v7455
        %v7477 = vpack.c.bf16 %v7458, %v7457
        %v7478 = vpack.c.bf16 %v7460, %v7459
        %v7479 = vpack.c.bf16 %v7462, %v7461
        %v7480 = vpack.c.bf16 %v7464, %v7463
        %v7481 = vld [vmem:[#allocation5] sm:$0xff]
        %v7482 = vld [vmem:[#allocation5 + $0x8] sm:$0xff]
        %v7483 = vld [vmem:[#allocation5 + $0x10] sm:$0xff]
        %v7484 = vld [vmem:[#allocation5 + $0x18] sm:$0xff]
        %v7485 = vld [vmem:[#allocation5 + $0x20] sm:$0xff]
        %v7486 = vld [vmem:[#allocation5 + $0x28] sm:$0xff]
        %v7487 = vld [vmem:[#allocation5 + $0x30] sm:$0xff]
        %v7488 = vld [vmem:[#allocation5 + $0x38] sm:$0xff]
        %7489 = vmatprep.subr.bf16.mxu0 0
        %7490 = vmatpush1.bf16.msra.mxu0 %v7481
        %7491 = vmatprep.subr.bf16.mxu0 0
        %7492 = vmatpush1.bf16.msra.mxu0 %v7482
        %7493 = vmatprep.subr.bf16.mxu0 0
        %7494 = vmatpush1.bf16.msra.mxu0 %v7483
        %7495 = vmatprep.subr.bf16.mxu0 0
        %7496 = vmatpush1.bf16.msra.mxu0 %v7484
        %7497 = vmatprep.subr.bf16.mxu0 0
        %7498 = vmatpush1.bf16.msra.mxu0 %v7485
        %7499 = vmatprep.subr.bf16.mxu0 0
        %7500 = vmatpush1.bf16.msra.mxu0 %v7486
        %7501 = vmatprep.subr.bf16.mxu0 0
        %7502 = vmatpush1.bf16.msra.mxu0 %v7487
        %7503 = vmatprep.subr.bf16.mxu0 0
        %7504 = vmatpush1.bf16.msra.mxu0 %v7488
        %7505 = vmatprep.subr.bf16.mxu0 0
        %7506 = vmatpush1.bf16.msra.mxu0 0
        %7507 = vmatprep.subr.bf16.mxu0 0
        %7508 = vmatpush1.bf16.msra.mxu0 0
        %7509 = vmatprep.subr.bf16.mxu0 0
        %7510 = vmatpush1.bf16.msra.mxu0 0
        %7511 = vmatprep.subr.bf16.mxu0 0
        %7512 = vmatpush1.bf16.msra.mxu0 0
        %7513 = vmatprep.subr.bf16.mxu0 0
        %7514 = vmatpush1.bf16.msra.mxu0 0
        %7515 = vmatprep.subr.bf16.mxu0 0
        %7516 = vmatpush1.bf16.msra.mxu0 0
        %7517 = vmatprep.subr.bf16.mxu0 0
        %7518 = vmatpush1.bf16.msra.mxu0 0
        %7519 = vmatprep.subr.bf16.mxu0 0
        %7520 = vmatpush1.bf16.msra.mxu0 0
        %7521 = vmatprep.mubr.bf16.mxu0 0
        %7522 = vmatmul.mubr.bf16.gmra.mrb[0].mxu0 %v7465
        %v7523 = vpop.f32.mrb[0].mxu0
        %v7524 = vadd.f32 0.0, %v7523
        %v7525 = vpop.f32.mrb[0].mxu0
        %v7526 = vpop.f32.mrb[0].mxu0
        %v7527 = vadd.f32 0.0, %v7526
        %v7528 = vpop.f32.mrb[0].mxu0
        %7529 = vmatprep.mubr.bf16.mxu0 0
        %7530 = vmatmul.mubr.bf16.gmra.mrb[0].mxu0 %v7466
        %v7531 = vpop.f32.mrb[0].mxu0
        %v7532 = vadd.f32 0.0, %v7531
        %v7533 = vpop.f32.mrb[0].mxu0
        %v7534 = vpop.f32.mrb[0].mxu0
        %v7535 = vadd.f32 0.0, %v7534
        %v7536 = vpop.f32.mrb[0].mxu0
        %7537 = vmatprep.mubr.bf16.mxu0 0
        %7538 = vmatmul.mubr.bf16.gmra.mrb[0].mxu0 %v7467
        %v7539 = vpop.f32.mrb[0].mxu0
        %v7540 = vadd.f32 0.0, %v7539
        %v7541 = vpop.f32.mrb[0].mxu0
        %v7542 = vpop.f32.mrb[0].mxu0
        %v7543 = vadd.f32 0.0, %v7542
        %v7544 = vpop.f32.mrb[0].mxu0
        %7545 = vmatprep.mubr.bf16.mxu0 0
        %7546 = vmatmul.mubr.bf16.gmra.mrb[0].mxu0 %v7468
        %v7547 = vpop.f32.mrb[0].mxu0
        %v7548 = vadd.f32 0.0, %v7547
        %v7549 = vpop.f32.mrb[0].mxu0
        %v7550 = vpop.f32.mrb[0].mxu0
        %v7551 = vadd.f32 0.0, %v7550
        %v7552 = vpop.f32.mrb[0].mxu0
        %7553 = vmatprep.mubr.bf16.mxu0 0
        %7554 = vmatmul.mubr.bf16.gmra.mrb[0].mxu0 %v7469
        %v7555 = vpop.f32.mrb[0].mxu0
        %v7556 = vadd.f32 0.0, %v7555
        %v7557 = vpop.f32.mrb[0].mxu0
        %v7558 = vpop.f32.mrb[0].mxu0
        %v7559 = vadd.f32 0.0, %v7558
        %v7560 = vpop.f32.mrb[0].mxu0
        %7561 = vmatprep.mubr.bf16.mxu0 0
        %7562 = vmatmul.mubr.bf16.gmra.mrb[0].mxu0 %v7470
        %v7563 = vpop.f32.mrb[0].mxu0
        %v7564 = vadd.f32 0.0, %v7563
        %v7565 = vpop.f32.mrb[0].mxu0
        %v7566 = vpop.f32.mrb[0].mxu0
        %v7567 = vadd.f32 0.0, %v7566
        %v7568 = vpop.f32.mrb[0].mxu0
        %7569 = vmatprep.mubr.bf16.mxu0 0
        %7570 = vmatmul.mubr.bf16.gmra.mrb[0].mxu0 %v7471
        %v7571 = vpop.f32.mrb[0].mxu0
        %v7572 = vadd.f32 0.0, %v7571
        %v7573 = vpop.f32.mrb[0].mxu0
        %v7574 = vpop.f32.mrb[0].mxu0
        %v7575 = vadd.f32 0.0, %v7574
        %v7576 = vpop.f32.mrb[0].mxu0
        %7577 = vmatprep.mubr.bf16.mxu0 0
        %7578 = vmatmul.mubr.bf16.gmra.mrb[0].mxu0 %v7472
        %v7579 = vpop.f32.mrb[0].mxu0
        %v7580 = vadd.f32 0.0, %v7579
        %v7581 = vpop.f32.mrb[0].mxu0
        %v7582 = vpop.f32.mrb[0].mxu0
        %v7583 = vadd.f32 0.0, %v7582
        %v7584 = vpop.f32.mrb[0].mxu0
        %7585 = vmatprep.mubr.bf16.mxu0 0
        %7586 = vmatmul.mubr.bf16.gmra.mrb[0].mxu0 %v7473
        %v7587 = vpop.f32.mrb[0].mxu0
        %v7588 = vadd.f32 0.0, %v7587
        %v7589 = vpop.f32.mrb[0].mxu0
        %v7590 = vpop.f32.mrb[0].mxu0
        %v7591 = vadd.f32 0.0, %v7590
        %v7592 = vpop.f32.mrb[0].mxu0
        %7593 = vmatprep.mubr.bf16.mxu0 0
        %7594 = vmatmul.mubr.bf16.gmra.mrb[0].mxu0 %v7474
        %v7595 = vpop.f32.mrb[0].mxu0
        %v7596 = vadd.f32 0.0, %v7595
        %v7597 = vpop.f32.mrb[0].mxu0
        %v7598 = vpop.f32.mrb[0].mxu0
        %v7599 = vadd.f32 0.0, %v7598
        %v7600 = vpop.f32.mrb[0].mxu0
        %7601 = vmatprep.mubr.bf16.mxu0 0
        %7602 = vmatmul.mubr.bf16.gmra.mrb[0].mxu0 %v7475
        %v7603 = vpop.f32.mrb[0].mxu0
        %v7604 = vadd.f32 0.0, %v7603
        %v7605 = vpop.f32.mrb[0].mxu0
        %v7606 = vpop.f32.mrb[0].mxu0
        %v7607 = vadd.f32 0.0, %v7606
        %v7608 = vpop.f32.mrb[0].mxu0
        %7609 = vmatprep.mubr.bf16.mxu0 0
        %7610 = vmatmul.mubr.bf16.gmra.mrb[0].mxu0 %v7476
        %v7611 = vpop.f32.mrb[0].mxu0
        %v7612 = vadd.f32 0.0, %v7611
        %v7613 = vpop.f32.mrb[0].mxu0
        %v7614 = vpop.f32.mrb[0].mxu0
        %v7615 = vadd.f32 0.0, %v7614
        %v7616 = vpop.f32.mrb[0].mxu0
        %7617 = vmatprep.mubr.bf16.mxu0 0
        %7618 = vmatmul.mubr.bf16.gmra.mrb[0].mxu0 %v7477
        %v7619 = vpop.f32.mrb[0].mxu0
        %v7620 = vadd.f32 0.0, %v7619
        %v7621 = vpop.f32.mrb[0].mxu0
        %v7622 = vpop.f32.mrb[0].mxu0
        %v7623 = vadd.f32 0.0, %v7622
        %v7624 = vpop.f32.mrb[0].mxu0
        %7625 = vmatprep.mubr.bf16.mxu0 0
        %7626 = vmatmul.mubr.bf16.gmra.mrb[0].mxu0 %v7478
        %v7627 = vpop.f32.mrb[0].mxu0
        %v7628 = vadd.f32 0.0, %v7627
        %v7629 = vpop.f32.mrb[0].mxu0
        %v7630 = vpop.f32.mrb[0].mxu0
        %v7631 = vadd.f32 0.0, %v7630
        %v7632 = vpop.f32.mrb[0].mxu0
        %7633 = vmatprep.mubr.bf16.mxu0 0
        %7634 = vmatmul.mubr.bf16.gmra.mrb[0].mxu0 %v7479
        %v7635 = vpop.f32.mrb[0].mxu0
        %v7636 = vadd.f32 0.0, %v7635
        %v7637 = vpop.f32.mrb[0].mxu0
        %v7638 = vpop.f32.mrb[0].mxu0
        %v7639 = vadd.f32 0.0, %v7638
        %v7640 = vpop.f32.mrb[0].mxu0
        %7641 = vmatprep.mubr.bf16.mxu0 0
        %7642 = vmatmul.mubr.bf16.gmra.mrb[0].mxu0 %v7480
        %v7643 = vpop.f32.mrb[0].mxu0
        %v7644 = vadd.f32 0.0, %v7643
        %v7645 = vpop.f32.mrb[0].mxu0
        %v7646 = vpop.f32.mrb[0].mxu0
        %v7647 = vadd.f32 0.0, %v7646
        %v7648 = vpop.f32.mrb[0].mxu0
        %7649 = vdwg.mxu0
        %v7650 = vadd.f32 %v7401, %v7524
        %v7651 = vadd.f32 %v7402, %v7527
        %v7652 = vadd.f32 %v7403, %v7532
        %v7653 = vadd.f32 %v7404, %v7535
        %v7654 = vadd.f32 %v7405, %v7540
        %v7655 = vadd.f32 %v7406, %v7543
        %v7656 = vadd.f32 %v7407, %v7548
        %v7657 = vadd.f32 %v7408, %v7551
        %v7658 = vadd.f32 %v7409, %v7556
        %v7659 = vadd.f32 %v7410, %v7559
        %v7660 = vadd.f32 %v7411, %v7564
        %v7661 = vadd.f32 %v7412, %v7567
        %v7662 = vadd.f32 %v7413, %v7572
        %v7663 = vadd.f32 %v7414, %v7575
        %v7664 = vadd.f32 %v7415, %v7580
        %v7665 = vadd.f32 %v7416, %v7583
        %v7666 = vadd.f32 %v7417, %v7588
        %v7667 = vadd.f32 %v7418, %v7591
        %v7668 = vadd.f32 %v7419, %v7596
        %v7669 = vadd.f32 %v7420, %v7599
        %v7670 = vadd.f32 %v7421, %v7604
        %v7671 = vadd.f32 %v7422, %v7607
        %v7672 = vadd.f32 %v7423, %v7612
        %v7673 = vadd.f32 %v7424, %v7615
        %v7674 = vadd.f32 %v7425, %v7620
        %v7675 = vadd.f32 %v7426, %v7623
        %v7676 = vadd.f32 %v7427, %v7628
        %v7677 = vadd.f32 %v7428, %v7631
        %v7678 = vadd.f32 %v7429, %v7636
        %v7679 = vadd.f32 %v7430, %v7639
        %v7680 = vadd.f32 %v7431, %v7644
        %v7681 = vadd.f32 %v7432, %v7647
        %7682 = vst [vmem:[#allocation2] sm:$0xff] %v7650
        %7683 = vst [vmem:[#allocation2 + $0x8] sm:$0xff] %v7651
        %7684 = vst [vmem:[#allocation2 + $0x10] sm:$0xff] %v7652
        %7685 = vst [vmem:[#allocation2 + $0x18] sm:$0xff] %v7653
        %7686 = vst [vmem:[#allocation2 + $0x20] sm:$0xff] %v7654
        %7687 = vst [vmem:[#allocation2 + $0x28] sm:$0xff] %v7655
        %7688 = vst [vmem:[#allocation2 + $0x30] sm:$0xff] %v7656
        %7689 = vst [vmem:[#allocation2 + $0x38] sm:$0xff] %v7657
        %7690 = vst [vmem:[#allocation2 + $0x40] sm:$0xff] %v7658
        %7691 = vst [vmem:[#allocation2 + $0x48] sm:$0xff] %v7659
        %7692 = vst [vmem:[#allocation2 + $0x50] sm:$0xff] %v7660
        %7693 = vst [vmem:[#allocation2 + $0x58] sm:$0xff] %v7661
        %7694 = vst [vmem:[#allocation2 + $0x60] sm:$0xff] %v7662
        %7695 = vst [vmem:[#allocation2 + $0x68] sm:$0xff] %v7663
        %7696 = vst [vmem:[#allocation2 + $0x70] sm:$0xff] %v7664
        %7697 = vst [vmem:[#allocation2 + $0x78] sm:$0xff] %v7665
        %7698 = vst [vmem:[#allocation2 + $0x80] sm:$0xff] %v7666
        %7699 = vst [vmem:[#allocation2 + $0x88] sm:$0xff] %v7667
        %7700 = vst [vmem:[#allocation2 + $0x90] sm:$0xff] %v7668
        %7701 = vst [vmem:[#allocation2 + $0x98] sm:$0xff] %v7669
        %7702 = vst [vmem:[#allocation2 + $0xa0] sm:$0xff] %v7670
        %7703 = vst [vmem:[#allocation2 + $0xa8] sm:$0xff] %v7671
        %7704 = vst [vmem:[#allocation2 + $0xb0] sm:$0xff] %v7672
        %7705 = vst [vmem:[#allocation2 + $0xb8] sm:$0xff] %v7673
        %7706 = vst [vmem:[#allocation2 + $0xc0] sm:$0xff] %v7674
        %7707 = vst [vmem:[#allocation2 + $0xc8] sm:$0xff] %v7675
        %7708 = vst [vmem:[#allocation2 + $0xd0] sm:$0xff] %v7676
        %7709 = vst [vmem:[#allocation2 + $0xd8] sm:$0xff] %v7677
        %7710 = vst [vmem:[#allocation2 + $0xe0] sm:$0xff] %v7678
        %7711 = vst [vmem:[#allocation2 + $0xe8] sm:$0xff] %v7679
        %7712 = vst [vmem:[#allocation2 + $0xf0] sm:$0xff] %v7680
        %7713 = vst [vmem:[#allocation2 + $0xf8] sm:$0xff] %v7681
        %v7714 = vld [vmem:[#allocation2] sm:$0xff]
        %v7715 = vld [vmem:[#allocation2 + $0x8] sm:$0xff]
        %v7716 = vld [vmem:[#allocation2 + $0x10] sm:$0xff]
        %v7717 = vld [vmem:[#allocation2 + $0x18] sm:$0xff]
        %v7718 = vld [vmem:[#allocation2 + $0x20] sm:$0xff]
        %v7719 = vld [vmem:[#allocation2 + $0x28] sm:$0xff]
        %v7720 = vld [vmem:[#allocation2 + $0x30] sm:$0xff]
        %v7721 = vld [vmem:[#allocation2 + $0x38] sm:$0xff]
        %v7722 = vld [vmem:[#allocation2 + $0x40] sm:$0xff]
        %v7723 = vld [vmem:[#allocation2 + $0x48] sm:$0xff]
        %v7724 = vld [vmem:[#allocation2 + $0x50] sm:$0xff]
        %v7725 = vld [vmem:[#allocation2 + $0x58] sm:$0xff]
        %v7726 = vld [vmem:[#allocation2 + $0x60] sm:$0xff]
        %v7727 = vld [vmem:[#allocation2 + $0x68] sm:$0xff]
        %v7728 = vld [vmem:[#allocation2 + $0x70] sm:$0xff]
        %v7729 = vld [vmem:[#allocation2 + $0x78] sm:$0xff]
        %v7730 = vld [vmem:[#allocation2 + $0x80] sm:$0xff]
        %v7731 = vld [vmem:[#allocation2 + $0x88] sm:$0xff]
        %v7732 = vld [vmem:[#allocation2 + $0x90] sm:$0xff]
        %v7733 = vld [vmem:[#allocation2 + $0x98] sm:$0xff]
        %v7734 = vld [vmem:[#allocation2 + $0xa0] sm:$0xff]
        %v7735 = vld [vmem:[#allocation2 + $0xa8] sm:$0xff]
        %v7736 = vld [vmem:[#allocation2 + $0xb0] sm:$0xff]
        %v7737 = vld [vmem:[#allocation2 + $0xb8] sm:$0xff]
        %v7738 = vld [vmem:[#allocation2 + $0xc0] sm:$0xff]
        %v7739 = vld [vmem:[#allocation2 + $0xc8] sm:$0xff]
        %v7740 = vld [vmem:[#allocation2 + $0xd0] sm:$0xff]
        %v7741 = vld [vmem:[#allocation2 + $0xd8] sm:$0xff]
        %v7742 = vld [vmem:[#allocation2 + $0xe0] sm:$0xff]
        %v7743 = vld [vmem:[#allocation2 + $0xe8] sm:$0xff]
        %v7744 = vld [vmem:[#allocation2 + $0xf0] sm:$0xff]
        %v7745 = vld [vmem:[#allocation2 + $0xf8] sm:$0xff]
        %v7746 = vadd.f32 %v6275, %v7714
        %v7747 = vadd.f32 %v6276, %v7715
        %v7748 = vadd.f32 %v6277, %v7716
        %v7749 = vadd.f32 %v6278, %v7717
        %v7750 = vadd.f32 %v6279, %v7718
        %v7751 = vadd.f32 %v6280, %v7719
        %v7752 = vadd.f32 %v6281, %v7720
        %v7753 = vadd.f32 %v6282, %v7721
        %v7754 = vadd.f32 %v6283, %v7722
        %v7755 = vadd.f32 %v6284, %v7723
        %v7756 = vadd.f32 %v6285, %v7724
        %v7757 = vadd.f32 %v6286, %v7725
        %v7758 = vadd.f32 %v6287, %v7726
        %v7759 = vadd.f32 %v6288, %v7727
        %v7760 = vadd.f32 %v6289, %v7728
        %v7761 = vadd.f32 %v6290, %v7729
        %v7762 = vadd.f32 %v6291, %v7730
        %v7763 = vadd.f32 %v6292, %v7731
        %v7764 = vadd.f32 %v6293, %v7732
        %v7765 = vadd.f32 %v6294, %v7733
        %v7766 = vadd.f32 %v6295, %v7734
        %v7767 = vadd.f32 %v6296, %v7735
        %v7768 = vadd.f32 %v6297, %v7736
        %v7769 = vadd.f32 %v6298, %v7737
        %v7770 = vadd.f32 %v6299, %v7738
        %v7771 = vadd.f32 %v6300, %v7739
        %v7772 = vadd.f32 %v6301, %v7740
        %v7773 = vadd.f32 %v6302, %v7741
        %v7774 = vadd.f32 %v6303, %v7742
        %v7775 = vadd.f32 %v6304, %v7743
        %v7776 = vadd.f32 %v6305, %v7744
        %v7777 = vadd.f32 %v6306, %v7745
        %v7778 = vld [vmem:[%s51] sm:$0x1]
        %v7780 = vlaneseq
        %v7781 = vshrl.u32 %v7780, 7
        %v7782 = vsub.s32 0, %v7781
        %v7783 = vrot.slane %v7778, %v7782
        %v7785 = vadd.f32 %v7746, %v7783
        %v7786 = vadd.f32 %v7747, %v7783
        %v7787 = vadd.f32 %v7748, %v7783
        %v7788 = vadd.f32 %v7749, %v7783
        %v7789 = vadd.f32 %v7750, %v7783
        %v7790 = vadd.f32 %v7751, %v7783
        %v7791 = vadd.f32 %v7752, %v7783
        %v7792 = vadd.f32 %v7753, %v7783
        %v7793 = vadd.f32 %v7754, %v7783
        %v7794 = vadd.f32 %v7755, %v7783
        %v7795 = vadd.f32 %v7756, %v7783
        %v7796 = vadd.f32 %v7757, %v7783
        %v7797 = vadd.f32 %v7758, %v7783
        %v7798 = vadd.f32 %v7759, %v7783
        %v7799 = vadd.f32 %v7760, %v7783
        %v7800 = vadd.f32 %v7761, %v7783
        %v7801 = vadd.f32 %v7762, %v7783
        %v7802 = vadd.f32 %v7763, %v7783
        %v7803 = vadd.f32 %v7764, %v7783
        %v7804 = vadd.f32 %v7765, %v7783
        %v7805 = vadd.f32 %v7766, %v7783
        %v7806 = vadd.f32 %v7767, %v7783
        %v7807 = vadd.f32 %v7768, %v7783
        %v7808 = vadd.f32 %v7769, %v7783
        %v7809 = vadd.f32 %v7770, %v7783
        %v7810 = vadd.f32 %v7771, %v7783
        %v7811 = vadd.f32 %v7772, %v7783
        %v7812 = vadd.f32 %v7773, %v7783
        %v7813 = vadd.f32 %v7774, %v7783
        %v7814 = vadd.f32 %v7775, %v7783
        %v7815 = vadd.f32 %v7776, %v7783
        %v7816 = vadd.f32 %v7777, %v7783
        %v7817 = vpack.c.bf16 %v7786, %v7785
        %v7818 = vpack.c.bf16 %v7788, %v7787
        %v7819 = vpack.c.bf16 %v7790, %v7789
        %v7820 = vpack.c.bf16 %v7792, %v7791
        %v7821 = vpack.c.bf16 %v7794, %v7793
        %v7822 = vpack.c.bf16 %v7796, %v7795
        %v7823 = vpack.c.bf16 %v7798, %v7797
        %v7824 = vpack.c.bf16 %v7800, %v7799
        %v7825 = vpack.c.bf16 %v7802, %v7801
        %v7826 = vpack.c.bf16 %v7804, %v7803
        %v7827 = vpack.c.bf16 %v7806, %v7805
        %v7828 = vpack.c.bf16 %v7808, %v7807
        %v7829 = vpack.c.bf16 %v7810, %v7809
        %v7830 = vpack.c.bf16 %v7812, %v7811
        %v7831 = vpack.c.bf16 %v7814, %v7813
        %v7832 = vpack.c.bf16 %v7816, %v7815
        %v7833 = vld [vmem:[%s53] sm:$0xf]
        %v7834 = vld [vmem:[%s53 + $0x4] sm:$0xf]
        %v7835 = vld [vmem:[%s53 + $0x8] sm:$0xf]
        %v7836 = vld [vmem:[%s53 + $0xc] sm:$0xf]
        %v7837 = vld [vmem:[%s53 + $0x10] sm:$0xf]
        %v7838 = vld [vmem:[%s53 + $0x14] sm:$0xf]
        %v7839 = vld [vmem:[%s53 + $0x18] sm:$0xf]
        %v7840 = vld [vmem:[%s53 + $0x1c] sm:$0xf]
        %v7841 = vld [vmem:[%s53 + $0x20] sm:$0xf]
        %v7842 = vld [vmem:[%s53 + $0x24] sm:$0xf]
        %v7843 = vld [vmem:[%s53 + $0x28] sm:$0xf]
        %v7844 = vld [vmem:[%s53 + $0x2c] sm:$0xf]
        %v7845 = vld [vmem:[%s53 + $0x30] sm:$0xf]
        %v7846 = vld [vmem:[%s53 + $0x34] sm:$0xf]
        %v7847 = vld [vmem:[%s53 + $0x38] sm:$0xf]
        %v7848 = vld [vmem:[%s53 + $0x3c] sm:$0xf]
        %v7865 = vunpack.c.l.b16 %v7833
        %v7866 = vunpack.c.l.b16 %v7834
        %v7867 = vunpack.c.l.b16 %v7835
        %v7868 = vunpack.c.l.b16 %v7836
        %v7869 = vunpack.c.l.b16 %v7837
        %v7870 = vunpack.c.l.b16 %v7838
        %v7871 = vunpack.c.l.b16 %v7839
        %v7872 = vunpack.c.l.b16 %v7840
        %v7873 = vunpack.c.l.b16 %v7841
        %v7874 = vunpack.c.l.b16 %v7842
        %v7875 = vunpack.c.l.b16 %v7843
        %v7876 = vunpack.c.l.b16 %v7844
        %v7877 = vunpack.c.l.b16 %v7845
        %v7878 = vunpack.c.l.b16 %v7846
        %v7879 = vunpack.c.l.b16 %v7847
        %v7880 = vunpack.c.l.b16 %v7848
        %v7881 = vpack.c.b16 %v7866, %v7865
        %v7882 = vpack.c.b16 %v7868, %v7867
        %v7883 = vpack.c.b16 %v7870, %v7869
        %v7884 = vpack.c.b16 %v7872, %v7871
        %v7885 = vpack.c.b16 %v7874, %v7873
        %v7886 = vpack.c.b16 %v7876, %v7875
        %v7887 = vpack.c.b16 %v7878, %v7877
        %v7888 = vpack.c.b16 %v7880, %v7879
        %7897 = vmatprep.subr.bf16.mxu0 0
        %7898 = vmatpush1.bf16.msra.mxu0 %v7881
        %7899 = vmatprep.subr.bf16.mxu0 0
        %7900 = vmatpush1.bf16.msra.mxu0 %v7882
        %7901 = vmatprep.subr.bf16.mxu0 0
        %7902 = vmatpush1.bf16.msra.mxu0 %v7883
        %7903 = vmatprep.subr.bf16.mxu0 0
        %7904 = vmatpush1.bf16.msra.mxu0 %v7884
        %7905 = vmatprep.subr.bf16.mxu0 0
        %7906 = vmatpush1.bf16.msra.mxu0 %v7885
        %7907 = vmatprep.subr.bf16.mxu0 0
        %7908 = vmatpush1.bf16.msra.mxu0 %v7886
        %7909 = vmatprep.subr.bf16.mxu0 0
        %7910 = vmatpush1.bf16.msra.mxu0 %v7887
        %7911 = vmatprep.subr.bf16.mxu0 0
        %7912 = vmatpush1.bf16.msra.mxu0 %v7888
        %7913 = vmatprep.subr.bf16.mxu0 0
        %7914 = vmatpush1.bf16.msra.mxu0 0
        %7915 = vmatprep.subr.bf16.mxu0 0
        %7916 = vmatpush1.bf16.msra.mxu0 0
        %7917 = vmatprep.subr.bf16.mxu0 0
        %7918 = vmatpush1.bf16.msra.mxu0 0
        %7919 = vmatprep.subr.bf16.mxu0 0
        %7920 = vmatpush1.bf16.msra.mxu0 0
        %7921 = vmatprep.subr.bf16.mxu0 0
        %7922 = vmatpush1.bf16.msra.mxu0 0
        %7923 = vmatprep.subr.bf16.mxu0 0
        %7924 = vmatpush1.bf16.msra.mxu0 0
        %7925 = vmatprep.subr.bf16.mxu0 0
        %7926 = vmatpush1.bf16.msra.mxu0 0
        %7927 = vmatprep.subr.bf16.mxu0 0
        %7928 = vmatpush1.bf16.msra.mxu0 0
        %7929 = vmatprep.mubr.bf16.mxu0 0
        %7930 = vmatmul.mubr.bf16.gmra.mrb[0].mxu0 %v7817
        %v7931 = vpop.f32.mrb[0].mxu0
        %v7932 = vadd.f32 0.0, %v7931
        %v7933 = vpop.f32.mrb[0].mxu0
        %v7934 = vpop.f32.mrb[0].mxu0
        %v7935 = vadd.f32 0.0, %v7934
        %v7936 = vpop.f32.mrb[0].mxu0
        %7937 = vmatprep.mubr.bf16.mxu0 0
        %7938 = vmatmul.mubr.bf16.gmra.mrb[0].mxu0 %v7818
        %v7939 = vpop.f32.mrb[0].mxu0
        %v7940 = vadd.f32 0.0, %v7939
        %v7941 = vpop.f32.mrb[0].mxu0
        %v7942 = vpop.f32.mrb[0].mxu0
        %v7943 = vadd.f32 0.0, %v7942
        %v7944 = vpop.f32.mrb[0].mxu0
        %7945 = vmatprep.mubr.bf16.mxu0 0
        %7946 = vmatmul.mubr.bf16.gmra.mrb[0].mxu0 %v7819
        %v7947 = vpop.f32.mrb[0].mxu0
        %v7948 = vadd.f32 0.0, %v7947
        %v7949 = vpop.f32.mrb[0].mxu0
        %v7950 = vpop.f32.mrb[0].mxu0
        %v7951 = vadd.f32 0.0, %v7950
        %v7952 = vpop.f32.mrb[0].mxu0
        %7953 = vmatprep.mubr.bf16.mxu0 0
        %7954 = vmatmul.mubr.bf16.gmra.mrb[0].mxu0 %v7820
        %v7955 = vpop.f32.mrb[0].mxu0
        %v7956 = vadd.f32 0.0, %v7955
        %v7957 = vpop.f32.mrb[0].mxu0
        %v7958 = vpop.f32.mrb[0].mxu0
        %v7959 = vadd.f32 0.0, %v7958
        %v7960 = vpop.f32.mrb[0].mxu0
        %7961 = vmatprep.mubr.bf16.mxu0 0
        %7962 = vmatmul.mubr.bf16.gmra.mrb[0].mxu0 %v7821
        %v7963 = vpop.f32.mrb[0].mxu0
        %v7964 = vadd.f32 0.0, %v7963
        %v7965 = vpop.f32.mrb[0].mxu0
        %v7966 = vpop.f32.mrb[0].mxu0
        %v7967 = vadd.f32 0.0, %v7966
        %v7968 = vpop.f32.mrb[0].mxu0
        %7969 = vmatprep.mubr.bf16.mxu0 0
        %7970 = vmatmul.mubr.bf16.gmra.mrb[0].mxu0 %v7822
        %v7971 = vpop.f32.mrb[0].mxu0
        %v7972 = vadd.f32 0.0, %v7971
        %v7973 = vpop.f32.mrb[0].mxu0
        %v7974 = vpop.f32.mrb[0].mxu0
        %v7975 = vadd.f32 0.0, %v7974
        %v7976 = vpop.f32.mrb[0].mxu0
        %7977 = vmatprep.mubr.bf16.mxu0 0
        %7978 = vmatmul.mubr.bf16.gmra.mrb[0].mxu0 %v7823
        %v7979 = vpop.f32.mrb[0].mxu0
        %v7980 = vadd.f32 0.0, %v7979
        %v7981 = vpop.f32.mrb[0].mxu0
        %v7982 = vpop.f32.mrb[0].mxu0
        %v7983 = vadd.f32 0.0, %v7982
        %v7984 = vpop.f32.mrb[0].mxu0
        %7985 = vmatprep.mubr.bf16.mxu0 0
        %7986 = vmatmul.mubr.bf16.gmra.mrb[0].mxu0 %v7824
        %v7987 = vpop.f32.mrb[0].mxu0
        %v7988 = vadd.f32 0.0, %v7987
        %v7989 = vpop.f32.mrb[0].mxu0
        %v7990 = vpop.f32.mrb[0].mxu0
        %v7991 = vadd.f32 0.0, %v7990
        %v7992 = vpop.f32.mrb[0].mxu0
        %7993 = vmatprep.mubr.bf16.mxu0 0
        %7994 = vmatmul.mubr.bf16.gmra.mrb[0].mxu0 %v7825
        %v7995 = vpop.f32.mrb[0].mxu0
        %v7996 = vadd.f32 0.0, %v7995
        %v7997 = vpop.f32.mrb[0].mxu0
        %v7998 = vpop.f32.mrb[0].mxu0
        %v7999 = vadd.f32 0.0, %v7998
        %v8000 = vpop.f32.mrb[0].mxu0
        %8001 = vmatprep.mubr.bf16.mxu0 0
        %8002 = vmatmul.mubr.bf16.gmra.mrb[0].mxu0 %v7826
        %v8003 = vpop.f32.mrb[0].mxu0
        %v8004 = vadd.f32 0.0, %v8003
        %v8005 = vpop.f32.mrb[0].mxu0
        %v8006 = vpop.f32.mrb[0].mxu0
        %v8007 = vadd.f32 0.0, %v8006
        %v8008 = vpop.f32.mrb[0].mxu0
        %8009 = vmatprep.mubr.bf16.mxu0 0
        %8010 = vmatmul.mubr.bf16.gmra.mrb[0].mxu0 %v7827
        %v8011 = vpop.f32.mrb[0].mxu0
        %v8012 = vadd.f32 0.0, %v8011
        %v8013 = vpop.f32.mrb[0].mxu0
        %v8014 = vpop.f32.mrb[0].mxu0
        %v8015 = vadd.f32 0.0, %v8014
        %v8016 = vpop.f32.mrb[0].mxu0
        %8017 = vmatprep.mubr.bf16.mxu0 0
        %8018 = vmatmul.mubr.bf16.gmra.mrb[0].mxu0 %v7828
        %v8019 = vpop.f32.mrb[0].mxu0
        %v8020 = vadd.f32 0.0, %v8019
        %v8021 = vpop.f32.mrb[0].mxu0
        %v8022 = vpop.f32.mrb[0].mxu0
        %v8023 = vadd.f32 0.0, %v8022
        %v8024 = vpop.f32.mrb[0].mxu0
        %8025 = vmatprep.mubr.bf16.mxu0 0
        %8026 = vmatmul.mubr.bf16.gmra.mrb[0].mxu0 %v7829
        %v8027 = vpop.f32.mrb[0].mxu0
        %v8028 = vadd.f32 0.0, %v8027
        %v8029 = vpop.f32.mrb[0].mxu0
        %v8030 = vpop.f32.mrb[0].mxu0
        %v8031 = vadd.f32 0.0, %v8030
        %v8032 = vpop.f32.mrb[0].mxu0
        %8033 = vmatprep.mubr.bf16.mxu0 0
        %8034 = vmatmul.mubr.bf16.gmra.mrb[0].mxu0 %v7830
        %v8035 = vpop.f32.mrb[0].mxu0
        %v8036 = vadd.f32 0.0, %v8035
        %v8037 = vpop.f32.mrb[0].mxu0
        %v8038 = vpop.f32.mrb[0].mxu0
        %v8039 = vadd.f32 0.0, %v8038
        %v8040 = vpop.f32.mrb[0].mxu0
        %8041 = vmatprep.mubr.bf16.mxu0 0
        %8042 = vmatmul.mubr.bf16.gmra.mrb[0].mxu0 %v7831
        %v8043 = vpop.f32.mrb[0].mxu0
        %v8044 = vadd.f32 0.0, %v8043
        %v8045 = vpop.f32.mrb[0].mxu0
        %v8046 = vpop.f32.mrb[0].mxu0
        %v8047 = vadd.f32 0.0, %v8046
        %v8048 = vpop.f32.mrb[0].mxu0
        %8049 = vmatprep.mubr.bf16.mxu0 0
        %8050 = vmatmul.mubr.bf16.gmra.mrb[0].mxu0 %v7832
        %v8051 = vpop.f32.mrb[0].mxu0
        %v8052 = vadd.f32 0.0, %v8051
        %v8053 = vpop.f32.mrb[0].mxu0
        %v8054 = vpop.f32.mrb[0].mxu0
        %v8055 = vadd.f32 0.0, %v8054
        %v8056 = vpop.f32.mrb[0].mxu0
        %8057 = vdwg.mxu0
        %v8058 = vadd.f32 %v928, %v7932
        %v8059 = vadd.f32 %v929, %v7935
        %v8060 = vadd.f32 %v930, %v7940
        %v8061 = vadd.f32 %v931, %v7943
        %v8062 = vadd.f32 %v932, %v7948
        %v8063 = vadd.f32 %v933, %v7951
        %v8064 = vadd.f32 %v934, %v7956
        %v8065 = vadd.f32 %v935, %v7959
        %v8066 = vadd.f32 %v936, %v7964
        %v8067 = vadd.f32 %v937, %v7967
        %v8068 = vadd.f32 %v938, %v7972
        %v8069 = vadd.f32 %v939, %v7975
        %v8070 = vadd.f32 %v940, %v7980
        %v8071 = vadd.f32 %v941, %v7983
        %v8072 = vadd.f32 %v942, %v7988
        %v8073 = vadd.f32 %v943, %v7991
        %v8074 = vadd.f32 %v944, %v7996
        %v8075 = vadd.f32 %v945, %v7999
        %v8076 = vadd.f32 %v946, %v8004
        %v8077 = vadd.f32 %v947, %v8007
        %v8078 = vadd.f32 %v948, %v8012
        %v8079 = vadd.f32 %v949, %v8015
        %v8080 = vadd.f32 %v950, %v8020
        %v8081 = vadd.f32 %v951, %v8023
        %v8082 = vadd.f32 %v952, %v8028
        %v8083 = vadd.f32 %v953, %v8031
        %v8084 = vadd.f32 %v954, %v8036
        %v8085 = vadd.f32 %v955, %v8039
        %v8086 = vadd.f32 %v956, %v8044
        %v8087 = vadd.f32 %v957, %v8047
        %v8088 = vadd.f32 %v958, %v8052
        %v8089 = vadd.f32 %v959, %v8055
        %v8090 = vld [vmem:[%s55] sm:$0x1]
        %v8092 = vlaneseq
        %v8093 = vshrl.u32 %v8092, 7
        %v8094 = vsub.s32 0, %v8093
        %v8095 = vrot.slane %v8090, %v8094
        %v8097 = vadd.f32 %v8058, %v8095
        %v8098 = vadd.f32 %v8059, %v8095
        %v8099 = vadd.f32 %v8060, %v8095
        %v8100 = vadd.f32 %v8061, %v8095
        %v8101 = vadd.f32 %v8062, %v8095
        %v8102 = vadd.f32 %v8063, %v8095
        %v8103 = vadd.f32 %v8064, %v8095
        %v8104 = vadd.f32 %v8065, %v8095
        %v8105 = vadd.f32 %v8066, %v8095
        %v8106 = vadd.f32 %v8067, %v8095
        %v8107 = vadd.f32 %v8068, %v8095
        %v8108 = vadd.f32 %v8069, %v8095
        %v8109 = vadd.f32 %v8070, %v8095
        %v8110 = vadd.f32 %v8071, %v8095
        %v8111 = vadd.f32 %v8072, %v8095
        %v8112 = vadd.f32 %v8073, %v8095
        %v8113 = vadd.f32 %v8074, %v8095
        %v8114 = vadd.f32 %v8075, %v8095
        %v8115 = vadd.f32 %v8076, %v8095
        %v8116 = vadd.f32 %v8077, %v8095
        %v8117 = vadd.f32 %v8078, %v8095
        %v8118 = vadd.f32 %v8079, %v8095
        %v8119 = vadd.f32 %v8080, %v8095
        %v8120 = vadd.f32 %v8081, %v8095
        %v8121 = vadd.f32 %v8082, %v8095
        %v8122 = vadd.f32 %v8083, %v8095
        %v8123 = vadd.f32 %v8084, %v8095
        %v8124 = vadd.f32 %v8085, %v8095
        %v8125 = vadd.f32 %v8086, %v8095
        %v8126 = vadd.f32 %v8087, %v8095
        %v8127 = vadd.f32 %v8088, %v8095
        %v8128 = vadd.f32 %v8089, %v8095
        %8129 = vst [vmem:[%s910] sm:$0xff] %v8097
        %8130 = vst [vmem:[%s910 + $0x8] sm:$0xff] %v8098
        %8131 = vst [vmem:[%s910 + $0x10] sm:$0xff] %v8099
        %8132 = vst [vmem:[%s910 + $0x18] sm:$0xff] %v8100
        %8133 = vst [vmem:[%s910 + $0x20] sm:$0xff] %v8101
        %8134 = vst [vmem:[%s910 + $0x28] sm:$0xff] %v8102
        %8135 = vst [vmem:[%s910 + $0x30] sm:$0xff] %v8103
        %8136 = vst [vmem:[%s910 + $0x38] sm:$0xff] %v8104
        %8137 = vst [vmem:[%s910 + $0x40] sm:$0xff] %v8105
        %8138 = vst [vmem:[%s910 + $0x48] sm:$0xff] %v8106
        %8139 = vst [vmem:[%s910 + $0x50] sm:$0xff] %v8107
        %8140 = vst [vmem:[%s910 + $0x58] sm:$0xff] %v8108
        %8141 = vst [vmem:[%s910 + $0x60] sm:$0xff] %v8109
        %8142 = vst [vmem:[%s910 + $0x68] sm:$0xff] %v8110
        %8143 = vst [vmem:[%s910 + $0x70] sm:$0xff] %v8111
        %8144 = vst [vmem:[%s910 + $0x78] sm:$0xff] %v8112
        %8145 = vst [vmem:[%s910 + $0x80] sm:$0xff] %v8113
        %8146 = vst [vmem:[%s910 + $0x88] sm:$0xff] %v8114
        %8147 = vst [vmem:[%s910 + $0x90] sm:$0xff] %v8115
        %8148 = vst [vmem:[%s910 + $0x98] sm:$0xff] %v8116
        %8149 = vst [vmem:[%s910 + $0xa0] sm:$0xff] %v8117
        %8150 = vst [vmem:[%s910 + $0xa8] sm:$0xff] %v8118
        %8151 = vst [vmem:[%s910 + $0xb0] sm:$0xff] %v8119
        %8152 = vst [vmem:[%s910 + $0xb8] sm:$0xff] %v8120
        %8153 = vst [vmem:[%s910 + $0xc0] sm:$0xff] %v8121
        %8154 = vst [vmem:[%s910 + $0xc8] sm:$0xff] %v8122
        %8155 = vst [vmem:[%s910 + $0xd0] sm:$0xff] %v8123
        %8156 = vst [vmem:[%s910 + $0xd8] sm:$0xff] %v8124
        %8157 = vst [vmem:[%s910 + $0xe0] sm:$0xff] %v8125
        %8158 = vst [vmem:[%s910 + $0xe8] sm:$0xff] %v8126
        %8159 = vst [vmem:[%s910 + $0xf0] sm:$0xff] %v8127
        %8160 = vst [vmem:[%s910 + $0xf8] sm:$0xff] %v8128
        %s8161 = sand.u32 %s693, 1
        %s8162 = scalar_lea.sflag [#allocation8], %s8161
        %s8163 = sand.u32 %s693, 1
        %s8164 = smul.addr %s8163, 256
        %s8165 = scalar_lea.vmem [#allocation7], %s8164
        // Predicated region
        $region249: #{unet_attention_block.1} parent=131 // pred_check
          %p8166 = pneg %p703
        $region250: #{unet_attention_block.1} parent=131 // pred_check_branch
          %8168 = sbr.rel (%p8166) target = $region252
        $region251: #{unet_attention_block.1} parent=131 // pred_region
          %s8170 = ssub.s32 4096, 4096
          %8171 = vsyncadd %s8162, %s8170
          %s8172 = smul.addr %s77, 32
          %s8173 = smul.addr %s8172, 128
          %s8174 = scalar_lea.hbm %s63, %s8173
          %s8175 = sshll.u32 %s8165, 4
          %s8176 = int_to_ptr.vmem [resolvable:$true] %s8175
          %8181 = dma.vmem_to_hbm [thread:$0]  %s8176, 4096, %s8174, %s8162, 128, 128, 8
        $region252: #{unet_attention_block.1} parent=131 // pred_fallthru
          _
      $region132: #{unet_attention_block.1} parent=5 // pred_fallthru
        _
      %p8182 = scmp.le.s32.totalorder 2, %s72
      // Predicated region
      $region253: #{unet_attention_block.1} parent=5 // pred_check
        %p8183 = pneg %p8182
      $region254: #{unet_attention_block.1} parent=5 // pred_check_branch
        %8185 = sbr.rel (%p8183) target = $region256
      $region255: #{unet_attention_block.1} parent=5 // pred_region
        %s8186 = ssub.s32 %s72, 2
        // Predicated region
        $region257: #{unet_attention_block.1} parent=255 // pred_check
          %p8187 = pneg %p709
        $region258: #{unet_attention_block.1} parent=255 // pred_check_branch
          %8189 = sbr.rel (%p8187) target = $region260
        $region259: #{unet_attention_block.1} parent=255 // pred_region
          %s8190 = sand.u32 %s694, 1
          %s8191 = scalar_lea.sflag [#allocation8], %s8190
          %s8192 = sand.u32 %s694, 1
          %s8193 = smul.addr %s8192, 256
          %s8194 = scalar_lea.vmem [#allocation7], %s8193
          %8195 = dma.done %s8191, 4096
        $region260: #{unet_attention_block.1} parent=255 // pred_fallthru
          _
      $region256: #{unet_attention_block.1} parent=5 // pred_fallthru
        _
    $region6: #{unet_attention_block.1} parent=1 // loop_footer
      %s76 = sadd.s32 1, %s72
    $region7: #{unet_attention_block.1} parent=1 // loop_footer_branch
      %71 = sbr.rel target = $region3
    $region8: #{unet_attention_block.1} parent=1 // loop_exit
      _
    %8196 = vsyncpa [#allocation8], 1
    %s8197 = scalar_lea.sflag [#allocation8], 1
    %8198 = vsyncpa %s8197, 1
  %8199 = vsyncmov [#allocation6]
  %s8200 = vpop.sfrf %8199
  %p8201 = scmp.eq.s32.totalorder %s8200, 0
  %p8202 = pneg %p8201
  %8204 = shalt.err (%p8202)
  %s8205 = scalar_lea.sflag [#allocation6], 1
  %8206 = vsyncmov %s8205
  %s8207 = vpop.sfrf %8206
  %p8208 = scmp.eq.s32.totalorder %s8207, 0
  %p8209 = pneg %p8208
  %8211 = shalt.err (%p8209)
  %s8212 = scalar_lea.sflag [#allocation6], 2
  %8213 = vsyncmov %s8212
  %s8214 = vpop.sfrf %8213
  %p8215 = scmp.eq.s32.totalorder %s8214, 0
  %p8216 = pneg %p8215
  %8218 = shalt.err (%p8216)
  %s8219 = scalar_lea.sflag [#allocation6], 3
  %8220 = vsyncmov %s8219
  %s8221 = vpop.sfrf %8220
  %p8222 = scmp.eq.s32.totalorder %s8221, 0
  %p8223 = pneg %p8222
  %8225 = shalt.err (%p8223)
  %s8226 = scalar_lea.sflag [#allocation6], 4
  %8227 = vsyncmov %s8226
  %s8228 = vpop.sfrf %8227
  %p8229 = scmp.eq.s32.totalorder %s8228, 0
  %p8230 = pneg %p8229
  %8232 = shalt.err (%p8230)
  %s8233 = scalar_lea.sflag [#allocation6], 5
  %8234 = vsyncmov %s8233
  %s8235 = vpop.sfrf %8234
  %p8236 = scmp.eq.s32.totalorder %s8235, 0
  %p8237 = pneg %p8236
  %8239 = shalt.err (%p8237)

</llo_original>
